<compile_context>
chip_gen: v7x
topology: tpu7x:2x2x1
jax: 0.10.0
libtpu: 0.0.40
codegen_flags: <defaults>
</compile_context>

<pallas_src>
import functools

import jax
import jax.numpy as jnp
from jax.experimental import pallas as pl
from jax.experimental.pallas import tpu as pltpu


# --------------------------------------------------------------------------
# Kernel A: fused conv (im2col GEMM) + bias + 2x2/stride-2 max-pool.
#   patches: (4, M, K) f32 -- tap t (t = 2*dh+dw of the pool window), im2col'd
#   w:       (K, Cout) f32,  b: (1, Cout) f32
#   out:     (M, Cout) f32  -- pooled conv output in NHWC row order
# Everything fits VMEM (M <= 792), so the call is un-gridded: one DMA in,
# 4 MXU matmuls + elementwise max, one DMA out.  max(conv_t) + b == pooling
# after bias since the bias is constant across the 4 taps.
# --------------------------------------------------------------------------
def _conv_pool_kernel(p_ref, w_ref, b_ref, o_ref):
    w = w_ref[...]
    r = jnp.dot(p_ref[0], w, preferred_element_type=jnp.float32)
    for t in range(1, 4):
        r = jnp.maximum(
            r, jnp.dot(p_ref[t], w, preferred_element_type=jnp.float32))
    o_ref[...] = r + b_ref[...]


def conv_pool(patches, w, b):
    _, m, _ = patches.shape
    cout = w.shape[1]
    return pl.pallas_call(
        _conv_pool_kernel,
        out_shape=jax.ShapeDtypeStruct((m, cout), jnp.float32),
    )(patches, w, b)


# --------------------------------------------------------------------------
# Kernel B: fused fc1 (5120->1024) + ReLU + out (1024->5, padded to 128).
# Grid = (K // tk,) over the fc1 contraction only; fc1 weights stream in
# (tk, 1024) bf16 blocks (2 MiB each, double-buffered -> safe on v5e/v6e/v7x
# VMEM).  f32 accumulator lives in VMEM scratch; the final grid step applies
# bias+ReLU and the small out-projection GEMM, writing a lane-dense (B, 128)
# result.
# --------------------------------------------------------------------------
def _fc_fused_kernel(x_ref, w1_ref, b1_ref, w2_ref, b2_ref, o_ref, acc_ref):
    k = pl.program_id(0)

    @pl.when(k == 0)
    def _():
        acc_ref[...] = jnp.zeros_like(acc_ref)

    acc_ref[...] += jnp.dot(x_ref[...].astype(jnp.bfloat16), w1_ref[...],
                            preferred_element_type=jnp.float32)

    @pl.when(k == pl.num_programs(0) - 1)
    def _():
        h = jnp.maximum(acc_ref[...] + b1_ref[...], 0.0)          # fc1 + ReLU
        out = jnp.dot(h.astype(jnp.bfloat16), w2_ref[...],
                      preferred_element_type=jnp.float32) + b2_ref[...]
        o_ref[...] = out.astype(o_ref.dtype)


def fc_fused(x, w1, b1, w2, b2, *, tk=1024):
    m, k1 = x.shape
    n1 = w1.shape[1]
    n2 = w2.shape[1]
    assert k1 % tk == 0
    return pl.pallas_call(
        _fc_fused_kernel,
        out_shape=jax.ShapeDtypeStruct((m, n2), jnp.float32),
        grid_spec=pltpu.PrefetchScalarGridSpec(
            num_scalar_prefetch=0,
            grid=(k1 // tk,),
            in_specs=[
                pl.BlockSpec((m, tk), lambda k: (0, k)),       # activations
                pl.BlockSpec((tk, n1), lambda k: (k, 0)),      # fc1 weights
                pl.BlockSpec((1, n1), lambda k: (0, 0)),       # fc1 bias
                pl.BlockSpec((n1, n2), lambda k: (0, 0)),      # out weights
                pl.BlockSpec((1, n2), lambda k: (0, 0)),       # out bias
            ],
            out_specs=pl.BlockSpec((m, n2), lambda k: (0, 0)),
            scratch_shapes=[pltpu.VMEM((m, n1), jnp.float32)],
        ),
        compiler_params=pltpu.CompilerParams(
            dimension_semantics=("arbitrary",)),
    )(x, w1, b1, w2, b2)


# --------------------------------------------------------------------------
# JAX glue: im2col for "conv(valid, stride 1) then 2x2/2 maxpool", emitted as
# 4 pool-window taps so the pool reduces to an elementwise max inside the
# conv GEMM kernel.  Feature order per tap is (kh, kw, cin).
# --------------------------------------------------------------------------
def pooled_im2col(x_nhwc, kh, kw):
    n, h, w, c = x_nhwc.shape
    ho, wo = h - kh + 1, w - kw + 1
    hp, wp = ho // 2, wo // 2
    taps = []
    for dh in range(2):
        for dw in range(2):
            cols = []
            for i in range(kh):
                for j in range(kw):
                    cols.append(
                        x_nhwc[:, dh + i: dh + i + 2 * hp: 2,
                                  dw + j: dw + j + 2 * wp: 2, :])
            t = jnp.stack(cols, axis=3)            # (n, hp, wp, kh*kw, c)
            taps.append(t.reshape(n * hp * wp, kh * kw * c))
    return jnp.stack(taps, axis=0), (n, hp, wp)


# --------------------------------------------------------------------------
# One-time weight preparation (kept out of the per-forward hot path).
# --------------------------------------------------------------------------
def prepare_params(params, img_h, img_w):
    hp1, wp1 = (img_h - 4) // 2, (img_w - 4) // 2
    hp2, wp2 = (hp1 - 2) // 2, (wp1 - 2) // 2
    assert 64 * hp2 * wp2 == 5120, "fc1 expects 5120 input features"

    # conv1: (32,1,5,5) -> (25,32) -> zero-pad K to 32 (sublane aligned)
    w1 = jnp.transpose(params["conv1_w"], (2, 3, 1, 0)).reshape(25, 32)
    w1 = jnp.pad(w1, ((0, 7), (0, 0)))
    b1 = params["conv1_b"].reshape(1, 32)

    # conv2: (64,32,3,3) -> (288,64)
    w2 = jnp.transpose(params["conv2_w"], (2, 3, 1, 0)).reshape(288, 64)
    b2 = params["conv2_b"].reshape(1, 64)

    # fc1: (1024,5120) with NCHW-ordered columns -> (5120,1024) with
    # NHWC-ordered rows (so the kernel can consume the NHWC-flattened conv
    # output directly, no runtime transpose), cast to bf16.
    fw = params["fc1_w"].reshape(1024, 64, hp2, wp2)
    fw = jnp.transpose(fw, (2, 3, 1, 0)).reshape(hp2 * wp2 * 64, 1024)
    fc1_w = fw.astype(jnp.bfloat16)
    fc1_b = params["fc1_b"].reshape(1, 1024)

    # out: (5,1024) -> (1024,128) zero-padded to a full lane group, bf16.
    ow = jnp.transpose(params["out_w"])                     # (1024, 5)
    out_w = jnp.pad(ow, ((0, 0), (0, 123))).astype(jnp.bfloat16)
    out_b = jnp.pad(params["out_b"], (0, 123)).reshape(1, 128)

    return {"w1": w1, "b1": b1, "w2": w2, "b2": b2,
            "fc1_w": fc1_w, "fc1_b": fc1_b, "out_w": out_w, "out_b": out_b}


# --------------------------------------------------------------------------
# Full forward pass of Net (takes prepared params).
# --------------------------------------------------------------------------
@jax.jit
def net_forward(x_nchw, p):
    x = jnp.transpose(x_nchw, (0, 2, 3, 1))                 # NCHW -> NHWC

    # conv1 (1->32, 5x5) + bias + maxpool 2x2, fused
    p1, (n, hp1, wp1) = pooled_im2col(x, 5, 5)
    p1 = jnp.pad(p1, ((0, 0), (0, 0), (0, 7)))              # K 25 -> 32
    y1 = conv_pool(p1, p["w1"], p["b1"])                    # (n*hp1*wp1, 32)
    y1 = y1.reshape(n, hp1, wp1, 32)

    # conv2 (32->64, 3x3) + bias + maxpool 2x2, fused
    p2, (n, hp2, wp2) = pooled_im2col(y1, 3, 3)
    y2 = conv_pool(p2, p["w2"], p["b2"])                    # (n*hp2*wp2, 64)

    # NHWC flatten (fc1 weight rows were permuted to match at prep time)
    flat = y2.reshape(n, hp2 * wp2 * 64)                    # (n, 5120)

    # fc1 + ReLU + out, fused; output padded to 128 lanes -> slice to 5
    out = fc_fused(flat, p["fc1_w"], p["fc1_b"], p["out_w"], p["out_b"])
    return out[:, :5]


# --------------------------------------------------------------------------
# Deterministic PyTorch-shaped parameter init (uniform +-1/sqrt(fan_in)).
# --------------------------------------------------------------------------
def init_params(key):
    def uni(k, shape, fan_in):
        bound = 1.0 / jnp.sqrt(jnp.float32(fan_in))
        return jax.random.uniform(k, shape, jnp.float32, -bound, bound)

    ks = jax.random.split(key, 8)
    return {
        "conv1_w": uni(ks[0], (32, 1, 5, 5), 1 * 5 * 5),
        "conv1_b": uni(ks[1], (32,), 1 * 5 * 5),
        "conv2_w": uni(ks[2], (64, 32, 3, 3), 32 * 3 * 3),
        "conv2_b": uni(ks[3], (64,), 32 * 3 * 3),
        "fc1_w":  uni(ks[4], (1024, 5120), 5120),
        "fc1_b":  uni(ks[5], (1024,), 5120),
        "out_w":  uni(ks[6], (5, 1024), 1024),
        "out_b":  uni(ks[7], (5,), 1024),
    }


# --------------------------------------------------------------------------
# Pure-JAX f32 reference (sanity check of the Pallas path).
# --------------------------------------------------------------------------
def net_reference(x_nchw, params):
    dn = ("NCHW", "OIHW", "NCHW")
    y = jax.lax.conv_general_dilated(x_nchw, params["conv1_w"], (1, 1), "VALID",
                                     dimension_numbers=dn)
    y = y + params["conv1_b"][None, :, None, None]
    y = jax.lax.reduce_window(y, -jnp.inf, jax.lax.max,
                              (1, 1, 2, 2), (1, 1, 2, 2), "VALID")
    y = jax.lax.conv_general_dilated(y, params["conv2_w"], (1, 1), "VALID",
                                     dimension_numbers=dn)
    y = y + params["conv2_b"][None, :, None, None]
    y = jax.lax.reduce_window(y, -jnp.inf, jax.lax.max,
                              (1, 1, 2, 2), (1, 1, 2, 2), "VALID")
    flat = y.reshape(y.shape[0], -1)
    h = jnp.maximum(flat @ params["fc1_w"].T + params["fc1_b"], 0.0)
    return h @ params["out_w"].T + params["out_b"]


if __name__ == "__main__":
    key = jax.random.PRNGKey(0)
    k_x, k_p = jax.random.split(key)

    # Input spatial size is fixed by fc1's 5120 features: (40, 48) -> 64*8*10.
    x = jax.random.normal(k_x, (2, 1, 40, 48), jnp.float32)
    params = init_params(k_p)
    prep = prepare_params(params, 40, 48)        # one-time weight layout work

    out = jax.block_until_ready(net_forward(x, prep))
    assert out.shape == (2, 5) and out.dtype == jnp.float32

    ref = jax.block_until_ready(net_reference(x, params))
    assert jnp.allclose(out, ref, rtol=1e-2, atol=1e-2), (out, ref)

    print("KERNEL_OK")
</pallas_src>

<mosaic_0001>
module attributes {stable_mosaic.version = 11 : i64} {
  func.func @_conv_pool_kernel(%arg0: memref<4x792x32xf32, #tpu.memory_space<vmem>>, %arg1: memref<32x32xf32, #tpu.memory_space<vmem>>, %arg2: memref<1x32xf32, #tpu.memory_space<vmem>>, %arg3: memref<792x32xf32, #tpu.memory_space<vmem>>) attributes {dimension_semantics = [], scalar_prefetch = 0 : i64, scratch_operands = 0 : i64, tpu.core_type = #tpu.core_type<tc>} {
    %c0 = arith.constant 0 : index
    %c0_0 = arith.constant 0 : index
    %0 = vector.load %arg1[%c0, %c0_0] : memref<32x32xf32, #tpu.memory_space<vmem>>, vector<32x32xf32>
    %c0_1 = arith.constant 0 : index
    %c0_2 = arith.constant 0 : index
    %c0_3 = arith.constant 0 : index
    %1 = vector.load %arg0[%c0_1, %c0_2, %c0_3] : memref<4x792x32xf32, #tpu.memory_space<vmem>>, vector<1x792x32xf32>
    %2 = vector.shape_cast %1 : vector<1x792x32xf32> to vector<792x32xf32>
    %cst = arith.constant dense<0.000000e+00> : vector<792x32xf32>
    %3 = tpu.matmul %2, %0, %cst {dimension_numbers = #tpu.dot_dimension_numbers<[1], [0], [0], [1], [0, 0, 1, 1], [], []>} : vector<792x32xf32>, vector<32x32xf32>, vector<792x32xf32> -> vector<792x32xf32>
    %c1 = arith.constant 1 : index
    %c0_4 = arith.constant 0 : index
    %c0_5 = arith.constant 0 : index
    %4 = vector.load %arg0[%c1, %c0_4, %c0_5] : memref<4x792x32xf32, #tpu.memory_space<vmem>>, vector<1x792x32xf32>
    %5 = vector.shape_cast %4 : vector<1x792x32xf32> to vector<792x32xf32>
    %cst_6 = arith.constant dense<0.000000e+00> : vector<792x32xf32>
    %6 = tpu.matmul %5, %0, %cst_6 {dimension_numbers = #tpu.dot_dimension_numbers<[1], [0], [0], [1], [0, 0, 1, 1], [], []>} : vector<792x32xf32>, vector<32x32xf32>, vector<792x32xf32> -> vector<792x32xf32>
    %7 = arith.maximumf %3, %6 : vector<792x32xf32>
    %c2 = arith.constant 2 : index
    %c0_7 = arith.constant 0 : index
    %c0_8 = arith.constant 0 : index
    %8 = vector.load %arg0[%c2, %c0_7, %c0_8] : memref<4x792x32xf32, #tpu.memory_space<vmem>>, vector<1x792x32xf32>
    %9 = vector.shape_cast %8 : vector<1x792x32xf32> to vector<792x32xf32>
    %cst_9 = arith.constant dense<0.000000e+00> : vector<792x32xf32>
    %10 = tpu.matmul %9, %0, %cst_9 {dimension_numbers = #tpu.dot_dimension_numbers<[1], [0], [0], [1], [0, 0, 1, 1], [], []>} : vector<792x32xf32>, vector<32x32xf32>, vector<792x32xf32> -> vector<792x32xf32>
    %11 = arith.maximumf %7, %10 : vector<792x32xf32>
    %c3 = arith.constant 3 : index
    %c0_10 = arith.constant 0 : index
    %c0_11 = arith.constant 0 : index
    %12 = vector.load %arg0[%c3, %c0_10, %c0_11] : memref<4x792x32xf32, #tpu.memory_space<vmem>>, vector<1x792x32xf32>
    %13 = vector.shape_cast %12 : vector<1x792x32xf32> to vector<792x32xf32>
    %cst_12 = arith.constant dense<0.000000e+00> : vector<792x32xf32>
    %14 = tpu.matmul %13, %0, %cst_12 {dimension_numbers = #tpu.dot_dimension_numbers<[1], [0], [0], [1], [0, 0, 1, 1], [], []>} : vector<792x32xf32>, vector<32x32xf32>, vector<792x32xf32> -> vector<792x32xf32>
    %15 = arith.maximumf %11, %14 : vector<792x32xf32>
    %c0_13 = arith.constant 0 : index
    %c0_14 = arith.constant 0 : index
    %16 = vector.load %arg2[%c0_13, %c0_14] : memref<1x32xf32, #tpu.memory_space<vmem>>, vector<1x32xf32>
    %17 = vector.broadcast %16 : vector<1x32xf32> to vector<792x32xf32>
    %18 = arith.addf %15, %17 : vector<792x32xf32>
    %c0_15 = arith.constant 0 : index
    %c0_16 = arith.constant 0 : index
    %19 = vector.load %arg3[%c0_15, %c0_16] : memref<792x32xf32, #tpu.memory_space<vmem>>, vector<792x32xf32>
    tpu.vector_store %arg3[%c0_15, %c0_16], %18 {strides = array<i32>} : memref<792x32xf32, #tpu.memory_space<vmem>>, vector<792x32xf32>,
    return
  }
}

module attributes {stable_mosaic.version = 11 : i64} {
  func.func @_conv_pool_kernel(%arg0: memref<4x160x288xf32, #tpu.memory_space<vmem>>, %arg1: memref<288x64xf32, #tpu.memory_space<vmem>>, %arg2: memref<1x64xf32, #tpu.memory_space<vmem>>, %arg3: memref<160x64xf32, #tpu.memory_space<vmem>>) attributes {dimension_semantics = [], scalar_prefetch = 0 : i64, scratch_operands = 0 : i64, tpu.core_type = #tpu.core_type<tc>} {
    %c0 = arith.constant 0 : index
    %c0_0 = arith.constant 0 : index
    %0 = vector.load %arg1[%c0, %c0_0] : memref<288x64xf32, #tpu.memory_space<vmem>>, vector<288x64xf32>
    %c0_1 = arith.constant 0 : index
    %c0_2 = arith.constant 0 : index
    %c0_3 = arith.constant 0 : index
    %1 = vector.load %arg0[%c0_1, %c0_2, %c0_3] : memref<4x160x288xf32, #tpu.memory_space<vmem>>, vector<1x160x288xf32>
    %2 = vector.shape_cast %1 : vector<1x160x288xf32> to vector<160x288xf32>
    %cst = arith.constant dense<0.000000e+00> : vector<160x64xf32>
    %3 = tpu.matmul %2, %0, %cst {dimension_numbers = #tpu.dot_dimension_numbers<[1], [0], [0], [1], [0, 0, 1, 1], [], []>} : vector<160x288xf32>, vector<288x64xf32>, vector<160x64xf32> -> vector<160x64xf32>
    %c1 = arith.constant 1 : index
    %c0_4 = arith.constant 0 : index
    %c0_5 = arith.constant 0 : index
    %4 = vector.load %arg0[%c1, %c0_4, %c0_5] : memref<4x160x288xf32, #tpu.memory_space<vmem>>, vector<1x160x288xf32>
    %5 = vector.shape_cast %4 : vector<1x160x288xf32> to vector<160x288xf32>
    %cst_6 = arith.constant dense<0.000000e+00> : vector<160x64xf32>
    %6 = tpu.matmul %5, %0, %cst_6 {dimension_numbers = #tpu.dot_dimension_numbers<[1], [0], [0], [1], [0, 0, 1, 1], [], []>} : vector<160x288xf32>, vector<288x64xf32>, vector<160x64xf32> -> vector<160x64xf32>
    %7 = arith.maximumf %3, %6 : vector<160x64xf32>
    %c2 = arith.constant 2 : index
    %c0_7 = arith.constant 0 : index
    %c0_8 = arith.constant 0 : index
    %8 = vector.load %arg0[%c2, %c0_7, %c0_8] : memref<4x160x288xf32, #tpu.memory_space<vmem>>, vector<1x160x288xf32>
    %9 = vector.shape_cast %8 : vector<1x160x288xf32> to vector<160x288xf32>
    %cst_9 = arith.constant dense<0.000000e+00> : vector<160x64xf32>
    %10 = tpu.matmul %9, %0, %cst_9 {dimension_numbers = #tpu.dot_dimension_numbers<[1], [0], [0], [1], [0, 0, 1, 1], [], []>} : vector<160x288xf32>, vector<288x64xf32>, vector<160x64xf32> -> vector<160x64xf32>
    %11 = arith.maximumf %7, %10 : vector<160x64xf32>
    %c3 = arith.constant 3 : index
    %c0_10 = arith.constant 0 : index
    %c0_11 = arith.constant 0 : index
    %12 = vector.load %arg0[%c3, %c0_10, %c0_11] : memref<4x160x288xf32, #tpu.memory_space<vmem>>, vector<1x160x288xf32>
    %13 = vector.shape_cast %12 : vector<1x160x288xf32> to vector<160x288xf32>
    %cst_12 = arith.constant dense<0.000000e+00> : vector<160x64xf32>
    %14 = tpu.matmul %13, %0, %cst_12 {dimension_numbers = #tpu.dot_dimension_numbers<[1], [0], [0], [1], [0, 0, 1, 1], [], []>} : vector<160x288xf32>, vector<288x64xf32>, vector<160x64xf32> -> vector<160x64xf32>
    %15 = arith.maximumf %11, %14 : vector<160x64xf32>
    %c0_13 = arith.constant 0 : index
    %c0_14 = arith.constant 0 : index
    %16 = vector.load %arg2[%c0_13, %c0_14] : memref<1x64xf32, #tpu.memory_space<vmem>>, vector<1x64xf32>
    %17 = vector.broadcast %16 : vector<1x64xf32> to vector<160x64xf32>
    %18 = arith.addf %15, %17 : vector<160x64xf32>
    %c0_15 = arith.constant 0 : index
    %c0_16 = arith.constant 0 : index
    %19 = vector.load %arg3[%c0_15, %c0_16] : memref<160x64xf32, #tpu.memory_space<vmem>>, vector<160x64xf32>
    tpu.vector_store %arg3[%c0_15, %c0_16], %18 {strides = array<i32>} : memref<160x64xf32, #tpu.memory_space<vmem>>, vector<160x64xf32>,
    return
  }
}

module attributes {stable_mosaic.version = 11 : i64} {
  func.func @_fc_fused_kernel(%arg0: i32, %arg1: memref<2x1024xf32, #tpu.memory_space<vmem>>, %arg2: memref<1024x1024xbf16, #tpu.memory_space<vmem>>, %arg3: memref<1x1024xf32, #tpu.memory_space<vmem>>, %arg4: memref<1024x128xbf16, #tpu.memory_space<vmem>>, %arg5: memref<1x128xf32, #tpu.memory_space<vmem>>, %arg6: memref<2x128xf32, #tpu.memory_space<vmem>>, %arg7: memref<2x1024xf32, #tpu.memory_space<vmem>>) attributes {dimension_semantics = [#tpu.dimension_semantics<arbitrary>], iteration_bounds = array<i64: 5>, scalar_prefetch = 0 : i64, scratch_operands = 1 : i64, tpu.core_type = #tpu.core_type<tc>, window_params = [{transform_indices = @transform_0, window_bounds = array<i64: 2, 1024>}, {transform_indices = @transform_1, window_bounds = array<i64: 1024, 1024>}, {pipeline_mode = #tpu.pipeline_mode<synchronous>, transform_indices = @transform_2, window_bounds = array<i64: 1, 1024>}, {pipeline_mode = #tpu.pipeline_mode<synchronous>, transform_indices = @transform_3, window_bounds = array<i64: 1024, 128>}, {pipeline_mode = #tpu.pipeline_mode<synchronous>, transform_indices = @transform_4, window_bounds = array<i64: 1, 128>}, {pipeline_mode = #tpu.pipeline_mode<synchronous>, transform_indices = @transform_5, window_bounds = array<i64: 2, 128>}]} {
    %c0_i32 = arith.constant 0 : i32
    %0 = arith.cmpi eq, %arg0, %c0_i32 : i32
    %1 = arith.extui %0 : i1 to i32
    %c0_i32_0 = arith.constant 0 : i32
    %2 = arith.cmpi ne, %1, %c0_i32_0 : i32
    scf.if %2 {
      %cst_9 = arith.constant 0.000000e+00 : f32
      %13 = vector.broadcast %cst_9 : f32 to vector<2x1024xf32>
      %c0_10 = arith.constant 0 : index
      %c0_11 = arith.constant 0 : index
      %14 = vector.load %arg7[%c0_10, %c0_11] : memref<2x1024xf32, #tpu.memory_space<vmem>>, vector<2x1024xf32>
      tpu.vector_store %arg7[%c0_10, %c0_11], %13 {strides = array<i32>} : memref<2x1024xf32, #tpu.memory_space<vmem>>, vector<2x1024xf32>,
    } else {
    }
    %c0 = arith.constant 0 : index
    %c0_1 = arith.constant 0 : index
    %3 = vector.load %arg7[%c0, %c0_1] : memref<2x1024xf32, #tpu.memory_space<vmem>>, vector<2x1024xf32>
    %c0_2 = arith.constant 0 : index
    %c0_3 = arith.constant 0 : index
    %4 = vector.load %arg1[%c0_2, %c0_3] : memref<2x1024xf32, #tpu.memory_space<vmem>>, vector<2x1024xf32>
    %5 = arith.truncf %4 : vector<2x1024xf32> to vector<2x1024xbf16>
    %c0_4 = arith.constant 0 : index
    %c0_5 = arith.constant 0 : index
    %6 = vector.load %arg2[%c0_4, %c0_5] : memref<1024x1024xbf16, #tpu.memory_space<vmem>>, vector<1024x1024xbf16>
    %cst = arith.constant dense<0.000000e+00> : vector<2x1024xf32>
    %7 = tpu.matmul %5, %6, %cst {dimension_numbers = #tpu.dot_dimension_numbers<[1], [0], [0], [1], [0, 0, 1, 1], [], []>} : vector<2x1024xbf16>, vector<1024x1024xbf16>, vector<2x1024xf32> -> vector<2x1024xf32>
    %8 = arith.addf %3, %7 : vector<2x1024xf32>
    %c0_6 = arith.constant 0 : index
    %c0_7 = arith.constant 0 : index
    %9 = vector.load %arg7[%c0_6, %c0_7] : memref<2x1024xf32, #tpu.memory_space<vmem>>, vector<2x1024xf32>
    tpu.vector_store %arg7[%c0_6, %c0_7], %8 {strides = array<i32>} : memref<2x1024xf32, #tpu.memory_space<vmem>>, vector<2x1024xf32>,
    %c4_i32 = arith.constant 4 : i32
    %10 = arith.cmpi eq, %arg0, %c4_i32 : i32
    %11 = arith.extui %10 : i1 to i32
    %c0_i32_8 = arith.constant 0 : i32
    %12 = arith.cmpi ne, %11, %c0_i32_8 : i32
    scf.if %12 {
      %c0_9 = arith.constant 0 : index
      %c0_10 = arith.constant 0 : index
      %13 = vector.load %arg7[%c0_9, %c0_10] : memref<2x1024xf32, #tpu.memory_space<vmem>>, vector<2x1024xf32>
      %c0_11 = arith.constant 0 : index
      %c0_12 = arith.constant 0 : index
      %14 = vector.load %arg3[%c0_11, %c0_12] : memref<1x1024xf32, #tpu.memory_space<vmem>>, vector<1x1024xf32>
      %15 = vector.broadcast %14 : vector<1x1024xf32> to vector<2x1024xf32>
      %16 = arith.addf %13, %15 : vector<2x1024xf32>
      %cst_13 = arith.constant 0.000000e+00 : f32
      %17 = vector.broadcast %cst_13 : f32 to vector<2x1024xf32>
      %18 = arith.maximumf %16, %17 : vector<2x1024xf32>
      %19 = arith.truncf %18 : vector<2x1024xf32> to vector<2x1024xbf16>
      %c0_14 = arith.constant 0 : index
      %c0_15 = arith.constant 0 : index
      %20 = vector.load %arg4[%c0_14, %c0_15] : memref<1024x128xbf16, #tpu.memory_space<vmem>>, vector<1024x128xbf16>
      %cst_16 = arith.constant dense<0.000000e+00> : vector<2x128xf32>
      %21 = tpu.matmul %19, %20, %cst_16 {dimension_numbers = #tpu.dot_dimension_numbers<[1], [0], [0], [1], [0, 0, 1, 1], [], []>} : vector<2x1024xbf16>, vector<1024x128xbf16>, vector<2x128xf32> -> vector<2x128xf32>
      %c0_17 = arith.constant 0 : index
      %c0_18 = arith.constant 0 : index
      %22 = vector.load %arg5[%c0_17, %c0_18] : memref<1x128xf32, #tpu.memory_space<vmem>>, vector<1x128xf32>
      %23 = vector.broadcast %22 : vector<1x128xf32> to vector<2x128xf32>
      %24 = arith.addf %21, %23 : vector<2x128xf32>
      %c0_19 = arith.constant 0 : index
      %c0_20 = arith.constant 0 : index
      %25 = vector.load %arg6[%c0_19, %c0_20] : memref<2x128xf32, #tpu.memory_space<vmem>>, vector<2x128xf32>
      tpu.vector_store %arg6[%c0_19, %c0_20], %24 {strides = array<i32>} : memref<2x128xf32, #tpu.memory_space<vmem>>, vector<2x128xf32>,
    } else {
    }
    return
  }
  func.func @transform_0(%arg0: i32) -> (i32, i32) {
    %c0_i32 = arith.constant 0 : i32
    %c0_i32_0 = arith.constant 0 : i32
    return %c0_i32, %arg0 : i32, i32
  }
  func.func @transform_1(%arg0: i32) -> (i32, i32) {
    %c0_i32 = arith.constant 0 : i32
    %c0_i32_0 = arith.constant 0 : i32
    return %arg0, %c0_i32 : i32, i32
  }
  func.func @transform_2(%arg0: i32) -> (i32, i32) {
    %c0_i32 = arith.constant 0 : i32
    %c0_i32_0 = arith.constant 0 : i32
    %c0_i32_1 = arith.constant 0 : i32
    return %c0_i32, %c0_i32_0 : i32, i32
  }
  func.func @transform_3(%arg0: i32) -> (i32, i32) {
    %c0_i32 = arith.constant 0 : i32
    %c0_i32_0 = arith.constant 0 : i32
    %c0_i32_1 = arith.constant 0 : i32
    return %c0_i32, %c0_i32_0 : i32, i32
  }
  func.func @transform_4(%arg0: i32) -> (i32, i32) {
    %c0_i32 = arith.constant 0 : i32
    %c0_i32_0 = arith.constant 0 : i32
    %c0_i32_1 = arith.constant 0 : i32
    return %c0_i32, %c0_i32_0 : i32, i32
  }
  func.func @transform_5(%arg0: i32) -> (i32, i32) {
    %c0_i32 = arith.constant 0 : i32
    %c0_i32_0 = arith.constant 0 : i32
    %c0_i32_1 = arith.constant 0 : i32
    return %c0_i32, %c0_i32_0 : i32, i32
  }
}

</mosaic_0001>

<llo_original>
// kernel: net_forward.3
$region0: #{net_forward.3}
  #allocation0 [shape = 'u32[]', space=smem, size = 0x4, offset = 0x4, fixed_abs, tag = 'smem constant byte address 0x4 - core index']
  #allocation1 [shape = 'u32[144,128]{1,0:T(1,128)}', space=vmem, size = 0x12000, scoped, tag = 'internal scratch']
  %s0 = inlined_call_operand.vmem [shape: f32[4,792,32], index: 0, kind: input, shape index: {}]
  %s1 = inlined_call_operand.vmem [shape: f32[32,32], index: 1, kind: input, shape index: {}]
  %s2 = inlined_call_operand.vmem [shape: f32[1,32], index: 2, kind: input, shape index: {}]
  %s3 = inlined_call_operand.vmem [shape: f32[792,32], index: 3, kind: output, shape index: {}]
  %s4 = sld [smem:[#allocation0]]
  $region22: #{net_forward.3} parent=0
    _
  %s6 = ssub.s32 1, %s4
  %s7 = scalar_select 0, %s6, %s4
  // Predicated region
  $region2: #{net_forward.3} parent=0 // pred_check
    _
  $region3: #{net_forward.3} parent=0 // pred_check_branch
    %9 = sbr.rel (0) target = $region5
  $region4: #{net_forward.3} parent=0 // pred_region
    _
  $region5: #{net_forward.3} parent=0 // pred_fallthru
    _
  // Predicated region
  $region6: #{net_forward.3} parent=0 // pred_check
    _
  $region7: #{net_forward.3} parent=0 // pred_check_branch
    %11 = sbr.rel (0) target = $region9
  $region8: #{net_forward.3} parent=0 // pred_region
    _
  $region9: #{net_forward.3} parent=0 // pred_fallthru
    _
  // Predicated region
  $region10: #{net_forward.3} parent=0 // pred_check
    _
  $region11: #{net_forward.3} parent=0 // pred_check_branch
    %13 = sbr.rel (0) target = $region13
  $region12: #{net_forward.3} parent=0 // pred_region
    _
  $region13: #{net_forward.3} parent=0 // pred_fallthru
    _
  %v14 = vld [vmem:[%s1] sm:$0xff]
  %v15 = vld [vmem:[%s1 + $0x8] sm:$0xff]
  %v16 = vld [vmem:[%s1 + $0x10] sm:$0xff]
  %v17 = vld [vmem:[%s1 + $0x18] sm:$0xff]
  %v18 = vld [vmem:[%s0] sm:$0xff]
  %v19 = vld [vmem:[%s0 + $0x8] sm:$0xff]
  %v20 = vld [vmem:[%s0 + $0x10] sm:$0xff]
  %v21 = vld [vmem:[%s0 + $0x18] sm:$0xff]
  %v22 = vld [vmem:[%s0 + $0x20] sm:$0xff]
  %v23 = vld [vmem:[%s0 + $0x28] sm:$0xff]
  %v24 = vld [vmem:[%s0 + $0x30] sm:$0xff]
  %v25 = vld [vmem:[%s0 + $0x38] sm:$0xff]
  %v26 = vld [vmem:[%s0 + $0x40] sm:$0xff]
  %v27 = vld [vmem:[%s0 + $0x48] sm:$0xff]
  %v28 = vld [vmem:[%s0 + $0x50] sm:$0xff]
  %v29 = vld [vmem:[%s0 + $0x58] sm:$0xff]
  %v30 = vld [vmem:[%s0 + $0x60] sm:$0xff]
  %v31 = vld [vmem:[%s0 + $0x68] sm:$0xff]
  %v32 = vld [vmem:[%s0 + $0x70] sm:$0xff]
  %v33 = vld [vmem:[%s0 + $0x78] sm:$0xff]
  %v34 = vld [vmem:[%s0 + $0x80] sm:$0xff]
  %v35 = vld [vmem:[%s0 + $0x88] sm:$0xff]
  %v36 = vld [vmem:[%s0 + $0x90] sm:$0xff]
  %v37 = vld [vmem:[%s0 + $0x98] sm:$0xff]
  %v38 = vld [vmem:[%s0 + $0xa0] sm:$0xff]
  %v39 = vld [vmem:[%s0 + $0xa8] sm:$0xff]
  %v40 = vld [vmem:[%s0 + $0xb0] sm:$0xff]
  %v41 = vld [vmem:[%s0 + $0xb8] sm:$0xff]
  %v42 = vld [vmem:[%s0 + $0xc0] sm:$0xff]
  %v43 = vld [vmem:[%s0 + $0xc8] sm:$0xff]
  %v44 = vld [vmem:[%s0 + $0xd0] sm:$0xff]
  %v45 = vld [vmem:[%s0 + $0xd8] sm:$0xff]
  %v46 = vld [vmem:[%s0 + $0xe0] sm:$0xff]
  %v47 = vld [vmem:[%s0 + $0xe8] sm:$0xff]
  %v48 = vld [vmem:[%s0 + $0xf0] sm:$0xff]
  %v49 = vld [vmem:[%s0 + $0xf8] sm:$0xff]
  %v50 = vld [vmem:[%s0 + $0x100] sm:$0xff]
  %v51 = vld [vmem:[%s0 + $0x108] sm:$0xff]
  %v52 = vld [vmem:[%s0 + $0x110] sm:$0xff]
  %v53 = vld [vmem:[%s0 + $0x118] sm:$0xff]
  %v54 = vld [vmem:[%s0 + $0x120] sm:$0xff]
  %v55 = vld [vmem:[%s0 + $0x128] sm:$0xff]
  %v56 = vld [vmem:[%s0 + $0x130] sm:$0xff]
  %v57 = vld [vmem:[%s0 + $0x138] sm:$0xff]
  %v58 = vld [vmem:[%s0 + $0x140] sm:$0xff]
  %v59 = vld [vmem:[%s0 + $0x148] sm:$0xff]
  %v60 = vld [vmem:[%s0 + $0x150] sm:$0xff]
  %v61 = vld [vmem:[%s0 + $0x158] sm:$0xff]
  %v62 = vld [vmem:[%s0 + $0x160] sm:$0xff]
  %v63 = vld [vmem:[%s0 + $0x168] sm:$0xff]
  %v64 = vld [vmem:[%s0 + $0x170] sm:$0xff]
  %v65 = vld [vmem:[%s0 + $0x178] sm:$0xff]
  %v66 = vld [vmem:[%s0 + $0x180] sm:$0xff]
  %v67 = vld [vmem:[%s0 + $0x188] sm:$0xff]
  %v68 = vld [vmem:[%s0 + $0x190] sm:$0xff]
  %v69 = vld [vmem:[%s0 + $0x198] sm:$0xff]
  %v70 = vld [vmem:[%s0 + $0x1a0] sm:$0xff]
  %v71 = vld [vmem:[%s0 + $0x1a8] sm:$0xff]
  %v72 = vld [vmem:[%s0 + $0x1b0] sm:$0xff]
  %v73 = vld [vmem:[%s0 + $0x1b8] sm:$0xff]
  %v74 = vld [vmem:[%s0 + $0x1c0] sm:$0xff]
  %v75 = vld [vmem:[%s0 + $0x1c8] sm:$0xff]
  %v76 = vld [vmem:[%s0 + $0x1d0] sm:$0xff]
  %v77 = vld [vmem:[%s0 + $0x1d8] sm:$0xff]
  %v78 = vld [vmem:[%s0 + $0x1e0] sm:$0xff]
  %v79 = vld [vmem:[%s0 + $0x1e8] sm:$0xff]
  %v80 = vld [vmem:[%s0 + $0x1f0] sm:$0xff]
  %v81 = vld [vmem:[%s0 + $0x1f8] sm:$0xff]
  %v82 = vld [vmem:[%s0 + $0x200] sm:$0xff]
  %v83 = vld [vmem:[%s0 + $0x208] sm:$0xff]
  %v84 = vld [vmem:[%s0 + $0x210] sm:$0xff]
  %v85 = vld [vmem:[%s0 + $0x218] sm:$0xff]
  %v86 = vld [vmem:[%s0 + $0x220] sm:$0xff]
  %v87 = vld [vmem:[%s0 + $0x228] sm:$0xff]
  %v88 = vld [vmem:[%s0 + $0x230] sm:$0xff]
  %v89 = vld [vmem:[%s0 + $0x238] sm:$0xff]
  %v90 = vld [vmem:[%s0 + $0x240] sm:$0xff]
  %v91 = vld [vmem:[%s0 + $0x248] sm:$0xff]
  %v92 = vld [vmem:[%s0 + $0x250] sm:$0xff]
  %v93 = vld [vmem:[%s0 + $0x258] sm:$0xff]
  %v94 = vld [vmem:[%s0 + $0x260] sm:$0xff]
  %v95 = vld [vmem:[%s0 + $0x268] sm:$0xff]
  %v96 = vld [vmem:[%s0 + $0x270] sm:$0xff]
  %v97 = vld [vmem:[%s0 + $0x278] sm:$0xff]
  %v98 = vld [vmem:[%s0 + $0x280] sm:$0xff]
  %v99 = vld [vmem:[%s0 + $0x288] sm:$0xff]
  %v100 = vld [vmem:[%s0 + $0x290] sm:$0xff]
  %v101 = vld [vmem:[%s0 + $0x298] sm:$0xff]
  %v102 = vld [vmem:[%s0 + $0x2a0] sm:$0xff]
  %v103 = vld [vmem:[%s0 + $0x2a8] sm:$0xff]
  %v104 = vld [vmem:[%s0 + $0x2b0] sm:$0xff]
  %v105 = vld [vmem:[%s0 + $0x2b8] sm:$0xff]
  %v106 = vld [vmem:[%s0 + $0x2c0] sm:$0xff]
  %v107 = vld [vmem:[%s0 + $0x2c8] sm:$0xff]
  %v108 = vld [vmem:[%s0 + $0x2d0] sm:$0xff]
  %v109 = vld [vmem:[%s0 + $0x2d8] sm:$0xff]
  %v110 = vld [vmem:[%s0 + $0x2e0] sm:$0xff]
  %v111 = vld [vmem:[%s0 + $0x2e8] sm:$0xff]
  %v112 = vld [vmem:[%s0 + $0x2f0] sm:$0xff]
  %v113 = vld [vmem:[%s0 + $0x2f8] sm:$0xff]
  %v114 = vld [vmem:[%s0 + $0x300] sm:$0xff]
  %v115 = vld [vmem:[%s0 + $0x308] sm:$0xff]
  %v116 = vld [vmem:[%s0 + $0x310] sm:$0xff]
  %vm117 = vcmask 261120
  %v119 = vsel %vm117, %v18, 0
  %v122 = vsel %vm117, %v19, 0
  %v125 = vsel %vm117, %v20, 0
  %v128 = vsel %vm117, %v21, 0
  %v131 = vsel %vm117, %v22, 0
  %v134 = vsel %vm117, %v23, 0
  %v137 = vsel %vm117, %v24, 0
  %v140 = vsel %vm117, %v25, 0
  %v143 = vsel %vm117, %v26, 0
  %v146 = vsel %vm117, %v27, 0
  %v149 = vsel %vm117, %v28, 0
  %v152 = vsel %vm117, %v29, 0
  %v155 = vsel %vm117, %v30, 0
  %v158 = vsel %vm117, %v31, 0
  %v161 = vsel %vm117, %v32, 0
  %v164 = vsel %vm117, %v33, 0
  %v167 = vsel %vm117, %v34, 0
  %v170 = vsel %vm117, %v35, 0
  %v173 = vsel %vm117, %v36, 0
  %v176 = vsel %vm117, %v37, 0
  %v179 = vsel %vm117, %v38, 0
  %v182 = vsel %vm117, %v39, 0
  %v185 = vsel %vm117, %v40, 0
  %v188 = vsel %vm117, %v41, 0
  %v191 = vsel %vm117, %v42, 0
  %v194 = vsel %vm117, %v43, 0
  %v197 = vsel %vm117, %v44, 0
  %v200 = vsel %vm117, %v45, 0
  %v203 = vsel %vm117, %v46, 0
  %v206 = vsel %vm117, %v47, 0
  %v209 = vsel %vm117, %v48, 0
  %v212 = vsel %vm117, %v49, 0
  %v215 = vsel %vm117, %v50, 0
  %v218 = vsel %vm117, %v51, 0
  %v221 = vsel %vm117, %v52, 0
  %v224 = vsel %vm117, %v53, 0
  %v227 = vsel %vm117, %v54, 0
  %v230 = vsel %vm117, %v55, 0
  %v233 = vsel %vm117, %v56, 0
  %v236 = vsel %vm117, %v57, 0
  %v239 = vsel %vm117, %v58, 0
  %v242 = vsel %vm117, %v59, 0
  %v245 = vsel %vm117, %v60, 0
  %v248 = vsel %vm117, %v61, 0
  %v251 = vsel %vm117, %v62, 0
  %v254 = vsel %vm117, %v63, 0
  %v257 = vsel %vm117, %v64, 0
  %v260 = vsel %vm117, %v65, 0
  %v263 = vsel %vm117, %v66, 0
  %v266 = vsel %vm117, %v67, 0
  %v269 = vsel %vm117, %v68, 0
  %v272 = vsel %vm117, %v69, 0
  %v275 = vsel %vm117, %v70, 0
  %v278 = vsel %vm117, %v71, 0
  %v281 = vsel %vm117, %v72, 0
  %v284 = vsel %vm117, %v73, 0
  %v287 = vsel %vm117, %v74, 0
  %v290 = vsel %vm117, %v75, 0
  %v293 = vsel %vm117, %v76, 0
  %v296 = vsel %vm117, %v77, 0
  %v299 = vsel %vm117, %v78, 0
  %v302 = vsel %vm117, %v79, 0
  %v305 = vsel %vm117, %v80, 0
  %v308 = vsel %vm117, %v81, 0
  %v311 = vsel %vm117, %v82, 0
  %v314 = vsel %vm117, %v83, 0
  %v317 = vsel %vm117, %v84, 0
  %v320 = vsel %vm117, %v85, 0
  %v323 = vsel %vm117, %v86, 0
  %v326 = vsel %vm117, %v87, 0
  %v329 = vsel %vm117, %v88, 0
  %v332 = vsel %vm117, %v89, 0
  %v335 = vsel %vm117, %v90, 0
  %v338 = vsel %vm117, %v91, 0
  %v341 = vsel %vm117, %v92, 0
  %v344 = vsel %vm117, %v93, 0
  %v347 = vsel %vm117, %v94, 0
  %v350 = vsel %vm117, %v95, 0
  %v353 = vsel %vm117, %v96, 0
  %v356 = vsel %vm117, %v97, 0
  %v359 = vsel %vm117, %v98, 0
  %v362 = vsel %vm117, %v99, 0
  %v365 = vsel %vm117, %v100, 0
  %v368 = vsel %vm117, %v101, 0
  %v371 = vsel %vm117, %v102, 0
  %v374 = vsel %vm117, %v103, 0
  %v377 = vsel %vm117, %v104, 0
  %v380 = vsel %vm117, %v105, 0
  %v383 = vsel %vm117, %v106, 0
  %v386 = vsel %vm117, %v107, 0
  %v389 = vsel %vm117, %v108, 0
  %v392 = vsel %vm117, %v109, 0
  %v395 = vsel %vm117, %v110, 0
  %v398 = vsel %vm117, %v111, 0
  %v401 = vsel %vm117, %v112, 0
  %v404 = vsel %vm117, %v113, 0
  %v407 = vsel %vm117, %v114, 0
  %v410 = vsel %vm117, %v115, 0
  %v413 = vsel %vm117, %v116, 0
  %415 = vmatprep.subr.mxu0 0.0
  %416 = vmatpush1.msra.mxu0 %v14
  %417 = vmatprep.subr.mxu0 0.0
  %418 = vmatpush1.msra.mxu0 %v15
  %419 = vmatprep.subr.mxu0 0.0
  %420 = vmatpush1.msra.mxu0 %v16
  %421 = vmatprep.subr.mxu0 0.0
  %422 = vmatpush1.msra.mxu0 %v17
  %423 = vmatprep.subr.mxu0 0.0
  %424 = vmatpush1.msra.mxu0 0.0
  %425 = vmatprep.subr.mxu0 0.0
  %426 = vmatpush1.msra.mxu0 0.0
  %427 = vmatprep.subr.mxu0 0.0
  %428 = vmatpush1.msra.mxu0 0.0
  %429 = vmatprep.subr.mxu0 0.0
  %430 = vmatpush1.msra.mxu0 0.0
  %431 = vmatprep.subr.mxu0 0.0
  %432 = vmatpush1.msra.mxu0 0.0
  %433 = vmatprep.subr.mxu0 0.0
  %434 = vmatpush1.msra.mxu0 0.0
  %435 = vmatprep.subr.mxu0 0.0
  %436 = vmatpush1.msra.mxu0 0.0
  %437 = vmatprep.subr.mxu0 0.0
  %438 = vmatpush1.msra.mxu0 0.0
  %439 = vmatprep.subr.mxu0 0.0
  %440 = vmatpush1.msra.mxu0 0.0
  %441 = vmatprep.subr.mxu0 0.0
  %442 = vmatpush1.msra.mxu0 0.0
  %443 = vmatprep.subr.mxu0 0.0
  %444 = vmatpush1.msra.mxu0 0.0
  %445 = vmatprep.subr.mxu0 0.0
  %446 = vmatpush1.msra.mxu0 0.0
  %447 = vmatprep.subr.mxu0 0.0
  %448 = vmatpush1.msra.mxu0 0.0
  %449 = vmatprep.subr.mxu0 0.0
  %450 = vmatpush1.msra.mxu0 0.0
  %451 = vmatprep.subr.mxu0 0.0
  %452 = vmatpush1.msra.mxu0 0.0
  %453 = vmatprep.subr.mxu0 0.0
  %454 = vmatpush1.msra.mxu0 0.0
  %455 = vmatprep.subr.mxu0 0.0
  %456 = vmatpush1.msra.mxu0 0.0
  %457 = vmatprep.subr.mxu0 0.0
  %458 = vmatpush1.msra.mxu0 0.0
  %459 = vmatprep.subr.mxu0 0.0
  %460 = vmatpush1.msra.mxu0 0.0
  %461 = vmatprep.subr.mxu0 0.0
  %462 = vmatpush1.msra.mxu0 0.0
  %463 = vmatprep.subr.mxu0 0.0
  %464 = vmatpush1.msra.mxu0 0.0
  %465 = vmatprep.subr.mxu0 0.0
  %466 = vmatpush1.msra.mxu0 0.0
  %467 = vmatprep.subr.mxu0 0.0
  %468 = vmatpush1.msra.mxu0 0.0
  %469 = vmatprep.subr.mxu0 0.0
  %470 = vmatpush1.msra.mxu0 0.0
  %471 = vmatprep.subr.mxu0 0.0
  %472 = vmatpush1.msra.mxu0 0.0
  %473 = vmatprep.subr.mxu0 0.0
  %474 = vmatpush1.msra.mxu0 0.0
  %475 = vmatprep.subr.mxu0 0.0
  %476 = vmatpush1.msra.mxu0 0.0
  %477 = vmatprep.subr.mxu0 0.0
  %478 = vmatpush1.msra.mxu0 0.0
  %479 = vmatprep.mubr.f32.mxu0 0.0
  %480 = vmatmul.mubr.f32.gmra.mrb[0].mxu0 %v119
  %v481 = vpop.f32.mrb[0].mxu0
  %v482 = vadd.f32 0.0, %v481
  %v483 = vpop.f32.mrb[0].mxu0
  %484 = vmatprep.mubr.f32.mxu0 0.0
  %485 = vmatmul.mubr.f32.gmra.mrb[0].mxu0 %v122
  %v486 = vpop.f32.mrb[0].mxu0
  %v487 = vadd.f32 0.0, %v486
  %v488 = vpop.f32.mrb[0].mxu0
  %489 = vmatprep.mubr.f32.mxu0 0.0
  %490 = vmatmul.mubr.f32.gmra.mrb[0].mxu0 %v125
  %v491 = vpop.f32.mrb[0].mxu0
  %v492 = vadd.f32 0.0, %v491
  %v493 = vpop.f32.mrb[0].mxu0
  %494 = vmatprep.mubr.f32.mxu0 0.0
  %495 = vmatmul.mubr.f32.gmra.mrb[0].mxu0 %v128
  %v496 = vpop.f32.mrb[0].mxu0
  %v497 = vadd.f32 0.0, %v496
  %v498 = vpop.f32.mrb[0].mxu0
  %499 = vmatprep.mubr.f32.mxu0 0.0
  %500 = vmatmul.mubr.f32.gmra.mrb[0].mxu0 %v131
  %v501 = vpop.f32.mrb[0].mxu0
  %v502 = vadd.f32 0.0, %v501
  %v503 = vpop.f32.mrb[0].mxu0
  %504 = vmatprep.mubr.f32.mxu0 0.0
  %505 = vmatmul.mubr.f32.gmra.mrb[0].mxu0 %v134
  %v506 = vpop.f32.mrb[0].mxu0
  %v507 = vadd.f32 0.0, %v506
  %v508 = vpop.f32.mrb[0].mxu0
  %509 = vmatprep.mubr.f32.mxu0 0.0
  %510 = vmatmul.mubr.f32.gmra.mrb[0].mxu0 %v137
  %v511 = vpop.f32.mrb[0].mxu0
  %v512 = vadd.f32 0.0, %v511
  %v513 = vpop.f32.mrb[0].mxu0
  %514 = vmatprep.mubr.f32.mxu0 0.0
  %515 = vmatmul.mubr.f32.gmra.mrb[0].mxu0 %v140
  %v516 = vpop.f32.mrb[0].mxu0
  %v517 = vadd.f32 0.0, %v516
  %v518 = vpop.f32.mrb[0].mxu0
  %519 = vmatprep.mubr.f32.mxu0 0.0
  %520 = vmatmul.mubr.f32.gmra.mrb[0].mxu0 %v143
  %v521 = vpop.f32.mrb[0].mxu0
  %v522 = vadd.f32 0.0, %v521
  %v523 = vpop.f32.mrb[0].mxu0
  %524 = vmatprep.mubr.f32.mxu0 0.0
  %525 = vmatmul.mubr.f32.gmra.mrb[0].mxu0 %v146
  %v526 = vpop.f32.mrb[0].mxu0
  %v527 = vadd.f32 0.0, %v526
  %v528 = vpop.f32.mrb[0].mxu0
  %529 = vmatprep.mubr.f32.mxu0 0.0
  %530 = vmatmul.mubr.f32.gmra.mrb[0].mxu0 %v149
  %v531 = vpop.f32.mrb[0].mxu0
  %v532 = vadd.f32 0.0, %v531
  %v533 = vpop.f32.mrb[0].mxu0
  %534 = vmatprep.mubr.f32.mxu0 0.0
  %535 = vmatmul.mubr.f32.gmra.mrb[0].mxu0 %v152
  %v536 = vpop.f32.mrb[0].mxu0
  %v537 = vadd.f32 0.0, %v536
  %v538 = vpop.f32.mrb[0].mxu0
  %539 = vmatprep.mubr.f32.mxu0 0.0
  %540 = vmatmul.mubr.f32.gmra.mrb[0].mxu0 %v155
  %v541 = vpop.f32.mrb[0].mxu0
  %v542 = vadd.f32 0.0, %v541
  %v543 = vpop.f32.mrb[0].mxu0
  %544 = vmatprep.mubr.f32.mxu0 0.0
  %545 = vmatmul.mubr.f32.gmra.mrb[0].mxu0 %v158
  %v546 = vpop.f32.mrb[0].mxu0
  %v547 = vadd.f32 0.0, %v546
  %v548 = vpop.f32.mrb[0].mxu0
  %549 = vmatprep.mubr.f32.mxu0 0.0
  %550 = vmatmul.mubr.f32.gmra.mrb[0].mxu0 %v161
  %v551 = vpop.f32.mrb[0].mxu0
  %v552 = vadd.f32 0.0, %v551
  %v553 = vpop.f32.mrb[0].mxu0
  %554 = vmatprep.mubr.f32.mxu0 0.0
  %555 = vmatmul.mubr.f32.gmra.mrb[0].mxu0 %v164
  %v556 = vpop.f32.mrb[0].mxu0
  %v557 = vadd.f32 0.0, %v556
  %v558 = vpop.f32.mrb[0].mxu0
  %559 = vmatprep.mubr.f32.mxu0 0.0
  %560 = vmatmul.mubr.f32.gmra.mrb[0].mxu0 %v167
  %v561 = vpop.f32.mrb[0].mxu0
  %v562 = vadd.f32 0.0, %v561
  %v563 = vpop.f32.mrb[0].mxu0
  %564 = vmatprep.mubr.f32.mxu0 0.0
  %565 = vmatmul.mubr.f32.gmra.mrb[0].mxu0 %v170
  %v566 = vpop.f32.mrb[0].mxu0
  %v567 = vadd.f32 0.0, %v566
  %v568 = vpop.f32.mrb[0].mxu0
  %569 = vmatprep.mubr.f32.mxu0 0.0
  %570 = vmatmul.mubr.f32.gmra.mrb[0].mxu0 %v173
  %v571 = vpop.f32.mrb[0].mxu0
  %v572 = vadd.f32 0.0, %v571
  %v573 = vpop.f32.mrb[0].mxu0
  %574 = vmatprep.mubr.f32.mxu0 0.0
  %575 = vmatmul.mubr.f32.gmra.mrb[0].mxu0 %v176
  %v576 = vpop.f32.mrb[0].mxu0
  %v577 = vadd.f32 0.0, %v576
  %v578 = vpop.f32.mrb[0].mxu0
  %579 = vmatprep.mubr.f32.mxu0 0.0
  %580 = vmatmul.mubr.f32.gmra.mrb[0].mxu0 %v179
  %v581 = vpop.f32.mrb[0].mxu0
  %v582 = vadd.f32 0.0, %v581
  %v583 = vpop.f32.mrb[0].mxu0
  %584 = vmatprep.mubr.f32.mxu0 0.0
  %585 = vmatmul.mubr.f32.gmra.mrb[0].mxu0 %v182
  %v586 = vpop.f32.mrb[0].mxu0
  %v587 = vadd.f32 0.0, %v586
  %v588 = vpop.f32.mrb[0].mxu0
  %589 = vmatprep.mubr.f32.mxu0 0.0
  %590 = vmatmul.mubr.f32.gmra.mrb[0].mxu0 %v185
  %v591 = vpop.f32.mrb[0].mxu0
  %v592 = vadd.f32 0.0, %v591
  %v593 = vpop.f32.mrb[0].mxu0
  %594 = vmatprep.mubr.f32.mxu0 0.0
  %595 = vmatmul.mubr.f32.gmra.mrb[0].mxu0 %v188
  %v596 = vpop.f32.mrb[0].mxu0
  %v597 = vadd.f32 0.0, %v596
  %v598 = vpop.f32.mrb[0].mxu0
  %599 = vmatprep.mubr.f32.mxu0 0.0
  %600 = vmatmul.mubr.f32.gmra.mrb[0].mxu0 %v191
  %v601 = vpop.f32.mrb[0].mxu0
  %v602 = vadd.f32 0.0, %v601
  %v603 = vpop.f32.mrb[0].mxu0
  %604 = vmatprep.mubr.f32.mxu0 0.0
  %605 = vmatmul.mubr.f32.gmra.mrb[0].mxu0 %v194
  %v606 = vpop.f32.mrb[0].mxu0
  %v607 = vadd.f32 0.0, %v606
  %v608 = vpop.f32.mrb[0].mxu0
  %609 = vmatprep.mubr.f32.mxu0 0.0
  %610 = vmatmul.mubr.f32.gmra.mrb[0].mxu0 %v197
  %v611 = vpop.f32.mrb[0].mxu0
  %v612 = vadd.f32 0.0, %v611
  %v613 = vpop.f32.mrb[0].mxu0
  %614 = vmatprep.mubr.f32.mxu0 0.0
  %615 = vmatmul.mubr.f32.gmra.mrb[0].mxu0 %v200
  %v616 = vpop.f32.mrb[0].mxu0
  %v617 = vadd.f32 0.0, %v616
  %v618 = vpop.f32.mrb[0].mxu0
  %619 = vmatprep.mubr.f32.mxu0 0.0
  %620 = vmatmul.mubr.f32.gmra.mrb[0].mxu0 %v203
  %v621 = vpop.f32.mrb[0].mxu0
  %v622 = vadd.f32 0.0, %v621
  %v623 = vpop.f32.mrb[0].mxu0
  %624 = vmatprep.mubr.f32.mxu0 0.0
  %625 = vmatmul.mubr.f32.gmra.mrb[0].mxu0 %v206
  %v626 = vpop.f32.mrb[0].mxu0
  %v627 = vadd.f32 0.0, %v626
  %v628 = vpop.f32.mrb[0].mxu0
  %629 = vmatprep.mubr.f32.mxu0 0.0
  %630 = vmatmul.mubr.f32.gmra.mrb[0].mxu0 %v209
  %v631 = vpop.f32.mrb[0].mxu0
  %v632 = vadd.f32 0.0, %v631
  %v633 = vpop.f32.mrb[0].mxu0
  %634 = vmatprep.mubr.f32.mxu0 0.0
  %635 = vmatmul.mubr.f32.gmra.mrb[0].mxu0 %v212
  %v636 = vpop.f32.mrb[0].mxu0
  %v637 = vadd.f32 0.0, %v636
  %v638 = vpop.f32.mrb[0].mxu0
  %639 = vmatprep.mubr.f32.mxu0 0.0
  %640 = vmatmul.mubr.f32.gmra.mrb[0].mxu0 %v215
  %v641 = vpop.f32.mrb[0].mxu0
  %v642 = vadd.f32 0.0, %v641
  %v643 = vpop.f32.mrb[0].mxu0
  %644 = vmatprep.mubr.f32.mxu0 0.0
  %645 = vmatmul.mubr.f32.gmra.mrb[0].mxu0 %v218
  %v646 = vpop.f32.mrb[0].mxu0
  %v647 = vadd.f32 0.0, %v646
  %v648 = vpop.f32.mrb[0].mxu0
  %649 = vmatprep.mubr.f32.mxu0 0.0
  %650 = vmatmul.mubr.f32.gmra.mrb[0].mxu0 %v221
  %v651 = vpop.f32.mrb[0].mxu0
  %v652 = vadd.f32 0.0, %v651
  %v653 = vpop.f32.mrb[0].mxu0
  %654 = vmatprep.mubr.f32.mxu0 0.0
  %655 = vmatmul.mubr.f32.gmra.mrb[0].mxu0 %v224
  %v656 = vpop.f32.mrb[0].mxu0
  %v657 = vadd.f32 0.0, %v656
  %v658 = vpop.f32.mrb[0].mxu0
  %659 = vmatprep.mubr.f32.mxu0 0.0
  %660 = vmatmul.mubr.f32.gmra.mrb[0].mxu0 %v227
  %v661 = vpop.f32.mrb[0].mxu0
  %v662 = vadd.f32 0.0, %v661
  %v663 = vpop.f32.mrb[0].mxu0
  %664 = vmatprep.mubr.f32.mxu0 0.0
  %665 = vmatmul.mubr.f32.gmra.mrb[0].mxu0 %v230
  %v666 = vpop.f32.mrb[0].mxu0
  %v667 = vadd.f32 0.0, %v666
  %v668 = vpop.f32.mrb[0].mxu0
  %669 = vmatprep.mubr.f32.mxu0 0.0
  %670 = vmatmul.mubr.f32.gmra.mrb[0].mxu0 %v233
  %v671 = vpop.f32.mrb[0].mxu0
  %v672 = vadd.f32 0.0, %v671
  %v673 = vpop.f32.mrb[0].mxu0
  %674 = vmatprep.mubr.f32.mxu0 0.0
  %675 = vmatmul.mubr.f32.gmra.mrb[0].mxu0 %v236
  %v676 = vpop.f32.mrb[0].mxu0
  %v677 = vadd.f32 0.0, %v676
  %v678 = vpop.f32.mrb[0].mxu0
  %679 = vmatprep.mubr.f32.mxu0 0.0
  %680 = vmatmul.mubr.f32.gmra.mrb[0].mxu0 %v239
  %v681 = vpop.f32.mrb[0].mxu0
  %v682 = vadd.f32 0.0, %v681
  %v683 = vpop.f32.mrb[0].mxu0
  %684 = vmatprep.mubr.f32.mxu0 0.0
  %685 = vmatmul.mubr.f32.gmra.mrb[0].mxu0 %v242
  %v686 = vpop.f32.mrb[0].mxu0
  %v687 = vadd.f32 0.0, %v686
  %v688 = vpop.f32.mrb[0].mxu0
  %689 = vmatprep.mubr.f32.mxu0 0.0
  %690 = vmatmul.mubr.f32.gmra.mrb[0].mxu0 %v245
  %v691 = vpop.f32.mrb[0].mxu0
  %v692 = vadd.f32 0.0, %v691
  %v693 = vpop.f32.mrb[0].mxu0
  %694 = vmatprep.mubr.f32.mxu0 0.0
  %695 = vmatmul.mubr.f32.gmra.mrb[0].mxu0 %v248
  %v696 = vpop.f32.mrb[0].mxu0
  %v697 = vadd.f32 0.0, %v696
  %v698 = vpop.f32.mrb[0].mxu0
  %699 = vmatprep.mubr.f32.mxu0 0.0
  %700 = vmatmul.mubr.f32.gmra.mrb[0].mxu0 %v251
  %v701 = vpop.f32.mrb[0].mxu0
  %v702 = vadd.f32 0.0, %v701
  %v703 = vpop.f32.mrb[0].mxu0
  %704 = vmatprep.mubr.f32.mxu0 0.0
  %705 = vmatmul.mubr.f32.gmra.mrb[0].mxu0 %v254
  %v706 = vpop.f32.mrb[0].mxu0
  %v707 = vadd.f32 0.0, %v706
  %v708 = vpop.f32.mrb[0].mxu0
  %709 = vmatprep.mubr.f32.mxu0 0.0
  %710 = vmatmul.mubr.f32.gmra.mrb[0].mxu0 %v257
  %v711 = vpop.f32.mrb[0].mxu0
  %v712 = vadd.f32 0.0, %v711
  %v713 = vpop.f32.mrb[0].mxu0
  %714 = vmatprep.mubr.f32.mxu0 0.0
  %715 = vmatmul.mubr.f32.gmra.mrb[0].mxu0 %v260
  %v716 = vpop.f32.mrb[0].mxu0
  %v717 = vadd.f32 0.0, %v716
  %v718 = vpop.f32.mrb[0].mxu0
  %719 = vmatprep.mubr.f32.mxu0 0.0
  %720 = vmatmul.mubr.f32.gmra.mrb[0].mxu0 %v263
  %v721 = vpop.f32.mrb[0].mxu0
  %v722 = vadd.f32 0.0, %v721
  %v723 = vpop.f32.mrb[0].mxu0
  %724 = vmatprep.mubr.f32.mxu0 0.0
  %725 = vmatmul.mubr.f32.gmra.mrb[0].mxu0 %v266
  %v726 = vpop.f32.mrb[0].mxu0
  %v727 = vadd.f32 0.0, %v726
  %v728 = vpop.f32.mrb[0].mxu0
  %729 = vmatprep.mubr.f32.mxu0 0.0
  %730 = vmatmul.mubr.f32.gmra.mrb[0].mxu0 %v269
  %v731 = vpop.f32.mrb[0].mxu0
  %v732 = vadd.f32 0.0, %v731
  %v733 = vpop.f32.mrb[0].mxu0
  %734 = vmatprep.mubr.f32.mxu0 0.0
  %735 = vmatmul.mubr.f32.gmra.mrb[0].mxu0 %v272
  %v736 = vpop.f32.mrb[0].mxu0
  %v737 = vadd.f32 0.0, %v736
  %v738 = vpop.f32.mrb[0].mxu0
  %739 = vmatprep.mubr.f32.mxu0 0.0
  %740 = vmatmul.mubr.f32.gmra.mrb[0].mxu0 %v275
  %v741 = vpop.f32.mrb[0].mxu0
  %v742 = vadd.f32 0.0, %v741
  %v743 = vpop.f32.mrb[0].mxu0
  %744 = vmatprep.mubr.f32.mxu0 0.0
  %745 = vmatmul.mubr.f32.gmra.mrb[0].mxu0 %v278
  %v746 = vpop.f32.mrb[0].mxu0
  %v747 = vadd.f32 0.0, %v746
  %v748 = vpop.f32.mrb[0].mxu0
  %749 = vmatprep.mubr.f32.mxu0 0.0
  %750 = vmatmul.mubr.f32.gmra.mrb[0].mxu0 %v281
  %v751 = vpop.f32.mrb[0].mxu0
  %v752 = vadd.f32 0.0, %v751
  %v753 = vpop.f32.mrb[0].mxu0
  %754 = vmatprep.mubr.f32.mxu0 0.0
  %755 = vmatmul.mubr.f32.gmra.mrb[0].mxu0 %v284
  %v756 = vpop.f32.mrb[0].mxu0
  %v757 = vadd.f32 0.0, %v756
  %v758 = vpop.f32.mrb[0].mxu0
  %759 = vmatprep.mubr.f32.mxu0 0.0
  %760 = vmatmul.mubr.f32.gmra.mrb[0].mxu0 %v287
  %v761 = vpop.f32.mrb[0].mxu0
  %v762 = vadd.f32 0.0, %v761
  %v763 = vpop.f32.mrb[0].mxu0
  %764 = vmatprep.mubr.f32.mxu0 0.0
  %765 = vmatmul.mubr.f32.gmra.mrb[0].mxu0 %v290
  %v766 = vpop.f32.mrb[0].mxu0
  %v767 = vadd.f32 0.0, %v766
  %v768 = vpop.f32.mrb[0].mxu0
  %769 = vmatprep.mubr.f32.mxu0 0.0
  %770 = vmatmul.mubr.f32.gmra.mrb[0].mxu0 %v293
  %v771 = vpop.f32.mrb[0].mxu0
  %v772 = vadd.f32 0.0, %v771
  %v773 = vpop.f32.mrb[0].mxu0
  %774 = vmatprep.mubr.f32.mxu0 0.0
  %775 = vmatmul.mubr.f32.gmra.mrb[0].mxu0 %v296
  %v776 = vpop.f32.mrb[0].mxu0
  %v777 = vadd.f32 0.0, %v776
  %v778 = vpop.f32.mrb[0].mxu0
  %779 = vmatprep.mubr.f32.mxu0 0.0
  %780 = vmatmul.mubr.f32.gmra.mrb[0].mxu0 %v299
  %v781 = vpop.f32.mrb[0].mxu0
  %v782 = vadd.f32 0.0, %v781
  %v783 = vpop.f32.mrb[0].mxu0
  %784 = vmatprep.mubr.f32.mxu0 0.0
  %785 = vmatmul.mubr.f32.gmra.mrb[0].mxu0 %v302
  %v786 = vpop.f32.mrb[0].mxu0
  %v787 = vadd.f32 0.0, %v786
  %v788 = vpop.f32.mrb[0].mxu0
  %789 = vmatprep.mubr.f32.mxu0 0.0
  %790 = vmatmul.mubr.f32.gmra.mrb[0].mxu0 %v305
  %v791 = vpop.f32.mrb[0].mxu0
  %v792 = vadd.f32 0.0, %v791
  %v793 = vpop.f32.mrb[0].mxu0
  %794 = vmatprep.mubr.f32.mxu0 0.0
  %795 = vmatmul.mubr.f32.gmra.mrb[0].mxu0 %v308
  %v796 = vpop.f32.mrb[0].mxu0
  %v797 = vadd.f32 0.0, %v796
  %v798 = vpop.f32.mrb[0].mxu0
  %799 = vmatprep.mubr.f32.mxu0 0.0
  %800 = vmatmul.mubr.f32.gmra.mrb[0].mxu0 %v311
  %v801 = vpop.f32.mrb[0].mxu0
  %v802 = vadd.f32 0.0, %v801
  %v803 = vpop.f32.mrb[0].mxu0
  %804 = vmatprep.mubr.f32.mxu0 0.0
  %805 = vmatmul.mubr.f32.gmra.mrb[0].mxu0 %v314
  %v806 = vpop.f32.mrb[0].mxu0
  %v807 = vadd.f32 0.0, %v806
  %v808 = vpop.f32.mrb[0].mxu0
  %809 = vmatprep.mubr.f32.mxu0 0.0
  %810 = vmatmul.mubr.f32.gmra.mrb[0].mxu0 %v317
  %v811 = vpop.f32.mrb[0].mxu0
  %v812 = vadd.f32 0.0, %v811
  %v813 = vpop.f32.mrb[0].mxu0
  %814 = vmatprep.mubr.f32.mxu0 0.0
  %815 = vmatmul.mubr.f32.gmra.mrb[0].mxu0 %v320
  %v816 = vpop.f32.mrb[0].mxu0
  %v817 = vadd.f32 0.0, %v816
  %v818 = vpop.f32.mrb[0].mxu0
  %819 = vmatprep.mubr.f32.mxu0 0.0
  %820 = vmatmul.mubr.f32.gmra.mrb[0].mxu0 %v323
  %v821 = vpop.f32.mrb[0].mxu0
  %v822 = vadd.f32 0.0, %v821
  %v823 = vpop.f32.mrb[0].mxu0
  %824 = vmatprep.mubr.f32.mxu0 0.0
  %825 = vmatmul.mubr.f32.gmra.mrb[0].mxu0 %v326
  %v826 = vpop.f32.mrb[0].mxu0
  %v827 = vadd.f32 0.0, %v826
  %v828 = vpop.f32.mrb[0].mxu0
  %829 = vmatprep.mubr.f32.mxu0 0.0
  %830 = vmatmul.mubr.f32.gmra.mrb[0].mxu0 %v329
  %v831 = vpop.f32.mrb[0].mxu0
  %v832 = vadd.f32 0.0, %v831
  %v833 = vpop.f32.mrb[0].mxu0
  %834 = vmatprep.mubr.f32.mxu0 0.0
  %835 = vmatmul.mubr.f32.gmra.mrb[0].mxu0 %v332
  %v836 = vpop.f32.mrb[0].mxu0
  %v837 = vadd.f32 0.0, %v836
  %v838 = vpop.f32.mrb[0].mxu0
  %839 = vmatprep.mubr.f32.mxu0 0.0
  %840 = vmatmul.mubr.f32.gmra.mrb[0].mxu0 %v335
  %v841 = vpop.f32.mrb[0].mxu0
  %v842 = vadd.f32 0.0, %v841
  %v843 = vpop.f32.mrb[0].mxu0
  %844 = vmatprep.mubr.f32.mxu0 0.0
  %845 = vmatmul.mubr.f32.gmra.mrb[0].mxu0 %v338
  %v846 = vpop.f32.mrb[0].mxu0
  %v847 = vadd.f32 0.0, %v846
  %v848 = vpop.f32.mrb[0].mxu0
  %849 = vmatprep.mubr.f32.mxu0 0.0
  %850 = vmatmul.mubr.f32.gmra.mrb[0].mxu0 %v341
  %v851 = vpop.f32.mrb[0].mxu0
  %v852 = vadd.f32 0.0, %v851
  %v853 = vpop.f32.mrb[0].mxu0
  %854 = vmatprep.mubr.f32.mxu0 0.0
  %855 = vmatmul.mubr.f32.gmra.mrb[0].mxu0 %v344
  %v856 = vpop.f32.mrb[0].mxu0
  %v857 = vadd.f32 0.0, %v856
  %v858 = vpop.f32.mrb[0].mxu0
  %859 = vmatprep.mubr.f32.mxu0 0.0
  %860 = vmatmul.mubr.f32.gmra.mrb[0].mxu0 %v347
  %v861 = vpop.f32.mrb[0].mxu0
  %v862 = vadd.f32 0.0, %v861
  %v863 = vpop.f32.mrb[0].mxu0
  %864 = vmatprep.mubr.f32.mxu0 0.0
  %865 = vmatmul.mubr.f32.gmra.mrb[0].mxu0 %v350
  %v866 = vpop.f32.mrb[0].mxu0
  %v867 = vadd.f32 0.0, %v866
  %v868 = vpop.f32.mrb[0].mxu0
  %869 = vmatprep.mubr.f32.mxu0 0.0
  %870 = vmatmul.mubr.f32.gmra.mrb[0].mxu0 %v353
  %v871 = vpop.f32.mrb[0].mxu0
  %v872 = vadd.f32 0.0, %v871
  %v873 = vpop.f32.mrb[0].mxu0
  %874 = vmatprep.mubr.f32.mxu0 0.0
  %875 = vmatmul.mubr.f32.gmra.mrb[0].mxu0 %v356
  %v876 = vpop.f32.mrb[0].mxu0
  %v877 = vadd.f32 0.0, %v876
  %v878 = vpop.f32.mrb[0].mxu0
  %879 = vmatprep.mubr.f32.mxu0 0.0
  %880 = vmatmul.mubr.f32.gmra.mrb[0].mxu0 %v359
  %v881 = vpop.f32.mrb[0].mxu0
  %v882 = vadd.f32 0.0, %v881
  %v883 = vpop.f32.mrb[0].mxu0
  %884 = vmatprep.mubr.f32.mxu0 0.0
  %885 = vmatmul.mubr.f32.gmra.mrb[0].mxu0 %v362
  %v886 = vpop.f32.mrb[0].mxu0
  %v887 = vadd.f32 0.0, %v886
  %v888 = vpop.f32.mrb[0].mxu0
  %889 = vmatprep.mubr.f32.mxu0 0.0
  %890 = vmatmul.mubr.f32.gmra.mrb[0].mxu0 %v365
  %v891 = vpop.f32.mrb[0].mxu0
  %v892 = vadd.f32 0.0, %v891
  %v893 = vpop.f32.mrb[0].mxu0
  %894 = vmatprep.mubr.f32.mxu0 0.0
  %895 = vmatmul.mubr.f32.gmra.mrb[0].mxu0 %v368
  %v896 = vpop.f32.mrb[0].mxu0
  %v897 = vadd.f32 0.0, %v896
  %v898 = vpop.f32.mrb[0].mxu0
  %899 = vmatprep.mubr.f32.mxu0 0.0
  %900 = vmatmul.mubr.f32.gmra.mrb[0].mxu0 %v371
  %v901 = vpop.f32.mrb[0].mxu0
  %v902 = vadd.f32 0.0, %v901
  %v903 = vpop.f32.mrb[0].mxu0
  %904 = vmatprep.mubr.f32.mxu0 0.0
  %905 = vmatmul.mubr.f32.gmra.mrb[0].mxu0 %v374
  %v906 = vpop.f32.mrb[0].mxu0
  %v907 = vadd.f32 0.0, %v906
  %v908 = vpop.f32.mrb[0].mxu0
  %909 = vmatprep.mubr.f32.mxu0 0.0
  %910 = vmatmul.mubr.f32.gmra.mrb[0].mxu0 %v377
  %v911 = vpop.f32.mrb[0].mxu0
  %v912 = vadd.f32 0.0, %v911
  %v913 = vpop.f32.mrb[0].mxu0
  %914 = vmatprep.mubr.f32.mxu0 0.0
  %915 = vmatmul.mubr.f32.gmra.mrb[0].mxu0 %v380
  %v916 = vpop.f32.mrb[0].mxu0
  %v917 = vadd.f32 0.0, %v916
  %v918 = vpop.f32.mrb[0].mxu0
  %919 = vmatprep.mubr.f32.mxu0 0.0
  %920 = vmatmul.mubr.f32.gmra.mrb[0].mxu0 %v383
  %v921 = vpop.f32.mrb[0].mxu0
  %v922 = vadd.f32 0.0, %v921
  %v923 = vpop.f32.mrb[0].mxu0
  %924 = vmatprep.mubr.f32.mxu0 0.0
  %925 = vmatmul.mubr.f32.gmra.mrb[0].mxu0 %v386
  %v926 = vpop.f32.mrb[0].mxu0
  %v927 = vadd.f32 0.0, %v926
  %v928 = vpop.f32.mrb[0].mxu0
  %929 = vmatprep.mubr.f32.mxu0 0.0
  %930 = vmatmul.mubr.f32.gmra.mrb[0].mxu0 %v389
  %v931 = vpop.f32.mrb[0].mxu0
  %v932 = vadd.f32 0.0, %v931
  %v933 = vpop.f32.mrb[0].mxu0
  %934 = vmatprep.mubr.f32.mxu0 0.0
  %935 = vmatmul.mubr.f32.gmra.mrb[0].mxu0 %v392
  %v936 = vpop.f32.mrb[0].mxu0
  %v937 = vadd.f32 0.0, %v936
  %v938 = vpop.f32.mrb[0].mxu0
  %939 = vmatprep.mubr.f32.mxu0 0.0
  %940 = vmatmul.mubr.f32.gmra.mrb[0].mxu0 %v395
  %v941 = vpop.f32.mrb[0].mxu0
  %v942 = vadd.f32 0.0, %v941
  %v943 = vpop.f32.mrb[0].mxu0
  %944 = vmatprep.mubr.f32.mxu0 0.0
  %945 = vmatmul.mubr.f32.gmra.mrb[0].mxu0 %v398
  %v946 = vpop.f32.mrb[0].mxu0
  %v947 = vadd.f32 0.0, %v946
  %v948 = vpop.f32.mrb[0].mxu0
  %949 = vmatprep.mubr.f32.mxu0 0.0
  %950 = vmatmul.mubr.f32.gmra.mrb[0].mxu0 %v401
  %v951 = vpop.f32.mrb[0].mxu0
  %v952 = vadd.f32 0.0, %v951
  %v953 = vpop.f32.mrb[0].mxu0
  %954 = vmatprep.mubr.f32.mxu0 0.0
  %955 = vmatmul.mubr.f32.gmra.mrb[0].mxu0 %v404
  %v956 = vpop.f32.mrb[0].mxu0
  %v957 = vadd.f32 0.0, %v956
  %v958 = vpop.f32.mrb[0].mxu0
  %959 = vmatprep.mubr.f32.mxu0 0.0
  %960 = vmatmul.mubr.f32.gmra.mrb[0].mxu0 %v407
  %v961 = vpop.f32.mrb[0].mxu0
  %v962 = vadd.f32 0.0, %v961
  %v963 = vpop.f32.mrb[0].mxu0
  %964 = vmatprep.mubr.f32.mxu0 0.0
  %965 = vmatmul.mubr.f32.gmra.mrb[0].mxu0 %v410
  %v966 = vpop.f32.mrb[0].mxu0
  %v967 = vadd.f32 0.0, %v966
  %v968 = vpop.f32.mrb[0].mxu0
  %969 = vmatprep.mubr.f32.mxu0 0.0
  %970 = vmatmul.mubr.f32.gmra.mrb[0].mxu0 %v413
  %v971 = vpop.f32.mrb[0].mxu0
  %v972 = vadd.f32 0.0, %v971
  %v973 = vpop.f32.mrb[0].mxu0
  %974 = vdwg.mxu0
  %s975 = scalar_lea.vmem %s0, 792
  %v976 = vld [vmem:[%s975] sm:$0xff]
  %v977 = vld [vmem:[%s975 + $0x8] sm:$0xff]
  %v978 = vld [vmem:[%s975 + $0x10] sm:$0xff]
  %v979 = vld [vmem:[%s975 + $0x18] sm:$0xff]
  %v980 = vld [vmem:[%s975 + $0x20] sm:$0xff]
  %v981 = vld [vmem:[%s975 + $0x28] sm:$0xff]
  %v982 = vld [vmem:[%s975 + $0x30] sm:$0xff]
  %v983 = vld [vmem:[%s975 + $0x38] sm:$0xff]
  %v984 = vld [vmem:[%s975 + $0x40] sm:$0xff]
  %v985 = vld [vmem:[%s975 + $0x48] sm:$0xff]
  %v986 = vld [vmem:[%s975 + $0x50] sm:$0xff]
  %v987 = vld [vmem:[%s975 + $0x58] sm:$0xff]
  %v988 = vld [vmem:[%s975 + $0x60] sm:$0xff]
  %v989 = vld [vmem:[%s975 + $0x68] sm:$0xff]
  %v990 = vld [vmem:[%s975 + $0x70] sm:$0xff]
  %v991 = vld [vmem:[%s975 + $0x78] sm:$0xff]
  %v992 = vld [vmem:[%s975 + $0x80] sm:$0xff]
  %v993 = vld [vmem:[%s975 + $0x88] sm:$0xff]
  %v994 = vld [vmem:[%s975 + $0x90] sm:$0xff]
  %v995 = vld [vmem:[%s975 + $0x98] sm:$0xff]
  %v996 = vld [vmem:[%s975 + $0xa0] sm:$0xff]
  %v997 = vld [vmem:[%s975 + $0xa8] sm:$0xff]
  %v998 = vld [vmem:[%s975 + $0xb0] sm:$0xff]
  %v999 = vld [vmem:[%s975 + $0xb8] sm:$0xff]
  %v1000 = vld [vmem:[%s975 + $0xc0] sm:$0xff]
  %v1001 = vld [vmem:[%s975 + $0xc8] sm:$0xff]
  %v1002 = vld [vmem:[%s975 + $0xd0] sm:$0xff]
  %v1003 = vld [vmem:[%s975 + $0xd8] sm:$0xff]
  %v1004 = vld [vmem:[%s975 + $0xe0] sm:$0xff]
  %v1005 = vld [vmem:[%s975 + $0xe8] sm:$0xff]
  %v1006 = vld [vmem:[%s975 + $0xf0] sm:$0xff]
  %v1007 = vld [vmem:[%s975 + $0xf8] sm:$0xff]
  %v1008 = vld [vmem:[%s975 + $0x100] sm:$0xff]
  %v1009 = vld [vmem:[%s975 + $0x108] sm:$0xff]
  %v1010 = vld [vmem:[%s975 + $0x110] sm:$0xff]
  %v1011 = vld [vmem:[%s975 + $0x118] sm:$0xff]
  %v1012 = vld [vmem:[%s975 + $0x120] sm:$0xff]
  %v1013 = vld [vmem:[%s975 + $0x128] sm:$0xff]
  %v1014 = vld [vmem:[%s975 + $0x130] sm:$0xff]
  %v1015 = vld [vmem:[%s975 + $0x138] sm:$0xff]
  %v1016 = vld [vmem:[%s975 + $0x140] sm:$0xff]
  %v1017 = vld [vmem:[%s975 + $0x148] sm:$0xff]
  %v1018 = vld [vmem:[%s975 + $0x150] sm:$0xff]
  %v1019 = vld [vmem:[%s975 + $0x158] sm:$0xff]
  %v1020 = vld [vmem:[%s975 + $0x160] sm:$0xff]
  %v1021 = vld [vmem:[%s975 + $0x168] sm:$0xff]
  %v1022 = vld [vmem:[%s975 + $0x170] sm:$0xff]
  %v1023 = vld [vmem:[%s975 + $0x178] sm:$0xff]
  %v1024 = vld [vmem:[%s975 + $0x180] sm:$0xff]
  %v1025 = vld [vmem:[%s975 + $0x188] sm:$0xff]
  %v1026 = vld [vmem:[%s975 + $0x190] sm:$0xff]
  %v1027 = vld [vmem:[%s975 + $0x198] sm:$0xff]
  %v1028 = vld [vmem:[%s975 + $0x1a0] sm:$0xff]
  %v1029 = vld [vmem:[%s975 + $0x1a8] sm:$0xff]
  %v1030 = vld [vmem:[%s975 + $0x1b0] sm:$0xff]
  %v1031 = vld [vmem:[%s975 + $0x1b8] sm:$0xff]
  %v1032 = vld [vmem:[%s975 + $0x1c0] sm:$0xff]
  %v1033 = vld [vmem:[%s975 + $0x1c8] sm:$0xff]
  %v1034 = vld [vmem:[%s975 + $0x1d0] sm:$0xff]
  %v1035 = vld [vmem:[%s975 + $0x1d8] sm:$0xff]
  %v1036 = vld [vmem:[%s975 + $0x1e0] sm:$0xff]
  %v1037 = vld [vmem:[%s975 + $0x1e8] sm:$0xff]
  %v1038 = vld [vmem:[%s975 + $0x1f0] sm:$0xff]
  %v1039 = vld [vmem:[%s975 + $0x1f8] sm:$0xff]
  %v1040 = vld [vmem:[%s975 + $0x200] sm:$0xff]
  %v1041 = vld [vmem:[%s975 + $0x208] sm:$0xff]
  %v1042 = vld [vmem:[%s975 + $0x210] sm:$0xff]
  %v1043 = vld [vmem:[%s975 + $0x218] sm:$0xff]
  %v1044 = vld [vmem:[%s975 + $0x220] sm:$0xff]
  %v1045 = vld [vmem:[%s975 + $0x228] sm:$0xff]
  %v1046 = vld [vmem:[%s975 + $0x230] sm:$0xff]
  %v1047 = vld [vmem:[%s975 + $0x238] sm:$0xff]
  %v1048 = vld [vmem:[%s975 + $0x240] sm:$0xff]
  %v1049 = vld [vmem:[%s975 + $0x248] sm:$0xff]
  %v1050 = vld [vmem:[%s975 + $0x250] sm:$0xff]
  %v1051 = vld [vmem:[%s975 + $0x258] sm:$0xff]
  %v1052 = vld [vmem:[%s975 + $0x260] sm:$0xff]
  %v1053 = vld [vmem:[%s975 + $0x268] sm:$0xff]
  %v1054 = vld [vmem:[%s975 + $0x270] sm:$0xff]
  %v1055 = vld [vmem:[%s975 + $0x278] sm:$0xff]
  %v1056 = vld [vmem:[%s975 + $0x280] sm:$0xff]
  %v1057 = vld [vmem:[%s975 + $0x288] sm:$0xff]
  %v1058 = vld [vmem:[%s975 + $0x290] sm:$0xff]
  %v1059 = vld [vmem:[%s975 + $0x298] sm:$0xff]
  %v1060 = vld [vmem:[%s975 + $0x2a0] sm:$0xff]
  %v1061 = vld [vmem:[%s975 + $0x2a8] sm:$0xff]
  %v1062 = vld [vmem:[%s975 + $0x2b0] sm:$0xff]
  %v1063 = vld [vmem:[%s975 + $0x2b8] sm:$0xff]
  %v1064 = vld [vmem:[%s975 + $0x2c0] sm:$0xff]
  %v1065 = vld [vmem:[%s975 + $0x2c8] sm:$0xff]
  %v1066 = vld [vmem:[%s975 + $0x2d0] sm:$0xff]
  %v1067 = vld [vmem:[%s975 + $0x2d8] sm:$0xff]
  %v1068 = vld [vmem:[%s975 + $0x2e0] sm:$0xff]
  %v1069 = vld [vmem:[%s975 + $0x2e8] sm:$0xff]
  %v1070 = vld [vmem:[%s975 + $0x2f0] sm:$0xff]
  %v1071 = vld [vmem:[%s975 + $0x2f8] sm:$0xff]
  %v1072 = vld [vmem:[%s975 + $0x300] sm:$0xff]
  %v1073 = vld [vmem:[%s975 + $0x308] sm:$0xff]
  %v1074 = vld [vmem:[%s975 + $0x310] sm:$0xff]
  %v1076 = vsel %vm117, %v976, 0
  %v1079 = vsel %vm117, %v977, 0
  %v1082 = vsel %vm117, %v978, 0
  %v1085 = vsel %vm117, %v979, 0
  %v1088 = vsel %vm117, %v980, 0
  %v1091 = vsel %vm117, %v981, 0
  %v1094 = vsel %vm117, %v982, 0
  %v1097 = vsel %vm117, %v983, 0
  %v1100 = vsel %vm117, %v984, 0
  %v1103 = vsel %vm117, %v985, 0
  %v1106 = vsel %vm117, %v986, 0
  %v1109 = vsel %vm117, %v987, 0
  %v1112 = vsel %vm117, %v988, 0
  %v1115 = vsel %vm117, %v989, 0
  %v1118 = vsel %vm117, %v990, 0
  %v1121 = vsel %vm117, %v991, 0
  %v1124 = vsel %vm117, %v992, 0
  %v1127 = vsel %vm117, %v993, 0
  %v1130 = vsel %vm117, %v994, 0
  %v1133 = vsel %vm117, %v995, 0
  %v1136 = vsel %vm117, %v996, 0
  %v1139 = vsel %vm117, %v997, 0
  %v1142 = vsel %vm117, %v998, 0
  %v1145 = vsel %vm117, %v999, 0
  %v1148 = vsel %vm117, %v1000, 0
  %v1151 = vsel %vm117, %v1001, 0
  %v1154 = vsel %vm117, %v1002, 0
  %v1157 = vsel %vm117, %v1003, 0
  %v1160 = vsel %vm117, %v1004, 0
  %v1163 = vsel %vm117, %v1005, 0
  %v1166 = vsel %vm117, %v1006, 0
  %v1169 = vsel %vm117, %v1007, 0
  %v1172 = vsel %vm117, %v1008, 0
  %v1175 = vsel %vm117, %v1009, 0
  %v1178 = vsel %vm117, %v1010, 0
  %v1181 = vsel %vm117, %v1011, 0
  %v1184 = vsel %vm117, %v1012, 0
  %v1187 = vsel %vm117, %v1013, 0
  %v1190 = vsel %vm117, %v1014, 0
  %v1193 = vsel %vm117, %v1015, 0
  %v1196 = vsel %vm117, %v1016, 0
  %v1199 = vsel %vm117, %v1017, 0
  %v1202 = vsel %vm117, %v1018, 0
  %v1205 = vsel %vm117, %v1019, 0
  %v1208 = vsel %vm117, %v1020, 0
  %v1211 = vsel %vm117, %v1021, 0
  %v1214 = vsel %vm117, %v1022, 0
  %v1217 = vsel %vm117, %v1023, 0
  %v1220 = vsel %vm117, %v1024, 0
  %v1223 = vsel %vm117, %v1025, 0
  %v1226 = vsel %vm117, %v1026, 0
  %v1229 = vsel %vm117, %v1027, 0
  %v1232 = vsel %vm117, %v1028, 0
  %v1235 = vsel %vm117, %v1029, 0
  %v1238 = vsel %vm117, %v1030, 0
  %v1241 = vsel %vm117, %v1031, 0
  %v1244 = vsel %vm117, %v1032, 0
  %v1247 = vsel %vm117, %v1033, 0
  %v1250 = vsel %vm117, %v1034, 0
  %v1253 = vsel %vm117, %v1035, 0
  %v1256 = vsel %vm117, %v1036, 0
  %v1259 = vsel %vm117, %v1037, 0
  %v1262 = vsel %vm117, %v1038, 0
  %v1265 = vsel %vm117, %v1039, 0
  %v1268 = vsel %vm117, %v1040, 0
  %v1271 = vsel %vm117, %v1041, 0
  %v1274 = vsel %vm117, %v1042, 0
  %v1277 = vsel %vm117, %v1043, 0
  %v1280 = vsel %vm117, %v1044, 0
  %v1283 = vsel %vm117, %v1045, 0
  %v1286 = vsel %vm117, %v1046, 0
  %v1289 = vsel %vm117, %v1047, 0
  %v1292 = vsel %vm117, %v1048, 0
  %v1295 = vsel %vm117, %v1049, 0
  %v1298 = vsel %vm117, %v1050, 0
  %v1301 = vsel %vm117, %v1051, 0
  %v1304 = vsel %vm117, %v1052, 0
  %v1307 = vsel %vm117, %v1053, 0
  %v1310 = vsel %vm117, %v1054, 0
  %v1313 = vsel %vm117, %v1055, 0
  %v1316 = vsel %vm117, %v1056, 0
  %v1319 = vsel %vm117, %v1057, 0
  %v1322 = vsel %vm117, %v1058, 0
  %v1325 = vsel %vm117, %v1059, 0
  %v1328 = vsel %vm117, %v1060, 0
  %v1331 = vsel %vm117, %v1061, 0
  %v1334 = vsel %vm117, %v1062, 0
  %v1337 = vsel %vm117, %v1063, 0
  %v1340 = vsel %vm117, %v1064, 0
  %v1343 = vsel %vm117, %v1065, 0
  %v1346 = vsel %vm117, %v1066, 0
  %v1349 = vsel %vm117, %v1067, 0
  %v1352 = vsel %vm117, %v1068, 0
  %v1355 = vsel %vm117, %v1069, 0
  %v1358 = vsel %vm117, %v1070, 0
  %v1361 = vsel %vm117, %v1071, 0
  %v1364 = vsel %vm117, %v1072, 0
  %v1367 = vsel %vm117, %v1073, 0
  %v1370 = vsel %vm117, %v1074, 0
  %1372 = vmatprep.subr.mxu0 0.0
  %1373 = vmatpush1.msra.mxu0 %v14
  %1374 = vmatprep.subr.mxu0 0.0
  %1375 = vmatpush1.msra.mxu0 %v15
  %1376 = vmatprep.subr.mxu0 0.0
  %1377 = vmatpush1.msra.mxu0 %v16
  %1378 = vmatprep.subr.mxu0 0.0
  %1379 = vmatpush1.msra.mxu0 %v17
  %1380 = vmatprep.subr.mxu0 0.0
  %1381 = vmatpush1.msra.mxu0 0.0
  %1382 = vmatprep.subr.mxu0 0.0
  %1383 = vmatpush1.msra.mxu0 0.0
  %1384 = vmatprep.subr.mxu0 0.0
  %1385 = vmatpush1.msra.mxu0 0.0
  %1386 = vmatprep.subr.mxu0 0.0
  %1387 = vmatpush1.msra.mxu0 0.0
  %1388 = vmatprep.subr.mxu0 0.0
  %1389 = vmatpush1.msra.mxu0 0.0
  %1390 = vmatprep.subr.mxu0 0.0
  %1391 = vmatpush1.msra.mxu0 0.0
  %1392 = vmatprep.subr.mxu0 0.0
  %1393 = vmatpush1.msra.mxu0 0.0
  %1394 = vmatprep.subr.mxu0 0.0
  %1395 = vmatpush1.msra.mxu0 0.0
  %1396 = vmatprep.subr.mxu0 0.0
  %1397 = vmatpush1.msra.mxu0 0.0
  %1398 = vmatprep.subr.mxu0 0.0
  %1399 = vmatpush1.msra.mxu0 0.0
  %1400 = vmatprep.subr.mxu0 0.0
  %1401 = vmatpush1.msra.mxu0 0.0
  %1402 = vmatprep.subr.mxu0 0.0
  %1403 = vmatpush1.msra.mxu0 0.0
  %1404 = vmatprep.subr.mxu0 0.0
  %1405 = vmatpush1.msra.mxu0 0.0
  %1406 = vmatprep.subr.mxu0 0.0
  %1407 = vmatpush1.msra.mxu0 0.0
  %1408 = vmatprep.subr.mxu0 0.0
  %1409 = vmatpush1.msra.mxu0 0.0
  %1410 = vmatprep.subr.mxu0 0.0
  %1411 = vmatpush1.msra.mxu0 0.0
  %1412 = vmatprep.subr.mxu0 0.0
  %1413 = vmatpush1.msra.mxu0 0.0
  %1414 = vmatprep.subr.mxu0 0.0
  %1415 = vmatpush1.msra.mxu0 0.0
  %1416 = vmatprep.subr.mxu0 0.0
  %1417 = vmatpush1.msra.mxu0 0.0
  %1418 = vmatprep.subr.mxu0 0.0
  %1419 = vmatpush1.msra.mxu0 0.0
  %1420 = vmatprep.subr.mxu0 0.0
  %1421 = vmatpush1.msra.mxu0 0.0
  %1422 = vmatprep.subr.mxu0 0.0
  %1423 = vmatpush1.msra.mxu0 0.0
  %1424 = vmatprep.subr.mxu0 0.0
  %1425 = vmatpush1.msra.mxu0 0.0
  %1426 = vmatprep.subr.mxu0 0.0
  %1427 = vmatpush1.msra.mxu0 0.0
  %1428 = vmatprep.subr.mxu0 0.0
  %1429 = vmatpush1.msra.mxu0 0.0
  %1430 = vmatprep.subr.mxu0 0.0
  %1431 = vmatpush1.msra.mxu0 0.0
  %1432 = vmatprep.subr.mxu0 0.0
  %1433 = vmatpush1.msra.mxu0 0.0
  %1434 = vmatprep.subr.mxu0 0.0
  %1435 = vmatpush1.msra.mxu0 0.0
  %1436 = vmatprep.mubr.f32.mxu0 0.0
  %1437 = vmatmul.mubr.f32.gmra.mrb[0].mxu0 %v1076
  %v1438 = vpop.f32.mrb[0].mxu0
  %v1439 = vadd.f32 0.0, %v1438
  %v1440 = vpop.f32.mrb[0].mxu0
  %1441 = vmatprep.mubr.f32.mxu0 0.0
  %1442 = vmatmul.mubr.f32.gmra.mrb[0].mxu0 %v1079
  %v1443 = vpop.f32.mrb[0].mxu0
  %v1444 = vadd.f32 0.0, %v1443
  %v1445 = vpop.f32.mrb[0].mxu0
  %1446 = vmatprep.mubr.f32.mxu0 0.0
  %1447 = vmatmul.mubr.f32.gmra.mrb[0].mxu0 %v1082
  %v1448 = vpop.f32.mrb[0].mxu0
  %v1449 = vadd.f32 0.0, %v1448
  %v1450 = vpop.f32.mrb[0].mxu0
  %1451 = vmatprep.mubr.f32.mxu0 0.0
  %1452 = vmatmul.mubr.f32.gmra.mrb[0].mxu0 %v1085
  %v1453 = vpop.f32.mrb[0].mxu0
  %v1454 = vadd.f32 0.0, %v1453
  %v1455 = vpop.f32.mrb[0].mxu0
  %1456 = vmatprep.mubr.f32.mxu0 0.0
  %1457 = vmatmul.mubr.f32.gmra.mrb[0].mxu0 %v1088
  %v1458 = vpop.f32.mrb[0].mxu0
  %v1459 = vadd.f32 0.0, %v1458
  %v1460 = vpop.f32.mrb[0].mxu0
  %1461 = vmatprep.mubr.f32.mxu0 0.0
  %1462 = vmatmul.mubr.f32.gmra.mrb[0].mxu0 %v1091
  %v1463 = vpop.f32.mrb[0].mxu0
  %v1464 = vadd.f32 0.0, %v1463
  %v1465 = vpop.f32.mrb[0].mxu0
  %1466 = vmatprep.mubr.f32.mxu0 0.0
  %1467 = vmatmul.mubr.f32.gmra.mrb[0].mxu0 %v1094
  %v1468 = vpop.f32.mrb[0].mxu0
  %v1469 = vadd.f32 0.0, %v1468
  %v1470 = vpop.f32.mrb[0].mxu0
  %1471 = vmatprep.mubr.f32.mxu0 0.0
  %1472 = vmatmul.mubr.f32.gmra.mrb[0].mxu0 %v1097
  %v1473 = vpop.f32.mrb[0].mxu0
  %v1474 = vadd.f32 0.0, %v1473
  %v1475 = vpop.f32.mrb[0].mxu0
  %1476 = vmatprep.mubr.f32.mxu0 0.0
  %1477 = vmatmul.mubr.f32.gmra.mrb[0].mxu0 %v1100
  %v1478 = vpop.f32.mrb[0].mxu0
  %v1479 = vadd.f32 0.0, %v1478
  %v1480 = vpop.f32.mrb[0].mxu0
  %1481 = vmatprep.mubr.f32.mxu0 0.0
  %1482 = vmatmul.mubr.f32.gmra.mrb[0].mxu0 %v1103
  %v1483 = vpop.f32.mrb[0].mxu0
  %v1484 = vadd.f32 0.0, %v1483
  %v1485 = vpop.f32.mrb[0].mxu0
  %1486 = vmatprep.mubr.f32.mxu0 0.0
  %1487 = vmatmul.mubr.f32.gmra.mrb[0].mxu0 %v1106
  %v1488 = vpop.f32.mrb[0].mxu0
  %v1489 = vadd.f32 0.0, %v1488
  %v1490 = vpop.f32.mrb[0].mxu0
  %1491 = vmatprep.mubr.f32.mxu0 0.0
  %1492 = vmatmul.mubr.f32.gmra.mrb[0].mxu0 %v1109
  %v1493 = vpop.f32.mrb[0].mxu0
  %v1494 = vadd.f32 0.0, %v1493
  %v1495 = vpop.f32.mrb[0].mxu0
  %1496 = vmatprep.mubr.f32.mxu0 0.0
  %1497 = vmatmul.mubr.f32.gmra.mrb[0].mxu0 %v1112
  %v1498 = vpop.f32.mrb[0].mxu0
  %v1499 = vadd.f32 0.0, %v1498
  %v1500 = vpop.f32.mrb[0].mxu0
  %1501 = vmatprep.mubr.f32.mxu0 0.0
  %1502 = vmatmul.mubr.f32.gmra.mrb[0].mxu0 %v1115
  %v1503 = vpop.f32.mrb[0].mxu0
  %v1504 = vadd.f32 0.0, %v1503
  %v1505 = vpop.f32.mrb[0].mxu0
  %1506 = vmatprep.mubr.f32.mxu0 0.0
  %1507 = vmatmul.mubr.f32.gmra.mrb[0].mxu0 %v1118
  %v1508 = vpop.f32.mrb[0].mxu0
  %v1509 = vadd.f32 0.0, %v1508
  %v1510 = vpop.f32.mrb[0].mxu0
  %1511 = vmatprep.mubr.f32.mxu0 0.0
  %1512 = vmatmul.mubr.f32.gmra.mrb[0].mxu0 %v1121
  %v1513 = vpop.f32.mrb[0].mxu0
  %v1514 = vadd.f32 0.0, %v1513
  %v1515 = vpop.f32.mrb[0].mxu0
  %1516 = vmatprep.mubr.f32.mxu0 0.0
  %1517 = vmatmul.mubr.f32.gmra.mrb[0].mxu0 %v1124
  %v1518 = vpop.f32.mrb[0].mxu0
  %v1519 = vadd.f32 0.0, %v1518
  %v1520 = vpop.f32.mrb[0].mxu0
  %1521 = vmatprep.mubr.f32.mxu0 0.0
  %1522 = vmatmul.mubr.f32.gmra.mrb[0].mxu0 %v1127
  %v1523 = vpop.f32.mrb[0].mxu0
  %v1524 = vadd.f32 0.0, %v1523
  %v1525 = vpop.f32.mrb[0].mxu0
  %1526 = vmatprep.mubr.f32.mxu0 0.0
  %1527 = vmatmul.mubr.f32.gmra.mrb[0].mxu0 %v1130
  %v1528 = vpop.f32.mrb[0].mxu0
  %v1529 = vadd.f32 0.0, %v1528
  %v1530 = vpop.f32.mrb[0].mxu0
  %1531 = vmatprep.mubr.f32.mxu0 0.0
  %1532 = vmatmul.mubr.f32.gmra.mrb[0].mxu0 %v1133
  %v1533 = vpop.f32.mrb[0].mxu0
  %v1534 = vadd.f32 0.0, %v1533
  %v1535 = vpop.f32.mrb[0].mxu0
  %1536 = vmatprep.mubr.f32.mxu0 0.0
  %1537 = vmatmul.mubr.f32.gmra.mrb[0].mxu0 %v1136
  %v1538 = vpop.f32.mrb[0].mxu0
  %v1539 = vadd.f32 0.0, %v1538
  %v1540 = vpop.f32.mrb[0].mxu0
  %1541 = vmatprep.mubr.f32.mxu0 0.0
  %1542 = vmatmul.mubr.f32.gmra.mrb[0].mxu0 %v1139
  %v1543 = vpop.f32.mrb[0].mxu0
  %v1544 = vadd.f32 0.0, %v1543
  %v1545 = vpop.f32.mrb[0].mxu0
  %1546 = vmatprep.mubr.f32.mxu0 0.0
  %1547 = vmatmul.mubr.f32.gmra.mrb[0].mxu0 %v1142
  %v1548 = vpop.f32.mrb[0].mxu0
  %v1549 = vadd.f32 0.0, %v1548
  %v1550 = vpop.f32.mrb[0].mxu0
  %1551 = vmatprep.mubr.f32.mxu0 0.0
  %1552 = vmatmul.mubr.f32.gmra.mrb[0].mxu0 %v1145
  %v1553 = vpop.f32.mrb[0].mxu0
  %v1554 = vadd.f32 0.0, %v1553
  %v1555 = vpop.f32.mrb[0].mxu0
  %1556 = vmatprep.mubr.f32.mxu0 0.0
  %1557 = vmatmul.mubr.f32.gmra.mrb[0].mxu0 %v1148
  %v1558 = vpop.f32.mrb[0].mxu0
  %v1559 = vadd.f32 0.0, %v1558
  %v1560 = vpop.f32.mrb[0].mxu0
  %1561 = vmatprep.mubr.f32.mxu0 0.0
  %1562 = vmatmul.mubr.f32.gmra.mrb[0].mxu0 %v1151
  %v1563 = vpop.f32.mrb[0].mxu0
  %v1564 = vadd.f32 0.0, %v1563
  %v1565 = vpop.f32.mrb[0].mxu0
  %1566 = vmatprep.mubr.f32.mxu0 0.0
  %1567 = vmatmul.mubr.f32.gmra.mrb[0].mxu0 %v1154
  %v1568 = vpop.f32.mrb[0].mxu0
  %v1569 = vadd.f32 0.0, %v1568
  %v1570 = vpop.f32.mrb[0].mxu0
  %1571 = vmatprep.mubr.f32.mxu0 0.0
  %1572 = vmatmul.mubr.f32.gmra.mrb[0].mxu0 %v1157
  %v1573 = vpop.f32.mrb[0].mxu0
  %v1574 = vadd.f32 0.0, %v1573
  %v1575 = vpop.f32.mrb[0].mxu0
  %1576 = vmatprep.mubr.f32.mxu0 0.0
  %1577 = vmatmul.mubr.f32.gmra.mrb[0].mxu0 %v1160
  %v1578 = vpop.f32.mrb[0].mxu0
  %v1579 = vadd.f32 0.0, %v1578
  %v1580 = vpop.f32.mrb[0].mxu0
  %1581 = vmatprep.mubr.f32.mxu0 0.0
  %1582 = vmatmul.mubr.f32.gmra.mrb[0].mxu0 %v1163
  %v1583 = vpop.f32.mrb[0].mxu0
  %v1584 = vadd.f32 0.0, %v1583
  %v1585 = vpop.f32.mrb[0].mxu0
  %1586 = vmatprep.mubr.f32.mxu0 0.0
  %1587 = vmatmul.mubr.f32.gmra.mrb[0].mxu0 %v1166
  %v1588 = vpop.f32.mrb[0].mxu0
  %v1589 = vadd.f32 0.0, %v1588
  %v1590 = vpop.f32.mrb[0].mxu0
  %1591 = vmatprep.mubr.f32.mxu0 0.0
  %1592 = vmatmul.mubr.f32.gmra.mrb[0].mxu0 %v1169
  %v1593 = vpop.f32.mrb[0].mxu0
  %v1594 = vadd.f32 0.0, %v1593
  %v1595 = vpop.f32.mrb[0].mxu0
  %1596 = vmatprep.mubr.f32.mxu0 0.0
  %1597 = vmatmul.mubr.f32.gmra.mrb[0].mxu0 %v1172
  %v1598 = vpop.f32.mrb[0].mxu0
  %v1599 = vadd.f32 0.0, %v1598
  %v1600 = vpop.f32.mrb[0].mxu0
  %1601 = vmatprep.mubr.f32.mxu0 0.0
  %1602 = vmatmul.mubr.f32.gmra.mrb[0].mxu0 %v1175
  %v1603 = vpop.f32.mrb[0].mxu0
  %v1604 = vadd.f32 0.0, %v1603
  %v1605 = vpop.f32.mrb[0].mxu0
  %1606 = vmatprep.mubr.f32.mxu0 0.0
  %1607 = vmatmul.mubr.f32.gmra.mrb[0].mxu0 %v1178
  %v1608 = vpop.f32.mrb[0].mxu0
  %v1609 = vadd.f32 0.0, %v1608
  %v1610 = vpop.f32.mrb[0].mxu0
  %1611 = vmatprep.mubr.f32.mxu0 0.0
  %1612 = vmatmul.mubr.f32.gmra.mrb[0].mxu0 %v1181
  %v1613 = vpop.f32.mrb[0].mxu0
  %v1614 = vadd.f32 0.0, %v1613
  %v1615 = vpop.f32.mrb[0].mxu0
  %1616 = vmatprep.mubr.f32.mxu0 0.0
  %1617 = vmatmul.mubr.f32.gmra.mrb[0].mxu0 %v1184
  %v1618 = vpop.f32.mrb[0].mxu0
  %v1619 = vadd.f32 0.0, %v1618
  %v1620 = vpop.f32.mrb[0].mxu0
  %1621 = vmatprep.mubr.f32.mxu0 0.0
  %1622 = vmatmul.mubr.f32.gmra.mrb[0].mxu0 %v1187
  %v1623 = vpop.f32.mrb[0].mxu0
  %v1624 = vadd.f32 0.0, %v1623
  %v1625 = vpop.f32.mrb[0].mxu0
  %1626 = vmatprep.mubr.f32.mxu0 0.0
  %1627 = vmatmul.mubr.f32.gmra.mrb[0].mxu0 %v1190
  %v1628 = vpop.f32.mrb[0].mxu0
  %v1629 = vadd.f32 0.0, %v1628
  %v1630 = vpop.f32.mrb[0].mxu0
  %1631 = vmatprep.mubr.f32.mxu0 0.0
  %1632 = vmatmul.mubr.f32.gmra.mrb[0].mxu0 %v1193
  %v1633 = vpop.f32.mrb[0].mxu0
  %v1634 = vadd.f32 0.0, %v1633
  %v1635 = vpop.f32.mrb[0].mxu0
  %1636 = vmatprep.mubr.f32.mxu0 0.0
  %1637 = vmatmul.mubr.f32.gmra.mrb[0].mxu0 %v1196
  %v1638 = vpop.f32.mrb[0].mxu0
  %v1639 = vadd.f32 0.0, %v1638
  %v1640 = vpop.f32.mrb[0].mxu0
  %1641 = vmatprep.mubr.f32.mxu0 0.0
  %1642 = vmatmul.mubr.f32.gmra.mrb[0].mxu0 %v1199
  %v1643 = vpop.f32.mrb[0].mxu0
  %v1644 = vadd.f32 0.0, %v1643
  %v1645 = vpop.f32.mrb[0].mxu0
  %1646 = vmatprep.mubr.f32.mxu0 0.0
  %1647 = vmatmul.mubr.f32.gmra.mrb[0].mxu0 %v1202
  %v1648 = vpop.f32.mrb[0].mxu0
  %v1649 = vadd.f32 0.0, %v1648
  %v1650 = vpop.f32.mrb[0].mxu0
  %1651 = vmatprep.mubr.f32.mxu0 0.0
  %1652 = vmatmul.mubr.f32.gmra.mrb[0].mxu0 %v1205
  %v1653 = vpop.f32.mrb[0].mxu0
  %v1654 = vadd.f32 0.0, %v1653
  %v1655 = vpop.f32.mrb[0].mxu0
  %1656 = vmatprep.mubr.f32.mxu0 0.0
  %1657 = vmatmul.mubr.f32.gmra.mrb[0].mxu0 %v1208
  %v1658 = vpop.f32.mrb[0].mxu0
  %v1659 = vadd.f32 0.0, %v1658
  %v1660 = vpop.f32.mrb[0].mxu0
  %1661 = vmatprep.mubr.f32.mxu0 0.0
  %1662 = vmatmul.mubr.f32.gmra.mrb[0].mxu0 %v1211
  %v1663 = vpop.f32.mrb[0].mxu0
  %v1664 = vadd.f32 0.0, %v1663
  %v1665 = vpop.f32.mrb[0].mxu0
  %1666 = vmatprep.mubr.f32.mxu0 0.0
  %1667 = vmatmul.mubr.f32.gmra.mrb[0].mxu0 %v1214
  %v1668 = vpop.f32.mrb[0].mxu0
  %v1669 = vadd.f32 0.0, %v1668
  %v1670 = vpop.f32.mrb[0].mxu0
  %1671 = vmatprep.mubr.f32.mxu0 0.0
  %1672 = vmatmul.mubr.f32.gmra.mrb[0].mxu0 %v1217
  %v1673 = vpop.f32.mrb[0].mxu0
  %v1674 = vadd.f32 0.0, %v1673
  %v1675 = vpop.f32.mrb[0].mxu0
  %1676 = vmatprep.mubr.f32.mxu0 0.0
  %1677 = vmatmul.mubr.f32.gmra.mrb[0].mxu0 %v1220
  %v1678 = vpop.f32.mrb[0].mxu0
  %v1679 = vadd.f32 0.0, %v1678
  %v1680 = vpop.f32.mrb[0].mxu0
  %1681 = vmatprep.mubr.f32.mxu0 0.0
  %1682 = vmatmul.mubr.f32.gmra.mrb[0].mxu0 %v1223
  %v1683 = vpop.f32.mrb[0].mxu0
  %v1684 = vadd.f32 0.0, %v1683
  %v1685 = vpop.f32.mrb[0].mxu0
  %1686 = vmatprep.mubr.f32.mxu0 0.0
  %1687 = vmatmul.mubr.f32.gmra.mrb[0].mxu0 %v1226
  %v1688 = vpop.f32.mrb[0].mxu0
  %v1689 = vadd.f32 0.0, %v1688
  %v1690 = vpop.f32.mrb[0].mxu0
  %1691 = vmatprep.mubr.f32.mxu0 0.0
  %1692 = vmatmul.mubr.f32.gmra.mrb[0].mxu0 %v1229
  %v1693 = vpop.f32.mrb[0].mxu0
  %v1694 = vadd.f32 0.0, %v1693
  %v1695 = vpop.f32.mrb[0].mxu0
  %1696 = vmatprep.mubr.f32.mxu0 0.0
  %1697 = vmatmul.mubr.f32.gmra.mrb[0].mxu0 %v1232
  %v1698 = vpop.f32.mrb[0].mxu0
  %v1699 = vadd.f32 0.0, %v1698
  %v1700 = vpop.f32.mrb[0].mxu0
  %1701 = vmatprep.mubr.f32.mxu0 0.0
  %1702 = vmatmul.mubr.f32.gmra.mrb[0].mxu0 %v1235
  %v1703 = vpop.f32.mrb[0].mxu0
  %v1704 = vadd.f32 0.0, %v1703
  %v1705 = vpop.f32.mrb[0].mxu0
  %1706 = vmatprep.mubr.f32.mxu0 0.0
  %1707 = vmatmul.mubr.f32.gmra.mrb[0].mxu0 %v1238
  %v1708 = vpop.f32.mrb[0].mxu0
  %v1709 = vadd.f32 0.0, %v1708
  %v1710 = vpop.f32.mrb[0].mxu0
  %1711 = vmatprep.mubr.f32.mxu0 0.0
  %1712 = vmatmul.mubr.f32.gmra.mrb[0].mxu0 %v1241
  %v1713 = vpop.f32.mrb[0].mxu0
  %v1714 = vadd.f32 0.0, %v1713
  %v1715 = vpop.f32.mrb[0].mxu0
  %1716 = vmatprep.mubr.f32.mxu0 0.0
  %1717 = vmatmul.mubr.f32.gmra.mrb[0].mxu0 %v1244
  %v1718 = vpop.f32.mrb[0].mxu0
  %v1719 = vadd.f32 0.0, %v1718
  %v1720 = vpop.f32.mrb[0].mxu0
  %1721 = vmatprep.mubr.f32.mxu0 0.0
  %1722 = vmatmul.mubr.f32.gmra.mrb[0].mxu0 %v1247
  %v1723 = vpop.f32.mrb[0].mxu0
  %v1724 = vadd.f32 0.0, %v1723
  %v1725 = vpop.f32.mrb[0].mxu0
  %1726 = vmatprep.mubr.f32.mxu0 0.0
  %1727 = vmatmul.mubr.f32.gmra.mrb[0].mxu0 %v1250
  %v1728 = vpop.f32.mrb[0].mxu0
  %v1729 = vadd.f32 0.0, %v1728
  %v1730 = vpop.f32.mrb[0].mxu0
  %1731 = vmatprep.mubr.f32.mxu0 0.0
  %1732 = vmatmul.mubr.f32.gmra.mrb[0].mxu0 %v1253
  %v1733 = vpop.f32.mrb[0].mxu0
  %v1734 = vadd.f32 0.0, %v1733
  %v1735 = vpop.f32.mrb[0].mxu0
  %1736 = vmatprep.mubr.f32.mxu0 0.0
  %1737 = vmatmul.mubr.f32.gmra.mrb[0].mxu0 %v1256
  %v1738 = vpop.f32.mrb[0].mxu0
  %v1739 = vadd.f32 0.0, %v1738
  %v1740 = vpop.f32.mrb[0].mxu0
  %1741 = vmatprep.mubr.f32.mxu0 0.0
  %1742 = vmatmul.mubr.f32.gmra.mrb[0].mxu0 %v1259
  %v1743 = vpop.f32.mrb[0].mxu0
  %v1744 = vadd.f32 0.0, %v1743
  %v1745 = vpop.f32.mrb[0].mxu0
  %1746 = vmatprep.mubr.f32.mxu0 0.0
  %1747 = vmatmul.mubr.f32.gmra.mrb[0].mxu0 %v1262
  %v1748 = vpop.f32.mrb[0].mxu0
  %v1749 = vadd.f32 0.0, %v1748
  %v1750 = vpop.f32.mrb[0].mxu0
  %1751 = vmatprep.mubr.f32.mxu0 0.0
  %1752 = vmatmul.mubr.f32.gmra.mrb[0].mxu0 %v1265
  %v1753 = vpop.f32.mrb[0].mxu0
  %v1754 = vadd.f32 0.0, %v1753
  %v1755 = vpop.f32.mrb[0].mxu0
  %1756 = vmatprep.mubr.f32.mxu0 0.0
  %1757 = vmatmul.mubr.f32.gmra.mrb[0].mxu0 %v1268
  %v1758 = vpop.f32.mrb[0].mxu0
  %v1759 = vadd.f32 0.0, %v1758
  %v1760 = vpop.f32.mrb[0].mxu0
  %1761 = vmatprep.mubr.f32.mxu0 0.0
  %1762 = vmatmul.mubr.f32.gmra.mrb[0].mxu0 %v1271
  %v1763 = vpop.f32.mrb[0].mxu0
  %v1764 = vadd.f32 0.0, %v1763
  %v1765 = vpop.f32.mrb[0].mxu0
  %1766 = vmatprep.mubr.f32.mxu0 0.0
  %1767 = vmatmul.mubr.f32.gmra.mrb[0].mxu0 %v1274
  %v1768 = vpop.f32.mrb[0].mxu0
  %v1769 = vadd.f32 0.0, %v1768
  %v1770 = vpop.f32.mrb[0].mxu0
  %1771 = vmatprep.mubr.f32.mxu0 0.0
  %1772 = vmatmul.mubr.f32.gmra.mrb[0].mxu0 %v1277
  %v1773 = vpop.f32.mrb[0].mxu0
  %v1774 = vadd.f32 0.0, %v1773
  %v1775 = vpop.f32.mrb[0].mxu0
  %1776 = vmatprep.mubr.f32.mxu0 0.0
  %1777 = vmatmul.mubr.f32.gmra.mrb[0].mxu0 %v1280
  %v1778 = vpop.f32.mrb[0].mxu0
  %v1779 = vadd.f32 0.0, %v1778
  %v1780 = vpop.f32.mrb[0].mxu0
  %1781 = vmatprep.mubr.f32.mxu0 0.0
  %1782 = vmatmul.mubr.f32.gmra.mrb[0].mxu0 %v1283
  %v1783 = vpop.f32.mrb[0].mxu0
  %v1784 = vadd.f32 0.0, %v1783
  %v1785 = vpop.f32.mrb[0].mxu0
  %1786 = vmatprep.mubr.f32.mxu0 0.0
  %1787 = vmatmul.mubr.f32.gmra.mrb[0].mxu0 %v1286
  %v1788 = vpop.f32.mrb[0].mxu0
  %v1789 = vadd.f32 0.0, %v1788
  %v1790 = vpop.f32.mrb[0].mxu0
  %1791 = vmatprep.mubr.f32.mxu0 0.0
  %1792 = vmatmul.mubr.f32.gmra.mrb[0].mxu0 %v1289
  %v1793 = vpop.f32.mrb[0].mxu0
  %v1794 = vadd.f32 0.0, %v1793
  %v1795 = vpop.f32.mrb[0].mxu0
  %1796 = vmatprep.mubr.f32.mxu0 0.0
  %1797 = vmatmul.mubr.f32.gmra.mrb[0].mxu0 %v1292
  %v1798 = vpop.f32.mrb[0].mxu0
  %v1799 = vadd.f32 0.0, %v1798
  %v1800 = vpop.f32.mrb[0].mxu0
  %1801 = vmatprep.mubr.f32.mxu0 0.0
  %1802 = vmatmul.mubr.f32.gmra.mrb[0].mxu0 %v1295
  %v1803 = vpop.f32.mrb[0].mxu0
  %v1804 = vadd.f32 0.0, %v1803
  %v1805 = vpop.f32.mrb[0].mxu0
  %1806 = vmatprep.mubr.f32.mxu0 0.0
  %1807 = vmatmul.mubr.f32.gmra.mrb[0].mxu0 %v1298
  %v1808 = vpop.f32.mrb[0].mxu0
  %v1809 = vadd.f32 0.0, %v1808
  %v1810 = vpop.f32.mrb[0].mxu0
  %1811 = vmatprep.mubr.f32.mxu0 0.0
  %1812 = vmatmul.mubr.f32.gmra.mrb[0].mxu0 %v1301
  %v1813 = vpop.f32.mrb[0].mxu0
  %v1814 = vadd.f32 0.0, %v1813
  %v1815 = vpop.f32.mrb[0].mxu0
  %1816 = vmatprep.mubr.f32.mxu0 0.0
  %1817 = vmatmul.mubr.f32.gmra.mrb[0].mxu0 %v1304
  %v1818 = vpop.f32.mrb[0].mxu0
  %v1819 = vadd.f32 0.0, %v1818
  %v1820 = vpop.f32.mrb[0].mxu0
  %1821 = vmatprep.mubr.f32.mxu0 0.0
  %1822 = vmatmul.mubr.f32.gmra.mrb[0].mxu0 %v1307
  %v1823 = vpop.f32.mrb[0].mxu0
  %v1824 = vadd.f32 0.0, %v1823
  %v1825 = vpop.f32.mrb[0].mxu0
  %1826 = vmatprep.mubr.f32.mxu0 0.0
  %1827 = vmatmul.mubr.f32.gmra.mrb[0].mxu0 %v1310
  %v1828 = vpop.f32.mrb[0].mxu0
  %v1829 = vadd.f32 0.0, %v1828
  %v1830 = vpop.f32.mrb[0].mxu0
  %1831 = vmatprep.mubr.f32.mxu0 0.0
  %1832 = vmatmul.mubr.f32.gmra.mrb[0].mxu0 %v1313
  %v1833 = vpop.f32.mrb[0].mxu0
  %v1834 = vadd.f32 0.0, %v1833
  %v1835 = vpop.f32.mrb[0].mxu0
  %1836 = vmatprep.mubr.f32.mxu0 0.0
  %1837 = vmatmul.mubr.f32.gmra.mrb[0].mxu0 %v1316
  %v1838 = vpop.f32.mrb[0].mxu0
  %v1839 = vadd.f32 0.0, %v1838
  %v1840 = vpop.f32.mrb[0].mxu0
  %1841 = vmatprep.mubr.f32.mxu0 0.0
  %1842 = vmatmul.mubr.f32.gmra.mrb[0].mxu0 %v1319
  %v1843 = vpop.f32.mrb[0].mxu0
  %v1844 = vadd.f32 0.0, %v1843
  %v1845 = vpop.f32.mrb[0].mxu0
  %1846 = vmatprep.mubr.f32.mxu0 0.0
  %1847 = vmatmul.mubr.f32.gmra.mrb[0].mxu0 %v1322
  %v1848 = vpop.f32.mrb[0].mxu0
  %v1849 = vadd.f32 0.0, %v1848
  %v1850 = vpop.f32.mrb[0].mxu0
  %1851 = vmatprep.mubr.f32.mxu0 0.0
  %1852 = vmatmul.mubr.f32.gmra.mrb[0].mxu0 %v1325
  %v1853 = vpop.f32.mrb[0].mxu0
  %v1854 = vadd.f32 0.0, %v1853
  %v1855 = vpop.f32.mrb[0].mxu0
  %1856 = vmatprep.mubr.f32.mxu0 0.0
  %1857 = vmatmul.mubr.f32.gmra.mrb[0].mxu0 %v1328
  %v1858 = vpop.f32.mrb[0].mxu0
  %v1859 = vadd.f32 0.0, %v1858
  %v1860 = vpop.f32.mrb[0].mxu0
  %1861 = vmatprep.mubr.f32.mxu0 0.0
  %1862 = vmatmul.mubr.f32.gmra.mrb[0].mxu0 %v1331
  %v1863 = vpop.f32.mrb[0].mxu0
  %v1864 = vadd.f32 0.0, %v1863
  %v1865 = vpop.f32.mrb[0].mxu0
  %1866 = vmatprep.mubr.f32.mxu0 0.0
  %1867 = vmatmul.mubr.f32.gmra.mrb[0].mxu0 %v1334
  %v1868 = vpop.f32.mrb[0].mxu0
  %v1869 = vadd.f32 0.0, %v1868
  %v1870 = vpop.f32.mrb[0].mxu0
  %1871 = vmatprep.mubr.f32.mxu0 0.0
  %1872 = vmatmul.mubr.f32.gmra.mrb[0].mxu0 %v1337
  %v1873 = vpop.f32.mrb[0].mxu0
  %v1874 = vadd.f32 0.0, %v1873
  %v1875 = vpop.f32.mrb[0].mxu0
  %1876 = vmatprep.mubr.f32.mxu0 0.0
  %1877 = vmatmul.mubr.f32.gmra.mrb[0].mxu0 %v1340
  %v1878 = vpop.f32.mrb[0].mxu0
  %v1879 = vadd.f32 0.0, %v1878
  %v1880 = vpop.f32.mrb[0].mxu0
  %1881 = vmatprep.mubr.f32.mxu0 0.0
  %1882 = vmatmul.mubr.f32.gmra.mrb[0].mxu0 %v1343
  %v1883 = vpop.f32.mrb[0].mxu0
  %v1884 = vadd.f32 0.0, %v1883
  %v1885 = vpop.f32.mrb[0].mxu0
  %1886 = vmatprep.mubr.f32.mxu0 0.0
  %1887 = vmatmul.mubr.f32.gmra.mrb[0].mxu0 %v1346
  %v1888 = vpop.f32.mrb[0].mxu0
  %v1889 = vadd.f32 0.0, %v1888
  %v1890 = vpop.f32.mrb[0].mxu0
  %1891 = vmatprep.mubr.f32.mxu0 0.0
  %1892 = vmatmul.mubr.f32.gmra.mrb[0].mxu0 %v1349
  %v1893 = vpop.f32.mrb[0].mxu0
  %v1894 = vadd.f32 0.0, %v1893
  %v1895 = vpop.f32.mrb[0].mxu0
  %1896 = vmatprep.mubr.f32.mxu0 0.0
  %1897 = vmatmul.mubr.f32.gmra.mrb[0].mxu0 %v1352
  %v1898 = vpop.f32.mrb[0].mxu0
  %v1899 = vadd.f32 0.0, %v1898
  %v1900 = vpop.f32.mrb[0].mxu0
  %1901 = vmatprep.mubr.f32.mxu0 0.0
  %1902 = vmatmul.mubr.f32.gmra.mrb[0].mxu0 %v1355
  %v1903 = vpop.f32.mrb[0].mxu0
  %v1904 = vadd.f32 0.0, %v1903
  %v1905 = vpop.f32.mrb[0].mxu0
  %1906 = vmatprep.mubr.f32.mxu0 0.0
  %1907 = vmatmul.mubr.f32.gmra.mrb[0].mxu0 %v1358
  %v1908 = vpop.f32.mrb[0].mxu0
  %v1909 = vadd.f32 0.0, %v1908
  %v1910 = vpop.f32.mrb[0].mxu0
  %1911 = vmatprep.mubr.f32.mxu0 0.0
  %1912 = vmatmul.mubr.f32.gmra.mrb[0].mxu0 %v1361
  %v1913 = vpop.f32.mrb[0].mxu0
  %v1914 = vadd.f32 0.0, %v1913
  %v1915 = vpop.f32.mrb[0].mxu0
  %1916 = vmatprep.mubr.f32.mxu0 0.0
  %1917 = vmatmul.mubr.f32.gmra.mrb[0].mxu0 %v1364
  %v1918 = vpop.f32.mrb[0].mxu0
  %v1919 = vadd.f32 0.0, %v1918
  %v1920 = vpop.f32.mrb[0].mxu0
  %1921 = vmatprep.mubr.f32.mxu0 0.0
  %1922 = vmatmul.mubr.f32.gmra.mrb[0].mxu0 %v1367
  %v1923 = vpop.f32.mrb[0].mxu0
  %v1924 = vadd.f32 0.0, %v1923
  %v1925 = vpop.f32.mrb[0].mxu0
  %1926 = vmatprep.mubr.f32.mxu0 0.0
  %1927 = vmatmul.mubr.f32.gmra.mrb[0].mxu0 %v1370
  %v1928 = vpop.f32.mrb[0].mxu0
  %v1929 = vadd.f32 0.0, %v1928
  %v1930 = vpop.f32.mrb[0].mxu0
  %1931 = vdwg.mxu0
  %v1932 = vmax.f32 %v482, %v1439
  %v1933 = vmax.f32 %v487, %v1444
  %v1934 = vmax.f32 %v492, %v1449
  %v1935 = vmax.f32 %v497, %v1454
  %v1936 = vmax.f32 %v502, %v1459
  %v1937 = vmax.f32 %v507, %v1464
  %v1938 = vmax.f32 %v512, %v1469
  %v1939 = vmax.f32 %v517, %v1474
  %v1940 = vmax.f32 %v522, %v1479
  %v1941 = vmax.f32 %v527, %v1484
  %v1942 = vmax.f32 %v532, %v1489
  %v1943 = vmax.f32 %v537, %v1494
  %v1944 = vmax.f32 %v542, %v1499
  %v1945 = vmax.f32 %v547, %v1504
  %v1946 = vmax.f32 %v552, %v1509
  %v1947 = vmax.f32 %v557, %v1514
  %v1948 = vmax.f32 %v562, %v1519
  %v1949 = vmax.f32 %v567, %v1524
  %v1950 = vmax.f32 %v572, %v1529
  %v1951 = vmax.f32 %v577, %v1534
  %v1952 = vmax.f32 %v582, %v1539
  %v1953 = vmax.f32 %v587, %v1544
  %v1954 = vmax.f32 %v592, %v1549
  %v1955 = vmax.f32 %v597, %v1554
  %v1956 = vmax.f32 %v602, %v1559
  %v1957 = vmax.f32 %v607, %v1564
  %v1958 = vmax.f32 %v612, %v1569
  %v1959 = vmax.f32 %v617, %v1574
  %v1960 = vmax.f32 %v622, %v1579
  %v1961 = vmax.f32 %v627, %v1584
  %v1962 = vmax.f32 %v632, %v1589
  %v1963 = vmax.f32 %v637, %v1594
  %v1964 = vmax.f32 %v642, %v1599
  %v1965 = vmax.f32 %v647, %v1604
  %v1966 = vmax.f32 %v652, %v1609
  %v1967 = vmax.f32 %v657, %v1614
  %v1968 = vmax.f32 %v662, %v1619
  %v1969 = vmax.f32 %v667, %v1624
  %v1970 = vmax.f32 %v672, %v1629
  %v1971 = vmax.f32 %v677, %v1634
  %v1972 = vmax.f32 %v682, %v1639
  %v1973 = vmax.f32 %v687, %v1644
  %v1974 = vmax.f32 %v692, %v1649
  %v1975 = vmax.f32 %v697, %v1654
  %v1976 = vmax.f32 %v702, %v1659
  %v1977 = vmax.f32 %v707, %v1664
  %v1978 = vmax.f32 %v712, %v1669
  %v1979 = vmax.f32 %v717, %v1674
  %v1980 = vmax.f32 %v722, %v1679
  %v1981 = vmax.f32 %v727, %v1684
  %v1982 = vmax.f32 %v732, %v1689
  %v1983 = vmax.f32 %v737, %v1694
  %v1984 = vmax.f32 %v742, %v1699
  %v1985 = vmax.f32 %v747, %v1704
  %v1986 = vmax.f32 %v752, %v1709
  %v1987 = vmax.f32 %v757, %v1714
  %v1988 = vmax.f32 %v762, %v1719
  %v1989 = vmax.f32 %v767, %v1724
  %v1990 = vmax.f32 %v772, %v1729
  %v1991 = vmax.f32 %v777, %v1734
  %v1992 = vmax.f32 %v782, %v1739
  %v1993 = vmax.f32 %v787, %v1744
  %v1994 = vmax.f32 %v792, %v1749
  %v1995 = vmax.f32 %v797, %v1754
  %v1996 = vmax.f32 %v802, %v1759
  %v1997 = vmax.f32 %v807, %v1764
  %v1998 = vmax.f32 %v812, %v1769
  %v1999 = vmax.f32 %v817, %v1774
  %v2000 = vmax.f32 %v822, %v1779
  %v2001 = vmax.f32 %v827, %v1784
  %v2002 = vmax.f32 %v832, %v1789
  %v2003 = vmax.f32 %v837, %v1794
  %v2004 = vmax.f32 %v842, %v1799
  %v2005 = vmax.f32 %v847, %v1804
  %v2006 = vmax.f32 %v852, %v1809
  %v2007 = vmax.f32 %v857, %v1814
  %v2008 = vmax.f32 %v862, %v1819
  %v2009 = vmax.f32 %v867, %v1824
  %v2010 = vmax.f32 %v872, %v1829
  %v2011 = vmax.f32 %v877, %v1834
  %v2012 = vmax.f32 %v882, %v1839
  %v2013 = vmax.f32 %v887, %v1844
  %v2014 = vmax.f32 %v892, %v1849
  %v2015 = vmax.f32 %v897, %v1854
  %v2016 = vmax.f32 %v902, %v1859
  %v2017 = vmax.f32 %v907, %v1864
  %v2018 = vmax.f32 %v912, %v1869
  %v2019 = vmax.f32 %v917, %v1874
  %v2020 = vmax.f32 %v922, %v1879
  %v2021 = vmax.f32 %v927, %v1884
  %v2022 = vmax.f32 %v932, %v1889
  %v2023 = vmax.f32 %v937, %v1894
  %v2024 = vmax.f32 %v942, %v1899
  %v2025 = vmax.f32 %v947, %v1904
  %v2026 = vmax.f32 %v952, %v1909
  %v2027 = vmax.f32 %v957, %v1914
  %v2028 = vmax.f32 %v962, %v1919
  %v2029 = vmax.f32 %v967, %v1924
  %v2030 = vmax.f32 %v972, %v1929
  %s2031 = scalar_lea.vmem %s0, 1584
  %v2032 = vld [vmem:[%s2031] sm:$0xff]
  %v2033 = vld [vmem:[%s2031 + $0x8] sm:$0xff]
  %v2034 = vld [vmem:[%s2031 + $0x10] sm:$0xff]
  %v2035 = vld [vmem:[%s2031 + $0x18] sm:$0xff]
  %v2036 = vld [vmem:[%s2031 + $0x20] sm:$0xff]
  %v2037 = vld [vmem:[%s2031 + $0x28] sm:$0xff]
  %v2038 = vld [vmem:[%s2031 + $0x30] sm:$0xff]
  %v2039 = vld [vmem:[%s2031 + $0x38] sm:$0xff]
  %v2040 = vld [vmem:[%s2031 + $0x40] sm:$0xff]
  %v2041 = vld [vmem:[%s2031 + $0x48] sm:$0xff]
  %v2042 = vld [vmem:[%s2031 + $0x50] sm:$0xff]
  %v2043 = vld [vmem:[%s2031 + $0x58] sm:$0xff]
  %v2044 = vld [vmem:[%s2031 + $0x60] sm:$0xff]
  %v2045 = vld [vmem:[%s2031 + $0x68] sm:$0xff]
  %v2046 = vld [vmem:[%s2031 + $0x70] sm:$0xff]
  %v2047 = vld [vmem:[%s2031 + $0x78] sm:$0xff]
  %v2048 = vld [vmem:[%s2031 + $0x80] sm:$0xff]
  %v2049 = vld [vmem:[%s2031 + $0x88] sm:$0xff]
  %v2050 = vld [vmem:[%s2031 + $0x90] sm:$0xff]
  %v2051 = vld [vmem:[%s2031 + $0x98] sm:$0xff]
  %v2052 = vld [vmem:[%s2031 + $0xa0] sm:$0xff]
  %v2053 = vld [vmem:[%s2031 + $0xa8] sm:$0xff]
  %v2054 = vld [vmem:[%s2031 + $0xb0] sm:$0xff]
  %v2055 = vld [vmem:[%s2031 + $0xb8] sm:$0xff]
  %v2056 = vld [vmem:[%s2031 + $0xc0] sm:$0xff]
  %v2057 = vld [vmem:[%s2031 + $0xc8] sm:$0xff]
  %v2058 = vld [vmem:[%s2031 + $0xd0] sm:$0xff]
  %v2059 = vld [vmem:[%s2031 + $0xd8] sm:$0xff]
  %v2060 = vld [vmem:[%s2031 + $0xe0] sm:$0xff]
  %v2061 = vld [vmem:[%s2031 + $0xe8] sm:$0xff]
  %v2062 = vld [vmem:[%s2031 + $0xf0] sm:$0xff]
  %v2063 = vld [vmem:[%s2031 + $0xf8] sm:$0xff]
  %v2064 = vld [vmem:[%s2031 + $0x100] sm:$0xff]
  %v2065 = vld [vmem:[%s2031 + $0x108] sm:$0xff]
  %v2066 = vld [vmem:[%s2031 + $0x110] sm:$0xff]
  %v2067 = vld [vmem:[%s2031 + $0x118] sm:$0xff]
  %v2068 = vld [vmem:[%s2031 + $0x120] sm:$0xff]
  %v2069 = vld [vmem:[%s2031 + $0x128] sm:$0xff]
  %v2070 = vld [vmem:[%s2031 + $0x130] sm:$0xff]
  %v2071 = vld [vmem:[%s2031 + $0x138] sm:$0xff]
  %v2072 = vld [vmem:[%s2031 + $0x140] sm:$0xff]
  %v2073 = vld [vmem:[%s2031 + $0x148] sm:$0xff]
  %v2074 = vld [vmem:[%s2031 + $0x150] sm:$0xff]
  %v2075 = vld [vmem:[%s2031 + $0x158] sm:$0xff]
  %v2076 = vld [vmem:[%s2031 + $0x160] sm:$0xff]
  %v2077 = vld [vmem:[%s2031 + $0x168] sm:$0xff]
  %v2078 = vld [vmem:[%s2031 + $0x170] sm:$0xff]
  %v2079 = vld [vmem:[%s2031 + $0x178] sm:$0xff]
  %v2080 = vld [vmem:[%s2031 + $0x180] sm:$0xff]
  %v2081 = vld [vmem:[%s2031 + $0x188] sm:$0xff]
  %v2082 = vld [vmem:[%s2031 + $0x190] sm:$0xff]
  %v2083 = vld [vmem:[%s2031 + $0x198] sm:$0xff]
  %v2084 = vld [vmem:[%s2031 + $0x1a0] sm:$0xff]
  %v2085 = vld [vmem:[%s2031 + $0x1a8] sm:$0xff]
  %v2086 = vld [vmem:[%s2031 + $0x1b0] sm:$0xff]
  %v2087 = vld [vmem:[%s2031 + $0x1b8] sm:$0xff]
  %v2088 = vld [vmem:[%s2031 + $0x1c0] sm:$0xff]
  %v2089 = vld [vmem:[%s2031 + $0x1c8] sm:$0xff]
  %v2090 = vld [vmem:[%s2031 + $0x1d0] sm:$0xff]
  %v2091 = vld [vmem:[%s2031 + $0x1d8] sm:$0xff]
  %v2092 = vld [vmem:[%s2031 + $0x1e0] sm:$0xff]
  %v2093 = vld [vmem:[%s2031 + $0x1e8] sm:$0xff]
  %v2094 = vld [vmem:[%s2031 + $0x1f0] sm:$0xff]
  %v2095 = vld [vmem:[%s2031 + $0x1f8] sm:$0xff]
  %v2096 = vld [vmem:[%s2031 + $0x200] sm:$0xff]
  %v2097 = vld [vmem:[%s2031 + $0x208] sm:$0xff]
  %v2098 = vld [vmem:[%s2031 + $0x210] sm:$0xff]
  %v2099 = vld [vmem:[%s2031 + $0x218] sm:$0xff]
  %v2100 = vld [vmem:[%s2031 + $0x220] sm:$0xff]
  %v2101 = vld [vmem:[%s2031 + $0x228] sm:$0xff]
  %v2102 = vld [vmem:[%s2031 + $0x230] sm:$0xff]
  %v2103 = vld [vmem:[%s2031 + $0x238] sm:$0xff]
  %v2104 = vld [vmem:[%s2031 + $0x240] sm:$0xff]
  %v2105 = vld [vmem:[%s2031 + $0x248] sm:$0xff]
  %v2106 = vld [vmem:[%s2031 + $0x250] sm:$0xff]
  %v2107 = vld [vmem:[%s2031 + $0x258] sm:$0xff]
  %v2108 = vld [vmem:[%s2031 + $0x260] sm:$0xff]
  %v2109 = vld [vmem:[%s2031 + $0x268] sm:$0xff]
  %v2110 = vld [vmem:[%s2031 + $0x270] sm:$0xff]
  %v2111 = vld [vmem:[%s2031 + $0x278] sm:$0xff]
  %v2112 = vld [vmem:[%s2031 + $0x280] sm:$0xff]
  %v2113 = vld [vmem:[%s2031 + $0x288] sm:$0xff]
  %v2114 = vld [vmem:[%s2031 + $0x290] sm:$0xff]
  %v2115 = vld [vmem:[%s2031 + $0x298] sm:$0xff]
  %v2116 = vld [vmem:[%s2031 + $0x2a0] sm:$0xff]
  %v2117 = vld [vmem:[%s2031 + $0x2a8] sm:$0xff]
  %v2118 = vld [vmem:[%s2031 + $0x2b0] sm:$0xff]
  %v2119 = vld [vmem:[%s2031 + $0x2b8] sm:$0xff]
  %v2120 = vld [vmem:[%s2031 + $0x2c0] sm:$0xff]
  %v2121 = vld [vmem:[%s2031 + $0x2c8] sm:$0xff]
  %v2122 = vld [vmem:[%s2031 + $0x2d0] sm:$0xff]
  %v2123 = vld [vmem:[%s2031 + $0x2d8] sm:$0xff]
  %v2124 = vld [vmem:[%s2031 + $0x2e0] sm:$0xff]
  %v2125 = vld [vmem:[%s2031 + $0x2e8] sm:$0xff]
  %v2126 = vld [vmem:[%s2031 + $0x2f0] sm:$0xff]
  %v2127 = vld [vmem:[%s2031 + $0x2f8] sm:$0xff]
  %v2128 = vld [vmem:[%s2031 + $0x300] sm:$0xff]
  %v2129 = vld [vmem:[%s2031 + $0x308] sm:$0xff]
  %v2130 = vld [vmem:[%s2031 + $0x310] sm:$0xff]
  %v2132 = vsel %vm117, %v2032, 0
  %v2135 = vsel %vm117, %v2033, 0
  %v2138 = vsel %vm117, %v2034, 0
  %v2141 = vsel %vm117, %v2035, 0
  %v2144 = vsel %vm117, %v2036, 0
  %v2147 = vsel %vm117, %v2037, 0
  %v2150 = vsel %vm117, %v2038, 0
  %v2153 = vsel %vm117, %v2039, 0
  %v2156 = vsel %vm117, %v2040, 0
  %v2159 = vsel %vm117, %v2041, 0
  %v2162 = vsel %vm117, %v2042, 0
  %v2165 = vsel %vm117, %v2043, 0
  %v2168 = vsel %vm117, %v2044, 0
  %v2171 = vsel %vm117, %v2045, 0
  %v2174 = vsel %vm117, %v2046, 0
  %v2177 = vsel %vm117, %v2047, 0
  %v2180 = vsel %vm117, %v2048, 0
  %v2183 = vsel %vm117, %v2049, 0
  %v2186 = vsel %vm117, %v2050, 0
  %v2189 = vsel %vm117, %v2051, 0
  %v2192 = vsel %vm117, %v2052, 0
  %v2195 = vsel %vm117, %v2053, 0
  %v2198 = vsel %vm117, %v2054, 0
  %v2201 = vsel %vm117, %v2055, 0
  %v2204 = vsel %vm117, %v2056, 0
  %v2207 = vsel %vm117, %v2057, 0
  %v2210 = vsel %vm117, %v2058, 0
  %v2213 = vsel %vm117, %v2059, 0
  %v2216 = vsel %vm117, %v2060, 0
  %v2219 = vsel %vm117, %v2061, 0
  %v2222 = vsel %vm117, %v2062, 0
  %v2225 = vsel %vm117, %v2063, 0
  %v2228 = vsel %vm117, %v2064, 0
  %v2231 = vsel %vm117, %v2065, 0
  %v2234 = vsel %vm117, %v2066, 0
  %v2237 = vsel %vm117, %v2067, 0
  %v2240 = vsel %vm117, %v2068, 0
  %v2243 = vsel %vm117, %v2069, 0
  %v2246 = vsel %vm117, %v2070, 0
  %v2249 = vsel %vm117, %v2071, 0
  %v2252 = vsel %vm117, %v2072, 0
  %v2255 = vsel %vm117, %v2073, 0
  %v2258 = vsel %vm117, %v2074, 0
  %v2261 = vsel %vm117, %v2075, 0
  %v2264 = vsel %vm117, %v2076, 0
  %v2267 = vsel %vm117, %v2077, 0
  %v2270 = vsel %vm117, %v2078, 0
  %v2273 = vsel %vm117, %v2079, 0
  %v2276 = vsel %vm117, %v2080, 0
  %v2279 = vsel %vm117, %v2081, 0
  %v2282 = vsel %vm117, %v2082, 0
  %v2285 = vsel %vm117, %v2083, 0
  %v2288 = vsel %vm117, %v2084, 0
  %v2291 = vsel %vm117, %v2085, 0
  %v2294 = vsel %vm117, %v2086, 0
  %v2297 = vsel %vm117, %v2087, 0
  %v2300 = vsel %vm117, %v2088, 0
  %v2303 = vsel %vm117, %v2089, 0
  %v2306 = vsel %vm117, %v2090, 0
  %v2309 = vsel %vm117, %v2091, 0
  %v2312 = vsel %vm117, %v2092, 0
  %v2315 = vsel %vm117, %v2093, 0
  %v2318 = vsel %vm117, %v2094, 0
  %v2321 = vsel %vm117, %v2095, 0
  %v2324 = vsel %vm117, %v2096, 0
  %v2327 = vsel %vm117, %v2097, 0
  %v2330 = vsel %vm117, %v2098, 0
  %v2333 = vsel %vm117, %v2099, 0
  %v2336 = vsel %vm117, %v2100, 0
  %v2339 = vsel %vm117, %v2101, 0
  %v2342 = vsel %vm117, %v2102, 0
  %v2345 = vsel %vm117, %v2103, 0
  %v2348 = vsel %vm117, %v2104, 0
  %v2351 = vsel %vm117, %v2105, 0
  %v2354 = vsel %vm117, %v2106, 0
  %v2357 = vsel %vm117, %v2107, 0
  %v2360 = vsel %vm117, %v2108, 0
  %v2363 = vsel %vm117, %v2109, 0
  %v2366 = vsel %vm117, %v2110, 0
  %v2369 = vsel %vm117, %v2111, 0
  %v2372 = vsel %vm117, %v2112, 0
  %v2375 = vsel %vm117, %v2113, 0
  %v2378 = vsel %vm117, %v2114, 0
  %v2381 = vsel %vm117, %v2115, 0
  %v2384 = vsel %vm117, %v2116, 0
  %v2387 = vsel %vm117, %v2117, 0
  %v2390 = vsel %vm117, %v2118, 0
  %v2393 = vsel %vm117, %v2119, 0
  %v2396 = vsel %vm117, %v2120, 0
  %v2399 = vsel %vm117, %v2121, 0
  %v2402 = vsel %vm117, %v2122, 0
  %v2405 = vsel %vm117, %v2123, 0
  %v2408 = vsel %vm117, %v2124, 0
  %v2411 = vsel %vm117, %v2125, 0
  %v2414 = vsel %vm117, %v2126, 0
  %v2417 = vsel %vm117, %v2127, 0
  %v2420 = vsel %vm117, %v2128, 0
  %v2423 = vsel %vm117, %v2129, 0
  %v2426 = vsel %vm117, %v2130, 0
  %2428 = vmatprep.subr.mxu0 0.0
  %2429 = vmatpush1.msra.mxu0 %v14
  %2430 = vmatprep.subr.mxu0 0.0
  %2431 = vmatpush1.msra.mxu0 %v15
  %2432 = vmatprep.subr.mxu0 0.0
  %2433 = vmatpush1.msra.mxu0 %v16
  %2434 = vmatprep.subr.mxu0 0.0
  %2435 = vmatpush1.msra.mxu0 %v17
  %2436 = vmatprep.subr.mxu0 0.0
  %2437 = vmatpush1.msra.mxu0 0.0
  %2438 = vmatprep.subr.mxu0 0.0
  %2439 = vmatpush1.msra.mxu0 0.0
  %2440 = vmatprep.subr.mxu0 0.0
  %2441 = vmatpush1.msra.mxu0 0.0
  %2442 = vmatprep.subr.mxu0 0.0
  %2443 = vmatpush1.msra.mxu0 0.0
  %2444 = vmatprep.subr.mxu0 0.0
  %2445 = vmatpush1.msra.mxu0 0.0
  %2446 = vmatprep.subr.mxu0 0.0
  %2447 = vmatpush1.msra.mxu0 0.0
  %2448 = vmatprep.subr.mxu0 0.0
  %2449 = vmatpush1.msra.mxu0 0.0
  %2450 = vmatprep.subr.mxu0 0.0
  %2451 = vmatpush1.msra.mxu0 0.0
  %2452 = vmatprep.subr.mxu0 0.0
  %2453 = vmatpush1.msra.mxu0 0.0
  %2454 = vmatprep.subr.mxu0 0.0
  %2455 = vmatpush1.msra.mxu0 0.0
  %2456 = vmatprep.subr.mxu0 0.0
  %2457 = vmatpush1.msra.mxu0 0.0
  %2458 = vmatprep.subr.mxu0 0.0
  %2459 = vmatpush1.msra.mxu0 0.0
  %2460 = vmatprep.subr.mxu0 0.0
  %2461 = vmatpush1.msra.mxu0 0.0
  %2462 = vmatprep.subr.mxu0 0.0
  %2463 = vmatpush1.msra.mxu0 0.0
  %2464 = vmatprep.subr.mxu0 0.0
  %2465 = vmatpush1.msra.mxu0 0.0
  %2466 = vmatprep.subr.mxu0 0.0
  %2467 = vmatpush1.msra.mxu0 0.0
  %2468 = vmatprep.subr.mxu0 0.0
  %2469 = vmatpush1.msra.mxu0 0.0
  %2470 = vmatprep.subr.mxu0 0.0
  %2471 = vmatpush1.msra.mxu0 0.0
  %2472 = vmatprep.subr.mxu0 0.0
  %2473 = vmatpush1.msra.mxu0 0.0
  %2474 = vmatprep.subr.mxu0 0.0
  %2475 = vmatpush1.msra.mxu0 0.0
  %2476 = vmatprep.subr.mxu0 0.0
  %2477 = vmatpush1.msra.mxu0 0.0
  %2478 = vmatprep.subr.mxu0 0.0
  %2479 = vmatpush1.msra.mxu0 0.0
  %2480 = vmatprep.subr.mxu0 0.0
  %2481 = vmatpush1.msra.mxu0 0.0
  %2482 = vmatprep.subr.mxu0 0.0
  %2483 = vmatpush1.msra.mxu0 0.0
  %2484 = vmatprep.subr.mxu0 0.0
  %2485 = vmatpush1.msra.mxu0 0.0
  %2486 = vmatprep.subr.mxu0 0.0
  %2487 = vmatpush1.msra.mxu0 0.0
  %2488 = vmatprep.subr.mxu0 0.0
  %2489 = vmatpush1.msra.mxu0 0.0
  %2490 = vmatprep.subr.mxu0 0.0
  %2491 = vmatpush1.msra.mxu0 0.0
  %2492 = vmatprep.mubr.f32.mxu0 0.0
  %2493 = vmatmul.mubr.f32.gmra.mrb[0].mxu0 %v2132
  %v2494 = vpop.f32.mrb[0].mxu0
  %v2495 = vadd.f32 0.0, %v2494
  %v2496 = vpop.f32.mrb[0].mxu0
  %2497 = vmatprep.mubr.f32.mxu0 0.0
  %2498 = vmatmul.mubr.f32.gmra.mrb[0].mxu0 %v2135
  %v2499 = vpop.f32.mrb[0].mxu0
  %v2500 = vadd.f32 0.0, %v2499
  %v2501 = vpop.f32.mrb[0].mxu0
  %2502 = vmatprep.mubr.f32.mxu0 0.0
  %2503 = vmatmul.mubr.f32.gmra.mrb[0].mxu0 %v2138
  %v2504 = vpop.f32.mrb[0].mxu0
  %v2505 = vadd.f32 0.0, %v2504
  %v2506 = vpop.f32.mrb[0].mxu0
  %2507 = vmatprep.mubr.f32.mxu0 0.0
  %2508 = vmatmul.mubr.f32.gmra.mrb[0].mxu0 %v2141
  %v2509 = vpop.f32.mrb[0].mxu0
  %v2510 = vadd.f32 0.0, %v2509
  %v2511 = vpop.f32.mrb[0].mxu0
  %2512 = vmatprep.mubr.f32.mxu0 0.0
  %2513 = vmatmul.mubr.f32.gmra.mrb[0].mxu0 %v2144
  %v2514 = vpop.f32.mrb[0].mxu0
  %v2515 = vadd.f32 0.0, %v2514
  %v2516 = vpop.f32.mrb[0].mxu0
  %2517 = vmatprep.mubr.f32.mxu0 0.0
  %2518 = vmatmul.mubr.f32.gmra.mrb[0].mxu0 %v2147
  %v2519 = vpop.f32.mrb[0].mxu0
  %v2520 = vadd.f32 0.0, %v2519
  %v2521 = vpop.f32.mrb[0].mxu0
  %2522 = vmatprep.mubr.f32.mxu0 0.0
  %2523 = vmatmul.mubr.f32.gmra.mrb[0].mxu0 %v2150
  %v2524 = vpop.f32.mrb[0].mxu0
  %v2525 = vadd.f32 0.0, %v2524
  %v2526 = vpop.f32.mrb[0].mxu0
  %2527 = vmatprep.mubr.f32.mxu0 0.0
  %2528 = vmatmul.mubr.f32.gmra.mrb[0].mxu0 %v2153
  %v2529 = vpop.f32.mrb[0].mxu0
  %v2530 = vadd.f32 0.0, %v2529
  %v2531 = vpop.f32.mrb[0].mxu0
  %2532 = vmatprep.mubr.f32.mxu0 0.0
  %2533 = vmatmul.mubr.f32.gmra.mrb[0].mxu0 %v2156
  %v2534 = vpop.f32.mrb[0].mxu0
  %v2535 = vadd.f32 0.0, %v2534
  %v2536 = vpop.f32.mrb[0].mxu0
  %2537 = vmatprep.mubr.f32.mxu0 0.0
  %2538 = vmatmul.mubr.f32.gmra.mrb[0].mxu0 %v2159
  %v2539 = vpop.f32.mrb[0].mxu0
  %v2540 = vadd.f32 0.0, %v2539
  %v2541 = vpop.f32.mrb[0].mxu0
  %2542 = vmatprep.mubr.f32.mxu0 0.0
  %2543 = vmatmul.mubr.f32.gmra.mrb[0].mxu0 %v2162
  %v2544 = vpop.f32.mrb[0].mxu0
  %v2545 = vadd.f32 0.0, %v2544
  %v2546 = vpop.f32.mrb[0].mxu0
  %2547 = vmatprep.mubr.f32.mxu0 0.0
  %2548 = vmatmul.mubr.f32.gmra.mrb[0].mxu0 %v2165
  %v2549 = vpop.f32.mrb[0].mxu0
  %v2550 = vadd.f32 0.0, %v2549
  %v2551 = vpop.f32.mrb[0].mxu0
  %2552 = vmatprep.mubr.f32.mxu0 0.0
  %2553 = vmatmul.mubr.f32.gmra.mrb[0].mxu0 %v2168
  %v2554 = vpop.f32.mrb[0].mxu0
  %v2555 = vadd.f32 0.0, %v2554
  %v2556 = vpop.f32.mrb[0].mxu0
  %2557 = vmatprep.mubr.f32.mxu0 0.0
  %2558 = vmatmul.mubr.f32.gmra.mrb[0].mxu0 %v2171
  %v2559 = vpop.f32.mrb[0].mxu0
  %v2560 = vadd.f32 0.0, %v2559
  %v2561 = vpop.f32.mrb[0].mxu0
  %2562 = vmatprep.mubr.f32.mxu0 0.0
  %2563 = vmatmul.mubr.f32.gmra.mrb[0].mxu0 %v2174
  %v2564 = vpop.f32.mrb[0].mxu0
  %v2565 = vadd.f32 0.0, %v2564
  %v2566 = vpop.f32.mrb[0].mxu0
  %2567 = vmatprep.mubr.f32.mxu0 0.0
  %2568 = vmatmul.mubr.f32.gmra.mrb[0].mxu0 %v2177
  %v2569 = vpop.f32.mrb[0].mxu0
  %v2570 = vadd.f32 0.0, %v2569
  %v2571 = vpop.f32.mrb[0].mxu0
  %2572 = vmatprep.mubr.f32.mxu0 0.0
  %2573 = vmatmul.mubr.f32.gmra.mrb[0].mxu0 %v2180
  %v2574 = vpop.f32.mrb[0].mxu0
  %v2575 = vadd.f32 0.0, %v2574
  %v2576 = vpop.f32.mrb[0].mxu0
  %2577 = vmatprep.mubr.f32.mxu0 0.0
  %2578 = vmatmul.mubr.f32.gmra.mrb[0].mxu0 %v2183
  %v2579 = vpop.f32.mrb[0].mxu0
  %v2580 = vadd.f32 0.0, %v2579
  %v2581 = vpop.f32.mrb[0].mxu0
  %2582 = vmatprep.mubr.f32.mxu0 0.0
  %2583 = vmatmul.mubr.f32.gmra.mrb[0].mxu0 %v2186
  %v2584 = vpop.f32.mrb[0].mxu0
  %v2585 = vadd.f32 0.0, %v2584
  %v2586 = vpop.f32.mrb[0].mxu0
  %2587 = vmatprep.mubr.f32.mxu0 0.0
  %2588 = vmatmul.mubr.f32.gmra.mrb[0].mxu0 %v2189
  %v2589 = vpop.f32.mrb[0].mxu0
  %v2590 = vadd.f32 0.0, %v2589
  %v2591 = vpop.f32.mrb[0].mxu0
  %2592 = vmatprep.mubr.f32.mxu0 0.0
  %2593 = vmatmul.mubr.f32.gmra.mrb[0].mxu0 %v2192
  %v2594 = vpop.f32.mrb[0].mxu0
  %v2595 = vadd.f32 0.0, %v2594
  %v2596 = vpop.f32.mrb[0].mxu0
  %2597 = vmatprep.mubr.f32.mxu0 0.0
  %2598 = vmatmul.mubr.f32.gmra.mrb[0].mxu0 %v2195
  %v2599 = vpop.f32.mrb[0].mxu0
  %v2600 = vadd.f32 0.0, %v2599
  %v2601 = vpop.f32.mrb[0].mxu0
  %2602 = vmatprep.mubr.f32.mxu0 0.0
  %2603 = vmatmul.mubr.f32.gmra.mrb[0].mxu0 %v2198
  %v2604 = vpop.f32.mrb[0].mxu0
  %v2605 = vadd.f32 0.0, %v2604
  %v2606 = vpop.f32.mrb[0].mxu0
  %2607 = vmatprep.mubr.f32.mxu0 0.0
  %2608 = vmatmul.mubr.f32.gmra.mrb[0].mxu0 %v2201
  %v2609 = vpop.f32.mrb[0].mxu0
  %v2610 = vadd.f32 0.0, %v2609
  %v2611 = vpop.f32.mrb[0].mxu0
  %2612 = vmatprep.mubr.f32.mxu0 0.0
  %2613 = vmatmul.mubr.f32.gmra.mrb[0].mxu0 %v2204
  %v2614 = vpop.f32.mrb[0].mxu0
  %v2615 = vadd.f32 0.0, %v2614
  %v2616 = vpop.f32.mrb[0].mxu0
  %2617 = vmatprep.mubr.f32.mxu0 0.0
  %2618 = vmatmul.mubr.f32.gmra.mrb[0].mxu0 %v2207
  %v2619 = vpop.f32.mrb[0].mxu0
  %v2620 = vadd.f32 0.0, %v2619
  %v2621 = vpop.f32.mrb[0].mxu0
  %2622 = vmatprep.mubr.f32.mxu0 0.0
  %2623 = vmatmul.mubr.f32.gmra.mrb[0].mxu0 %v2210
  %v2624 = vpop.f32.mrb[0].mxu0
  %v2625 = vadd.f32 0.0, %v2624
  %v2626 = vpop.f32.mrb[0].mxu0
  %2627 = vmatprep.mubr.f32.mxu0 0.0
  %2628 = vmatmul.mubr.f32.gmra.mrb[0].mxu0 %v2213
  %v2629 = vpop.f32.mrb[0].mxu0
  %v2630 = vadd.f32 0.0, %v2629
  %v2631 = vpop.f32.mrb[0].mxu0
  %2632 = vmatprep.mubr.f32.mxu0 0.0
  %2633 = vmatmul.mubr.f32.gmra.mrb[0].mxu0 %v2216
  %v2634 = vpop.f32.mrb[0].mxu0
  %v2635 = vadd.f32 0.0, %v2634
  %v2636 = vpop.f32.mrb[0].mxu0
  %2637 = vmatprep.mubr.f32.mxu0 0.0
  %2638 = vmatmul.mubr.f32.gmra.mrb[0].mxu0 %v2219
  %v2639 = vpop.f32.mrb[0].mxu0
  %v2640 = vadd.f32 0.0, %v2639
  %v2641 = vpop.f32.mrb[0].mxu0
  %2642 = vmatprep.mubr.f32.mxu0 0.0
  %2643 = vmatmul.mubr.f32.gmra.mrb[0].mxu0 %v2222
  %v2644 = vpop.f32.mrb[0].mxu0
  %v2645 = vadd.f32 0.0, %v2644
  %v2646 = vpop.f32.mrb[0].mxu0
  %2647 = vmatprep.mubr.f32.mxu0 0.0
  %2648 = vmatmul.mubr.f32.gmra.mrb[0].mxu0 %v2225
  %v2649 = vpop.f32.mrb[0].mxu0
  %v2650 = vadd.f32 0.0, %v2649
  %v2651 = vpop.f32.mrb[0].mxu0
  %2652 = vmatprep.mubr.f32.mxu0 0.0
  %2653 = vmatmul.mubr.f32.gmra.mrb[0].mxu0 %v2228
  %v2654 = vpop.f32.mrb[0].mxu0
  %v2655 = vadd.f32 0.0, %v2654
  %v2656 = vpop.f32.mrb[0].mxu0
  %2657 = vmatprep.mubr.f32.mxu0 0.0
  %2658 = vmatmul.mubr.f32.gmra.mrb[0].mxu0 %v2231
  %v2659 = vpop.f32.mrb[0].mxu0
  %v2660 = vadd.f32 0.0, %v2659
  %v2661 = vpop.f32.mrb[0].mxu0
  %2662 = vmatprep.mubr.f32.mxu0 0.0
  %2663 = vmatmul.mubr.f32.gmra.mrb[0].mxu0 %v2234
  %v2664 = vpop.f32.mrb[0].mxu0
  %v2665 = vadd.f32 0.0, %v2664
  %v2666 = vpop.f32.mrb[0].mxu0
  %2667 = vmatprep.mubr.f32.mxu0 0.0
  %2668 = vmatmul.mubr.f32.gmra.mrb[0].mxu0 %v2237
  %v2669 = vpop.f32.mrb[0].mxu0
  %v2670 = vadd.f32 0.0, %v2669
  %v2671 = vpop.f32.mrb[0].mxu0
  %2672 = vmatprep.mubr.f32.mxu0 0.0
  %2673 = vmatmul.mubr.f32.gmra.mrb[0].mxu0 %v2240
  %v2674 = vpop.f32.mrb[0].mxu0
  %v2675 = vadd.f32 0.0, %v2674
  %v2676 = vpop.f32.mrb[0].mxu0
  %2677 = vmatprep.mubr.f32.mxu0 0.0
  %2678 = vmatmul.mubr.f32.gmra.mrb[0].mxu0 %v2243
  %v2679 = vpop.f32.mrb[0].mxu0
  %v2680 = vadd.f32 0.0, %v2679
  %v2681 = vpop.f32.mrb[0].mxu0
  %2682 = vmatprep.mubr.f32.mxu0 0.0
  %2683 = vmatmul.mubr.f32.gmra.mrb[0].mxu0 %v2246
  %v2684 = vpop.f32.mrb[0].mxu0
  %v2685 = vadd.f32 0.0, %v2684
  %v2686 = vpop.f32.mrb[0].mxu0
  %2687 = vmatprep.mubr.f32.mxu0 0.0
  %2688 = vmatmul.mubr.f32.gmra.mrb[0].mxu0 %v2249
  %v2689 = vpop.f32.mrb[0].mxu0
  %v2690 = vadd.f32 0.0, %v2689
  %v2691 = vpop.f32.mrb[0].mxu0
  %2692 = vmatprep.mubr.f32.mxu0 0.0
  %2693 = vmatmul.mubr.f32.gmra.mrb[0].mxu0 %v2252
  %v2694 = vpop.f32.mrb[0].mxu0
  %v2695 = vadd.f32 0.0, %v2694
  %v2696 = vpop.f32.mrb[0].mxu0
  %2697 = vmatprep.mubr.f32.mxu0 0.0
  %2698 = vmatmul.mubr.f32.gmra.mrb[0].mxu0 %v2255
  %v2699 = vpop.f32.mrb[0].mxu0
  %v2700 = vadd.f32 0.0, %v2699
  %v2701 = vpop.f32.mrb[0].mxu0
  %2702 = vmatprep.mubr.f32.mxu0 0.0
  %2703 = vmatmul.mubr.f32.gmra.mrb[0].mxu0 %v2258
  %v2704 = vpop.f32.mrb[0].mxu0
  %v2705 = vadd.f32 0.0, %v2704
  %v2706 = vpop.f32.mrb[0].mxu0
  %2707 = vmatprep.mubr.f32.mxu0 0.0
  %2708 = vmatmul.mubr.f32.gmra.mrb[0].mxu0 %v2261
  %v2709 = vpop.f32.mrb[0].mxu0
  %v2710 = vadd.f32 0.0, %v2709
  %v2711 = vpop.f32.mrb[0].mxu0
  %2712 = vmatprep.mubr.f32.mxu0 0.0
  %2713 = vmatmul.mubr.f32.gmra.mrb[0].mxu0 %v2264
  %v2714 = vpop.f32.mrb[0].mxu0
  %v2715 = vadd.f32 0.0, %v2714
  %v2716 = vpop.f32.mrb[0].mxu0
  %2717 = vmatprep.mubr.f32.mxu0 0.0
  %2718 = vmatmul.mubr.f32.gmra.mrb[0].mxu0 %v2267
  %v2719 = vpop.f32.mrb[0].mxu0
  %v2720 = vadd.f32 0.0, %v2719
  %v2721 = vpop.f32.mrb[0].mxu0
  %2722 = vmatprep.mubr.f32.mxu0 0.0
  %2723 = vmatmul.mubr.f32.gmra.mrb[0].mxu0 %v2270
  %v2724 = vpop.f32.mrb[0].mxu0
  %v2725 = vadd.f32 0.0, %v2724
  %v2726 = vpop.f32.mrb[0].mxu0
  %2727 = vmatprep.mubr.f32.mxu0 0.0
  %2728 = vmatmul.mubr.f32.gmra.mrb[0].mxu0 %v2273
  %v2729 = vpop.f32.mrb[0].mxu0
  %v2730 = vadd.f32 0.0, %v2729
  %v2731 = vpop.f32.mrb[0].mxu0
  %2732 = vmatprep.mubr.f32.mxu0 0.0
  %2733 = vmatmul.mubr.f32.gmra.mrb[0].mxu0 %v2276
  %v2734 = vpop.f32.mrb[0].mxu0
  %v2735 = vadd.f32 0.0, %v2734
  %v2736 = vpop.f32.mrb[0].mxu0
  %2737 = vmatprep.mubr.f32.mxu0 0.0
  %2738 = vmatmul.mubr.f32.gmra.mrb[0].mxu0 %v2279
  %v2739 = vpop.f32.mrb[0].mxu0
  %v2740 = vadd.f32 0.0, %v2739
  %v2741 = vpop.f32.mrb[0].mxu0
  %2742 = vmatprep.mubr.f32.mxu0 0.0
  %2743 = vmatmul.mubr.f32.gmra.mrb[0].mxu0 %v2282
  %v2744 = vpop.f32.mrb[0].mxu0
  %v2745 = vadd.f32 0.0, %v2744
  %v2746 = vpop.f32.mrb[0].mxu0
  %2747 = vmatprep.mubr.f32.mxu0 0.0
  %2748 = vmatmul.mubr.f32.gmra.mrb[0].mxu0 %v2285
  %v2749 = vpop.f32.mrb[0].mxu0
  %v2750 = vadd.f32 0.0, %v2749
  %v2751 = vpop.f32.mrb[0].mxu0
  %2752 = vmatprep.mubr.f32.mxu0 0.0
  %2753 = vmatmul.mubr.f32.gmra.mrb[0].mxu0 %v2288
  %v2754 = vpop.f32.mrb[0].mxu0
  %v2755 = vadd.f32 0.0, %v2754
  %v2756 = vpop.f32.mrb[0].mxu0
  %2757 = vmatprep.mubr.f32.mxu0 0.0
  %2758 = vmatmul.mubr.f32.gmra.mrb[0].mxu0 %v2291
  %v2759 = vpop.f32.mrb[0].mxu0
  %v2760 = vadd.f32 0.0, %v2759
  %v2761 = vpop.f32.mrb[0].mxu0
  %2762 = vmatprep.mubr.f32.mxu0 0.0
  %2763 = vmatmul.mubr.f32.gmra.mrb[0].mxu0 %v2294
  %v2764 = vpop.f32.mrb[0].mxu0
  %v2765 = vadd.f32 0.0, %v2764
  %v2766 = vpop.f32.mrb[0].mxu0
  %2767 = vmatprep.mubr.f32.mxu0 0.0
  %2768 = vmatmul.mubr.f32.gmra.mrb[0].mxu0 %v2297
  %v2769 = vpop.f32.mrb[0].mxu0
  %v2770 = vadd.f32 0.0, %v2769
  %v2771 = vpop.f32.mrb[0].mxu0
  %2772 = vmatprep.mubr.f32.mxu0 0.0
  %2773 = vmatmul.mubr.f32.gmra.mrb[0].mxu0 %v2300
  %v2774 = vpop.f32.mrb[0].mxu0
  %v2775 = vadd.f32 0.0, %v2774
  %v2776 = vpop.f32.mrb[0].mxu0
  %2777 = vmatprep.mubr.f32.mxu0 0.0
  %2778 = vmatmul.mubr.f32.gmra.mrb[0].mxu0 %v2303
  %v2779 = vpop.f32.mrb[0].mxu0
  %v2780 = vadd.f32 0.0, %v2779
  %v2781 = vpop.f32.mrb[0].mxu0
  %2782 = vmatprep.mubr.f32.mxu0 0.0
  %2783 = vmatmul.mubr.f32.gmra.mrb[0].mxu0 %v2306
  %v2784 = vpop.f32.mrb[0].mxu0
  %v2785 = vadd.f32 0.0, %v2784
  %v2786 = vpop.f32.mrb[0].mxu0
  %2787 = vmatprep.mubr.f32.mxu0 0.0
  %2788 = vmatmul.mubr.f32.gmra.mrb[0].mxu0 %v2309
  %v2789 = vpop.f32.mrb[0].mxu0
  %v2790 = vadd.f32 0.0, %v2789
  %v2791 = vpop.f32.mrb[0].mxu0
  %2792 = vmatprep.mubr.f32.mxu0 0.0
  %2793 = vmatmul.mubr.f32.gmra.mrb[0].mxu0 %v2312
  %v2794 = vpop.f32.mrb[0].mxu0
  %v2795 = vadd.f32 0.0, %v2794
  %v2796 = vpop.f32.mrb[0].mxu0
  %2797 = vmatprep.mubr.f32.mxu0 0.0
  %2798 = vmatmul.mubr.f32.gmra.mrb[0].mxu0 %v2315
  %v2799 = vpop.f32.mrb[0].mxu0
  %v2800 = vadd.f32 0.0, %v2799
  %v2801 = vpop.f32.mrb[0].mxu0
  %2802 = vmatprep.mubr.f32.mxu0 0.0
  %2803 = vmatmul.mubr.f32.gmra.mrb[0].mxu0 %v2318
  %v2804 = vpop.f32.mrb[0].mxu0
  %v2805 = vadd.f32 0.0, %v2804
  %v2806 = vpop.f32.mrb[0].mxu0
  %2807 = vmatprep.mubr.f32.mxu0 0.0
  %2808 = vmatmul.mubr.f32.gmra.mrb[0].mxu0 %v2321
  %v2809 = vpop.f32.mrb[0].mxu0
  %v2810 = vadd.f32 0.0, %v2809
  %v2811 = vpop.f32.mrb[0].mxu0
  %2812 = vmatprep.mubr.f32.mxu0 0.0
  %2813 = vmatmul.mubr.f32.gmra.mrb[0].mxu0 %v2324
  %v2814 = vpop.f32.mrb[0].mxu0
  %v2815 = vadd.f32 0.0, %v2814
  %v2816 = vpop.f32.mrb[0].mxu0
  %2817 = vmatprep.mubr.f32.mxu0 0.0
  %2818 = vmatmul.mubr.f32.gmra.mrb[0].mxu0 %v2327
  %v2819 = vpop.f32.mrb[0].mxu0
  %v2820 = vadd.f32 0.0, %v2819
  %v2821 = vpop.f32.mrb[0].mxu0
  %2822 = vmatprep.mubr.f32.mxu0 0.0
  %2823 = vmatmul.mubr.f32.gmra.mrb[0].mxu0 %v2330
  %v2824 = vpop.f32.mrb[0].mxu0
  %v2825 = vadd.f32 0.0, %v2824
  %v2826 = vpop.f32.mrb[0].mxu0
  %2827 = vmatprep.mubr.f32.mxu0 0.0
  %2828 = vmatmul.mubr.f32.gmra.mrb[0].mxu0 %v2333
  %v2829 = vpop.f32.mrb[0].mxu0
  %v2830 = vadd.f32 0.0, %v2829
  %v2831 = vpop.f32.mrb[0].mxu0
  %2832 = vmatprep.mubr.f32.mxu0 0.0
  %2833 = vmatmul.mubr.f32.gmra.mrb[0].mxu0 %v2336
  %v2834 = vpop.f32.mrb[0].mxu0
  %v2835 = vadd.f32 0.0, %v2834
  %v2836 = vpop.f32.mrb[0].mxu0
  %2837 = vmatprep.mubr.f32.mxu0 0.0
  %2838 = vmatmul.mubr.f32.gmra.mrb[0].mxu0 %v2339
  %v2839 = vpop.f32.mrb[0].mxu0
  %v2840 = vadd.f32 0.0, %v2839
  %v2841 = vpop.f32.mrb[0].mxu0
  %2842 = vmatprep.mubr.f32.mxu0 0.0
  %2843 = vmatmul.mubr.f32.gmra.mrb[0].mxu0 %v2342
  %v2844 = vpop.f32.mrb[0].mxu0
  %v2845 = vadd.f32 0.0, %v2844
  %v2846 = vpop.f32.mrb[0].mxu0
  %2847 = vmatprep.mubr.f32.mxu0 0.0
  %2848 = vmatmul.mubr.f32.gmra.mrb[0].mxu0 %v2345
  %v2849 = vpop.f32.mrb[0].mxu0
  %v2850 = vadd.f32 0.0, %v2849
  %v2851 = vpop.f32.mrb[0].mxu0
  %2852 = vmatprep.mubr.f32.mxu0 0.0
  %2853 = vmatmul.mubr.f32.gmra.mrb[0].mxu0 %v2348
  %v2854 = vpop.f32.mrb[0].mxu0
  %v2855 = vadd.f32 0.0, %v2854
  %v2856 = vpop.f32.mrb[0].mxu0
  %2857 = vmatprep.mubr.f32.mxu0 0.0
  %2858 = vmatmul.mubr.f32.gmra.mrb[0].mxu0 %v2351
  %v2859 = vpop.f32.mrb[0].mxu0
  %v2860 = vadd.f32 0.0, %v2859
  %v2861 = vpop.f32.mrb[0].mxu0
  %2862 = vmatprep.mubr.f32.mxu0 0.0
  %2863 = vmatmul.mubr.f32.gmra.mrb[0].mxu0 %v2354
  %v2864 = vpop.f32.mrb[0].mxu0
  %v2865 = vadd.f32 0.0, %v2864
  %v2866 = vpop.f32.mrb[0].mxu0
  %2867 = vmatprep.mubr.f32.mxu0 0.0
  %2868 = vmatmul.mubr.f32.gmra.mrb[0].mxu0 %v2357
  %v2869 = vpop.f32.mrb[0].mxu0
  %v2870 = vadd.f32 0.0, %v2869
  %v2871 = vpop.f32.mrb[0].mxu0
  %2872 = vmatprep.mubr.f32.mxu0 0.0
  %2873 = vmatmul.mubr.f32.gmra.mrb[0].mxu0 %v2360
  %v2874 = vpop.f32.mrb[0].mxu0
  %v2875 = vadd.f32 0.0, %v2874
  %v2876 = vpop.f32.mrb[0].mxu0
  %2877 = vmatprep.mubr.f32.mxu0 0.0
  %2878 = vmatmul.mubr.f32.gmra.mrb[0].mxu0 %v2363
  %v2879 = vpop.f32.mrb[0].mxu0
  %v2880 = vadd.f32 0.0, %v2879
  %v2881 = vpop.f32.mrb[0].mxu0
  %2882 = vmatprep.mubr.f32.mxu0 0.0
  %2883 = vmatmul.mubr.f32.gmra.mrb[0].mxu0 %v2366
  %v2884 = vpop.f32.mrb[0].mxu0
  %v2885 = vadd.f32 0.0, %v2884
  %v2886 = vpop.f32.mrb[0].mxu0
  %2887 = vmatprep.mubr.f32.mxu0 0.0
  %2888 = vmatmul.mubr.f32.gmra.mrb[0].mxu0 %v2369
  %v2889 = vpop.f32.mrb[0].mxu0
  %v2890 = vadd.f32 0.0, %v2889
  %v2891 = vpop.f32.mrb[0].mxu0
  %2892 = vmatprep.mubr.f32.mxu0 0.0
  %2893 = vmatmul.mubr.f32.gmra.mrb[0].mxu0 %v2372
  %v2894 = vpop.f32.mrb[0].mxu0
  %v2895 = vadd.f32 0.0, %v2894
  %v2896 = vpop.f32.mrb[0].mxu0
  %2897 = vmatprep.mubr.f32.mxu0 0.0
  %2898 = vmatmul.mubr.f32.gmra.mrb[0].mxu0 %v2375
  %v2899 = vpop.f32.mrb[0].mxu0
  %v2900 = vadd.f32 0.0, %v2899
  %v2901 = vpop.f32.mrb[0].mxu0
  %2902 = vmatprep.mubr.f32.mxu0 0.0
  %2903 = vmatmul.mubr.f32.gmra.mrb[0].mxu0 %v2378
  %v2904 = vpop.f32.mrb[0].mxu0
  %v2905 = vadd.f32 0.0, %v2904
  %v2906 = vpop.f32.mrb[0].mxu0
  %2907 = vmatprep.mubr.f32.mxu0 0.0
  %2908 = vmatmul.mubr.f32.gmra.mrb[0].mxu0 %v2381
  %v2909 = vpop.f32.mrb[0].mxu0
  %v2910 = vadd.f32 0.0, %v2909
  %v2911 = vpop.f32.mrb[0].mxu0
  %2912 = vmatprep.mubr.f32.mxu0 0.0
  %2913 = vmatmul.mubr.f32.gmra.mrb[0].mxu0 %v2384
  %v2914 = vpop.f32.mrb[0].mxu0
  %v2915 = vadd.f32 0.0, %v2914
  %v2916 = vpop.f32.mrb[0].mxu0
  %2917 = vmatprep.mubr.f32.mxu0 0.0
  %2918 = vmatmul.mubr.f32.gmra.mrb[0].mxu0 %v2387
  %v2919 = vpop.f32.mrb[0].mxu0
  %v2920 = vadd.f32 0.0, %v2919
  %v2921 = vpop.f32.mrb[0].mxu0
  %2922 = vmatprep.mubr.f32.mxu0 0.0
  %2923 = vmatmul.mubr.f32.gmra.mrb[0].mxu0 %v2390
  %v2924 = vpop.f32.mrb[0].mxu0
  %v2925 = vadd.f32 0.0, %v2924
  %v2926 = vpop.f32.mrb[0].mxu0
  %2927 = vmatprep.mubr.f32.mxu0 0.0
  %2928 = vmatmul.mubr.f32.gmra.mrb[0].mxu0 %v2393
  %v2929 = vpop.f32.mrb[0].mxu0
  %v2930 = vadd.f32 0.0, %v2929
  %v2931 = vpop.f32.mrb[0].mxu0
  %2932 = vmatprep.mubr.f32.mxu0 0.0
  %2933 = vmatmul.mubr.f32.gmra.mrb[0].mxu0 %v2396
  %v2934 = vpop.f32.mrb[0].mxu0
  %v2935 = vadd.f32 0.0, %v2934
  %v2936 = vpop.f32.mrb[0].mxu0
  %2937 = vmatprep.mubr.f32.mxu0 0.0
  %2938 = vmatmul.mubr.f32.gmra.mrb[0].mxu0 %v2399
  %v2939 = vpop.f32.mrb[0].mxu0
  %v2940 = vadd.f32 0.0, %v2939
  %v2941 = vpop.f32.mrb[0].mxu0
  %2942 = vmatprep.mubr.f32.mxu0 0.0
  %2943 = vmatmul.mubr.f32.gmra.mrb[0].mxu0 %v2402
  %v2944 = vpop.f32.mrb[0].mxu0
  %v2945 = vadd.f32 0.0, %v2944
  %v2946 = vpop.f32.mrb[0].mxu0
  %2947 = vmatprep.mubr.f32.mxu0 0.0
  %2948 = vmatmul.mubr.f32.gmra.mrb[0].mxu0 %v2405
  %v2949 = vpop.f32.mrb[0].mxu0
  %v2950 = vadd.f32 0.0, %v2949
  %v2951 = vpop.f32.mrb[0].mxu0
  %2952 = vmatprep.mubr.f32.mxu0 0.0
  %2953 = vmatmul.mubr.f32.gmra.mrb[0].mxu0 %v2408
  %v2954 = vpop.f32.mrb[0].mxu0
  %v2955 = vadd.f32 0.0, %v2954
  %v2956 = vpop.f32.mrb[0].mxu0
  %2957 = vmatprep.mubr.f32.mxu0 0.0
  %2958 = vmatmul.mubr.f32.gmra.mrb[0].mxu0 %v2411
  %v2959 = vpop.f32.mrb[0].mxu0
  %v2960 = vadd.f32 0.0, %v2959
  %v2961 = vpop.f32.mrb[0].mxu0
  %2962 = vmatprep.mubr.f32.mxu0 0.0
  %2963 = vmatmul.mubr.f32.gmra.mrb[0].mxu0 %v2414
  %v2964 = vpop.f32.mrb[0].mxu0
  %v2965 = vadd.f32 0.0, %v2964
  %v2966 = vpop.f32.mrb[0].mxu0
  %2967 = vmatprep.mubr.f32.mxu0 0.0
  %2968 = vmatmul.mubr.f32.gmra.mrb[0].mxu0 %v2417
  %v2969 = vpop.f32.mrb[0].mxu0
  %v2970 = vadd.f32 0.0, %v2969
  %v2971 = vpop.f32.mrb[0].mxu0
  %2972 = vmatprep.mubr.f32.mxu0 0.0
  %2973 = vmatmul.mubr.f32.gmra.mrb[0].mxu0 %v2420
  %v2974 = vpop.f32.mrb[0].mxu0
  %v2975 = vadd.f32 0.0, %v2974
  %v2976 = vpop.f32.mrb[0].mxu0
  %2977 = vmatprep.mubr.f32.mxu0 0.0
  %2978 = vmatmul.mubr.f32.gmra.mrb[0].mxu0 %v2423
  %v2979 = vpop.f32.mrb[0].mxu0
  %v2980 = vadd.f32 0.0, %v2979
  %v2981 = vpop.f32.mrb[0].mxu0
  %2982 = vmatprep.mubr.f32.mxu0 0.0
  %2983 = vmatmul.mubr.f32.gmra.mrb[0].mxu0 %v2426
  %v2984 = vpop.f32.mrb[0].mxu0
  %v2985 = vadd.f32 0.0, %v2984
  %v2986 = vpop.f32.mrb[0].mxu0
  %2987 = vdwg.mxu0
  %v2988 = vmax.f32 %v1932, %v2495
  %v2989 = vmax.f32 %v1933, %v2500
  %v2990 = vmax.f32 %v1934, %v2505
  %v2991 = vmax.f32 %v1935, %v2510
  %v2992 = vmax.f32 %v1936, %v2515
  %v2993 = vmax.f32 %v1937, %v2520
  %v2994 = vmax.f32 %v1938, %v2525
  %v2995 = vmax.f32 %v1939, %v2530
  %v2996 = vmax.f32 %v1940, %v2535
  %v2997 = vmax.f32 %v1941, %v2540
  %v2998 = vmax.f32 %v1942, %v2545
  %v2999 = vmax.f32 %v1943, %v2550
  %v3000 = vmax.f32 %v1944, %v2555
  %v3001 = vmax.f32 %v1945, %v2560
  %v3002 = vmax.f32 %v1946, %v2565
  %v3003 = vmax.f32 %v1947, %v2570
  %v3004 = vmax.f32 %v1948, %v2575
  %v3005 = vmax.f32 %v1949, %v2580
  %v3006 = vmax.f32 %v1950, %v2585
  %v3007 = vmax.f32 %v1951, %v2590
  %v3008 = vmax.f32 %v1952, %v2595
  %v3009 = vmax.f32 %v1953, %v2600
  %v3010 = vmax.f32 %v1954, %v2605
  %v3011 = vmax.f32 %v1955, %v2610
  %v3012 = vmax.f32 %v1956, %v2615
  %v3013 = vmax.f32 %v1957, %v2620
  %v3014 = vmax.f32 %v1958, %v2625
  %v3015 = vmax.f32 %v1959, %v2630
  %v3016 = vmax.f32 %v1960, %v2635
  %v3017 = vmax.f32 %v1961, %v2640
  %v3018 = vmax.f32 %v1962, %v2645
  %v3019 = vmax.f32 %v1963, %v2650
  %v3020 = vmax.f32 %v1964, %v2655
  %v3021 = vmax.f32 %v1965, %v2660
  %v3022 = vmax.f32 %v1966, %v2665
  %v3023 = vmax.f32 %v1967, %v2670
  %v3024 = vmax.f32 %v1968, %v2675
  %v3025 = vmax.f32 %v1969, %v2680
  %v3026 = vmax.f32 %v1970, %v2685
  %v3027 = vmax.f32 %v1971, %v2690
  %v3028 = vmax.f32 %v1972, %v2695
  %v3029 = vmax.f32 %v1973, %v2700
  %v3030 = vmax.f32 %v1974, %v2705
  %v3031 = vmax.f32 %v1975, %v2710
  %v3032 = vmax.f32 %v1976, %v2715
  %v3033 = vmax.f32 %v1977, %v2720
  %v3034 = vmax.f32 %v1978, %v2725
  %v3035 = vmax.f32 %v1979, %v2730
  %v3036 = vmax.f32 %v1980, %v2735
  %v3037 = vmax.f32 %v1981, %v2740
  %v3038 = vmax.f32 %v1982, %v2745
  %v3039 = vmax.f32 %v1983, %v2750
  %v3040 = vmax.f32 %v1984, %v2755
  %v3041 = vmax.f32 %v1985, %v2760
  %v3042 = vmax.f32 %v1986, %v2765
  %v3043 = vmax.f32 %v1987, %v2770
  %v3044 = vmax.f32 %v1988, %v2775
  %v3045 = vmax.f32 %v1989, %v2780
  %v3046 = vmax.f32 %v1990, %v2785
  %v3047 = vmax.f32 %v1991, %v2790
  %v3048 = vmax.f32 %v1992, %v2795
  %v3049 = vmax.f32 %v1993, %v2800
  %v3050 = vmax.f32 %v1994, %v2805
  %v3051 = vmax.f32 %v1995, %v2810
  %v3052 = vmax.f32 %v1996, %v2815
  %v3053 = vmax.f32 %v1997, %v2820
  %v3054 = vmax.f32 %v1998, %v2825
  %v3055 = vmax.f32 %v1999, %v2830
  %v3056 = vmax.f32 %v2000, %v2835
  %v3057 = vmax.f32 %v2001, %v2840
  %v3058 = vmax.f32 %v2002, %v2845
  %v3059 = vmax.f32 %v2003, %v2850
  %v3060 = vmax.f32 %v2004, %v2855
  %v3061 = vmax.f32 %v2005, %v2860
  %v3062 = vmax.f32 %v2006, %v2865
  %v3063 = vmax.f32 %v2007, %v2870
  %v3064 = vmax.f32 %v2008, %v2875
  %v3065 = vmax.f32 %v2009, %v2880
  %v3066 = vmax.f32 %v2010, %v2885
  %v3067 = vmax.f32 %v2011, %v2890
  %v3068 = vmax.f32 %v2012, %v2895
  %v3069 = vmax.f32 %v2013, %v2900
  %v3070 = vmax.f32 %v2014, %v2905
  %v3071 = vmax.f32 %v2015, %v2910
  %v3072 = vmax.f32 %v2016, %v2915
  %v3073 = vmax.f32 %v2017, %v2920
  %v3074 = vmax.f32 %v2018, %v2925
  %v3075 = vmax.f32 %v2019, %v2930
  %v3076 = vmax.f32 %v2020, %v2935
  %v3077 = vmax.f32 %v2021, %v2940
  %v3078 = vmax.f32 %v2022, %v2945
  %v3079 = vmax.f32 %v2023, %v2950
  %v3080 = vmax.f32 %v2024, %v2955
  %v3081 = vmax.f32 %v2025, %v2960
  %v3082 = vmax.f32 %v2026, %v2965
  %v3083 = vmax.f32 %v2027, %v2970
  %v3084 = vmax.f32 %v2028, %v2975
  %v3085 = vmax.f32 %v2029, %v2980
  %v3086 = vmax.f32 %v2030, %v2985
  %s3087 = scalar_lea.vmem %s0, 2376
  %v3088 = vld [vmem:[%s3087] sm:$0xff]
  %v3089 = vld [vmem:[%s3087 + $0x8] sm:$0xff]
  %v3090 = vld [vmem:[%s3087 + $0x10] sm:$0xff]
  %v3091 = vld [vmem:[%s3087 + $0x18] sm:$0xff]
  %v3092 = vld [vmem:[%s3087 + $0x20] sm:$0xff]
  %v3093 = vld [vmem:[%s3087 + $0x28] sm:$0xff]
  %v3094 = vld [vmem:[%s3087 + $0x30] sm:$0xff]
  %v3095 = vld [vmem:[%s3087 + $0x38] sm:$0xff]
  %v3096 = vld [vmem:[%s3087 + $0x40] sm:$0xff]
  %v3097 = vld [vmem:[%s3087 + $0x48] sm:$0xff]
  %v3098 = vld [vmem:[%s3087 + $0x50] sm:$0xff]
  %v3099 = vld [vmem:[%s3087 + $0x58] sm:$0xff]
  %v3100 = vld [vmem:[%s3087 + $0x60] sm:$0xff]
  %v3101 = vld [vmem:[%s3087 + $0x68] sm:$0xff]
  %v3102 = vld [vmem:[%s3087 + $0x70] sm:$0xff]
  %v3103 = vld [vmem:[%s3087 + $0x78] sm:$0xff]
  %v3104 = vld [vmem:[%s3087 + $0x80] sm:$0xff]
  %v3105 = vld [vmem:[%s3087 + $0x88] sm:$0xff]
  %v3106 = vld [vmem:[%s3087 + $0x90] sm:$0xff]
  %v3107 = vld [vmem:[%s3087 + $0x98] sm:$0xff]
  %v3108 = vld [vmem:[%s3087 + $0xa0] sm:$0xff]
  %v3109 = vld [vmem:[%s3087 + $0xa8] sm:$0xff]
  %v3110 = vld [vmem:[%s3087 + $0xb0] sm:$0xff]
  %v3111 = vld [vmem:[%s3087 + $0xb8] sm:$0xff]
  %v3112 = vld [vmem:[%s3087 + $0xc0] sm:$0xff]
  %v3113 = vld [vmem:[%s3087 + $0xc8] sm:$0xff]
  %v3114 = vld [vmem:[%s3087 + $0xd0] sm:$0xff]
  %v3115 = vld [vmem:[%s3087 + $0xd8] sm:$0xff]
  %v3116 = vld [vmem:[%s3087 + $0xe0] sm:$0xff]
  %v3117 = vld [vmem:[%s3087 + $0xe8] sm:$0xff]
  %v3118 = vld [vmem:[%s3087 + $0xf0] sm:$0xff]
  %v3119 = vld [vmem:[%s3087 + $0xf8] sm:$0xff]
  %v3120 = vld [vmem:[%s3087 + $0x100] sm:$0xff]
  %v3121 = vld [vmem:[%s3087 + $0x108] sm:$0xff]
  %v3122 = vld [vmem:[%s3087 + $0x110] sm:$0xff]
  %v3123 = vld [vmem:[%s3087 + $0x118] sm:$0xff]
  %v3124 = vld [vmem:[%s3087 + $0x120] sm:$0xff]
  %v3125 = vld [vmem:[%s3087 + $0x128] sm:$0xff]
  %v3126 = vld [vmem:[%s3087 + $0x130] sm:$0xff]
  %v3127 = vld [vmem:[%s3087 + $0x138] sm:$0xff]
  %v3128 = vld [vmem:[%s3087 + $0x140] sm:$0xff]
  %v3129 = vld [vmem:[%s3087 + $0x148] sm:$0xff]
  %v3130 = vld [vmem:[%s3087 + $0x150] sm:$0xff]
  %v3131 = vld [vmem:[%s3087 + $0x158] sm:$0xff]
  %v3132 = vld [vmem:[%s3087 + $0x160] sm:$0xff]
  %v3133 = vld [vmem:[%s3087 + $0x168] sm:$0xff]
  %v3134 = vld [vmem:[%s3087 + $0x170] sm:$0xff]
  %v3135 = vld [vmem:[%s3087 + $0x178] sm:$0xff]
  %v3136 = vld [vmem:[%s3087 + $0x180] sm:$0xff]
  %v3137 = vld [vmem:[%s3087 + $0x188] sm:$0xff]
  %v3138 = vld [vmem:[%s3087 + $0x190] sm:$0xff]
  %v3139 = vld [vmem:[%s3087 + $0x198] sm:$0xff]
  %v3140 = vld [vmem:[%s3087 + $0x1a0] sm:$0xff]
  %v3141 = vld [vmem:[%s3087 + $0x1a8] sm:$0xff]
  %v3142 = vld [vmem:[%s3087 + $0x1b0] sm:$0xff]
  %v3143 = vld [vmem:[%s3087 + $0x1b8] sm:$0xff]
  %v3144 = vld [vmem:[%s3087 + $0x1c0] sm:$0xff]
  %v3145 = vld [vmem:[%s3087 + $0x1c8] sm:$0xff]
  %v3146 = vld [vmem:[%s3087 + $0x1d0] sm:$0xff]
  %v3147 = vld [vmem:[%s3087 + $0x1d8] sm:$0xff]
  %v3148 = vld [vmem:[%s3087 + $0x1e0] sm:$0xff]
  %v3149 = vld [vmem:[%s3087 + $0x1e8] sm:$0xff]
  %v3150 = vld [vmem:[%s3087 + $0x1f0] sm:$0xff]
  %v3151 = vld [vmem:[%s3087 + $0x1f8] sm:$0xff]
  %v3152 = vld [vmem:[%s3087 + $0x200] sm:$0xff]
  %v3153 = vld [vmem:[%s3087 + $0x208] sm:$0xff]
  %v3154 = vld [vmem:[%s3087 + $0x210] sm:$0xff]
  %v3155 = vld [vmem:[%s3087 + $0x218] sm:$0xff]
  %v3156 = vld [vmem:[%s3087 + $0x220] sm:$0xff]
  %v3157 = vld [vmem:[%s3087 + $0x228] sm:$0xff]
  %v3158 = vld [vmem:[%s3087 + $0x230] sm:$0xff]
  %v3159 = vld [vmem:[%s3087 + $0x238] sm:$0xff]
  %v3160 = vld [vmem:[%s3087 + $0x240] sm:$0xff]
  %v3161 = vld [vmem:[%s3087 + $0x248] sm:$0xff]
  %v3162 = vld [vmem:[%s3087 + $0x250] sm:$0xff]
  %v3163 = vld [vmem:[%s3087 + $0x258] sm:$0xff]
  %v3164 = vld [vmem:[%s3087 + $0x260] sm:$0xff]
  %v3165 = vld [vmem:[%s3087 + $0x268] sm:$0xff]
  %v3166 = vld [vmem:[%s3087 + $0x270] sm:$0xff]
  %v3167 = vld [vmem:[%s3087 + $0x278] sm:$0xff]
  %v3168 = vld [vmem:[%s3087 + $0x280] sm:$0xff]
  %v3169 = vld [vmem:[%s3087 + $0x288] sm:$0xff]
  %v3170 = vld [vmem:[%s3087 + $0x290] sm:$0xff]
  %v3171 = vld [vmem:[%s3087 + $0x298] sm:$0xff]
  %v3172 = vld [vmem:[%s3087 + $0x2a0] sm:$0xff]
  %v3173 = vld [vmem:[%s3087 + $0x2a8] sm:$0xff]
  %v3174 = vld [vmem:[%s3087 + $0x2b0] sm:$0xff]
  %v3175 = vld [vmem:[%s3087 + $0x2b8] sm:$0xff]
  %v3176 = vld [vmem:[%s3087 + $0x2c0] sm:$0xff]
  %v3177 = vld [vmem:[%s3087 + $0x2c8] sm:$0xff]
  %v3178 = vld [vmem:[%s3087 + $0x2d0] sm:$0xff]
  %v3179 = vld [vmem:[%s3087 + $0x2d8] sm:$0xff]
  %v3180 = vld [vmem:[%s3087 + $0x2e0] sm:$0xff]
  %v3181 = vld [vmem:[%s3087 + $0x2e8] sm:$0xff]
  %v3182 = vld [vmem:[%s3087 + $0x2f0] sm:$0xff]
  %v3183 = vld [vmem:[%s3087 + $0x2f8] sm:$0xff]
  %v3184 = vld [vmem:[%s3087 + $0x300] sm:$0xff]
  %v3185 = vld [vmem:[%s3087 + $0x308] sm:$0xff]
  %v3186 = vld [vmem:[%s3087 + $0x310] sm:$0xff]
  %v3188 = vsel %vm117, %v3088, 0
  %v3191 = vsel %vm117, %v3089, 0
  %v3194 = vsel %vm117, %v3090, 0
  %v3197 = vsel %vm117, %v3091, 0
  %v3200 = vsel %vm117, %v3092, 0
  %v3203 = vsel %vm117, %v3093, 0
  %v3206 = vsel %vm117, %v3094, 0
  %v3209 = vsel %vm117, %v3095, 0
  %v3212 = vsel %vm117, %v3096, 0
  %v3215 = vsel %vm117, %v3097, 0
  %v3218 = vsel %vm117, %v3098, 0
  %v3221 = vsel %vm117, %v3099, 0
  %v3224 = vsel %vm117, %v3100, 0
  %v3227 = vsel %vm117, %v3101, 0
  %v3230 = vsel %vm117, %v3102, 0
  %v3233 = vsel %vm117, %v3103, 0
  %v3236 = vsel %vm117, %v3104, 0
  %v3239 = vsel %vm117, %v3105, 0
  %v3242 = vsel %vm117, %v3106, 0
  %v3245 = vsel %vm117, %v3107, 0
  %v3248 = vsel %vm117, %v3108, 0
  %v3251 = vsel %vm117, %v3109, 0
  %v3254 = vsel %vm117, %v3110, 0
  %v3257 = vsel %vm117, %v3111, 0
  %v3260 = vsel %vm117, %v3112, 0
  %v3263 = vsel %vm117, %v3113, 0
  %v3266 = vsel %vm117, %v3114, 0
  %v3269 = vsel %vm117, %v3115, 0
  %v3272 = vsel %vm117, %v3116, 0
  %v3275 = vsel %vm117, %v3117, 0
  %v3278 = vsel %vm117, %v3118, 0
  %v3281 = vsel %vm117, %v3119, 0
  %v3284 = vsel %vm117, %v3120, 0
  %v3287 = vsel %vm117, %v3121, 0
  %v3290 = vsel %vm117, %v3122, 0
  %v3293 = vsel %vm117, %v3123, 0
  %v3296 = vsel %vm117, %v3124, 0
  %v3299 = vsel %vm117, %v3125, 0
  %v3302 = vsel %vm117, %v3126, 0
  %v3305 = vsel %vm117, %v3127, 0
  %v3308 = vsel %vm117, %v3128, 0
  %v3311 = vsel %vm117, %v3129, 0
  %v3314 = vsel %vm117, %v3130, 0
  %v3317 = vsel %vm117, %v3131, 0
  %v3320 = vsel %vm117, %v3132, 0
  %v3323 = vsel %vm117, %v3133, 0
  %v3326 = vsel %vm117, %v3134, 0
  %v3329 = vsel %vm117, %v3135, 0
  %v3332 = vsel %vm117, %v3136, 0
  %v3335 = vsel %vm117, %v3137, 0
  %v3338 = vsel %vm117, %v3138, 0
  %v3341 = vsel %vm117, %v3139, 0
  %v3344 = vsel %vm117, %v3140, 0
  %v3347 = vsel %vm117, %v3141, 0
  %v3350 = vsel %vm117, %v3142, 0
  %v3353 = vsel %vm117, %v3143, 0
  %v3356 = vsel %vm117, %v3144, 0
  %v3359 = vsel %vm117, %v3145, 0
  %v3362 = vsel %vm117, %v3146, 0
  %v3365 = vsel %vm117, %v3147, 0
  %v3368 = vsel %vm117, %v3148, 0
  %v3371 = vsel %vm117, %v3149, 0
  %v3374 = vsel %vm117, %v3150, 0
  %v3377 = vsel %vm117, %v3151, 0
  %v3380 = vsel %vm117, %v3152, 0
  %v3383 = vsel %vm117, %v3153, 0
  %v3386 = vsel %vm117, %v3154, 0
  %v3389 = vsel %vm117, %v3155, 0
  %v3392 = vsel %vm117, %v3156, 0
  %v3395 = vsel %vm117, %v3157, 0
  %v3398 = vsel %vm117, %v3158, 0
  %v3401 = vsel %vm117, %v3159, 0
  %v3404 = vsel %vm117, %v3160, 0
  %v3407 = vsel %vm117, %v3161, 0
  %v3410 = vsel %vm117, %v3162, 0
  %v3413 = vsel %vm117, %v3163, 0
  %v3416 = vsel %vm117, %v3164, 0
  %v3419 = vsel %vm117, %v3165, 0
  %v3422 = vsel %vm117, %v3166, 0
  %v3425 = vsel %vm117, %v3167, 0
  %v3428 = vsel %vm117, %v3168, 0
  %v3431 = vsel %vm117, %v3169, 0
  %v3434 = vsel %vm117, %v3170, 0
  %v3437 = vsel %vm117, %v3171, 0
  %v3440 = vsel %vm117, %v3172, 0
  %v3443 = vsel %vm117, %v3173, 0
  %v3446 = vsel %vm117, %v3174, 0
  %v3449 = vsel %vm117, %v3175, 0
  %v3452 = vsel %vm117, %v3176, 0
  %v3455 = vsel %vm117, %v3177, 0
  %v3458 = vsel %vm117, %v3178, 0
  %v3461 = vsel %vm117, %v3179, 0
  %v3464 = vsel %vm117, %v3180, 0
  %v3467 = vsel %vm117, %v3181, 0
  %v3470 = vsel %vm117, %v3182, 0
  %v3473 = vsel %vm117, %v3183, 0
  %v3476 = vsel %vm117, %v3184, 0
  %v3479 = vsel %vm117, %v3185, 0
  %v3482 = vsel %vm117, %v3186, 0
  %3484 = vmatprep.subr.mxu0 0.0
  %3485 = vmatpush1.msra.mxu0 %v14
  %3486 = vmatprep.subr.mxu0 0.0
  %3487 = vmatpush1.msra.mxu0 %v15
  %3488 = vmatprep.subr.mxu0 0.0
  %3489 = vmatpush1.msra.mxu0 %v16
  %3490 = vmatprep.subr.mxu0 0.0
  %3491 = vmatpush1.msra.mxu0 %v17
  %3492 = vmatprep.subr.mxu0 0.0
  %3493 = vmatpush1.msra.mxu0 0.0
  %3494 = vmatprep.subr.mxu0 0.0
  %3495 = vmatpush1.msra.mxu0 0.0
  %3496 = vmatprep.subr.mxu0 0.0
  %3497 = vmatpush1.msra.mxu0 0.0
  %3498 = vmatprep.subr.mxu0 0.0
  %3499 = vmatpush1.msra.mxu0 0.0
  %3500 = vmatprep.subr.mxu0 0.0
  %3501 = vmatpush1.msra.mxu0 0.0
  %3502 = vmatprep.subr.mxu0 0.0
  %3503 = vmatpush1.msra.mxu0 0.0
  %3504 = vmatprep.subr.mxu0 0.0
  %3505 = vmatpush1.msra.mxu0 0.0
  %3506 = vmatprep.subr.mxu0 0.0
  %3507 = vmatpush1.msra.mxu0 0.0
  %3508 = vmatprep.subr.mxu0 0.0
  %3509 = vmatpush1.msra.mxu0 0.0
  %3510 = vmatprep.subr.mxu0 0.0
  %3511 = vmatpush1.msra.mxu0 0.0
  %3512 = vmatprep.subr.mxu0 0.0
  %3513 = vmatpush1.msra.mxu0 0.0
  %3514 = vmatprep.subr.mxu0 0.0
  %3515 = vmatpush1.msra.mxu0 0.0
  %3516 = vmatprep.subr.mxu0 0.0
  %3517 = vmatpush1.msra.mxu0 0.0
  %3518 = vmatprep.subr.mxu0 0.0
  %3519 = vmatpush1.msra.mxu0 0.0
  %3520 = vmatprep.subr.mxu0 0.0
  %3521 = vmatpush1.msra.mxu0 0.0
  %3522 = vmatprep.subr.mxu0 0.0
  %3523 = vmatpush1.msra.mxu0 0.0
  %3524 = vmatprep.subr.mxu0 0.0
  %3525 = vmatpush1.msra.mxu0 0.0
  %3526 = vmatprep.subr.mxu0 0.0
  %3527 = vmatpush1.msra.mxu0 0.0
  %3528 = vmatprep.subr.mxu0 0.0
  %3529 = vmatpush1.msra.mxu0 0.0
  %3530 = vmatprep.subr.mxu0 0.0
  %3531 = vmatpush1.msra.mxu0 0.0
  %3532 = vmatprep.subr.mxu0 0.0
  %3533 = vmatpush1.msra.mxu0 0.0
  %3534 = vmatprep.subr.mxu0 0.0
  %3535 = vmatpush1.msra.mxu0 0.0
  %3536 = vmatprep.subr.mxu0 0.0
  %3537 = vmatpush1.msra.mxu0 0.0
  %3538 = vmatprep.subr.mxu0 0.0
  %3539 = vmatpush1.msra.mxu0 0.0
  %3540 = vmatprep.subr.mxu0 0.0
  %3541 = vmatpush1.msra.mxu0 0.0
  %3542 = vmatprep.subr.mxu0 0.0
  %3543 = vmatpush1.msra.mxu0 0.0
  %3544 = vmatprep.subr.mxu0 0.0
  %3545 = vmatpush1.msra.mxu0 0.0
  %3546 = vmatprep.subr.mxu0 0.0
  %3547 = vmatpush1.msra.mxu0 0.0
  %3548 = vmatprep.mubr.f32.mxu0 0.0
  %3549 = vmatmul.mubr.f32.gmra.mrb[0].mxu0 %v3188
  %v3550 = vpop.f32.mrb[0].mxu0
  %v3551 = vadd.f32 0.0, %v3550
  %v3552 = vpop.f32.mrb[0].mxu0
  %3553 = vmatprep.mubr.f32.mxu0 0.0
  %3554 = vmatmul.mubr.f32.gmra.mrb[0].mxu0 %v3191
  %v3555 = vpop.f32.mrb[0].mxu0
  %v3556 = vadd.f32 0.0, %v3555
  %v3557 = vpop.f32.mrb[0].mxu0
  %3558 = vmatprep.mubr.f32.mxu0 0.0
  %3559 = vmatmul.mubr.f32.gmra.mrb[0].mxu0 %v3194
  %v3560 = vpop.f32.mrb[0].mxu0
  %v3561 = vadd.f32 0.0, %v3560
  %v3562 = vpop.f32.mrb[0].mxu0
  %3563 = vmatprep.mubr.f32.mxu0 0.0
  %3564 = vmatmul.mubr.f32.gmra.mrb[0].mxu0 %v3197
  %v3565 = vpop.f32.mrb[0].mxu0
  %v3566 = vadd.f32 0.0, %v3565
  %v3567 = vpop.f32.mrb[0].mxu0
  %3568 = vmatprep.mubr.f32.mxu0 0.0
  %3569 = vmatmul.mubr.f32.gmra.mrb[0].mxu0 %v3200
  %v3570 = vpop.f32.mrb[0].mxu0
  %v3571 = vadd.f32 0.0, %v3570
  %v3572 = vpop.f32.mrb[0].mxu0
  %3573 = vmatprep.mubr.f32.mxu0 0.0
  %3574 = vmatmul.mubr.f32.gmra.mrb[0].mxu0 %v3203
  %v3575 = vpop.f32.mrb[0].mxu0
  %v3576 = vadd.f32 0.0, %v3575
  %v3577 = vpop.f32.mrb[0].mxu0
  %3578 = vmatprep.mubr.f32.mxu0 0.0
  %3579 = vmatmul.mubr.f32.gmra.mrb[0].mxu0 %v3206
  %v3580 = vpop.f32.mrb[0].mxu0
  %v3581 = vadd.f32 0.0, %v3580
  %v3582 = vpop.f32.mrb[0].mxu0
  %3583 = vmatprep.mubr.f32.mxu0 0.0
  %3584 = vmatmul.mubr.f32.gmra.mrb[0].mxu0 %v3209
  %v3585 = vpop.f32.mrb[0].mxu0
  %v3586 = vadd.f32 0.0, %v3585
  %v3587 = vpop.f32.mrb[0].mxu0
  %3588 = vmatprep.mubr.f32.mxu0 0.0
  %3589 = vmatmul.mubr.f32.gmra.mrb[0].mxu0 %v3212
  %v3590 = vpop.f32.mrb[0].mxu0
  %v3591 = vadd.f32 0.0, %v3590
  %v3592 = vpop.f32.mrb[0].mxu0
  %3593 = vmatprep.mubr.f32.mxu0 0.0
  %3594 = vmatmul.mubr.f32.gmra.mrb[0].mxu0 %v3215
  %v3595 = vpop.f32.mrb[0].mxu0
  %v3596 = vadd.f32 0.0, %v3595
  %v3597 = vpop.f32.mrb[0].mxu0
  %3598 = vmatprep.mubr.f32.mxu0 0.0
  %3599 = vmatmul.mubr.f32.gmra.mrb[0].mxu0 %v3218
  %v3600 = vpop.f32.mrb[0].mxu0
  %v3601 = vadd.f32 0.0, %v3600
  %v3602 = vpop.f32.mrb[0].mxu0
  %3603 = vmatprep.mubr.f32.mxu0 0.0
  %3604 = vmatmul.mubr.f32.gmra.mrb[0].mxu0 %v3221
  %v3605 = vpop.f32.mrb[0].mxu0
  %v3606 = vadd.f32 0.0, %v3605
  %v3607 = vpop.f32.mrb[0].mxu0
  %3608 = vmatprep.mubr.f32.mxu0 0.0
  %3609 = vmatmul.mubr.f32.gmra.mrb[0].mxu0 %v3224
  %v3610 = vpop.f32.mrb[0].mxu0
  %v3611 = vadd.f32 0.0, %v3610
  %v3612 = vpop.f32.mrb[0].mxu0
  %3613 = vmatprep.mubr.f32.mxu0 0.0
  %3614 = vmatmul.mubr.f32.gmra.mrb[0].mxu0 %v3227
  %v3615 = vpop.f32.mrb[0].mxu0
  %v3616 = vadd.f32 0.0, %v3615
  %v3617 = vpop.f32.mrb[0].mxu0
  %3618 = vmatprep.mubr.f32.mxu0 0.0
  %3619 = vmatmul.mubr.f32.gmra.mrb[0].mxu0 %v3230
  %v3620 = vpop.f32.mrb[0].mxu0
  %v3621 = vadd.f32 0.0, %v3620
  %v3622 = vpop.f32.mrb[0].mxu0
  %3623 = vmatprep.mubr.f32.mxu0 0.0
  %3624 = vmatmul.mubr.f32.gmra.mrb[0].mxu0 %v3233
  %v3625 = vpop.f32.mrb[0].mxu0
  %v3626 = vadd.f32 0.0, %v3625
  %v3627 = vpop.f32.mrb[0].mxu0
  %3628 = vmatprep.mubr.f32.mxu0 0.0
  %3629 = vmatmul.mubr.f32.gmra.mrb[0].mxu0 %v3236
  %v3630 = vpop.f32.mrb[0].mxu0
  %v3631 = vadd.f32 0.0, %v3630
  %v3632 = vpop.f32.mrb[0].mxu0
  %3633 = vmatprep.mubr.f32.mxu0 0.0
  %3634 = vmatmul.mubr.f32.gmra.mrb[0].mxu0 %v3239
  %v3635 = vpop.f32.mrb[0].mxu0
  %v3636 = vadd.f32 0.0, %v3635
  %v3637 = vpop.f32.mrb[0].mxu0
  %3638 = vmatprep.mubr.f32.mxu0 0.0
  %3639 = vmatmul.mubr.f32.gmra.mrb[0].mxu0 %v3242
  %v3640 = vpop.f32.mrb[0].mxu0
  %v3641 = vadd.f32 0.0, %v3640
  %v3642 = vpop.f32.mrb[0].mxu0
  %3643 = vmatprep.mubr.f32.mxu0 0.0
  %3644 = vmatmul.mubr.f32.gmra.mrb[0].mxu0 %v3245
  %v3645 = vpop.f32.mrb[0].mxu0
  %v3646 = vadd.f32 0.0, %v3645
  %v3647 = vpop.f32.mrb[0].mxu0
  %3648 = vmatprep.mubr.f32.mxu0 0.0
  %3649 = vmatmul.mubr.f32.gmra.mrb[0].mxu0 %v3248
  %v3650 = vpop.f32.mrb[0].mxu0
  %v3651 = vadd.f32 0.0, %v3650
  %v3652 = vpop.f32.mrb[0].mxu0
  %3653 = vmatprep.mubr.f32.mxu0 0.0
  %3654 = vmatmul.mubr.f32.gmra.mrb[0].mxu0 %v3251
  %v3655 = vpop.f32.mrb[0].mxu0
  %v3656 = vadd.f32 0.0, %v3655
  %v3657 = vpop.f32.mrb[0].mxu0
  %3658 = vmatprep.mubr.f32.mxu0 0.0
  %3659 = vmatmul.mubr.f32.gmra.mrb[0].mxu0 %v3254
  %v3660 = vpop.f32.mrb[0].mxu0
  %v3661 = vadd.f32 0.0, %v3660
  %v3662 = vpop.f32.mrb[0].mxu0
  %3663 = vmatprep.mubr.f32.mxu0 0.0
  %3664 = vmatmul.mubr.f32.gmra.mrb[0].mxu0 %v3257
  %v3665 = vpop.f32.mrb[0].mxu0
  %v3666 = vadd.f32 0.0, %v3665
  %v3667 = vpop.f32.mrb[0].mxu0
  %3668 = vmatprep.mubr.f32.mxu0 0.0
  %3669 = vmatmul.mubr.f32.gmra.mrb[0].mxu0 %v3260
  %v3670 = vpop.f32.mrb[0].mxu0
  %v3671 = vadd.f32 0.0, %v3670
  %v3672 = vpop.f32.mrb[0].mxu0
  %3673 = vmatprep.mubr.f32.mxu0 0.0
  %3674 = vmatmul.mubr.f32.gmra.mrb[0].mxu0 %v3263
  %v3675 = vpop.f32.mrb[0].mxu0
  %v3676 = vadd.f32 0.0, %v3675
  %v3677 = vpop.f32.mrb[0].mxu0
  %3678 = vmatprep.mubr.f32.mxu0 0.0
  %3679 = vmatmul.mubr.f32.gmra.mrb[0].mxu0 %v3266
  %v3680 = vpop.f32.mrb[0].mxu0
  %v3681 = vadd.f32 0.0, %v3680
  %v3682 = vpop.f32.mrb[0].mxu0
  %3683 = vmatprep.mubr.f32.mxu0 0.0
  %3684 = vmatmul.mubr.f32.gmra.mrb[0].mxu0 %v3269
  %v3685 = vpop.f32.mrb[0].mxu0
  %v3686 = vadd.f32 0.0, %v3685
  %v3687 = vpop.f32.mrb[0].mxu0
  %3688 = vmatprep.mubr.f32.mxu0 0.0
  %3689 = vmatmul.mubr.f32.gmra.mrb[0].mxu0 %v3272
  %v3690 = vpop.f32.mrb[0].mxu0
  %v3691 = vadd.f32 0.0, %v3690
  %v3692 = vpop.f32.mrb[0].mxu0
  %3693 = vmatprep.mubr.f32.mxu0 0.0
  %3694 = vmatmul.mubr.f32.gmra.mrb[0].mxu0 %v3275
  %v3695 = vpop.f32.mrb[0].mxu0
  %v3696 = vadd.f32 0.0, %v3695
  %v3697 = vpop.f32.mrb[0].mxu0
  %3698 = vmatprep.mubr.f32.mxu0 0.0
  %3699 = vmatmul.mubr.f32.gmra.mrb[0].mxu0 %v3278
  %v3700 = vpop.f32.mrb[0].mxu0
  %v3701 = vadd.f32 0.0, %v3700
  %v3702 = vpop.f32.mrb[0].mxu0
  %3703 = vmatprep.mubr.f32.mxu0 0.0
  %3704 = vmatmul.mubr.f32.gmra.mrb[0].mxu0 %v3281
  %v3705 = vpop.f32.mrb[0].mxu0
  %v3706 = vadd.f32 0.0, %v3705
  %v3707 = vpop.f32.mrb[0].mxu0
  %3708 = vmatprep.mubr.f32.mxu0 0.0
  %3709 = vmatmul.mubr.f32.gmra.mrb[0].mxu0 %v3284
  %v3710 = vpop.f32.mrb[0].mxu0
  %v3711 = vadd.f32 0.0, %v3710
  %v3712 = vpop.f32.mrb[0].mxu0
  %3713 = vmatprep.mubr.f32.mxu0 0.0
  %3714 = vmatmul.mubr.f32.gmra.mrb[0].mxu0 %v3287
  %v3715 = vpop.f32.mrb[0].mxu0
  %v3716 = vadd.f32 0.0, %v3715
  %v3717 = vpop.f32.mrb[0].mxu0
  %3718 = vmatprep.mubr.f32.mxu0 0.0
  %3719 = vmatmul.mubr.f32.gmra.mrb[0].mxu0 %v3290
  %v3720 = vpop.f32.mrb[0].mxu0
  %v3721 = vadd.f32 0.0, %v3720
  %v3722 = vpop.f32.mrb[0].mxu0
  %3723 = vmatprep.mubr.f32.mxu0 0.0
  %3724 = vmatmul.mubr.f32.gmra.mrb[0].mxu0 %v3293
  %v3725 = vpop.f32.mrb[0].mxu0
  %v3726 = vadd.f32 0.0, %v3725
  %v3727 = vpop.f32.mrb[0].mxu0
  %3728 = vmatprep.mubr.f32.mxu0 0.0
  %3729 = vmatmul.mubr.f32.gmra.mrb[0].mxu0 %v3296
  %v3730 = vpop.f32.mrb[0].mxu0
  %v3731 = vadd.f32 0.0, %v3730
  %v3732 = vpop.f32.mrb[0].mxu0
  %3733 = vmatprep.mubr.f32.mxu0 0.0
  %3734 = vmatmul.mubr.f32.gmra.mrb[0].mxu0 %v3299
  %v3735 = vpop.f32.mrb[0].mxu0
  %v3736 = vadd.f32 0.0, %v3735
  %v3737 = vpop.f32.mrb[0].mxu0
  %3738 = vmatprep.mubr.f32.mxu0 0.0
  %3739 = vmatmul.mubr.f32.gmra.mrb[0].mxu0 %v3302
  %v3740 = vpop.f32.mrb[0].mxu0
  %v3741 = vadd.f32 0.0, %v3740
  %v3742 = vpop.f32.mrb[0].mxu0
  %3743 = vmatprep.mubr.f32.mxu0 0.0
  %3744 = vmatmul.mubr.f32.gmra.mrb[0].mxu0 %v3305
  %v3745 = vpop.f32.mrb[0].mxu0
  %v3746 = vadd.f32 0.0, %v3745
  %v3747 = vpop.f32.mrb[0].mxu0
  %3748 = vmatprep.mubr.f32.mxu0 0.0
  %3749 = vmatmul.mubr.f32.gmra.mrb[0].mxu0 %v3308
  %v3750 = vpop.f32.mrb[0].mxu0
  %v3751 = vadd.f32 0.0, %v3750
  %v3752 = vpop.f32.mrb[0].mxu0
  %3753 = vmatprep.mubr.f32.mxu0 0.0
  %3754 = vmatmul.mubr.f32.gmra.mrb[0].mxu0 %v3311
  %v3755 = vpop.f32.mrb[0].mxu0
  %v3756 = vadd.f32 0.0, %v3755
  %v3757 = vpop.f32.mrb[0].mxu0
  %3758 = vmatprep.mubr.f32.mxu0 0.0
  %3759 = vmatmul.mubr.f32.gmra.mrb[0].mxu0 %v3314
  %v3760 = vpop.f32.mrb[0].mxu0
  %v3761 = vadd.f32 0.0, %v3760
  %v3762 = vpop.f32.mrb[0].mxu0
  %3763 = vmatprep.mubr.f32.mxu0 0.0
  %3764 = vmatmul.mubr.f32.gmra.mrb[0].mxu0 %v3317
  %v3765 = vpop.f32.mrb[0].mxu0
  %v3766 = vadd.f32 0.0, %v3765
  %v3767 = vpop.f32.mrb[0].mxu0
  %3768 = vmatprep.mubr.f32.mxu0 0.0
  %3769 = vmatmul.mubr.f32.gmra.mrb[0].mxu0 %v3320
  %v3770 = vpop.f32.mrb[0].mxu0
  %v3771 = vadd.f32 0.0, %v3770
  %v3772 = vpop.f32.mrb[0].mxu0
  %3773 = vmatprep.mubr.f32.mxu0 0.0
  %3774 = vmatmul.mubr.f32.gmra.mrb[0].mxu0 %v3323
  %v3775 = vpop.f32.mrb[0].mxu0
  %v3776 = vadd.f32 0.0, %v3775
  %v3777 = vpop.f32.mrb[0].mxu0
  %3778 = vmatprep.mubr.f32.mxu0 0.0
  %3779 = vmatmul.mubr.f32.gmra.mrb[0].mxu0 %v3326
  %v3780 = vpop.f32.mrb[0].mxu0
  %v3781 = vadd.f32 0.0, %v3780
  %v3782 = vpop.f32.mrb[0].mxu0
  %3783 = vmatprep.mubr.f32.mxu0 0.0
  %3784 = vmatmul.mubr.f32.gmra.mrb[0].mxu0 %v3329
  %v3785 = vpop.f32.mrb[0].mxu0
  %v3786 = vadd.f32 0.0, %v3785
  %v3787 = vpop.f32.mrb[0].mxu0
  %3788 = vmatprep.mubr.f32.mxu0 0.0
  %3789 = vmatmul.mubr.f32.gmra.mrb[0].mxu0 %v3332
  %v3790 = vpop.f32.mrb[0].mxu0
  %v3791 = vadd.f32 0.0, %v3790
  %v3792 = vpop.f32.mrb[0].mxu0
  %3793 = vmatprep.mubr.f32.mxu0 0.0
  %3794 = vmatmul.mubr.f32.gmra.mrb[0].mxu0 %v3335
  %v3795 = vpop.f32.mrb[0].mxu0
  %v3796 = vadd.f32 0.0, %v3795
  %v3797 = vpop.f32.mrb[0].mxu0
  %3798 = vmatprep.mubr.f32.mxu0 0.0
  %3799 = vmatmul.mubr.f32.gmra.mrb[0].mxu0 %v3338
  %v3800 = vpop.f32.mrb[0].mxu0
  %v3801 = vadd.f32 0.0, %v3800
  %v3802 = vpop.f32.mrb[0].mxu0
  %3803 = vmatprep.mubr.f32.mxu0 0.0
  %3804 = vmatmul.mubr.f32.gmra.mrb[0].mxu0 %v3341
  %v3805 = vpop.f32.mrb[0].mxu0
  %v3806 = vadd.f32 0.0, %v3805
  %v3807 = vpop.f32.mrb[0].mxu0
  %3808 = vmatprep.mubr.f32.mxu0 0.0
  %3809 = vmatmul.mubr.f32.gmra.mrb[0].mxu0 %v3344
  %v3810 = vpop.f32.mrb[0].mxu0
  %v3811 = vadd.f32 0.0, %v3810
  %v3812 = vpop.f32.mrb[0].mxu0
  %3813 = vmatprep.mubr.f32.mxu0 0.0
  %3814 = vmatmul.mubr.f32.gmra.mrb[0].mxu0 %v3347
  %v3815 = vpop.f32.mrb[0].mxu0
  %v3816 = vadd.f32 0.0, %v3815
  %v3817 = vpop.f32.mrb[0].mxu0
  %3818 = vmatprep.mubr.f32.mxu0 0.0
  %3819 = vmatmul.mubr.f32.gmra.mrb[0].mxu0 %v3350
  %v3820 = vpop.f32.mrb[0].mxu0
  %v3821 = vadd.f32 0.0, %v3820
  %v3822 = vpop.f32.mrb[0].mxu0
  %3823 = vmatprep.mubr.f32.mxu0 0.0
  %3824 = vmatmul.mubr.f32.gmra.mrb[0].mxu0 %v3353
  %v3825 = vpop.f32.mrb[0].mxu0
  %v3826 = vadd.f32 0.0, %v3825
  %v3827 = vpop.f32.mrb[0].mxu0
  %3828 = vmatprep.mubr.f32.mxu0 0.0
  %3829 = vmatmul.mubr.f32.gmra.mrb[0].mxu0 %v3356
  %v3830 = vpop.f32.mrb[0].mxu0
  %v3831 = vadd.f32 0.0, %v3830
  %v3832 = vpop.f32.mrb[0].mxu0
  %3833 = vmatprep.mubr.f32.mxu0 0.0
  %3834 = vmatmul.mubr.f32.gmra.mrb[0].mxu0 %v3359
  %v3835 = vpop.f32.mrb[0].mxu0
  %v3836 = vadd.f32 0.0, %v3835
  %v3837 = vpop.f32.mrb[0].mxu0
  %3838 = vmatprep.mubr.f32.mxu0 0.0
  %3839 = vmatmul.mubr.f32.gmra.mrb[0].mxu0 %v3362
  %v3840 = vpop.f32.mrb[0].mxu0
  %v3841 = vadd.f32 0.0, %v3840
  %v3842 = vpop.f32.mrb[0].mxu0
  %3843 = vmatprep.mubr.f32.mxu0 0.0
  %3844 = vmatmul.mubr.f32.gmra.mrb[0].mxu0 %v3365
  %v3845 = vpop.f32.mrb[0].mxu0
  %v3846 = vadd.f32 0.0, %v3845
  %v3847 = vpop.f32.mrb[0].mxu0
  %3848 = vmatprep.mubr.f32.mxu0 0.0
  %3849 = vmatmul.mubr.f32.gmra.mrb[0].mxu0 %v3368
  %v3850 = vpop.f32.mrb[0].mxu0
  %v3851 = vadd.f32 0.0, %v3850
  %v3852 = vpop.f32.mrb[0].mxu0
  %3853 = vmatprep.mubr.f32.mxu0 0.0
  %3854 = vmatmul.mubr.f32.gmra.mrb[0].mxu0 %v3371
  %v3855 = vpop.f32.mrb[0].mxu0
  %v3856 = vadd.f32 0.0, %v3855
  %v3857 = vpop.f32.mrb[0].mxu0
  %3858 = vmatprep.mubr.f32.mxu0 0.0
  %3859 = vmatmul.mubr.f32.gmra.mrb[0].mxu0 %v3374
  %v3860 = vpop.f32.mrb[0].mxu0
  %v3861 = vadd.f32 0.0, %v3860
  %v3862 = vpop.f32.mrb[0].mxu0
  %3863 = vmatprep.mubr.f32.mxu0 0.0
  %3864 = vmatmul.mubr.f32.gmra.mrb[0].mxu0 %v3377
  %v3865 = vpop.f32.mrb[0].mxu0
  %v3866 = vadd.f32 0.0, %v3865
  %v3867 = vpop.f32.mrb[0].mxu0
  %3868 = vmatprep.mubr.f32.mxu0 0.0
  %3869 = vmatmul.mubr.f32.gmra.mrb[0].mxu0 %v3380
  %v3870 = vpop.f32.mrb[0].mxu0
  %v3871 = vadd.f32 0.0, %v3870
  %v3872 = vpop.f32.mrb[0].mxu0
  %3873 = vmatprep.mubr.f32.mxu0 0.0
  %3874 = vmatmul.mubr.f32.gmra.mrb[0].mxu0 %v3383
  %v3875 = vpop.f32.mrb[0].mxu0
  %v3876 = vadd.f32 0.0, %v3875
  %v3877 = vpop.f32.mrb[0].mxu0
  %3878 = vmatprep.mubr.f32.mxu0 0.0
  %3879 = vmatmul.mubr.f32.gmra.mrb[0].mxu0 %v3386
  %v3880 = vpop.f32.mrb[0].mxu0
  %v3881 = vadd.f32 0.0, %v3880
  %v3882 = vpop.f32.mrb[0].mxu0
  %3883 = vmatprep.mubr.f32.mxu0 0.0
  %3884 = vmatmul.mubr.f32.gmra.mrb[0].mxu0 %v3389
  %v3885 = vpop.f32.mrb[0].mxu0
  %v3886 = vadd.f32 0.0, %v3885
  %v3887 = vpop.f32.mrb[0].mxu0
  %3888 = vmatprep.mubr.f32.mxu0 0.0
  %3889 = vmatmul.mubr.f32.gmra.mrb[0].mxu0 %v3392
  %v3890 = vpop.f32.mrb[0].mxu0
  %v3891 = vadd.f32 0.0, %v3890
  %v3892 = vpop.f32.mrb[0].mxu0
  %3893 = vmatprep.mubr.f32.mxu0 0.0
  %3894 = vmatmul.mubr.f32.gmra.mrb[0].mxu0 %v3395
  %v3895 = vpop.f32.mrb[0].mxu0
  %v3896 = vadd.f32 0.0, %v3895
  %v3897 = vpop.f32.mrb[0].mxu0
  %3898 = vmatprep.mubr.f32.mxu0 0.0
  %3899 = vmatmul.mubr.f32.gmra.mrb[0].mxu0 %v3398
  %v3900 = vpop.f32.mrb[0].mxu0
  %v3901 = vadd.f32 0.0, %v3900
  %v3902 = vpop.f32.mrb[0].mxu0
  %3903 = vmatprep.mubr.f32.mxu0 0.0
  %3904 = vmatmul.mubr.f32.gmra.mrb[0].mxu0 %v3401
  %v3905 = vpop.f32.mrb[0].mxu0
  %v3906 = vadd.f32 0.0, %v3905
  %v3907 = vpop.f32.mrb[0].mxu0
  %3908 = vmatprep.mubr.f32.mxu0 0.0
  %3909 = vmatmul.mubr.f32.gmra.mrb[0].mxu0 %v3404
  %v3910 = vpop.f32.mrb[0].mxu0
  %v3911 = vadd.f32 0.0, %v3910
  %v3912 = vpop.f32.mrb[0].mxu0
  %3913 = vmatprep.mubr.f32.mxu0 0.0
  %3914 = vmatmul.mubr.f32.gmra.mrb[0].mxu0 %v3407
  %v3915 = vpop.f32.mrb[0].mxu0
  %v3916 = vadd.f32 0.0, %v3915
  %v3917 = vpop.f32.mrb[0].mxu0
  %3918 = vmatprep.mubr.f32.mxu0 0.0
  %3919 = vmatmul.mubr.f32.gmra.mrb[0].mxu0 %v3410
  %v3920 = vpop.f32.mrb[0].mxu0
  %v3921 = vadd.f32 0.0, %v3920
  %v3922 = vpop.f32.mrb[0].mxu0
  %3923 = vmatprep.mubr.f32.mxu0 0.0
  %3924 = vmatmul.mubr.f32.gmra.mrb[0].mxu0 %v3413
  %v3925 = vpop.f32.mrb[0].mxu0
  %v3926 = vadd.f32 0.0, %v3925
  %v3927 = vpop.f32.mrb[0].mxu0
  %3928 = vmatprep.mubr.f32.mxu0 0.0
  %3929 = vmatmul.mubr.f32.gmra.mrb[0].mxu0 %v3416
  %v3930 = vpop.f32.mrb[0].mxu0
  %v3931 = vadd.f32 0.0, %v3930
  %v3932 = vpop.f32.mrb[0].mxu0
  %3933 = vmatprep.mubr.f32.mxu0 0.0
  %3934 = vmatmul.mubr.f32.gmra.mrb[0].mxu0 %v3419
  %v3935 = vpop.f32.mrb[0].mxu0
  %v3936 = vadd.f32 0.0, %v3935
  %v3937 = vpop.f32.mrb[0].mxu0
  %3938 = vmatprep.mubr.f32.mxu0 0.0
  %3939 = vmatmul.mubr.f32.gmra.mrb[0].mxu0 %v3422
  %v3940 = vpop.f32.mrb[0].mxu0
  %v3941 = vadd.f32 0.0, %v3940
  %v3942 = vpop.f32.mrb[0].mxu0
  %3943 = vmatprep.mubr.f32.mxu0 0.0
  %3944 = vmatmul.mubr.f32.gmra.mrb[0].mxu0 %v3425
  %v3945 = vpop.f32.mrb[0].mxu0
  %v3946 = vadd.f32 0.0, %v3945
  %v3947 = vpop.f32.mrb[0].mxu0
  %3948 = vmatprep.mubr.f32.mxu0 0.0
  %3949 = vmatmul.mubr.f32.gmra.mrb[0].mxu0 %v3428
  %v3950 = vpop.f32.mrb[0].mxu0
  %v3951 = vadd.f32 0.0, %v3950
  %v3952 = vpop.f32.mrb[0].mxu0
  %3953 = vmatprep.mubr.f32.mxu0 0.0
  %3954 = vmatmul.mubr.f32.gmra.mrb[0].mxu0 %v3431
  %v3955 = vpop.f32.mrb[0].mxu0
  %v3956 = vadd.f32 0.0, %v3955
  %v3957 = vpop.f32.mrb[0].mxu0
  %3958 = vmatprep.mubr.f32.mxu0 0.0
  %3959 = vmatmul.mubr.f32.gmra.mrb[0].mxu0 %v3434
  %v3960 = vpop.f32.mrb[0].mxu0
  %v3961 = vadd.f32 0.0, %v3960
  %v3962 = vpop.f32.mrb[0].mxu0
  %3963 = vmatprep.mubr.f32.mxu0 0.0
  %3964 = vmatmul.mubr.f32.gmra.mrb[0].mxu0 %v3437
  %v3965 = vpop.f32.mrb[0].mxu0
  %v3966 = vadd.f32 0.0, %v3965
  %v3967 = vpop.f32.mrb[0].mxu0
  %3968 = vmatprep.mubr.f32.mxu0 0.0
  %3969 = vmatmul.mubr.f32.gmra.mrb[0].mxu0 %v3440
  %v3970 = vpop.f32.mrb[0].mxu0
  %v3971 = vadd.f32 0.0, %v3970
  %v3972 = vpop.f32.mrb[0].mxu0
  %3973 = vmatprep.mubr.f32.mxu0 0.0
  %3974 = vmatmul.mubr.f32.gmra.mrb[0].mxu0 %v3443
  %v3975 = vpop.f32.mrb[0].mxu0
  %v3976 = vadd.f32 0.0, %v3975
  %v3977 = vpop.f32.mrb[0].mxu0
  %3978 = vmatprep.mubr.f32.mxu0 0.0
  %3979 = vmatmul.mubr.f32.gmra.mrb[0].mxu0 %v3446
  %v3980 = vpop.f32.mrb[0].mxu0
  %v3981 = vadd.f32 0.0, %v3980
  %v3982 = vpop.f32.mrb[0].mxu0
  %3983 = vmatprep.mubr.f32.mxu0 0.0
  %3984 = vmatmul.mubr.f32.gmra.mrb[0].mxu0 %v3449
  %v3985 = vpop.f32.mrb[0].mxu0
  %v3986 = vadd.f32 0.0, %v3985
  %v3987 = vpop.f32.mrb[0].mxu0
  %3988 = vmatprep.mubr.f32.mxu0 0.0
  %3989 = vmatmul.mubr.f32.gmra.mrb[0].mxu0 %v3452
  %v3990 = vpop.f32.mrb[0].mxu0
  %v3991 = vadd.f32 0.0, %v3990
  %v3992 = vpop.f32.mrb[0].mxu0
  %3993 = vmatprep.mubr.f32.mxu0 0.0
  %3994 = vmatmul.mubr.f32.gmra.mrb[0].mxu0 %v3455
  %v3995 = vpop.f32.mrb[0].mxu0
  %v3996 = vadd.f32 0.0, %v3995
  %v3997 = vpop.f32.mrb[0].mxu0
  %3998 = vmatprep.mubr.f32.mxu0 0.0
  %3999 = vmatmul.mubr.f32.gmra.mrb[0].mxu0 %v3458
  %v4000 = vpop.f32.mrb[0].mxu0
  %v4001 = vadd.f32 0.0, %v4000
  %v4002 = vpop.f32.mrb[0].mxu0
  %4003 = vmatprep.mubr.f32.mxu0 0.0
  %4004 = vmatmul.mubr.f32.gmra.mrb[0].mxu0 %v3461
  %v4005 = vpop.f32.mrb[0].mxu0
  %v4006 = vadd.f32 0.0, %v4005
  %v4007 = vpop.f32.mrb[0].mxu0
  %4008 = vmatprep.mubr.f32.mxu0 0.0
  %4009 = vmatmul.mubr.f32.gmra.mrb[0].mxu0 %v3464
  %v4010 = vpop.f32.mrb[0].mxu0
  %v4011 = vadd.f32 0.0, %v4010
  %v4012 = vpop.f32.mrb[0].mxu0
  %4013 = vmatprep.mubr.f32.mxu0 0.0
  %4014 = vmatmul.mubr.f32.gmra.mrb[0].mxu0 %v3467
  %v4015 = vpop.f32.mrb[0].mxu0
  %v4016 = vadd.f32 0.0, %v4015
  %v4017 = vpop.f32.mrb[0].mxu0
  %4018 = vmatprep.mubr.f32.mxu0 0.0
  %4019 = vmatmul.mubr.f32.gmra.mrb[0].mxu0 %v3470
  %v4020 = vpop.f32.mrb[0].mxu0
  %v4021 = vadd.f32 0.0, %v4020
  %v4022 = vpop.f32.mrb[0].mxu0
  %4023 = vmatprep.mubr.f32.mxu0 0.0
  %4024 = vmatmul.mubr.f32.gmra.mrb[0].mxu0 %v3473
  %v4025 = vpop.f32.mrb[0].mxu0
  %v4026 = vadd.f32 0.0, %v4025
  %v4027 = vpop.f32.mrb[0].mxu0
  %4028 = vmatprep.mubr.f32.mxu0 0.0
  %4029 = vmatmul.mubr.f32.gmra.mrb[0].mxu0 %v3476
  %v4030 = vpop.f32.mrb[0].mxu0
  %v4031 = vadd.f32 0.0, %v4030
  %v4032 = vpop.f32.mrb[0].mxu0
  %4033 = vmatprep.mubr.f32.mxu0 0.0
  %4034 = vmatmul.mubr.f32.gmra.mrb[0].mxu0 %v3479
  %v4035 = vpop.f32.mrb[0].mxu0
  %v4036 = vadd.f32 0.0, %v4035
  %v4037 = vpop.f32.mrb[0].mxu0
  %4038 = vmatprep.mubr.f32.mxu0 0.0
  %4039 = vmatmul.mubr.f32.gmra.mrb[0].mxu0 %v3482
  %v4040 = vpop.f32.mrb[0].mxu0
  %v4041 = vadd.f32 0.0, %v4040
  %v4042 = vpop.f32.mrb[0].mxu0
  %4043 = vdwg.mxu0
  %v4044 = vmax.f32 %v2988, %v3551
  %v4045 = vmax.f32 %v2989, %v3556
  %v4046 = vmax.f32 %v2990, %v3561
  %v4047 = vmax.f32 %v2991, %v3566
  %v4048 = vmax.f32 %v2992, %v3571
  %v4049 = vmax.f32 %v2993, %v3576
  %v4050 = vmax.f32 %v2994, %v3581
  %v4051 = vmax.f32 %v2995, %v3586
  %v4052 = vmax.f32 %v2996, %v3591
  %v4053 = vmax.f32 %v2997, %v3596
  %v4054 = vmax.f32 %v2998, %v3601
  %v4055 = vmax.f32 %v2999, %v3606
  %v4056 = vmax.f32 %v3000, %v3611
  %v4057 = vmax.f32 %v3001, %v3616
  %v4058 = vmax.f32 %v3002, %v3621
  %v4059 = vmax.f32 %v3003, %v3626
  %v4060 = vmax.f32 %v3004, %v3631
  %v4061 = vmax.f32 %v3005, %v3636
  %v4062 = vmax.f32 %v3006, %v3641
  %v4063 = vmax.f32 %v3007, %v3646
  %v4064 = vmax.f32 %v3008, %v3651
  %v4065 = vmax.f32 %v3009, %v3656
  %v4066 = vmax.f32 %v3010, %v3661
  %v4067 = vmax.f32 %v3011, %v3666
  %v4068 = vmax.f32 %v3012, %v3671
  %v4069 = vmax.f32 %v3013, %v3676
  %v4070 = vmax.f32 %v3014, %v3681
  %v4071 = vmax.f32 %v3015, %v3686
  %v4072 = vmax.f32 %v3016, %v3691
  %v4073 = vmax.f32 %v3017, %v3696
  %v4074 = vmax.f32 %v3018, %v3701
  %v4075 = vmax.f32 %v3019, %v3706
  %v4076 = vmax.f32 %v3020, %v3711
  %v4077 = vmax.f32 %v3021, %v3716
  %v4078 = vmax.f32 %v3022, %v3721
  %v4079 = vmax.f32 %v3023, %v3726
  %v4080 = vmax.f32 %v3024, %v3731
  %v4081 = vmax.f32 %v3025, %v3736
  %v4082 = vmax.f32 %v3026, %v3741
  %v4083 = vmax.f32 %v3027, %v3746
  %v4084 = vmax.f32 %v3028, %v3751
  %v4085 = vmax.f32 %v3029, %v3756
  %v4086 = vmax.f32 %v3030, %v3761
  %v4087 = vmax.f32 %v3031, %v3766
  %v4088 = vmax.f32 %v3032, %v3771
  %v4089 = vmax.f32 %v3033, %v3776
  %v4090 = vmax.f32 %v3034, %v3781
  %v4091 = vmax.f32 %v3035, %v3786
  %v4092 = vmax.f32 %v3036, %v3791
  %v4093 = vmax.f32 %v3037, %v3796
  %v4094 = vmax.f32 %v3038, %v3801
  %v4095 = vmax.f32 %v3039, %v3806
  %v4096 = vmax.f32 %v3040, %v3811
  %v4097 = vmax.f32 %v3041, %v3816
  %v4098 = vmax.f32 %v3042, %v3821
  %v4099 = vmax.f32 %v3043, %v3826
  %v4100 = vmax.f32 %v3044, %v3831
  %v4101 = vmax.f32 %v3045, %v3836
  %v4102 = vmax.f32 %v3046, %v3841
  %v4103 = vmax.f32 %v3047, %v3846
  %v4104 = vmax.f32 %v3048, %v3851
  %v4105 = vmax.f32 %v3049, %v3856
  %v4106 = vmax.f32 %v3050, %v3861
  %v4107 = vmax.f32 %v3051, %v3866
  %v4108 = vmax.f32 %v3052, %v3871
  %v4109 = vmax.f32 %v3053, %v3876
  %v4110 = vmax.f32 %v3054, %v3881
  %v4111 = vmax.f32 %v3055, %v3886
  %v4112 = vmax.f32 %v3056, %v3891
  %v4113 = vmax.f32 %v3057, %v3896
  %v4114 = vmax.f32 %v3058, %v3901
  %v4115 = vmax.f32 %v3059, %v3906
  %v4116 = vmax.f32 %v3060, %v3911
  %v4117 = vmax.f32 %v3061, %v3916
  %v4118 = vmax.f32 %v3062, %v3921
  %v4119 = vmax.f32 %v3063, %v3926
  %v4120 = vmax.f32 %v3064, %v3931
  %v4121 = vmax.f32 %v3065, %v3936
  %v4122 = vmax.f32 %v3066, %v3941
  %v4123 = vmax.f32 %v3067, %v3946
  %v4124 = vmax.f32 %v3068, %v3951
  %v4125 = vmax.f32 %v3069, %v3956
  %v4126 = vmax.f32 %v3070, %v3961
  %v4127 = vmax.f32 %v3071, %v3966
  %v4128 = vmax.f32 %v3072, %v3971
  %v4129 = vmax.f32 %v3073, %v3976
  %v4130 = vmax.f32 %v3074, %v3981
  %v4131 = vmax.f32 %v3075, %v3986
  %v4132 = vmax.f32 %v3076, %v3991
  %v4133 = vmax.f32 %v3077, %v3996
  %v4134 = vmax.f32 %v3078, %v4001
  %v4135 = vmax.f32 %v3079, %v4006
  %v4136 = vmax.f32 %v3080, %v4011
  %v4137 = vmax.f32 %v3081, %v4016
  %v4138 = vmax.f32 %v3082, %v4021
  %v4139 = vmax.f32 %v3083, %v4026
  %v4140 = vmax.f32 %v3084, %v4031
  %v4141 = vmax.f32 %v3085, %v4036
  %v4142 = vmax.f32 %v3086, %v4041
  %v4143 = vld [vmem:[%s2] sm:$0x1]
  %v4145 = vlaneseq
  %v4146 = vshrl.u32 %v4145, 7
  %v4147 = vsub.s32 0, %v4146
  %v4148 = vrot.slane %v4143, %v4147
  %v4150 = vadd.f32 %v4044, %v4148
  %v4151 = vadd.f32 %v4045, %v4148
  %v4152 = vadd.f32 %v4046, %v4148
  %v4153 = vadd.f32 %v4047, %v4148
  %v4154 = vadd.f32 %v4048, %v4148
  %v4155 = vadd.f32 %v4049, %v4148
  %v4156 = vadd.f32 %v4050, %v4148
  %v4157 = vadd.f32 %v4051, %v4148
  %v4158 = vadd.f32 %v4052, %v4148
  %v4159 = vadd.f32 %v4053, %v4148
  %v4160 = vadd.f32 %v4054, %v4148
  %v4161 = vadd.f32 %v4055, %v4148
  %v4162 = vadd.f32 %v4056, %v4148
  %v4163 = vadd.f32 %v4057, %v4148
  %v4164 = vadd.f32 %v4058, %v4148
  %v4165 = vadd.f32 %v4059, %v4148
  %v4166 = vadd.f32 %v4060, %v4148
  %v4167 = vadd.f32 %v4061, %v4148
  %v4168 = vadd.f32 %v4062, %v4148
  %v4169 = vadd.f32 %v4063, %v4148
  %v4170 = vadd.f32 %v4064, %v4148
  %v4171 = vadd.f32 %v4065, %v4148
  %v4172 = vadd.f32 %v4066, %v4148
  %v4173 = vadd.f32 %v4067, %v4148
  %v4174 = vadd.f32 %v4068, %v4148
  %v4175 = vadd.f32 %v4069, %v4148
  %v4176 = vadd.f32 %v4070, %v4148
  %v4177 = vadd.f32 %v4071, %v4148
  %v4178 = vadd.f32 %v4072, %v4148
  %v4179 = vadd.f32 %v4073, %v4148
  %v4180 = vadd.f32 %v4074, %v4148
  %v4181 = vadd.f32 %v4075, %v4148
  %v4182 = vadd.f32 %v4076, %v4148
  %v4183 = vadd.f32 %v4077, %v4148
  %v4184 = vadd.f32 %v4078, %v4148
  %v4185 = vadd.f32 %v4079, %v4148
  %v4186 = vadd.f32 %v4080, %v4148
  %v4187 = vadd.f32 %v4081, %v4148
  %v4188 = vadd.f32 %v4082, %v4148
  %v4189 = vadd.f32 %v4083, %v4148
  %v4190 = vadd.f32 %v4084, %v4148
  %v4191 = vadd.f32 %v4085, %v4148
  %v4192 = vadd.f32 %v4086, %v4148
  %v4193 = vadd.f32 %v4087, %v4148
  %v4194 = vadd.f32 %v4088, %v4148
  %v4195 = vadd.f32 %v4089, %v4148
  %v4196 = vadd.f32 %v4090, %v4148
  %v4197 = vadd.f32 %v4091, %v4148
  %v4198 = vadd.f32 %v4092, %v4148
  %v4199 = vadd.f32 %v4093, %v4148
  %v4200 = vadd.f32 %v4094, %v4148
  %v4201 = vadd.f32 %v4095, %v4148
  %v4202 = vadd.f32 %v4096, %v4148
  %v4203 = vadd.f32 %v4097, %v4148
  %v4204 = vadd.f32 %v4098, %v4148
  %v4205 = vadd.f32 %v4099, %v4148
  %v4206 = vadd.f32 %v4100, %v4148
  %v4207 = vadd.f32 %v4101, %v4148
  %v4208 = vadd.f32 %v4102, %v4148
  %v4209 = vadd.f32 %v4103, %v4148
  %v4210 = vadd.f32 %v4104, %v4148
  %v4211 = vadd.f32 %v4105, %v4148
  %v4212 = vadd.f32 %v4106, %v4148
  %v4213 = vadd.f32 %v4107, %v4148
  %v4214 = vadd.f32 %v4108, %v4148
  %v4215 = vadd.f32 %v4109, %v4148
  %v4216 = vadd.f32 %v4110, %v4148
  %v4217 = vadd.f32 %v4111, %v4148
  %v4218 = vadd.f32 %v4112, %v4148
  %v4219 = vadd.f32 %v4113, %v4148
  %v4220 = vadd.f32 %v4114, %v4148
  %v4221 = vadd.f32 %v4115, %v4148
  %v4222 = vadd.f32 %v4116, %v4148
  %v4223 = vadd.f32 %v4117, %v4148
  %v4224 = vadd.f32 %v4118, %v4148
  %v4225 = vadd.f32 %v4119, %v4148
  %v4226 = vadd.f32 %v4120, %v4148
  %v4227 = vadd.f32 %v4121, %v4148
  %v4228 = vadd.f32 %v4122, %v4148
  %v4229 = vadd.f32 %v4123, %v4148
  %v4230 = vadd.f32 %v4124, %v4148
  %v4231 = vadd.f32 %v4125, %v4148
  %v4232 = vadd.f32 %v4126, %v4148
  %v4233 = vadd.f32 %v4127, %v4148
  %v4234 = vadd.f32 %v4128, %v4148
  %v4235 = vadd.f32 %v4129, %v4148
  %v4236 = vadd.f32 %v4130, %v4148
  %v4237 = vadd.f32 %v4131, %v4148
  %v4238 = vadd.f32 %v4132, %v4148
  %v4239 = vadd.f32 %v4133, %v4148
  %v4240 = vadd.f32 %v4134, %v4148
  %v4241 = vadd.f32 %v4135, %v4148
  %v4242 = vadd.f32 %v4136, %v4148
  %v4243 = vadd.f32 %v4137, %v4148
  %v4244 = vadd.f32 %v4138, %v4148
  %v4245 = vadd.f32 %v4139, %v4148
  %v4246 = vadd.f32 %v4140, %v4148
  %v4247 = vadd.f32 %v4141, %v4148
  %v4248 = vadd.f32 %v4142, %v4148
  %4249 = vst.msk [vmem:[%s3] sm:$0xff] %vm117, %v4150
  %4250 = vst.msk [vmem:[%s3 + $0x8] sm:$0xff] %vm117, %v4151
  %4251 = vst.msk [vmem:[%s3 + $0x10] sm:$0xff] %vm117, %v4152
  %4252 = vst.msk [vmem:[%s3 + $0x18] sm:$0xff] %vm117, %v4153
  %4253 = vst.msk [vmem:[%s3 + $0x20] sm:$0xff] %vm117, %v4154
  %4254 = vst.msk [vmem:[%s3 + $0x28] sm:$0xff] %vm117, %v4155
  %4255 = vst.msk [vmem:[%s3 + $0x30] sm:$0xff] %vm117, %v4156
  %4256 = vst.msk [vmem:[%s3 + $0x38] sm:$0xff] %vm117, %v4157
  %4257 = vst.msk [vmem:[%s3 + $0x40] sm:$0xff] %vm117, %v4158
  %4258 = vst.msk [vmem:[%s3 + $0x48] sm:$0xff] %vm117, %v4159
  %4259 = vst.msk [vmem:[%s3 + $0x50] sm:$0xff] %vm117, %v4160
  %4260 = vst.msk [vmem:[%s3 + $0x58] sm:$0xff] %vm117, %v4161
  %4261 = vst.msk [vmem:[%s3 + $0x60] sm:$0xff] %vm117, %v4162
  %4262 = vst.msk [vmem:[%s3 + $0x68] sm:$0xff] %vm117, %v4163
  %4263 = vst.msk [vmem:[%s3 + $0x70] sm:$0xff] %vm117, %v4164
  %4264 = vst.msk [vmem:[%s3 + $0x78] sm:$0xff] %vm117, %v4165
  %4265 = vst.msk [vmem:[%s3 + $0x80] sm:$0xff] %vm117, %v4166
  %4266 = vst.msk [vmem:[%s3 + $0x88] sm:$0xff] %vm117, %v4167
  %4267 = vst.msk [vmem:[%s3 + $0x90] sm:$0xff] %vm117, %v4168
  %4268 = vst.msk [vmem:[%s3 + $0x98] sm:$0xff] %vm117, %v4169
  %4269 = vst.msk [vmem:[%s3 + $0xa0] sm:$0xff] %vm117, %v4170
  %4270 = vst.msk [vmem:[%s3 + $0xa8] sm:$0xff] %vm117, %v4171
  %4271 = vst.msk [vmem:[%s3 + $0xb0] sm:$0xff] %vm117, %v4172
  %4272 = vst.msk [vmem:[%s3 + $0xb8] sm:$0xff] %vm117, %v4173
  %4273 = vst.msk [vmem:[%s3 + $0xc0] sm:$0xff] %vm117, %v4174
  %4274 = vst.msk [vmem:[%s3 + $0xc8] sm:$0xff] %vm117, %v4175
  %4275 = vst.msk [vmem:[%s3 + $0xd0] sm:$0xff] %vm117, %v4176
  %4276 = vst.msk [vmem:[%s3 + $0xd8] sm:$0xff] %vm117, %v4177
  %4277 = vst.msk [vmem:[%s3 + $0xe0] sm:$0xff] %vm117, %v4178
  %4278 = vst.msk [vmem:[%s3 + $0xe8] sm:$0xff] %vm117, %v4179
  %4279 = vst.msk [vmem:[%s3 + $0xf0] sm:$0xff] %vm117, %v4180
  %4280 = vst.msk [vmem:[%s3 + $0xf8] sm:$0xff] %vm117, %v4181
  %4281 = vst.msk [vmem:[%s3 + $0x100] sm:$0xff] %vm117, %v4182
  %4282 = vst.msk [vmem:[%s3 + $0x108] sm:$0xff] %vm117, %v4183
  %4283 = vst.msk [vmem:[%s3 + $0x110] sm:$0xff] %vm117, %v4184
  %4284 = vst.msk [vmem:[%s3 + $0x118] sm:$0xff] %vm117, %v4185
  %4285 = vst.msk [vmem:[%s3 + $0x120] sm:$0xff] %vm117, %v4186
  %4286 = vst.msk [vmem:[%s3 + $0x128] sm:$0xff] %vm117, %v4187
  %4287 = vst.msk [vmem:[%s3 + $0x130] sm:$0xff] %vm117, %v4188
  %4288 = vst.msk [vmem:[%s3 + $0x138] sm:$0xff] %vm117, %v4189
  %4289 = vst.msk [vmem:[%s3 + $0x140] sm:$0xff] %vm117, %v4190
  %4290 = vst.msk [vmem:[%s3 + $0x148] sm:$0xff] %vm117, %v4191
  %4291 = vst.msk [vmem:[%s3 + $0x150] sm:$0xff] %vm117, %v4192
  %4292 = vst.msk [vmem:[%s3 + $0x158] sm:$0xff] %vm117, %v4193
  %4293 = vst.msk [vmem:[%s3 + $0x160] sm:$0xff] %vm117, %v4194
  %4294 = vst.msk [vmem:[%s3 + $0x168] sm:$0xff] %vm117, %v4195
  %4295 = vst.msk [vmem:[%s3 + $0x170] sm:$0xff] %vm117, %v4196
  %4296 = vst.msk [vmem:[%s3 + $0x178] sm:$0xff] %vm117, %v4197
  %4297 = vst.msk [vmem:[%s3 + $0x180] sm:$0xff] %vm117, %v4198
  %4298 = vst.msk [vmem:[%s3 + $0x188] sm:$0xff] %vm117, %v4199
  %4299 = vst.msk [vmem:[%s3 + $0x190] sm:$0xff] %vm117, %v4200
  %4300 = vst.msk [vmem:[%s3 + $0x198] sm:$0xff] %vm117, %v4201
  %4301 = vst.msk [vmem:[%s3 + $0x1a0] sm:$0xff] %vm117, %v4202
  %4302 = vst.msk [vmem:[%s3 + $0x1a8] sm:$0xff] %vm117, %v4203
  %4303 = vst.msk [vmem:[%s3 + $0x1b0] sm:$0xff] %vm117, %v4204
  %4304 = vst.msk [vmem:[%s3 + $0x1b8] sm:$0xff] %vm117, %v4205
  %4305 = vst.msk [vmem:[%s3 + $0x1c0] sm:$0xff] %vm117, %v4206
  %4306 = vst.msk [vmem:[%s3 + $0x1c8] sm:$0xff] %vm117, %v4207
  %4307 = vst.msk [vmem:[%s3 + $0x1d0] sm:$0xff] %vm117, %v4208
  %4308 = vst.msk [vmem:[%s3 + $0x1d8] sm:$0xff] %vm117, %v4209
  %4309 = vst.msk [vmem:[%s3 + $0x1e0] sm:$0xff] %vm117, %v4210
  %4310 = vst.msk [vmem:[%s3 + $0x1e8] sm:$0xff] %vm117, %v4211
  %4311 = vst.msk [vmem:[%s3 + $0x1f0] sm:$0xff] %vm117, %v4212
  %4312 = vst.msk [vmem:[%s3 + $0x1f8] sm:$0xff] %vm117, %v4213
  %4313 = vst.msk [vmem:[%s3 + $0x200] sm:$0xff] %vm117, %v4214
  %4314 = vst.msk [vmem:[%s3 + $0x208] sm:$0xff] %vm117, %v4215
  %4315 = vst.msk [vmem:[%s3 + $0x210] sm:$0xff] %vm117, %v4216
  %4316 = vst.msk [vmem:[%s3 + $0x218] sm:$0xff] %vm117, %v4217
  %4317 = vst.msk [vmem:[%s3 + $0x220] sm:$0xff] %vm117, %v4218
  %4318 = vst.msk [vmem:[%s3 + $0x228] sm:$0xff] %vm117, %v4219
  %4319 = vst.msk [vmem:[%s3 + $0x230] sm:$0xff] %vm117, %v4220
  %4320 = vst.msk [vmem:[%s3 + $0x238] sm:$0xff] %vm117, %v4221
  %4321 = vst.msk [vmem:[%s3 + $0x240] sm:$0xff] %vm117, %v4222
  %4322 = vst.msk [vmem:[%s3 + $0x248] sm:$0xff] %vm117, %v4223
  %4323 = vst.msk [vmem:[%s3 + $0x250] sm:$0xff] %vm117, %v4224
  %4324 = vst.msk [vmem:[%s3 + $0x258] sm:$0xff] %vm117, %v4225
  %4325 = vst.msk [vmem:[%s3 + $0x260] sm:$0xff] %vm117, %v4226
  %4326 = vst.msk [vmem:[%s3 + $0x268] sm:$0xff] %vm117, %v4227
  %4327 = vst.msk [vmem:[%s3 + $0x270] sm:$0xff] %vm117, %v4228
  %4328 = vst.msk [vmem:[%s3 + $0x278] sm:$0xff] %vm117, %v4229
  %4329 = vst.msk [vmem:[%s3 + $0x280] sm:$0xff] %vm117, %v4230
  %4330 = vst.msk [vmem:[%s3 + $0x288] sm:$0xff] %vm117, %v4231
  %4331 = vst.msk [vmem:[%s3 + $0x290] sm:$0xff] %vm117, %v4232
  %4332 = vst.msk [vmem:[%s3 + $0x298] sm:$0xff] %vm117, %v4233
  %4333 = vst.msk [vmem:[%s3 + $0x2a0] sm:$0xff] %vm117, %v4234
  %4334 = vst.msk [vmem:[%s3 + $0x2a8] sm:$0xff] %vm117, %v4235
  %4335 = vst.msk [vmem:[%s3 + $0x2b0] sm:$0xff] %vm117, %v4236
  %4336 = vst.msk [vmem:[%s3 + $0x2b8] sm:$0xff] %vm117, %v4237
  %4337 = vst.msk [vmem:[%s3 + $0x2c0] sm:$0xff] %vm117, %v4238
  %4338 = vst.msk [vmem:[%s3 + $0x2c8] sm:$0xff] %vm117, %v4239
  %4339 = vst.msk [vmem:[%s3 + $0x2d0] sm:$0xff] %vm117, %v4240
  %4340 = vst.msk [vmem:[%s3 + $0x2d8] sm:$0xff] %vm117, %v4241
  %4341 = vst.msk [vmem:[%s3 + $0x2e0] sm:$0xff] %vm117, %v4242
  %4342 = vst.msk [vmem:[%s3 + $0x2e8] sm:$0xff] %vm117, %v4243
  %4343 = vst.msk [vmem:[%s3 + $0x2f0] sm:$0xff] %vm117, %v4244
  %4344 = vst.msk [vmem:[%s3 + $0x2f8] sm:$0xff] %vm117, %v4245
  %4345 = vst.msk [vmem:[%s3 + $0x300] sm:$0xff] %vm117, %v4246
  %4346 = vst.msk [vmem:[%s3 + $0x308] sm:$0xff] %vm117, %v4247
  %4347 = vst.msk [vmem:[%s3 + $0x310] sm:$0xff] %vm117, %v4248
  // Predicated region
  $region14: #{net_forward.3} parent=0 // pred_check
    _
  $region15: #{net_forward.3} parent=0 // pred_check_branch
    %4349 = sbr.rel (0) target = $region17
  $region16: #{net_forward.3} parent=0 // pred_region
    _
  $region17: #{net_forward.3} parent=0 // pred_fallthru
    _
  // Predicated region
  $region18: #{net_forward.3} parent=0 // pred_check
    _
  $region19: #{net_forward.3} parent=0 // pred_check_branch
    %4351 = sbr.rel (0) target = $region21
  $region20: #{net_forward.3} parent=0 // pred_region
    _
  $region21: #{net_forward.3} parent=0 // pred_fallthru
    _

// kernel: net_forward.4
$region0: #{net_forward.4}
  #allocation0 [shape = 'u32[]', space=smem, size = 0x4, offset = 0x4, fixed_abs, tag = 'smem constant byte address 0x4 - core index']
  #allocation1 [shape = 'u32[144,128]{1,0:T(1,128)}', space=vmem, size = 0x12000, scoped, tag = 'internal scratch']
  %s0 = inlined_call_operand.vmem [shape: f32[4,160,288], index: 0, kind: input, shape index: {}]
  %s1 = inlined_call_operand.vmem [shape: f32[288,64], index: 1, kind: input, shape index: {}]
  %s2 = inlined_call_operand.vmem [shape: f32[1,64], index: 2, kind: input, shape index: {}]
  %s3 = inlined_call_operand.vmem [shape: f32[160,64], index: 3, kind: output, shape index: {}]
  %s4 = sld [smem:[#allocation0]]
  $region22: #{net_forward.4} parent=0
    _
  %s6 = ssub.s32 1, %s4
  %s7 = scalar_select 0, %s6, %s4
  // Predicated region
  $region2: #{net_forward.4} parent=0 // pred_check
    _
  $region3: #{net_forward.4} parent=0 // pred_check_branch
    %9 = sbr.rel (0) target = $region5
  $region4: #{net_forward.4} parent=0 // pred_region
    _
  $region5: #{net_forward.4} parent=0 // pred_fallthru
    _
  // Predicated region
  $region6: #{net_forward.4} parent=0 // pred_check
    _
  $region7: #{net_forward.4} parent=0 // pred_check_branch
    %11 = sbr.rel (0) target = $region9
  $region8: #{net_forward.4} parent=0 // pred_region
    _
  $region9: #{net_forward.4} parent=0 // pred_fallthru
    _
  // Predicated region
  $region10: #{net_forward.4} parent=0 // pred_check
    _
  $region11: #{net_forward.4} parent=0 // pred_check_branch
    %13 = sbr.rel (0) target = $region13
  $region12: #{net_forward.4} parent=0 // pred_region
    _
  $region13: #{net_forward.4} parent=0 // pred_fallthru
    _
  %v14 = vld [vmem:[%s1] sm:$0xff]
  %v15 = vld [vmem:[%s1 + $0x8] sm:$0xff]
  %v16 = vld [vmem:[%s1 + $0x10] sm:$0xff]
  %v17 = vld [vmem:[%s1 + $0x18] sm:$0xff]
  %v18 = vld [vmem:[%s1 + $0x20] sm:$0xff]
  %v19 = vld [vmem:[%s1 + $0x28] sm:$0xff]
  %v20 = vld [vmem:[%s1 + $0x30] sm:$0xff]
  %v21 = vld [vmem:[%s1 + $0x38] sm:$0xff]
  %v22 = vld [vmem:[%s1 + $0x40] sm:$0xff]
  %v23 = vld [vmem:[%s1 + $0x48] sm:$0xff]
  %v24 = vld [vmem:[%s1 + $0x50] sm:$0xff]
  %v25 = vld [vmem:[%s1 + $0x58] sm:$0xff]
  %v26 = vld [vmem:[%s1 + $0x60] sm:$0xff]
  %v27 = vld [vmem:[%s1 + $0x68] sm:$0xff]
  %v28 = vld [vmem:[%s1 + $0x70] sm:$0xff]
  %v29 = vld [vmem:[%s1 + $0x78] sm:$0xff]
  %v30 = vld [vmem:[%s1 + $0x80] sm:$0xff]
  %v31 = vld [vmem:[%s1 + $0x88] sm:$0xff]
  %v32 = vld [vmem:[%s1 + $0x90] sm:$0xff]
  %v33 = vld [vmem:[%s1 + $0x98] sm:$0xff]
  %v34 = vld [vmem:[%s1 + $0xa0] sm:$0xff]
  %v35 = vld [vmem:[%s1 + $0xa8] sm:$0xff]
  %v36 = vld [vmem:[%s1 + $0xb0] sm:$0xff]
  %v37 = vld [vmem:[%s1 + $0xb8] sm:$0xff]
  %v38 = vld [vmem:[%s1 + $0xc0] sm:$0xff]
  %v39 = vld [vmem:[%s1 + $0xc8] sm:$0xff]
  %v40 = vld [vmem:[%s1 + $0xd0] sm:$0xff]
  %v41 = vld [vmem:[%s1 + $0xd8] sm:$0xff]
  %v42 = vld [vmem:[%s1 + $0xe0] sm:$0xff]
  %v43 = vld [vmem:[%s1 + $0xe8] sm:$0xff]
  %v44 = vld [vmem:[%s1 + $0xf0] sm:$0xff]
  %v45 = vld [vmem:[%s1 + $0xf8] sm:$0xff]
  %v46 = vld [vmem:[%s1 + $0x100] sm:$0xff]
  %v47 = vld [vmem:[%s1 + $0x108] sm:$0xff]
  %v48 = vld [vmem:[%s1 + $0x110] sm:$0xff]
  %v49 = vld [vmem:[%s1 + $0x118] sm:$0xff]
  %v50 = vld [vmem:[%s0] sm:$0xff]
  %v51 = vld [vmem:[%s0 + $0x8] sm:$0xff]
  %v52 = vld [vmem:[%s0 + $0x10] sm:$0xff]
  %v53 = vld [vmem:[%s0 + $0x18] sm:$0xff]
  %v54 = vld [vmem:[%s0 + $0x20] sm:$0xff]
  %v55 = vld [vmem:[%s0 + $0x28] sm:$0xff]
  %v56 = vld [vmem:[%s0 + $0x30] sm:$0xff]
  %v57 = vld [vmem:[%s0 + $0x38] sm:$0xff]
  %v58 = vld [vmem:[%s0 + $0x40] sm:$0xff]
  %v59 = vld [vmem:[%s0 + $0x48] sm:$0xff]
  %v60 = vld [vmem:[%s0 + $0x50] sm:$0xff]
  %v61 = vld [vmem:[%s0 + $0x58] sm:$0xff]
  %v62 = vld [vmem:[%s0 + $0x60] sm:$0xff]
  %v63 = vld [vmem:[%s0 + $0x68] sm:$0xff]
  %v64 = vld [vmem:[%s0 + $0x70] sm:$0xff]
  %v65 = vld [vmem:[%s0 + $0x78] sm:$0xff]
  %v66 = vld [vmem:[%s0 + $0x80] sm:$0xff]
  %v67 = vld [vmem:[%s0 + $0x88] sm:$0xff]
  %v68 = vld [vmem:[%s0 + $0x90] sm:$0xff]
  %v69 = vld [vmem:[%s0 + $0x98] sm:$0xff]
  %v70 = vld [vmem:[%s0 + $0xa0] sm:$0xff]
  %v71 = vld [vmem:[%s0 + $0xa8] sm:$0xff]
  %v72 = vld [vmem:[%s0 + $0xb0] sm:$0xff]
  %v73 = vld [vmem:[%s0 + $0xb8] sm:$0xff]
  %v74 = vld [vmem:[%s0 + $0xc0] sm:$0xff]
  %v75 = vld [vmem:[%s0 + $0xc8] sm:$0xff]
  %v76 = vld [vmem:[%s0 + $0xd0] sm:$0xff]
  %v77 = vld [vmem:[%s0 + $0xd8] sm:$0xff]
  %v78 = vld [vmem:[%s0 + $0xe0] sm:$0xff]
  %v79 = vld [vmem:[%s0 + $0xe8] sm:$0xff]
  %v80 = vld [vmem:[%s0 + $0xf0] sm:$0xff]
  %v81 = vld [vmem:[%s0 + $0xf8] sm:$0xff]
  %v82 = vld [vmem:[%s0 + $0x100] sm:$0xff]
  %v83 = vld [vmem:[%s0 + $0x108] sm:$0xff]
  %v84 = vld [vmem:[%s0 + $0x110] sm:$0xff]
  %v85 = vld [vmem:[%s0 + $0x118] sm:$0xff]
  %v86 = vld [vmem:[%s0 + $0x120] sm:$0xff]
  %v87 = vld [vmem:[%s0 + $0x128] sm:$0xff]
  %v88 = vld [vmem:[%s0 + $0x130] sm:$0xff]
  %v89 = vld [vmem:[%s0 + $0x138] sm:$0xff]
  %v90 = vld [vmem:[%s0 + $0x140] sm:$0xff]
  %v91 = vld [vmem:[%s0 + $0x148] sm:$0xff]
  %v92 = vld [vmem:[%s0 + $0x150] sm:$0xff]
  %v93 = vld [vmem:[%s0 + $0x158] sm:$0xff]
  %v94 = vld [vmem:[%s0 + $0x160] sm:$0xff]
  %v95 = vld [vmem:[%s0 + $0x168] sm:$0xff]
  %v96 = vld [vmem:[%s0 + $0x170] sm:$0xff]
  %v97 = vld [vmem:[%s0 + $0x178] sm:$0xff]
  %v98 = vld [vmem:[%s0 + $0x180] sm:$0xff]
  %v99 = vld [vmem:[%s0 + $0x188] sm:$0xff]
  %v100 = vld [vmem:[%s0 + $0x190] sm:$0xff]
  %v101 = vld [vmem:[%s0 + $0x198] sm:$0xff]
  %v102 = vld [vmem:[%s0 + $0x1a0] sm:$0xff]
  %v103 = vld [vmem:[%s0 + $0x1a8] sm:$0xff]
  %v104 = vld [vmem:[%s0 + $0x1b0] sm:$0xff]
  %v105 = vld [vmem:[%s0 + $0x1b8] sm:$0xff]
  %v106 = vld [vmem:[%s0 + $0x1c0] sm:$0xff]
  %v107 = vld [vmem:[%s0 + $0x1c8] sm:$0xff]
  %v108 = vld [vmem:[%s0 + $0x1d0] sm:$0xff]
  %v109 = vld [vmem:[%s0 + $0x1d8] sm:$0xff]
  %vm110 = vcmask 261120
  %v112 = vsel %vm110, %v52, 0
  %v115 = vsel %vm110, %v55, 0
  %v118 = vsel %vm110, %v58, 0
  %v121 = vsel %vm110, %v61, 0
  %v124 = vsel %vm110, %v64, 0
  %v127 = vsel %vm110, %v67, 0
  %v130 = vsel %vm110, %v70, 0
  %v133 = vsel %vm110, %v73, 0
  %v136 = vsel %vm110, %v76, 0
  %v139 = vsel %vm110, %v79, 0
  %v142 = vsel %vm110, %v82, 0
  %v145 = vsel %vm110, %v85, 0
  %v148 = vsel %vm110, %v88, 0
  %v151 = vsel %vm110, %v91, 0
  %v154 = vsel %vm110, %v94, 0
  %v157 = vsel %vm110, %v97, 0
  %v160 = vsel %vm110, %v100, 0
  %v163 = vsel %vm110, %v103, 0
  %v166 = vsel %vm110, %v106, 0
  %v169 = vsel %vm110, %v109, 0
  %171 = vmatprep.subr.mxu0 0.0
  %172 = vmatpush1.msra.mxu0 %v14
  %173 = vmatprep.subr.mxu0 0.0
  %174 = vmatpush1.msra.mxu0 %v15
  %175 = vmatprep.subr.mxu0 0.0
  %176 = vmatpush1.msra.mxu0 %v16
  %177 = vmatprep.subr.mxu0 0.0
  %178 = vmatpush1.msra.mxu0 %v17
  %179 = vmatprep.subr.mxu0 0.0
  %180 = vmatpush1.msra.mxu0 %v18
  %181 = vmatprep.subr.mxu0 0.0
  %182 = vmatpush1.msra.mxu0 %v19
  %183 = vmatprep.subr.mxu0 0.0
  %184 = vmatpush1.msra.mxu0 %v20
  %185 = vmatprep.subr.mxu0 0.0
  %186 = vmatpush1.msra.mxu0 %v21
  %187 = vmatprep.subr.mxu0 0.0
  %188 = vmatpush1.msra.mxu0 %v22
  %189 = vmatprep.subr.mxu0 0.0
  %190 = vmatpush1.msra.mxu0 %v23
  %191 = vmatprep.subr.mxu0 0.0
  %192 = vmatpush1.msra.mxu0 %v24
  %193 = vmatprep.subr.mxu0 0.0
  %194 = vmatpush1.msra.mxu0 %v25
  %195 = vmatprep.subr.mxu0 0.0
  %196 = vmatpush1.msra.mxu0 %v26
  %197 = vmatprep.subr.mxu0 0.0
  %198 = vmatpush1.msra.mxu0 %v27
  %199 = vmatprep.subr.mxu0 0.0
  %200 = vmatpush1.msra.mxu0 %v28
  %201 = vmatprep.subr.mxu0 0.0
  %202 = vmatpush1.msra.mxu0 %v29
  %203 = vmatprep.subr.mxu0 0.0
  %204 = vmatpush1.msra.mxu0 %v30
  %205 = vmatprep.subr.mxu0 0.0
  %206 = vmatpush1.msra.mxu0 %v31
  %207 = vmatprep.subr.mxu0 0.0
  %208 = vmatpush1.msra.mxu0 %v32
  %209 = vmatprep.subr.mxu0 0.0
  %210 = vmatpush1.msra.mxu0 %v33
  %211 = vmatprep.subr.mxu0 0.0
  %212 = vmatpush1.msra.mxu0 %v34
  %213 = vmatprep.subr.mxu0 0.0
  %214 = vmatpush1.msra.mxu0 %v35
  %215 = vmatprep.subr.mxu0 0.0
  %216 = vmatpush1.msra.mxu0 %v36
  %217 = vmatprep.subr.mxu0 0.0
  %218 = vmatpush1.msra.mxu0 %v37
  %219 = vmatprep.subr.mxu0 0.0
  %220 = vmatpush1.msra.mxu0 %v38
  %221 = vmatprep.subr.mxu0 0.0
  %222 = vmatpush1.msra.mxu0 %v39
  %223 = vmatprep.subr.mxu0 0.0
  %224 = vmatpush1.msra.mxu0 %v40
  %225 = vmatprep.subr.mxu0 0.0
  %226 = vmatpush1.msra.mxu0 %v41
  %227 = vmatprep.subr.mxu0 0.0
  %228 = vmatpush1.msra.mxu0 %v42
  %229 = vmatprep.subr.mxu0 0.0
  %230 = vmatpush1.msra.mxu0 %v43
  %231 = vmatprep.subr.mxu0 0.0
  %232 = vmatpush1.msra.mxu0 %v44
  %233 = vmatprep.subr.mxu0 0.0
  %234 = vmatpush1.msra.mxu0 %v45
  %235 = vmatprep.mubr.f32.mxu0 %v51
  %236 = vmatmul.mubr.f32.gmra.mrb[0].mxu0 %v50
  %v237 = vpop.f32.mrb[0].mxu0
  %v238 = vadd.f32 0.0, %v237
  %v239 = vpop.f32.mrb[0].mxu0
  %240 = vmatprep.mubr.f32.mxu0 %v54
  %241 = vmatmul.mubr.f32.gmra.mrb[0].mxu0 %v53
  %v242 = vpop.f32.mrb[0].mxu0
  %v243 = vadd.f32 0.0, %v242
  %v244 = vpop.f32.mrb[0].mxu0
  %245 = vmatprep.mubr.f32.mxu0 %v57
  %246 = vmatmul.mubr.f32.gmra.mrb[0].mxu0 %v56
  %v247 = vpop.f32.mrb[0].mxu0
  %v248 = vadd.f32 0.0, %v247
  %v249 = vpop.f32.mrb[0].mxu0
  %250 = vmatprep.mubr.f32.mxu0 %v60
  %251 = vmatmul.mubr.f32.gmra.mrb[0].mxu0 %v59
  %v252 = vpop.f32.mrb[0].mxu0
  %v253 = vadd.f32 0.0, %v252
  %v254 = vpop.f32.mrb[0].mxu0
  %255 = vmatprep.mubr.f32.mxu0 %v63
  %256 = vmatmul.mubr.f32.gmra.mrb[0].mxu0 %v62
  %v257 = vpop.f32.mrb[0].mxu0
  %v258 = vadd.f32 0.0, %v257
  %v259 = vpop.f32.mrb[0].mxu0
  %260 = vmatprep.mubr.f32.mxu0 %v66
  %261 = vmatmul.mubr.f32.gmra.mrb[0].mxu0 %v65
  %v262 = vpop.f32.mrb[0].mxu0
  %v263 = vadd.f32 0.0, %v262
  %v264 = vpop.f32.mrb[0].mxu0
  %265 = vmatprep.mubr.f32.mxu0 %v69
  %266 = vmatmul.mubr.f32.gmra.mrb[0].mxu0 %v68
  %v267 = vpop.f32.mrb[0].mxu0
  %v268 = vadd.f32 0.0, %v267
  %v269 = vpop.f32.mrb[0].mxu0
  %270 = vmatprep.mubr.f32.mxu0 %v72
  %271 = vmatmul.mubr.f32.gmra.mrb[0].mxu0 %v71
  %v272 = vpop.f32.mrb[0].mxu0
  %v273 = vadd.f32 0.0, %v272
  %v274 = vpop.f32.mrb[0].mxu0
  %275 = vmatprep.mubr.f32.mxu0 %v75
  %276 = vmatmul.mubr.f32.gmra.mrb[0].mxu0 %v74
  %v277 = vpop.f32.mrb[0].mxu0
  %v278 = vadd.f32 0.0, %v277
  %v279 = vpop.f32.mrb[0].mxu0
  %280 = vmatprep.mubr.f32.mxu0 %v78
  %281 = vmatmul.mubr.f32.gmra.mrb[0].mxu0 %v77
  %v282 = vpop.f32.mrb[0].mxu0
  %v283 = vadd.f32 0.0, %v282
  %v284 = vpop.f32.mrb[0].mxu0
  %285 = vmatprep.mubr.f32.mxu0 %v81
  %286 = vmatmul.mubr.f32.gmra.mrb[0].mxu0 %v80
  %v287 = vpop.f32.mrb[0].mxu0
  %v288 = vadd.f32 0.0, %v287
  %v289 = vpop.f32.mrb[0].mxu0
  %290 = vmatprep.mubr.f32.mxu0 %v84
  %291 = vmatmul.mubr.f32.gmra.mrb[0].mxu0 %v83
  %v292 = vpop.f32.mrb[0].mxu0
  %v293 = vadd.f32 0.0, %v292
  %v294 = vpop.f32.mrb[0].mxu0
  %295 = vmatprep.mubr.f32.mxu0 %v87
  %296 = vmatmul.mubr.f32.gmra.mrb[0].mxu0 %v86
  %v297 = vpop.f32.mrb[0].mxu0
  %v298 = vadd.f32 0.0, %v297
  %v299 = vpop.f32.mrb[0].mxu0
  %300 = vmatprep.mubr.f32.mxu0 %v90
  %301 = vmatmul.mubr.f32.gmra.mrb[0].mxu0 %v89
  %v302 = vpop.f32.mrb[0].mxu0
  %v303 = vadd.f32 0.0, %v302
  %v304 = vpop.f32.mrb[0].mxu0
  %305 = vmatprep.mubr.f32.mxu0 %v93
  %306 = vmatmul.mubr.f32.gmra.mrb[0].mxu0 %v92
  %v307 = vpop.f32.mrb[0].mxu0
  %v308 = vadd.f32 0.0, %v307
  %v309 = vpop.f32.mrb[0].mxu0
  %310 = vmatprep.mubr.f32.mxu0 %v96
  %311 = vmatmul.mubr.f32.gmra.mrb[0].mxu0 %v95
  %v312 = vpop.f32.mrb[0].mxu0
  %v313 = vadd.f32 0.0, %v312
  %v314 = vpop.f32.mrb[0].mxu0
  %315 = vmatprep.mubr.f32.mxu0 %v99
  %316 = vmatmul.mubr.f32.gmra.mrb[0].mxu0 %v98
  %v317 = vpop.f32.mrb[0].mxu0
  %v318 = vadd.f32 0.0, %v317
  %v319 = vpop.f32.mrb[0].mxu0
  %320 = vmatprep.mubr.f32.mxu0 %v102
  %321 = vmatmul.mubr.f32.gmra.mrb[0].mxu0 %v101
  %v322 = vpop.f32.mrb[0].mxu0
  %v323 = vadd.f32 0.0, %v322
  %v324 = vpop.f32.mrb[0].mxu0
  %325 = vmatprep.mubr.f32.mxu0 %v105
  %326 = vmatmul.mubr.f32.gmra.mrb[0].mxu0 %v104
  %v327 = vpop.f32.mrb[0].mxu0
  %v328 = vadd.f32 0.0, %v327
  %v329 = vpop.f32.mrb[0].mxu0
  %330 = vmatprep.mubr.f32.mxu0 %v108
  %331 = vmatmul.mubr.f32.gmra.mrb[0].mxu0 %v107
  %v332 = vpop.f32.mrb[0].mxu0
  %v333 = vadd.f32 0.0, %v332
  %v334 = vpop.f32.mrb[0].mxu0
  %335 = vdwg.mxu0
  %336 = vmatprep.subr.mxu0 0.0
  %337 = vmatpush1.msra.mxu0 %v46
  %338 = vmatprep.subr.mxu0 0.0
  %339 = vmatpush1.msra.mxu0 %v47
  %340 = vmatprep.subr.mxu0 0.0
  %341 = vmatpush1.msra.mxu0 %v48
  %342 = vmatprep.subr.mxu0 0.0
  %343 = vmatpush1.msra.mxu0 %v49
  %344 = vmatprep.subr.mxu0 0.0
  %345 = vmatpush1.msra.mxu0 0.0
  %346 = vmatprep.subr.mxu0 0.0
  %347 = vmatpush1.msra.mxu0 0.0
  %348 = vmatprep.subr.mxu0 0.0
  %349 = vmatpush1.msra.mxu0 0.0
  %350 = vmatprep.subr.mxu0 0.0
  %351 = vmatpush1.msra.mxu0 0.0
  %352 = vmatprep.subr.mxu0 0.0
  %353 = vmatpush1.msra.mxu0 0.0
  %354 = vmatprep.subr.mxu0 0.0
  %355 = vmatpush1.msra.mxu0 0.0
  %356 = vmatprep.subr.mxu0 0.0
  %357 = vmatpush1.msra.mxu0 0.0
  %358 = vmatprep.subr.mxu0 0.0
  %359 = vmatpush1.msra.mxu0 0.0
  %360 = vmatprep.subr.mxu0 0.0
  %361 = vmatpush1.msra.mxu0 0.0
  %362 = vmatprep.subr.mxu0 0.0
  %363 = vmatpush1.msra.mxu0 0.0
  %364 = vmatprep.subr.mxu0 0.0
  %365 = vmatpush1.msra.mxu0 0.0
  %366 = vmatprep.subr.mxu0 0.0
  %367 = vmatpush1.msra.mxu0 0.0
  %368 = vmatprep.subr.mxu0 0.0
  %369 = vmatpush1.msra.mxu0 0.0
  %370 = vmatprep.subr.mxu0 0.0
  %371 = vmatpush1.msra.mxu0 0.0
  %372 = vmatprep.subr.mxu0 0.0
  %373 = vmatpush1.msra.mxu0 0.0
  %374 = vmatprep.subr.mxu0 0.0
  %375 = vmatpush1.msra.mxu0 0.0
  %376 = vmatprep.subr.mxu0 0.0
  %377 = vmatpush1.msra.mxu0 0.0
  %378 = vmatprep.subr.mxu0 0.0
  %379 = vmatpush1.msra.mxu0 0.0
  %380 = vmatprep.subr.mxu0 0.0
  %381 = vmatpush1.msra.mxu0 0.0
  %382 = vmatprep.subr.mxu0 0.0
  %383 = vmatpush1.msra.mxu0 0.0
  %384 = vmatprep.subr.mxu0 0.0
  %385 = vmatpush1.msra.mxu0 0.0
  %386 = vmatprep.subr.mxu0 0.0
  %387 = vmatpush1.msra.mxu0 0.0
  %388 = vmatprep.subr.mxu0 0.0
  %389 = vmatpush1.msra.mxu0 0.0
  %390 = vmatprep.subr.mxu0 0.0
  %391 = vmatpush1.msra.mxu0 0.0
  %392 = vmatprep.subr.mxu0 0.0
  %393 = vmatpush1.msra.mxu0 0.0
  %394 = vmatprep.subr.mxu0 0.0
  %395 = vmatpush1.msra.mxu0 0.0
  %396 = vmatprep.subr.mxu0 0.0
  %397 = vmatpush1.msra.mxu0 0.0
  %398 = vmatprep.subr.mxu0 0.0
  %399 = vmatpush1.msra.mxu0 0.0
  %400 = vmatprep.mubr.f32.mxu0 0.0
  %401 = vmatmul.mubr.f32.gmra.mrb[0].mxu0 %v112
  %v402 = vpop.f32.mrb[0].mxu0
  %v403 = vadd.f32 %v238, %v402
  %v404 = vpop.f32.mrb[0].mxu0
  %405 = vmatprep.mubr.f32.mxu0 0.0
  %406 = vmatmul.mubr.f32.gmra.mrb[0].mxu0 %v115
  %v407 = vpop.f32.mrb[0].mxu0
  %v408 = vadd.f32 %v243, %v407
  %v409 = vpop.f32.mrb[0].mxu0
  %410 = vmatprep.mubr.f32.mxu0 0.0
  %411 = vmatmul.mubr.f32.gmra.mrb[0].mxu0 %v118
  %v412 = vpop.f32.mrb[0].mxu0
  %v413 = vadd.f32 %v248, %v412
  %v414 = vpop.f32.mrb[0].mxu0
  %415 = vmatprep.mubr.f32.mxu0 0.0
  %416 = vmatmul.mubr.f32.gmra.mrb[0].mxu0 %v121
  %v417 = vpop.f32.mrb[0].mxu0
  %v418 = vadd.f32 %v253, %v417
  %v419 = vpop.f32.mrb[0].mxu0
  %420 = vmatprep.mubr.f32.mxu0 0.0
  %421 = vmatmul.mubr.f32.gmra.mrb[0].mxu0 %v124
  %v422 = vpop.f32.mrb[0].mxu0
  %v423 = vadd.f32 %v258, %v422
  %v424 = vpop.f32.mrb[0].mxu0
  %425 = vmatprep.mubr.f32.mxu0 0.0
  %426 = vmatmul.mubr.f32.gmra.mrb[0].mxu0 %v127
  %v427 = vpop.f32.mrb[0].mxu0
  %v428 = vadd.f32 %v263, %v427
  %v429 = vpop.f32.mrb[0].mxu0
  %430 = vmatprep.mubr.f32.mxu0 0.0
  %431 = vmatmul.mubr.f32.gmra.mrb[0].mxu0 %v130
  %v432 = vpop.f32.mrb[0].mxu0
  %v433 = vadd.f32 %v268, %v432
  %v434 = vpop.f32.mrb[0].mxu0
  %435 = vmatprep.mubr.f32.mxu0 0.0
  %436 = vmatmul.mubr.f32.gmra.mrb[0].mxu0 %v133
  %v437 = vpop.f32.mrb[0].mxu0
  %v438 = vadd.f32 %v273, %v437
  %v439 = vpop.f32.mrb[0].mxu0
  %440 = vmatprep.mubr.f32.mxu0 0.0
  %441 = vmatmul.mubr.f32.gmra.mrb[0].mxu0 %v136
  %v442 = vpop.f32.mrb[0].mxu0
  %v443 = vadd.f32 %v278, %v442
  %v444 = vpop.f32.mrb[0].mxu0
  %445 = vmatprep.mubr.f32.mxu0 0.0
  %446 = vmatmul.mubr.f32.gmra.mrb[0].mxu0 %v139
  %v447 = vpop.f32.mrb[0].mxu0
  %v448 = vadd.f32 %v283, %v447
  %v449 = vpop.f32.mrb[0].mxu0
  %450 = vmatprep.mubr.f32.mxu0 0.0
  %451 = vmatmul.mubr.f32.gmra.mrb[0].mxu0 %v142
  %v452 = vpop.f32.mrb[0].mxu0
  %v453 = vadd.f32 %v288, %v452
  %v454 = vpop.f32.mrb[0].mxu0
  %455 = vmatprep.mubr.f32.mxu0 0.0
  %456 = vmatmul.mubr.f32.gmra.mrb[0].mxu0 %v145
  %v457 = vpop.f32.mrb[0].mxu0
  %v458 = vadd.f32 %v293, %v457
  %v459 = vpop.f32.mrb[0].mxu0
  %460 = vmatprep.mubr.f32.mxu0 0.0
  %461 = vmatmul.mubr.f32.gmra.mrb[0].mxu0 %v148
  %v462 = vpop.f32.mrb[0].mxu0
  %v463 = vadd.f32 %v298, %v462
  %v464 = vpop.f32.mrb[0].mxu0
  %465 = vmatprep.mubr.f32.mxu0 0.0
  %466 = vmatmul.mubr.f32.gmra.mrb[0].mxu0 %v151
  %v467 = vpop.f32.mrb[0].mxu0
  %v468 = vadd.f32 %v303, %v467
  %v469 = vpop.f32.mrb[0].mxu0
  %470 = vmatprep.mubr.f32.mxu0 0.0
  %471 = vmatmul.mubr.f32.gmra.mrb[0].mxu0 %v154
  %v472 = vpop.f32.mrb[0].mxu0
  %v473 = vadd.f32 %v308, %v472
  %v474 = vpop.f32.mrb[0].mxu0
  %475 = vmatprep.mubr.f32.mxu0 0.0
  %476 = vmatmul.mubr.f32.gmra.mrb[0].mxu0 %v157
  %v477 = vpop.f32.mrb[0].mxu0
  %v478 = vadd.f32 %v313, %v477
  %v479 = vpop.f32.mrb[0].mxu0
  %480 = vmatprep.mubr.f32.mxu0 0.0
  %481 = vmatmul.mubr.f32.gmra.mrb[0].mxu0 %v160
  %v482 = vpop.f32.mrb[0].mxu0
  %v483 = vadd.f32 %v318, %v482
  %v484 = vpop.f32.mrb[0].mxu0
  %485 = vmatprep.mubr.f32.mxu0 0.0
  %486 = vmatmul.mubr.f32.gmra.mrb[0].mxu0 %v163
  %v487 = vpop.f32.mrb[0].mxu0
  %v488 = vadd.f32 %v323, %v487
  %v489 = vpop.f32.mrb[0].mxu0
  %490 = vmatprep.mubr.f32.mxu0 0.0
  %491 = vmatmul.mubr.f32.gmra.mrb[0].mxu0 %v166
  %v492 = vpop.f32.mrb[0].mxu0
  %v493 = vadd.f32 %v328, %v492
  %v494 = vpop.f32.mrb[0].mxu0
  %495 = vmatprep.mubr.f32.mxu0 0.0
  %496 = vmatmul.mubr.f32.gmra.mrb[0].mxu0 %v169
  %v497 = vpop.f32.mrb[0].mxu0
  %v498 = vadd.f32 %v333, %v497
  %v499 = vpop.f32.mrb[0].mxu0
  %500 = vdwg.mxu0
  %s501 = scalar_lea.vmem %s0, 480
  %v502 = vld [vmem:[%s501] sm:$0xff]
  %v503 = vld [vmem:[%s501 + $0x8] sm:$0xff]
  %v504 = vld [vmem:[%s501 + $0x10] sm:$0xff]
  %v505 = vld [vmem:[%s501 + $0x18] sm:$0xff]
  %v506 = vld [vmem:[%s501 + $0x20] sm:$0xff]
  %v507 = vld [vmem:[%s501 + $0x28] sm:$0xff]
  %v508 = vld [vmem:[%s501 + $0x30] sm:$0xff]
  %v509 = vld [vmem:[%s501 + $0x38] sm:$0xff]
  %v510 = vld [vmem:[%s501 + $0x40] sm:$0xff]
  %v511 = vld [vmem:[%s501 + $0x48] sm:$0xff]
  %v512 = vld [vmem:[%s501 + $0x50] sm:$0xff]
  %v513 = vld [vmem:[%s501 + $0x58] sm:$0xff]
  %v514 = vld [vmem:[%s501 + $0x60] sm:$0xff]
  %v515 = vld [vmem:[%s501 + $0x68] sm:$0xff]
  %v516 = vld [vmem:[%s501 + $0x70] sm:$0xff]
  %v517 = vld [vmem:[%s501 + $0x78] sm:$0xff]
  %v518 = vld [vmem:[%s501 + $0x80] sm:$0xff]
  %v519 = vld [vmem:[%s501 + $0x88] sm:$0xff]
  %v520 = vld [vmem:[%s501 + $0x90] sm:$0xff]
  %v521 = vld [vmem:[%s501 + $0x98] sm:$0xff]
  %v522 = vld [vmem:[%s501 + $0xa0] sm:$0xff]
  %v523 = vld [vmem:[%s501 + $0xa8] sm:$0xff]
  %v524 = vld [vmem:[%s501 + $0xb0] sm:$0xff]
  %v525 = vld [vmem:[%s501 + $0xb8] sm:$0xff]
  %v526 = vld [vmem:[%s501 + $0xc0] sm:$0xff]
  %v527 = vld [vmem:[%s501 + $0xc8] sm:$0xff]
  %v528 = vld [vmem:[%s501 + $0xd0] sm:$0xff]
  %v529 = vld [vmem:[%s501 + $0xd8] sm:$0xff]
  %v530 = vld [vmem:[%s501 + $0xe0] sm:$0xff]
  %v531 = vld [vmem:[%s501 + $0xe8] sm:$0xff]
  %v532 = vld [vmem:[%s501 + $0xf0] sm:$0xff]
  %v533 = vld [vmem:[%s501 + $0xf8] sm:$0xff]
  %v534 = vld [vmem:[%s501 + $0x100] sm:$0xff]
  %v535 = vld [vmem:[%s501 + $0x108] sm:$0xff]
  %v536 = vld [vmem:[%s501 + $0x110] sm:$0xff]
  %v537 = vld [vmem:[%s501 + $0x118] sm:$0xff]
  %v538 = vld [vmem:[%s501 + $0x120] sm:$0xff]
  %v539 = vld [vmem:[%s501 + $0x128] sm:$0xff]
  %v540 = vld [vmem:[%s501 + $0x130] sm:$0xff]
  %v541 = vld [vmem:[%s501 + $0x138] sm:$0xff]
  %v542 = vld [vmem:[%s501 + $0x140] sm:$0xff]
  %v543 = vld [vmem:[%s501 + $0x148] sm:$0xff]
  %v544 = vld [vmem:[%s501 + $0x150] sm:$0xff]
  %v545 = vld [vmem:[%s501 + $0x158] sm:$0xff]
  %v546 = vld [vmem:[%s501 + $0x160] sm:$0xff]
  %v547 = vld [vmem:[%s501 + $0x168] sm:$0xff]
  %v548 = vld [vmem:[%s501 + $0x170] sm:$0xff]
  %v549 = vld [vmem:[%s501 + $0x178] sm:$0xff]
  %v550 = vld [vmem:[%s501 + $0x180] sm:$0xff]
  %v551 = vld [vmem:[%s501 + $0x188] sm:$0xff]
  %v552 = vld [vmem:[%s501 + $0x190] sm:$0xff]
  %v553 = vld [vmem:[%s501 + $0x198] sm:$0xff]
  %v554 = vld [vmem:[%s501 + $0x1a0] sm:$0xff]
  %v555 = vld [vmem:[%s501 + $0x1a8] sm:$0xff]
  %v556 = vld [vmem:[%s501 + $0x1b0] sm:$0xff]
  %v557 = vld [vmem:[%s501 + $0x1b8] sm:$0xff]
  %v558 = vld [vmem:[%s501 + $0x1c0] sm:$0xff]
  %v559 = vld [vmem:[%s501 + $0x1c8] sm:$0xff]
  %v560 = vld [vmem:[%s501 + $0x1d0] sm:$0xff]
  %v561 = vld [vmem:[%s501 + $0x1d8] sm:$0xff]
  %v563 = vsel %vm110, %v504, 0
  %v566 = vsel %vm110, %v507, 0
  %v569 = vsel %vm110, %v510, 0
  %v572 = vsel %vm110, %v513, 0
  %v575 = vsel %vm110, %v516, 0
  %v578 = vsel %vm110, %v519, 0
  %v581 = vsel %vm110, %v522, 0
  %v584 = vsel %vm110, %v525, 0
  %v587 = vsel %vm110, %v528, 0
  %v590 = vsel %vm110, %v531, 0
  %v593 = vsel %vm110, %v534, 0
  %v596 = vsel %vm110, %v537, 0
  %v599 = vsel %vm110, %v540, 0
  %v602 = vsel %vm110, %v543, 0
  %v605 = vsel %vm110, %v546, 0
  %v608 = vsel %vm110, %v549, 0
  %v611 = vsel %vm110, %v552, 0
  %v614 = vsel %vm110, %v555, 0
  %v617 = vsel %vm110, %v558, 0
  %v620 = vsel %vm110, %v561, 0
  %622 = vmatprep.subr.mxu0 0.0
  %623 = vmatpush1.msra.mxu0 %v14
  %624 = vmatprep.subr.mxu0 0.0
  %625 = vmatpush1.msra.mxu0 %v15
  %626 = vmatprep.subr.mxu0 0.0
  %627 = vmatpush1.msra.mxu0 %v16
  %628 = vmatprep.subr.mxu0 0.0
  %629 = vmatpush1.msra.mxu0 %v17
  %630 = vmatprep.subr.mxu0 0.0
  %631 = vmatpush1.msra.mxu0 %v18
  %632 = vmatprep.subr.mxu0 0.0
  %633 = vmatpush1.msra.mxu0 %v19
  %634 = vmatprep.subr.mxu0 0.0
  %635 = vmatpush1.msra.mxu0 %v20
  %636 = vmatprep.subr.mxu0 0.0
  %637 = vmatpush1.msra.mxu0 %v21
  %638 = vmatprep.subr.mxu0 0.0
  %639 = vmatpush1.msra.mxu0 %v22
  %640 = vmatprep.subr.mxu0 0.0
  %641 = vmatpush1.msra.mxu0 %v23
  %642 = vmatprep.subr.mxu0 0.0
  %643 = vmatpush1.msra.mxu0 %v24
  %644 = vmatprep.subr.mxu0 0.0
  %645 = vmatpush1.msra.mxu0 %v25
  %646 = vmatprep.subr.mxu0 0.0
  %647 = vmatpush1.msra.mxu0 %v26
  %648 = vmatprep.subr.mxu0 0.0
  %649 = vmatpush1.msra.mxu0 %v27
  %650 = vmatprep.subr.mxu0 0.0
  %651 = vmatpush1.msra.mxu0 %v28
  %652 = vmatprep.subr.mxu0 0.0
  %653 = vmatpush1.msra.mxu0 %v29
  %654 = vmatprep.subr.mxu0 0.0
  %655 = vmatpush1.msra.mxu0 %v30
  %656 = vmatprep.subr.mxu0 0.0
  %657 = vmatpush1.msra.mxu0 %v31
  %658 = vmatprep.subr.mxu0 0.0
  %659 = vmatpush1.msra.mxu0 %v32
  %660 = vmatprep.subr.mxu0 0.0
  %661 = vmatpush1.msra.mxu0 %v33
  %662 = vmatprep.subr.mxu0 0.0
  %663 = vmatpush1.msra.mxu0 %v34
  %664 = vmatprep.subr.mxu0 0.0
  %665 = vmatpush1.msra.mxu0 %v35
  %666 = vmatprep.subr.mxu0 0.0
  %667 = vmatpush1.msra.mxu0 %v36
  %668 = vmatprep.subr.mxu0 0.0
  %669 = vmatpush1.msra.mxu0 %v37
  %670 = vmatprep.subr.mxu0 0.0
  %671 = vmatpush1.msra.mxu0 %v38
  %672 = vmatprep.subr.mxu0 0.0
  %673 = vmatpush1.msra.mxu0 %v39
  %674 = vmatprep.subr.mxu0 0.0
  %675 = vmatpush1.msra.mxu0 %v40
  %676 = vmatprep.subr.mxu0 0.0
  %677 = vmatpush1.msra.mxu0 %v41
  %678 = vmatprep.subr.mxu0 0.0
  %679 = vmatpush1.msra.mxu0 %v42
  %680 = vmatprep.subr.mxu0 0.0
  %681 = vmatpush1.msra.mxu0 %v43
  %682 = vmatprep.subr.mxu0 0.0
  %683 = vmatpush1.msra.mxu0 %v44
  %684 = vmatprep.subr.mxu0 0.0
  %685 = vmatpush1.msra.mxu0 %v45
  %686 = vmatprep.mubr.f32.mxu0 %v503
  %687 = vmatmul.mubr.f32.gmra.mrb[0].mxu0 %v502
  %v688 = vpop.f32.mrb[0].mxu0
  %v689 = vadd.f32 0.0, %v688
  %v690 = vpop.f32.mrb[0].mxu0
  %691 = vmatprep.mubr.f32.mxu0 %v506
  %692 = vmatmul.mubr.f32.gmra.mrb[0].mxu0 %v505
  %v693 = vpop.f32.mrb[0].mxu0
  %v694 = vadd.f32 0.0, %v693
  %v695 = vpop.f32.mrb[0].mxu0
  %696 = vmatprep.mubr.f32.mxu0 %v509
  %697 = vmatmul.mubr.f32.gmra.mrb[0].mxu0 %v508
  %v698 = vpop.f32.mrb[0].mxu0
  %v699 = vadd.f32 0.0, %v698
  %v700 = vpop.f32.mrb[0].mxu0
  %701 = vmatprep.mubr.f32.mxu0 %v512
  %702 = vmatmul.mubr.f32.gmra.mrb[0].mxu0 %v511
  %v703 = vpop.f32.mrb[0].mxu0
  %v704 = vadd.f32 0.0, %v703
  %v705 = vpop.f32.mrb[0].mxu0
  %706 = vmatprep.mubr.f32.mxu0 %v515
  %707 = vmatmul.mubr.f32.gmra.mrb[0].mxu0 %v514
  %v708 = vpop.f32.mrb[0].mxu0
  %v709 = vadd.f32 0.0, %v708
  %v710 = vpop.f32.mrb[0].mxu0
  %711 = vmatprep.mubr.f32.mxu0 %v518
  %712 = vmatmul.mubr.f32.gmra.mrb[0].mxu0 %v517
  %v713 = vpop.f32.mrb[0].mxu0
  %v714 = vadd.f32 0.0, %v713
  %v715 = vpop.f32.mrb[0].mxu0
  %716 = vmatprep.mubr.f32.mxu0 %v521
  %717 = vmatmul.mubr.f32.gmra.mrb[0].mxu0 %v520
  %v718 = vpop.f32.mrb[0].mxu0
  %v719 = vadd.f32 0.0, %v718
  %v720 = vpop.f32.mrb[0].mxu0
  %721 = vmatprep.mubr.f32.mxu0 %v524
  %722 = vmatmul.mubr.f32.gmra.mrb[0].mxu0 %v523
  %v723 = vpop.f32.mrb[0].mxu0
  %v724 = vadd.f32 0.0, %v723
  %v725 = vpop.f32.mrb[0].mxu0
  %726 = vmatprep.mubr.f32.mxu0 %v527
  %727 = vmatmul.mubr.f32.gmra.mrb[0].mxu0 %v526
  %v728 = vpop.f32.mrb[0].mxu0
  %v729 = vadd.f32 0.0, %v728
  %v730 = vpop.f32.mrb[0].mxu0
  %731 = vmatprep.mubr.f32.mxu0 %v530
  %732 = vmatmul.mubr.f32.gmra.mrb[0].mxu0 %v529
  %v733 = vpop.f32.mrb[0].mxu0
  %v734 = vadd.f32 0.0, %v733
  %v735 = vpop.f32.mrb[0].mxu0
  %736 = vmatprep.mubr.f32.mxu0 %v533
  %737 = vmatmul.mubr.f32.gmra.mrb[0].mxu0 %v532
  %v738 = vpop.f32.mrb[0].mxu0
  %v739 = vadd.f32 0.0, %v738
  %v740 = vpop.f32.mrb[0].mxu0
  %741 = vmatprep.mubr.f32.mxu0 %v536
  %742 = vmatmul.mubr.f32.gmra.mrb[0].mxu0 %v535
  %v743 = vpop.f32.mrb[0].mxu0
  %v744 = vadd.f32 0.0, %v743
  %v745 = vpop.f32.mrb[0].mxu0
  %746 = vmatprep.mubr.f32.mxu0 %v539
  %747 = vmatmul.mubr.f32.gmra.mrb[0].mxu0 %v538
  %v748 = vpop.f32.mrb[0].mxu0
  %v749 = vadd.f32 0.0, %v748
  %v750 = vpop.f32.mrb[0].mxu0
  %751 = vmatprep.mubr.f32.mxu0 %v542
  %752 = vmatmul.mubr.f32.gmra.mrb[0].mxu0 %v541
  %v753 = vpop.f32.mrb[0].mxu0
  %v754 = vadd.f32 0.0, %v753
  %v755 = vpop.f32.mrb[0].mxu0
  %756 = vmatprep.mubr.f32.mxu0 %v545
  %757 = vmatmul.mubr.f32.gmra.mrb[0].mxu0 %v544
  %v758 = vpop.f32.mrb[0].mxu0
  %v759 = vadd.f32 0.0, %v758
  %v760 = vpop.f32.mrb[0].mxu0
  %761 = vmatprep.mubr.f32.mxu0 %v548
  %762 = vmatmul.mubr.f32.gmra.mrb[0].mxu0 %v547
  %v763 = vpop.f32.mrb[0].mxu0
  %v764 = vadd.f32 0.0, %v763
  %v765 = vpop.f32.mrb[0].mxu0
  %766 = vmatprep.mubr.f32.mxu0 %v551
  %767 = vmatmul.mubr.f32.gmra.mrb[0].mxu0 %v550
  %v768 = vpop.f32.mrb[0].mxu0
  %v769 = vadd.f32 0.0, %v768
  %v770 = vpop.f32.mrb[0].mxu0
  %771 = vmatprep.mubr.f32.mxu0 %v554
  %772 = vmatmul.mubr.f32.gmra.mrb[0].mxu0 %v553
  %v773 = vpop.f32.mrb[0].mxu0
  %v774 = vadd.f32 0.0, %v773
  %v775 = vpop.f32.mrb[0].mxu0
  %776 = vmatprep.mubr.f32.mxu0 %v557
  %777 = vmatmul.mubr.f32.gmra.mrb[0].mxu0 %v556
  %v778 = vpop.f32.mrb[0].mxu0
  %v779 = vadd.f32 0.0, %v778
  %v780 = vpop.f32.mrb[0].mxu0
  %781 = vmatprep.mubr.f32.mxu0 %v560
  %782 = vmatmul.mubr.f32.gmra.mrb[0].mxu0 %v559
  %v783 = vpop.f32.mrb[0].mxu0
  %v784 = vadd.f32 0.0, %v783
  %v785 = vpop.f32.mrb[0].mxu0
  %786 = vdwg.mxu0
  %787 = vmatprep.subr.mxu0 0.0
  %788 = vmatpush1.msra.mxu0 %v46
  %789 = vmatprep.subr.mxu0 0.0
  %790 = vmatpush1.msra.mxu0 %v47
  %791 = vmatprep.subr.mxu0 0.0
  %792 = vmatpush1.msra.mxu0 %v48
  %793 = vmatprep.subr.mxu0 0.0
  %794 = vmatpush1.msra.mxu0 %v49
  %795 = vmatprep.subr.mxu0 0.0
  %796 = vmatpush1.msra.mxu0 0.0
  %797 = vmatprep.subr.mxu0 0.0
  %798 = vmatpush1.msra.mxu0 0.0
  %799 = vmatprep.subr.mxu0 0.0
  %800 = vmatpush1.msra.mxu0 0.0
  %801 = vmatprep.subr.mxu0 0.0
  %802 = vmatpush1.msra.mxu0 0.0
  %803 = vmatprep.subr.mxu0 0.0
  %804 = vmatpush1.msra.mxu0 0.0
  %805 = vmatprep.subr.mxu0 0.0
  %806 = vmatpush1.msra.mxu0 0.0
  %807 = vmatprep.subr.mxu0 0.0
  %808 = vmatpush1.msra.mxu0 0.0
  %809 = vmatprep.subr.mxu0 0.0
  %810 = vmatpush1.msra.mxu0 0.0
  %811 = vmatprep.subr.mxu0 0.0
  %812 = vmatpush1.msra.mxu0 0.0
  %813 = vmatprep.subr.mxu0 0.0
  %814 = vmatpush1.msra.mxu0 0.0
  %815 = vmatprep.subr.mxu0 0.0
  %816 = vmatpush1.msra.mxu0 0.0
  %817 = vmatprep.subr.mxu0 0.0
  %818 = vmatpush1.msra.mxu0 0.0
  %819 = vmatprep.subr.mxu0 0.0
  %820 = vmatpush1.msra.mxu0 0.0
  %821 = vmatprep.subr.mxu0 0.0
  %822 = vmatpush1.msra.mxu0 0.0
  %823 = vmatprep.subr.mxu0 0.0
  %824 = vmatpush1.msra.mxu0 0.0
  %825 = vmatprep.subr.mxu0 0.0
  %826 = vmatpush1.msra.mxu0 0.0
  %827 = vmatprep.subr.mxu0 0.0
  %828 = vmatpush1.msra.mxu0 0.0
  %829 = vmatprep.subr.mxu0 0.0
  %830 = vmatpush1.msra.mxu0 0.0
  %831 = vmatprep.subr.mxu0 0.0
  %832 = vmatpush1.msra.mxu0 0.0
  %833 = vmatprep.subr.mxu0 0.0
  %834 = vmatpush1.msra.mxu0 0.0
  %835 = vmatprep.subr.mxu0 0.0
  %836 = vmatpush1.msra.mxu0 0.0
  %837 = vmatprep.subr.mxu0 0.0
  %838 = vmatpush1.msra.mxu0 0.0
  %839 = vmatprep.subr.mxu0 0.0
  %840 = vmatpush1.msra.mxu0 0.0
  %841 = vmatprep.subr.mxu0 0.0
  %842 = vmatpush1.msra.mxu0 0.0
  %843 = vmatprep.subr.mxu0 0.0
  %844 = vmatpush1.msra.mxu0 0.0
  %845 = vmatprep.subr.mxu0 0.0
  %846 = vmatpush1.msra.mxu0 0.0
  %847 = vmatprep.subr.mxu0 0.0
  %848 = vmatpush1.msra.mxu0 0.0
  %849 = vmatprep.subr.mxu0 0.0
  %850 = vmatpush1.msra.mxu0 0.0
  %851 = vmatprep.mubr.f32.mxu0 0.0
  %852 = vmatmul.mubr.f32.gmra.mrb[0].mxu0 %v563
  %v853 = vpop.f32.mrb[0].mxu0
  %v854 = vadd.f32 %v689, %v853
  %v855 = vpop.f32.mrb[0].mxu0
  %856 = vmatprep.mubr.f32.mxu0 0.0
  %857 = vmatmul.mubr.f32.gmra.mrb[0].mxu0 %v566
  %v858 = vpop.f32.mrb[0].mxu0
  %v859 = vadd.f32 %v694, %v858
  %v860 = vpop.f32.mrb[0].mxu0
  %861 = vmatprep.mubr.f32.mxu0 0.0
  %862 = vmatmul.mubr.f32.gmra.mrb[0].mxu0 %v569
  %v863 = vpop.f32.mrb[0].mxu0
  %v864 = vadd.f32 %v699, %v863
  %v865 = vpop.f32.mrb[0].mxu0
  %866 = vmatprep.mubr.f32.mxu0 0.0
  %867 = vmatmul.mubr.f32.gmra.mrb[0].mxu0 %v572
  %v868 = vpop.f32.mrb[0].mxu0
  %v869 = vadd.f32 %v704, %v868
  %v870 = vpop.f32.mrb[0].mxu0
  %871 = vmatprep.mubr.f32.mxu0 0.0
  %872 = vmatmul.mubr.f32.gmra.mrb[0].mxu0 %v575
  %v873 = vpop.f32.mrb[0].mxu0
  %v874 = vadd.f32 %v709, %v873
  %v875 = vpop.f32.mrb[0].mxu0
  %876 = vmatprep.mubr.f32.mxu0 0.0
  %877 = vmatmul.mubr.f32.gmra.mrb[0].mxu0 %v578
  %v878 = vpop.f32.mrb[0].mxu0
  %v879 = vadd.f32 %v714, %v878
  %v880 = vpop.f32.mrb[0].mxu0
  %881 = vmatprep.mubr.f32.mxu0 0.0
  %882 = vmatmul.mubr.f32.gmra.mrb[0].mxu0 %v581
  %v883 = vpop.f32.mrb[0].mxu0
  %v884 = vadd.f32 %v719, %v883
  %v885 = vpop.f32.mrb[0].mxu0
  %886 = vmatprep.mubr.f32.mxu0 0.0
  %887 = vmatmul.mubr.f32.gmra.mrb[0].mxu0 %v584
  %v888 = vpop.f32.mrb[0].mxu0
  %v889 = vadd.f32 %v724, %v888
  %v890 = vpop.f32.mrb[0].mxu0
  %891 = vmatprep.mubr.f32.mxu0 0.0
  %892 = vmatmul.mubr.f32.gmra.mrb[0].mxu0 %v587
  %v893 = vpop.f32.mrb[0].mxu0
  %v894 = vadd.f32 %v729, %v893
  %v895 = vpop.f32.mrb[0].mxu0
  %896 = vmatprep.mubr.f32.mxu0 0.0
  %897 = vmatmul.mubr.f32.gmra.mrb[0].mxu0 %v590
  %v898 = vpop.f32.mrb[0].mxu0
  %v899 = vadd.f32 %v734, %v898
  %v900 = vpop.f32.mrb[0].mxu0
  %901 = vmatprep.mubr.f32.mxu0 0.0
  %902 = vmatmul.mubr.f32.gmra.mrb[0].mxu0 %v593
  %v903 = vpop.f32.mrb[0].mxu0
  %v904 = vadd.f32 %v739, %v903
  %v905 = vpop.f32.mrb[0].mxu0
  %906 = vmatprep.mubr.f32.mxu0 0.0
  %907 = vmatmul.mubr.f32.gmra.mrb[0].mxu0 %v596
  %v908 = vpop.f32.mrb[0].mxu0
  %v909 = vadd.f32 %v744, %v908
  %v910 = vpop.f32.mrb[0].mxu0
  %911 = vmatprep.mubr.f32.mxu0 0.0
  %912 = vmatmul.mubr.f32.gmra.mrb[0].mxu0 %v599
  %v913 = vpop.f32.mrb[0].mxu0
  %v914 = vadd.f32 %v749, %v913
  %v915 = vpop.f32.mrb[0].mxu0
  %916 = vmatprep.mubr.f32.mxu0 0.0
  %917 = vmatmul.mubr.f32.gmra.mrb[0].mxu0 %v602
  %v918 = vpop.f32.mrb[0].mxu0
  %v919 = vadd.f32 %v754, %v918
  %v920 = vpop.f32.mrb[0].mxu0
  %921 = vmatprep.mubr.f32.mxu0 0.0
  %922 = vmatmul.mubr.f32.gmra.mrb[0].mxu0 %v605
  %v923 = vpop.f32.mrb[0].mxu0
  %v924 = vadd.f32 %v759, %v923
  %v925 = vpop.f32.mrb[0].mxu0
  %926 = vmatprep.mubr.f32.mxu0 0.0
  %927 = vmatmul.mubr.f32.gmra.mrb[0].mxu0 %v608
  %v928 = vpop.f32.mrb[0].mxu0
  %v929 = vadd.f32 %v764, %v928
  %v930 = vpop.f32.mrb[0].mxu0
  %931 = vmatprep.mubr.f32.mxu0 0.0
  %932 = vmatmul.mubr.f32.gmra.mrb[0].mxu0 %v611
  %v933 = vpop.f32.mrb[0].mxu0
  %v934 = vadd.f32 %v769, %v933
  %v935 = vpop.f32.mrb[0].mxu0
  %936 = vmatprep.mubr.f32.mxu0 0.0
  %937 = vmatmul.mubr.f32.gmra.mrb[0].mxu0 %v614
  %v938 = vpop.f32.mrb[0].mxu0
  %v939 = vadd.f32 %v774, %v938
  %v940 = vpop.f32.mrb[0].mxu0
  %941 = vmatprep.mubr.f32.mxu0 0.0
  %942 = vmatmul.mubr.f32.gmra.mrb[0].mxu0 %v617
  %v943 = vpop.f32.mrb[0].mxu0
  %v944 = vadd.f32 %v779, %v943
  %v945 = vpop.f32.mrb[0].mxu0
  %946 = vmatprep.mubr.f32.mxu0 0.0
  %947 = vmatmul.mubr.f32.gmra.mrb[0].mxu0 %v620
  %v948 = vpop.f32.mrb[0].mxu0
  %v949 = vadd.f32 %v784, %v948
  %v950 = vpop.f32.mrb[0].mxu0
  %951 = vdwg.mxu0
  %v952 = vmax.f32 %v403, %v854
  %v953 = vmax.f32 %v408, %v859
  %v954 = vmax.f32 %v413, %v864
  %v955 = vmax.f32 %v418, %v869
  %v956 = vmax.f32 %v423, %v874
  %v957 = vmax.f32 %v428, %v879
  %v958 = vmax.f32 %v433, %v884
  %v959 = vmax.f32 %v438, %v889
  %v960 = vmax.f32 %v443, %v894
  %v961 = vmax.f32 %v448, %v899
  %v962 = vmax.f32 %v453, %v904
  %v963 = vmax.f32 %v458, %v909
  %v964 = vmax.f32 %v463, %v914
  %v965 = vmax.f32 %v468, %v919
  %v966 = vmax.f32 %v473, %v924
  %v967 = vmax.f32 %v478, %v929
  %v968 = vmax.f32 %v483, %v934
  %v969 = vmax.f32 %v488, %v939
  %v970 = vmax.f32 %v493, %v944
  %v971 = vmax.f32 %v498, %v949
  %s972 = scalar_lea.vmem %s0, 960
  %v973 = vld [vmem:[%s972] sm:$0xff]
  %v974 = vld [vmem:[%s972 + $0x8] sm:$0xff]
  %v975 = vld [vmem:[%s972 + $0x10] sm:$0xff]
  %v976 = vld [vmem:[%s972 + $0x18] sm:$0xff]
  %v977 = vld [vmem:[%s972 + $0x20] sm:$0xff]
  %v978 = vld [vmem:[%s972 + $0x28] sm:$0xff]
  %v979 = vld [vmem:[%s972 + $0x30] sm:$0xff]
  %v980 = vld [vmem:[%s972 + $0x38] sm:$0xff]
  %v981 = vld [vmem:[%s972 + $0x40] sm:$0xff]
  %v982 = vld [vmem:[%s972 + $0x48] sm:$0xff]
  %v983 = vld [vmem:[%s972 + $0x50] sm:$0xff]
  %v984 = vld [vmem:[%s972 + $0x58] sm:$0xff]
  %v985 = vld [vmem:[%s972 + $0x60] sm:$0xff]
  %v986 = vld [vmem:[%s972 + $0x68] sm:$0xff]
  %v987 = vld [vmem:[%s972 + $0x70] sm:$0xff]
  %v988 = vld [vmem:[%s972 + $0x78] sm:$0xff]
  %v989 = vld [vmem:[%s972 + $0x80] sm:$0xff]
  %v990 = vld [vmem:[%s972 + $0x88] sm:$0xff]
  %v991 = vld [vmem:[%s972 + $0x90] sm:$0xff]
  %v992 = vld [vmem:[%s972 + $0x98] sm:$0xff]
  %v993 = vld [vmem:[%s972 + $0xa0] sm:$0xff]
  %v994 = vld [vmem:[%s972 + $0xa8] sm:$0xff]
  %v995 = vld [vmem:[%s972 + $0xb0] sm:$0xff]
  %v996 = vld [vmem:[%s972 + $0xb8] sm:$0xff]
  %v997 = vld [vmem:[%s972 + $0xc0] sm:$0xff]
  %v998 = vld [vmem:[%s972 + $0xc8] sm:$0xff]
  %v999 = vld [vmem:[%s972 + $0xd0] sm:$0xff]
  %v1000 = vld [vmem:[%s972 + $0xd8] sm:$0xff]
  %v1001 = vld [vmem:[%s972 + $0xe0] sm:$0xff]
  %v1002 = vld [vmem:[%s972 + $0xe8] sm:$0xff]
  %v1003 = vld [vmem:[%s972 + $0xf0] sm:$0xff]
  %v1004 = vld [vmem:[%s972 + $0xf8] sm:$0xff]
  %v1005 = vld [vmem:[%s972 + $0x100] sm:$0xff]
  %v1006 = vld [vmem:[%s972 + $0x108] sm:$0xff]
  %v1007 = vld [vmem:[%s972 + $0x110] sm:$0xff]
  %v1008 = vld [vmem:[%s972 + $0x118] sm:$0xff]
  %v1009 = vld [vmem:[%s972 + $0x120] sm:$0xff]
  %v1010 = vld [vmem:[%s972 + $0x128] sm:$0xff]
  %v1011 = vld [vmem:[%s972 + $0x130] sm:$0xff]
  %v1012 = vld [vmem:[%s972 + $0x138] sm:$0xff]
  %v1013 = vld [vmem:[%s972 + $0x140] sm:$0xff]
  %v1014 = vld [vmem:[%s972 + $0x148] sm:$0xff]
  %v1015 = vld [vmem:[%s972 + $0x150] sm:$0xff]
  %v1016 = vld [vmem:[%s972 + $0x158] sm:$0xff]
  %v1017 = vld [vmem:[%s972 + $0x160] sm:$0xff]
  %v1018 = vld [vmem:[%s972 + $0x168] sm:$0xff]
  %v1019 = vld [vmem:[%s972 + $0x170] sm:$0xff]
  %v1020 = vld [vmem:[%s972 + $0x178] sm:$0xff]
  %v1021 = vld [vmem:[%s972 + $0x180] sm:$0xff]
  %v1022 = vld [vmem:[%s972 + $0x188] sm:$0xff]
  %v1023 = vld [vmem:[%s972 + $0x190] sm:$0xff]
  %v1024 = vld [vmem:[%s972 + $0x198] sm:$0xff]
  %v1025 = vld [vmem:[%s972 + $0x1a0] sm:$0xff]
  %v1026 = vld [vmem:[%s972 + $0x1a8] sm:$0xff]
  %v1027 = vld [vmem:[%s972 + $0x1b0] sm:$0xff]
  %v1028 = vld [vmem:[%s972 + $0x1b8] sm:$0xff]
  %v1029 = vld [vmem:[%s972 + $0x1c0] sm:$0xff]
  %v1030 = vld [vmem:[%s972 + $0x1c8] sm:$0xff]
  %v1031 = vld [vmem:[%s972 + $0x1d0] sm:$0xff]
  %v1032 = vld [vmem:[%s972 + $0x1d8] sm:$0xff]
  %v1034 = vsel %vm110, %v975, 0
  %v1037 = vsel %vm110, %v978, 0
  %v1040 = vsel %vm110, %v981, 0
  %v1043 = vsel %vm110, %v984, 0
  %v1046 = vsel %vm110, %v987, 0
  %v1049 = vsel %vm110, %v990, 0
  %v1052 = vsel %vm110, %v993, 0
  %v1055 = vsel %vm110, %v996, 0
  %v1058 = vsel %vm110, %v999, 0
  %v1061 = vsel %vm110, %v1002, 0
  %v1064 = vsel %vm110, %v1005, 0
  %v1067 = vsel %vm110, %v1008, 0
  %v1070 = vsel %vm110, %v1011, 0
  %v1073 = vsel %vm110, %v1014, 0
  %v1076 = vsel %vm110, %v1017, 0
  %v1079 = vsel %vm110, %v1020, 0
  %v1082 = vsel %vm110, %v1023, 0
  %v1085 = vsel %vm110, %v1026, 0
  %v1088 = vsel %vm110, %v1029, 0
  %v1091 = vsel %vm110, %v1032, 0
  %1093 = vmatprep.subr.mxu0 0.0
  %1094 = vmatpush1.msra.mxu0 %v14
  %1095 = vmatprep.subr.mxu0 0.0
  %1096 = vmatpush1.msra.mxu0 %v15
  %1097 = vmatprep.subr.mxu0 0.0
  %1098 = vmatpush1.msra.mxu0 %v16
  %1099 = vmatprep.subr.mxu0 0.0
  %1100 = vmatpush1.msra.mxu0 %v17
  %1101 = vmatprep.subr.mxu0 0.0
  %1102 = vmatpush1.msra.mxu0 %v18
  %1103 = vmatprep.subr.mxu0 0.0
  %1104 = vmatpush1.msra.mxu0 %v19
  %1105 = vmatprep.subr.mxu0 0.0
  %1106 = vmatpush1.msra.mxu0 %v20
  %1107 = vmatprep.subr.mxu0 0.0
  %1108 = vmatpush1.msra.mxu0 %v21
  %1109 = vmatprep.subr.mxu0 0.0
  %1110 = vmatpush1.msra.mxu0 %v22
  %1111 = vmatprep.subr.mxu0 0.0
  %1112 = vmatpush1.msra.mxu0 %v23
  %1113 = vmatprep.subr.mxu0 0.0
  %1114 = vmatpush1.msra.mxu0 %v24
  %1115 = vmatprep.subr.mxu0 0.0
  %1116 = vmatpush1.msra.mxu0 %v25
  %1117 = vmatprep.subr.mxu0 0.0
  %1118 = vmatpush1.msra.mxu0 %v26
  %1119 = vmatprep.subr.mxu0 0.0
  %1120 = vmatpush1.msra.mxu0 %v27
  %1121 = vmatprep.subr.mxu0 0.0
  %1122 = vmatpush1.msra.mxu0 %v28
  %1123 = vmatprep.subr.mxu0 0.0
  %1124 = vmatpush1.msra.mxu0 %v29
  %1125 = vmatprep.subr.mxu0 0.0
  %1126 = vmatpush1.msra.mxu0 %v30
  %1127 = vmatprep.subr.mxu0 0.0
  %1128 = vmatpush1.msra.mxu0 %v31
  %1129 = vmatprep.subr.mxu0 0.0
  %1130 = vmatpush1.msra.mxu0 %v32
  %1131 = vmatprep.subr.mxu0 0.0
  %1132 = vmatpush1.msra.mxu0 %v33
  %1133 = vmatprep.subr.mxu0 0.0
  %1134 = vmatpush1.msra.mxu0 %v34
  %1135 = vmatprep.subr.mxu0 0.0
  %1136 = vmatpush1.msra.mxu0 %v35
  %1137 = vmatprep.subr.mxu0 0.0
  %1138 = vmatpush1.msra.mxu0 %v36
  %1139 = vmatprep.subr.mxu0 0.0
  %1140 = vmatpush1.msra.mxu0 %v37
  %1141 = vmatprep.subr.mxu0 0.0
  %1142 = vmatpush1.msra.mxu0 %v38
  %1143 = vmatprep.subr.mxu0 0.0
  %1144 = vmatpush1.msra.mxu0 %v39
  %1145 = vmatprep.subr.mxu0 0.0
  %1146 = vmatpush1.msra.mxu0 %v40
  %1147 = vmatprep.subr.mxu0 0.0
  %1148 = vmatpush1.msra.mxu0 %v41
  %1149 = vmatprep.subr.mxu0 0.0
  %1150 = vmatpush1.msra.mxu0 %v42
  %1151 = vmatprep.subr.mxu0 0.0
  %1152 = vmatpush1.msra.mxu0 %v43
  %1153 = vmatprep.subr.mxu0 0.0
  %1154 = vmatpush1.msra.mxu0 %v44
  %1155 = vmatprep.subr.mxu0 0.0
  %1156 = vmatpush1.msra.mxu0 %v45
  %1157 = vmatprep.mubr.f32.mxu0 %v974
  %1158 = vmatmul.mubr.f32.gmra.mrb[0].mxu0 %v973
  %v1159 = vpop.f32.mrb[0].mxu0
  %v1160 = vadd.f32 0.0, %v1159
  %v1161 = vpop.f32.mrb[0].mxu0
  %1162 = vmatprep.mubr.f32.mxu0 %v977
  %1163 = vmatmul.mubr.f32.gmra.mrb[0].mxu0 %v976
  %v1164 = vpop.f32.mrb[0].mxu0
  %v1165 = vadd.f32 0.0, %v1164
  %v1166 = vpop.f32.mrb[0].mxu0
  %1167 = vmatprep.mubr.f32.mxu0 %v980
  %1168 = vmatmul.mubr.f32.gmra.mrb[0].mxu0 %v979
  %v1169 = vpop.f32.mrb[0].mxu0
  %v1170 = vadd.f32 0.0, %v1169
  %v1171 = vpop.f32.mrb[0].mxu0
  %1172 = vmatprep.mubr.f32.mxu0 %v983
  %1173 = vmatmul.mubr.f32.gmra.mrb[0].mxu0 %v982
  %v1174 = vpop.f32.mrb[0].mxu0
  %v1175 = vadd.f32 0.0, %v1174
  %v1176 = vpop.f32.mrb[0].mxu0
  %1177 = vmatprep.mubr.f32.mxu0 %v986
  %1178 = vmatmul.mubr.f32.gmra.mrb[0].mxu0 %v985
  %v1179 = vpop.f32.mrb[0].mxu0
  %v1180 = vadd.f32 0.0, %v1179
  %v1181 = vpop.f32.mrb[0].mxu0
  %1182 = vmatprep.mubr.f32.mxu0 %v989
  %1183 = vmatmul.mubr.f32.gmra.mrb[0].mxu0 %v988
  %v1184 = vpop.f32.mrb[0].mxu0
  %v1185 = vadd.f32 0.0, %v1184
  %v1186 = vpop.f32.mrb[0].mxu0
  %1187 = vmatprep.mubr.f32.mxu0 %v992
  %1188 = vmatmul.mubr.f32.gmra.mrb[0].mxu0 %v991
  %v1189 = vpop.f32.mrb[0].mxu0
  %v1190 = vadd.f32 0.0, %v1189
  %v1191 = vpop.f32.mrb[0].mxu0
  %1192 = vmatprep.mubr.f32.mxu0 %v995
  %1193 = vmatmul.mubr.f32.gmra.mrb[0].mxu0 %v994
  %v1194 = vpop.f32.mrb[0].mxu0
  %v1195 = vadd.f32 0.0, %v1194
  %v1196 = vpop.f32.mrb[0].mxu0
  %1197 = vmatprep.mubr.f32.mxu0 %v998
  %1198 = vmatmul.mubr.f32.gmra.mrb[0].mxu0 %v997
  %v1199 = vpop.f32.mrb[0].mxu0
  %v1200 = vadd.f32 0.0, %v1199
  %v1201 = vpop.f32.mrb[0].mxu0
  %1202 = vmatprep.mubr.f32.mxu0 %v1001
  %1203 = vmatmul.mubr.f32.gmra.mrb[0].mxu0 %v1000
  %v1204 = vpop.f32.mrb[0].mxu0
  %v1205 = vadd.f32 0.0, %v1204
  %v1206 = vpop.f32.mrb[0].mxu0
  %1207 = vmatprep.mubr.f32.mxu0 %v1004
  %1208 = vmatmul.mubr.f32.gmra.mrb[0].mxu0 %v1003
  %v1209 = vpop.f32.mrb[0].mxu0
  %v1210 = vadd.f32 0.0, %v1209
  %v1211 = vpop.f32.mrb[0].mxu0
  %1212 = vmatprep.mubr.f32.mxu0 %v1007
  %1213 = vmatmul.mubr.f32.gmra.mrb[0].mxu0 %v1006
  %v1214 = vpop.f32.mrb[0].mxu0
  %v1215 = vadd.f32 0.0, %v1214
  %v1216 = vpop.f32.mrb[0].mxu0
  %1217 = vmatprep.mubr.f32.mxu0 %v1010
  %1218 = vmatmul.mubr.f32.gmra.mrb[0].mxu0 %v1009
  %v1219 = vpop.f32.mrb[0].mxu0
  %v1220 = vadd.f32 0.0, %v1219
  %v1221 = vpop.f32.mrb[0].mxu0
  %1222 = vmatprep.mubr.f32.mxu0 %v1013
  %1223 = vmatmul.mubr.f32.gmra.mrb[0].mxu0 %v1012
  %v1224 = vpop.f32.mrb[0].mxu0
  %v1225 = vadd.f32 0.0, %v1224
  %v1226 = vpop.f32.mrb[0].mxu0
  %1227 = vmatprep.mubr.f32.mxu0 %v1016
  %1228 = vmatmul.mubr.f32.gmra.mrb[0].mxu0 %v1015
  %v1229 = vpop.f32.mrb[0].mxu0
  %v1230 = vadd.f32 0.0, %v1229
  %v1231 = vpop.f32.mrb[0].mxu0
  %1232 = vmatprep.mubr.f32.mxu0 %v1019
  %1233 = vmatmul.mubr.f32.gmra.mrb[0].mxu0 %v1018
  %v1234 = vpop.f32.mrb[0].mxu0
  %v1235 = vadd.f32 0.0, %v1234
  %v1236 = vpop.f32.mrb[0].mxu0
  %1237 = vmatprep.mubr.f32.mxu0 %v1022
  %1238 = vmatmul.mubr.f32.gmra.mrb[0].mxu0 %v1021
  %v1239 = vpop.f32.mrb[0].mxu0
  %v1240 = vadd.f32 0.0, %v1239
  %v1241 = vpop.f32.mrb[0].mxu0
  %1242 = vmatprep.mubr.f32.mxu0 %v1025
  %1243 = vmatmul.mubr.f32.gmra.mrb[0].mxu0 %v1024
  %v1244 = vpop.f32.mrb[0].mxu0
  %v1245 = vadd.f32 0.0, %v1244
  %v1246 = vpop.f32.mrb[0].mxu0
  %1247 = vmatprep.mubr.f32.mxu0 %v1028
  %1248 = vmatmul.mubr.f32.gmra.mrb[0].mxu0 %v1027
  %v1249 = vpop.f32.mrb[0].mxu0
  %v1250 = vadd.f32 0.0, %v1249
  %v1251 = vpop.f32.mrb[0].mxu0
  %1252 = vmatprep.mubr.f32.mxu0 %v1031
  %1253 = vmatmul.mubr.f32.gmra.mrb[0].mxu0 %v1030
  %v1254 = vpop.f32.mrb[0].mxu0
  %v1255 = vadd.f32 0.0, %v1254
  %v1256 = vpop.f32.mrb[0].mxu0
  %1257 = vdwg.mxu0
  %1258 = vmatprep.subr.mxu0 0.0
  %1259 = vmatpush1.msra.mxu0 %v46
  %1260 = vmatprep.subr.mxu0 0.0
  %1261 = vmatpush1.msra.mxu0 %v47
  %1262 = vmatprep.subr.mxu0 0.0
  %1263 = vmatpush1.msra.mxu0 %v48
  %1264 = vmatprep.subr.mxu0 0.0
  %1265 = vmatpush1.msra.mxu0 %v49
  %1266 = vmatprep.subr.mxu0 0.0
  %1267 = vmatpush1.msra.mxu0 0.0
  %1268 = vmatprep.subr.mxu0 0.0
  %1269 = vmatpush1.msra.mxu0 0.0
  %1270 = vmatprep.subr.mxu0 0.0
  %1271 = vmatpush1.msra.mxu0 0.0
  %1272 = vmatprep.subr.mxu0 0.0
  %1273 = vmatpush1.msra.mxu0 0.0
  %1274 = vmatprep.subr.mxu0 0.0
  %1275 = vmatpush1.msra.mxu0 0.0
  %1276 = vmatprep.subr.mxu0 0.0
  %1277 = vmatpush1.msra.mxu0 0.0
  %1278 = vmatprep.subr.mxu0 0.0
  %1279 = vmatpush1.msra.mxu0 0.0
  %1280 = vmatprep.subr.mxu0 0.0
  %1281 = vmatpush1.msra.mxu0 0.0
  %1282 = vmatprep.subr.mxu0 0.0
  %1283 = vmatpush1.msra.mxu0 0.0
  %1284 = vmatprep.subr.mxu0 0.0
  %1285 = vmatpush1.msra.mxu0 0.0
  %1286 = vmatprep.subr.mxu0 0.0
  %1287 = vmatpush1.msra.mxu0 0.0
  %1288 = vmatprep.subr.mxu0 0.0
  %1289 = vmatpush1.msra.mxu0 0.0
  %1290 = vmatprep.subr.mxu0 0.0
  %1291 = vmatpush1.msra.mxu0 0.0
  %1292 = vmatprep.subr.mxu0 0.0
  %1293 = vmatpush1.msra.mxu0 0.0
  %1294 = vmatprep.subr.mxu0 0.0
  %1295 = vmatpush1.msra.mxu0 0.0
  %1296 = vmatprep.subr.mxu0 0.0
  %1297 = vmatpush1.msra.mxu0 0.0
  %1298 = vmatprep.subr.mxu0 0.0
  %1299 = vmatpush1.msra.mxu0 0.0
  %1300 = vmatprep.subr.mxu0 0.0
  %1301 = vmatpush1.msra.mxu0 0.0
  %1302 = vmatprep.subr.mxu0 0.0
  %1303 = vmatpush1.msra.mxu0 0.0
  %1304 = vmatprep.subr.mxu0 0.0
  %1305 = vmatpush1.msra.mxu0 0.0
  %1306 = vmatprep.subr.mxu0 0.0
  %1307 = vmatpush1.msra.mxu0 0.0
  %1308 = vmatprep.subr.mxu0 0.0
  %1309 = vmatpush1.msra.mxu0 0.0
  %1310 = vmatprep.subr.mxu0 0.0
  %1311 = vmatpush1.msra.mxu0 0.0
  %1312 = vmatprep.subr.mxu0 0.0
  %1313 = vmatpush1.msra.mxu0 0.0
  %1314 = vmatprep.subr.mxu0 0.0
  %1315 = vmatpush1.msra.mxu0 0.0
  %1316 = vmatprep.subr.mxu0 0.0
  %1317 = vmatpush1.msra.mxu0 0.0
  %1318 = vmatprep.subr.mxu0 0.0
  %1319 = vmatpush1.msra.mxu0 0.0
  %1320 = vmatprep.subr.mxu0 0.0
  %1321 = vmatpush1.msra.mxu0 0.0
  %1322 = vmatprep.mubr.f32.mxu0 0.0
  %1323 = vmatmul.mubr.f32.gmra.mrb[0].mxu0 %v1034
  %v1324 = vpop.f32.mrb[0].mxu0
  %v1325 = vadd.f32 %v1160, %v1324
  %v1326 = vpop.f32.mrb[0].mxu0
  %1327 = vmatprep.mubr.f32.mxu0 0.0
  %1328 = vmatmul.mubr.f32.gmra.mrb[0].mxu0 %v1037
  %v1329 = vpop.f32.mrb[0].mxu0
  %v1330 = vadd.f32 %v1165, %v1329
  %v1331 = vpop.f32.mrb[0].mxu0
  %1332 = vmatprep.mubr.f32.mxu0 0.0
  %1333 = vmatmul.mubr.f32.gmra.mrb[0].mxu0 %v1040
  %v1334 = vpop.f32.mrb[0].mxu0
  %v1335 = vadd.f32 %v1170, %v1334
  %v1336 = vpop.f32.mrb[0].mxu0
  %1337 = vmatprep.mubr.f32.mxu0 0.0
  %1338 = vmatmul.mubr.f32.gmra.mrb[0].mxu0 %v1043
  %v1339 = vpop.f32.mrb[0].mxu0
  %v1340 = vadd.f32 %v1175, %v1339
  %v1341 = vpop.f32.mrb[0].mxu0
  %1342 = vmatprep.mubr.f32.mxu0 0.0
  %1343 = vmatmul.mubr.f32.gmra.mrb[0].mxu0 %v1046
  %v1344 = vpop.f32.mrb[0].mxu0
  %v1345 = vadd.f32 %v1180, %v1344
  %v1346 = vpop.f32.mrb[0].mxu0
  %1347 = vmatprep.mubr.f32.mxu0 0.0
  %1348 = vmatmul.mubr.f32.gmra.mrb[0].mxu0 %v1049
  %v1349 = vpop.f32.mrb[0].mxu0
  %v1350 = vadd.f32 %v1185, %v1349
  %v1351 = vpop.f32.mrb[0].mxu0
  %1352 = vmatprep.mubr.f32.mxu0 0.0
  %1353 = vmatmul.mubr.f32.gmra.mrb[0].mxu0 %v1052
  %v1354 = vpop.f32.mrb[0].mxu0
  %v1355 = vadd.f32 %v1190, %v1354
  %v1356 = vpop.f32.mrb[0].mxu0
  %1357 = vmatprep.mubr.f32.mxu0 0.0
  %1358 = vmatmul.mubr.f32.gmra.mrb[0].mxu0 %v1055
  %v1359 = vpop.f32.mrb[0].mxu0
  %v1360 = vadd.f32 %v1195, %v1359
  %v1361 = vpop.f32.mrb[0].mxu0
  %1362 = vmatprep.mubr.f32.mxu0 0.0
  %1363 = vmatmul.mubr.f32.gmra.mrb[0].mxu0 %v1058
  %v1364 = vpop.f32.mrb[0].mxu0
  %v1365 = vadd.f32 %v1200, %v1364
  %v1366 = vpop.f32.mrb[0].mxu0
  %1367 = vmatprep.mubr.f32.mxu0 0.0
  %1368 = vmatmul.mubr.f32.gmra.mrb[0].mxu0 %v1061
  %v1369 = vpop.f32.mrb[0].mxu0
  %v1370 = vadd.f32 %v1205, %v1369
  %v1371 = vpop.f32.mrb[0].mxu0
  %1372 = vmatprep.mubr.f32.mxu0 0.0
  %1373 = vmatmul.mubr.f32.gmra.mrb[0].mxu0 %v1064
  %v1374 = vpop.f32.mrb[0].mxu0
  %v1375 = vadd.f32 %v1210, %v1374
  %v1376 = vpop.f32.mrb[0].mxu0
  %1377 = vmatprep.mubr.f32.mxu0 0.0
  %1378 = vmatmul.mubr.f32.gmra.mrb[0].mxu0 %v1067
  %v1379 = vpop.f32.mrb[0].mxu0
  %v1380 = vadd.f32 %v1215, %v1379
  %v1381 = vpop.f32.mrb[0].mxu0
  %1382 = vmatprep.mubr.f32.mxu0 0.0
  %1383 = vmatmul.mubr.f32.gmra.mrb[0].mxu0 %v1070
  %v1384 = vpop.f32.mrb[0].mxu0
  %v1385 = vadd.f32 %v1220, %v1384
  %v1386 = vpop.f32.mrb[0].mxu0
  %1387 = vmatprep.mubr.f32.mxu0 0.0
  %1388 = vmatmul.mubr.f32.gmra.mrb[0].mxu0 %v1073
  %v1389 = vpop.f32.mrb[0].mxu0
  %v1390 = vadd.f32 %v1225, %v1389
  %v1391 = vpop.f32.mrb[0].mxu0
  %1392 = vmatprep.mubr.f32.mxu0 0.0
  %1393 = vmatmul.mubr.f32.gmra.mrb[0].mxu0 %v1076
  %v1394 = vpop.f32.mrb[0].mxu0
  %v1395 = vadd.f32 %v1230, %v1394
  %v1396 = vpop.f32.mrb[0].mxu0
  %1397 = vmatprep.mubr.f32.mxu0 0.0
  %1398 = vmatmul.mubr.f32.gmra.mrb[0].mxu0 %v1079
  %v1399 = vpop.f32.mrb[0].mxu0
  %v1400 = vadd.f32 %v1235, %v1399
  %v1401 = vpop.f32.mrb[0].mxu0
  %1402 = vmatprep.mubr.f32.mxu0 0.0
  %1403 = vmatmul.mubr.f32.gmra.mrb[0].mxu0 %v1082
  %v1404 = vpop.f32.mrb[0].mxu0
  %v1405 = vadd.f32 %v1240, %v1404
  %v1406 = vpop.f32.mrb[0].mxu0
  %1407 = vmatprep.mubr.f32.mxu0 0.0
  %1408 = vmatmul.mubr.f32.gmra.mrb[0].mxu0 %v1085
  %v1409 = vpop.f32.mrb[0].mxu0
  %v1410 = vadd.f32 %v1245, %v1409
  %v1411 = vpop.f32.mrb[0].mxu0
  %1412 = vmatprep.mubr.f32.mxu0 0.0
  %1413 = vmatmul.mubr.f32.gmra.mrb[0].mxu0 %v1088
  %v1414 = vpop.f32.mrb[0].mxu0
  %v1415 = vadd.f32 %v1250, %v1414
  %v1416 = vpop.f32.mrb[0].mxu0
  %1417 = vmatprep.mubr.f32.mxu0 0.0
  %1418 = vmatmul.mubr.f32.gmra.mrb[0].mxu0 %v1091
  %v1419 = vpop.f32.mrb[0].mxu0
  %v1420 = vadd.f32 %v1255, %v1419
  %v1421 = vpop.f32.mrb[0].mxu0
  %1422 = vdwg.mxu0
  %v1423 = vmax.f32 %v952, %v1325
  %v1424 = vmax.f32 %v953, %v1330
  %v1425 = vmax.f32 %v954, %v1335
  %v1426 = vmax.f32 %v955, %v1340
  %v1427 = vmax.f32 %v956, %v1345
  %v1428 = vmax.f32 %v957, %v1350
  %v1429 = vmax.f32 %v958, %v1355
  %v1430 = vmax.f32 %v959, %v1360
  %v1431 = vmax.f32 %v960, %v1365
  %v1432 = vmax.f32 %v961, %v1370
  %v1433 = vmax.f32 %v962, %v1375
  %v1434 = vmax.f32 %v963, %v1380
  %v1435 = vmax.f32 %v964, %v1385
  %v1436 = vmax.f32 %v965, %v1390
  %v1437 = vmax.f32 %v966, %v1395
  %v1438 = vmax.f32 %v967, %v1400
  %v1439 = vmax.f32 %v968, %v1405
  %v1440 = vmax.f32 %v969, %v1410
  %v1441 = vmax.f32 %v970, %v1415
  %v1442 = vmax.f32 %v971, %v1420
  %s1443 = scalar_lea.vmem %s0, 1440
  %v1444 = vld [vmem:[%s1443] sm:$0xff]
  %v1445 = vld [vmem:[%s1443 + $0x8] sm:$0xff]
  %v1446 = vld [vmem:[%s1443 + $0x10] sm:$0xff]
  %v1447 = vld [vmem:[%s1443 + $0x18] sm:$0xff]
  %v1448 = vld [vmem:[%s1443 + $0x20] sm:$0xff]
  %v1449 = vld [vmem:[%s1443 + $0x28] sm:$0xff]
  %v1450 = vld [vmem:[%s1443 + $0x30] sm:$0xff]
  %v1451 = vld [vmem:[%s1443 + $0x38] sm:$0xff]
  %v1452 = vld [vmem:[%s1443 + $0x40] sm:$0xff]
  %v1453 = vld [vmem:[%s1443 + $0x48] sm:$0xff]
  %v1454 = vld [vmem:[%s1443 + $0x50] sm:$0xff]
  %v1455 = vld [vmem:[%s1443 + $0x58] sm:$0xff]
  %v1456 = vld [vmem:[%s1443 + $0x60] sm:$0xff]
  %v1457 = vld [vmem:[%s1443 + $0x68] sm:$0xff]
  %v1458 = vld [vmem:[%s1443 + $0x70] sm:$0xff]
  %v1459 = vld [vmem:[%s1443 + $0x78] sm:$0xff]
  %v1460 = vld [vmem:[%s1443 + $0x80] sm:$0xff]
  %v1461 = vld [vmem:[%s1443 + $0x88] sm:$0xff]
  %v1462 = vld [vmem:[%s1443 + $0x90] sm:$0xff]
  %v1463 = vld [vmem:[%s1443 + $0x98] sm:$0xff]
  %v1464 = vld [vmem:[%s1443 + $0xa0] sm:$0xff]
  %v1465 = vld [vmem:[%s1443 + $0xa8] sm:$0xff]
  %v1466 = vld [vmem:[%s1443 + $0xb0] sm:$0xff]
  %v1467 = vld [vmem:[%s1443 + $0xb8] sm:$0xff]
  %v1468 = vld [vmem:[%s1443 + $0xc0] sm:$0xff]
  %v1469 = vld [vmem:[%s1443 + $0xc8] sm:$0xff]
  %v1470 = vld [vmem:[%s1443 + $0xd0] sm:$0xff]
  %v1471 = vld [vmem:[%s1443 + $0xd8] sm:$0xff]
  %v1472 = vld [vmem:[%s1443 + $0xe0] sm:$0xff]
  %v1473 = vld [vmem:[%s1443 + $0xe8] sm:$0xff]
  %v1474 = vld [vmem:[%s1443 + $0xf0] sm:$0xff]
  %v1475 = vld [vmem:[%s1443 + $0xf8] sm:$0xff]
  %v1476 = vld [vmem:[%s1443 + $0x100] sm:$0xff]
  %v1477 = vld [vmem:[%s1443 + $0x108] sm:$0xff]
  %v1478 = vld [vmem:[%s1443 + $0x110] sm:$0xff]
  %v1479 = vld [vmem:[%s1443 + $0x118] sm:$0xff]
  %v1480 = vld [vmem:[%s1443 + $0x120] sm:$0xff]
  %v1481 = vld [vmem:[%s1443 + $0x128] sm:$0xff]
  %v1482 = vld [vmem:[%s1443 + $0x130] sm:$0xff]
  %v1483 = vld [vmem:[%s1443 + $0x138] sm:$0xff]
  %v1484 = vld [vmem:[%s1443 + $0x140] sm:$0xff]
  %v1485 = vld [vmem:[%s1443 + $0x148] sm:$0xff]
  %v1486 = vld [vmem:[%s1443 + $0x150] sm:$0xff]
  %v1487 = vld [vmem:[%s1443 + $0x158] sm:$0xff]
  %v1488 = vld [vmem:[%s1443 + $0x160] sm:$0xff]
  %v1489 = vld [vmem:[%s1443 + $0x168] sm:$0xff]
  %v1490 = vld [vmem:[%s1443 + $0x170] sm:$0xff]
  %v1491 = vld [vmem:[%s1443 + $0x178] sm:$0xff]
  %v1492 = vld [vmem:[%s1443 + $0x180] sm:$0xff]
  %v1493 = vld [vmem:[%s1443 + $0x188] sm:$0xff]
  %v1494 = vld [vmem:[%s1443 + $0x190] sm:$0xff]
  %v1495 = vld [vmem:[%s1443 + $0x198] sm:$0xff]
  %v1496 = vld [vmem:[%s1443 + $0x1a0] sm:$0xff]
  %v1497 = vld [vmem:[%s1443 + $0x1a8] sm:$0xff]
  %v1498 = vld [vmem:[%s1443 + $0x1b0] sm:$0xff]
  %v1499 = vld [vmem:[%s1443 + $0x1b8] sm:$0xff]
  %v1500 = vld [vmem:[%s1443 + $0x1c0] sm:$0xff]
  %v1501 = vld [vmem:[%s1443 + $0x1c8] sm:$0xff]
  %v1502 = vld [vmem:[%s1443 + $0x1d0] sm:$0xff]
  %v1503 = vld [vmem:[%s1443 + $0x1d8] sm:$0xff]
  %v1505 = vsel %vm110, %v1446, 0
  %v1508 = vsel %vm110, %v1449, 0
  %v1511 = vsel %vm110, %v1452, 0
  %v1514 = vsel %vm110, %v1455, 0
  %v1517 = vsel %vm110, %v1458, 0
  %v1520 = vsel %vm110, %v1461, 0
  %v1523 = vsel %vm110, %v1464, 0
  %v1526 = vsel %vm110, %v1467, 0
  %v1529 = vsel %vm110, %v1470, 0
  %v1532 = vsel %vm110, %v1473, 0
  %v1535 = vsel %vm110, %v1476, 0
  %v1538 = vsel %vm110, %v1479, 0
  %v1541 = vsel %vm110, %v1482, 0
  %v1544 = vsel %vm110, %v1485, 0
  %v1547 = vsel %vm110, %v1488, 0
  %v1550 = vsel %vm110, %v1491, 0
  %v1553 = vsel %vm110, %v1494, 0
  %v1556 = vsel %vm110, %v1497, 0
  %v1559 = vsel %vm110, %v1500, 0
  %v1562 = vsel %vm110, %v1503, 0
  %1564 = vmatprep.subr.mxu0 0.0
  %1565 = vmatpush1.msra.mxu0 %v14
  %1566 = vmatprep.subr.mxu0 0.0
  %1567 = vmatpush1.msra.mxu0 %v15
  %1568 = vmatprep.subr.mxu0 0.0
  %1569 = vmatpush1.msra.mxu0 %v16
  %1570 = vmatprep.subr.mxu0 0.0
  %1571 = vmatpush1.msra.mxu0 %v17
  %1572 = vmatprep.subr.mxu0 0.0
  %1573 = vmatpush1.msra.mxu0 %v18
  %1574 = vmatprep.subr.mxu0 0.0
  %1575 = vmatpush1.msra.mxu0 %v19
  %1576 = vmatprep.subr.mxu0 0.0
  %1577 = vmatpush1.msra.mxu0 %v20
  %1578 = vmatprep.subr.mxu0 0.0
  %1579 = vmatpush1.msra.mxu0 %v21
  %1580 = vmatprep.subr.mxu0 0.0
  %1581 = vmatpush1.msra.mxu0 %v22
  %1582 = vmatprep.subr.mxu0 0.0
  %1583 = vmatpush1.msra.mxu0 %v23
  %1584 = vmatprep.subr.mxu0 0.0
  %1585 = vmatpush1.msra.mxu0 %v24
  %1586 = vmatprep.subr.mxu0 0.0
  %1587 = vmatpush1.msra.mxu0 %v25
  %1588 = vmatprep.subr.mxu0 0.0
  %1589 = vmatpush1.msra.mxu0 %v26
  %1590 = vmatprep.subr.mxu0 0.0
  %1591 = vmatpush1.msra.mxu0 %v27
  %1592 = vmatprep.subr.mxu0 0.0
  %1593 = vmatpush1.msra.mxu0 %v28
  %1594 = vmatprep.subr.mxu0 0.0
  %1595 = vmatpush1.msra.mxu0 %v29
  %1596 = vmatprep.subr.mxu0 0.0
  %1597 = vmatpush1.msra.mxu0 %v30
  %1598 = vmatprep.subr.mxu0 0.0
  %1599 = vmatpush1.msra.mxu0 %v31
  %1600 = vmatprep.subr.mxu0 0.0
  %1601 = vmatpush1.msra.mxu0 %v32
  %1602 = vmatprep.subr.mxu0 0.0
  %1603 = vmatpush1.msra.mxu0 %v33
  %1604 = vmatprep.subr.mxu0 0.0
  %1605 = vmatpush1.msra.mxu0 %v34
  %1606 = vmatprep.subr.mxu0 0.0
  %1607 = vmatpush1.msra.mxu0 %v35
  %1608 = vmatprep.subr.mxu0 0.0
  %1609 = vmatpush1.msra.mxu0 %v36
  %1610 = vmatprep.subr.mxu0 0.0
  %1611 = vmatpush1.msra.mxu0 %v37
  %1612 = vmatprep.subr.mxu0 0.0
  %1613 = vmatpush1.msra.mxu0 %v38
  %1614 = vmatprep.subr.mxu0 0.0
  %1615 = vmatpush1.msra.mxu0 %v39
  %1616 = vmatprep.subr.mxu0 0.0
  %1617 = vmatpush1.msra.mxu0 %v40
  %1618 = vmatprep.subr.mxu0 0.0
  %1619 = vmatpush1.msra.mxu0 %v41
  %1620 = vmatprep.subr.mxu0 0.0
  %1621 = vmatpush1.msra.mxu0 %v42
  %1622 = vmatprep.subr.mxu0 0.0
  %1623 = vmatpush1.msra.mxu0 %v43
  %1624 = vmatprep.subr.mxu0 0.0
  %1625 = vmatpush1.msra.mxu0 %v44
  %1626 = vmatprep.subr.mxu0 0.0
  %1627 = vmatpush1.msra.mxu0 %v45
  %1628 = vmatprep.mubr.f32.mxu0 %v1445
  %1629 = vmatmul.mubr.f32.gmra.mrb[0].mxu0 %v1444
  %v1630 = vpop.f32.mrb[0].mxu0
  %v1631 = vadd.f32 0.0, %v1630
  %v1632 = vpop.f32.mrb[0].mxu0
  %1633 = vmatprep.mubr.f32.mxu0 %v1448
  %1634 = vmatmul.mubr.f32.gmra.mrb[0].mxu0 %v1447
  %v1635 = vpop.f32.mrb[0].mxu0
  %v1636 = vadd.f32 0.0, %v1635
  %v1637 = vpop.f32.mrb[0].mxu0
  %1638 = vmatprep.mubr.f32.mxu0 %v1451
  %1639 = vmatmul.mubr.f32.gmra.mrb[0].mxu0 %v1450
  %v1640 = vpop.f32.mrb[0].mxu0
  %v1641 = vadd.f32 0.0, %v1640
  %v1642 = vpop.f32.mrb[0].mxu0
  %1643 = vmatprep.mubr.f32.mxu0 %v1454
  %1644 = vmatmul.mubr.f32.gmra.mrb[0].mxu0 %v1453
  %v1645 = vpop.f32.mrb[0].mxu0
  %v1646 = vadd.f32 0.0, %v1645
  %v1647 = vpop.f32.mrb[0].mxu0
  %1648 = vmatprep.mubr.f32.mxu0 %v1457
  %1649 = vmatmul.mubr.f32.gmra.mrb[0].mxu0 %v1456
  %v1650 = vpop.f32.mrb[0].mxu0
  %v1651 = vadd.f32 0.0, %v1650
  %v1652 = vpop.f32.mrb[0].mxu0
  %1653 = vmatprep.mubr.f32.mxu0 %v1460
  %1654 = vmatmul.mubr.f32.gmra.mrb[0].mxu0 %v1459
  %v1655 = vpop.f32.mrb[0].mxu0
  %v1656 = vadd.f32 0.0, %v1655
  %v1657 = vpop.f32.mrb[0].mxu0
  %1658 = vmatprep.mubr.f32.mxu0 %v1463
  %1659 = vmatmul.mubr.f32.gmra.mrb[0].mxu0 %v1462
  %v1660 = vpop.f32.mrb[0].mxu0
  %v1661 = vadd.f32 0.0, %v1660
  %v1662 = vpop.f32.mrb[0].mxu0
  %1663 = vmatprep.mubr.f32.mxu0 %v1466
  %1664 = vmatmul.mubr.f32.gmra.mrb[0].mxu0 %v1465
  %v1665 = vpop.f32.mrb[0].mxu0
  %v1666 = vadd.f32 0.0, %v1665
  %v1667 = vpop.f32.mrb[0].mxu0
  %1668 = vmatprep.mubr.f32.mxu0 %v1469
  %1669 = vmatmul.mubr.f32.gmra.mrb[0].mxu0 %v1468
  %v1670 = vpop.f32.mrb[0].mxu0
  %v1671 = vadd.f32 0.0, %v1670
  %v1672 = vpop.f32.mrb[0].mxu0
  %1673 = vmatprep.mubr.f32.mxu0 %v1472
  %1674 = vmatmul.mubr.f32.gmra.mrb[0].mxu0 %v1471
  %v1675 = vpop.f32.mrb[0].mxu0
  %v1676 = vadd.f32 0.0, %v1675
  %v1677 = vpop.f32.mrb[0].mxu0
  %1678 = vmatprep.mubr.f32.mxu0 %v1475
  %1679 = vmatmul.mubr.f32.gmra.mrb[0].mxu0 %v1474
  %v1680 = vpop.f32.mrb[0].mxu0
  %v1681 = vadd.f32 0.0, %v1680
  %v1682 = vpop.f32.mrb[0].mxu0
  %1683 = vmatprep.mubr.f32.mxu0 %v1478
  %1684 = vmatmul.mubr.f32.gmra.mrb[0].mxu0 %v1477
  %v1685 = vpop.f32.mrb[0].mxu0
  %v1686 = vadd.f32 0.0, %v1685
  %v1687 = vpop.f32.mrb[0].mxu0
  %1688 = vmatprep.mubr.f32.mxu0 %v1481
  %1689 = vmatmul.mubr.f32.gmra.mrb[0].mxu0 %v1480
  %v1690 = vpop.f32.mrb[0].mxu0
  %v1691 = vadd.f32 0.0, %v1690
  %v1692 = vpop.f32.mrb[0].mxu0
  %1693 = vmatprep.mubr.f32.mxu0 %v1484
  %1694 = vmatmul.mubr.f32.gmra.mrb[0].mxu0 %v1483
  %v1695 = vpop.f32.mrb[0].mxu0
  %v1696 = vadd.f32 0.0, %v1695
  %v1697 = vpop.f32.mrb[0].mxu0
  %1698 = vmatprep.mubr.f32.mxu0 %v1487
  %1699 = vmatmul.mubr.f32.gmra.mrb[0].mxu0 %v1486
  %v1700 = vpop.f32.mrb[0].mxu0
  %v1701 = vadd.f32 0.0, %v1700
  %v1702 = vpop.f32.mrb[0].mxu0
  %1703 = vmatprep.mubr.f32.mxu0 %v1490
  %1704 = vmatmul.mubr.f32.gmra.mrb[0].mxu0 %v1489
  %v1705 = vpop.f32.mrb[0].mxu0
  %v1706 = vadd.f32 0.0, %v1705
  %v1707 = vpop.f32.mrb[0].mxu0
  %1708 = vmatprep.mubr.f32.mxu0 %v1493
  %1709 = vmatmul.mubr.f32.gmra.mrb[0].mxu0 %v1492
  %v1710 = vpop.f32.mrb[0].mxu0
  %v1711 = vadd.f32 0.0, %v1710
  %v1712 = vpop.f32.mrb[0].mxu0
  %1713 = vmatprep.mubr.f32.mxu0 %v1496
  %1714 = vmatmul.mubr.f32.gmra.mrb[0].mxu0 %v1495
  %v1715 = vpop.f32.mrb[0].mxu0
  %v1716 = vadd.f32 0.0, %v1715
  %v1717 = vpop.f32.mrb[0].mxu0
  %1718 = vmatprep.mubr.f32.mxu0 %v1499
  %1719 = vmatmul.mubr.f32.gmra.mrb[0].mxu0 %v1498
  %v1720 = vpop.f32.mrb[0].mxu0
  %v1721 = vadd.f32 0.0, %v1720
  %v1722 = vpop.f32.mrb[0].mxu0
  %1723 = vmatprep.mubr.f32.mxu0 %v1502
  %1724 = vmatmul.mubr.f32.gmra.mrb[0].mxu0 %v1501
  %v1725 = vpop.f32.mrb[0].mxu0
  %v1726 = vadd.f32 0.0, %v1725
  %v1727 = vpop.f32.mrb[0].mxu0
  %1728 = vdwg.mxu0
  %1729 = vmatprep.subr.mxu0 0.0
  %1730 = vmatpush1.msra.mxu0 %v46
  %1731 = vmatprep.subr.mxu0 0.0
  %1732 = vmatpush1.msra.mxu0 %v47
  %1733 = vmatprep.subr.mxu0 0.0
  %1734 = vmatpush1.msra.mxu0 %v48
  %1735 = vmatprep.subr.mxu0 0.0
  %1736 = vmatpush1.msra.mxu0 %v49
  %1737 = vmatprep.subr.mxu0 0.0
  %1738 = vmatpush1.msra.mxu0 0.0
  %1739 = vmatprep.subr.mxu0 0.0
  %1740 = vmatpush1.msra.mxu0 0.0
  %1741 = vmatprep.subr.mxu0 0.0
  %1742 = vmatpush1.msra.mxu0 0.0
  %1743 = vmatprep.subr.mxu0 0.0
  %1744 = vmatpush1.msra.mxu0 0.0
  %1745 = vmatprep.subr.mxu0 0.0
  %1746 = vmatpush1.msra.mxu0 0.0
  %1747 = vmatprep.subr.mxu0 0.0
  %1748 = vmatpush1.msra.mxu0 0.0
  %1749 = vmatprep.subr.mxu0 0.0
  %1750 = vmatpush1.msra.mxu0 0.0
  %1751 = vmatprep.subr.mxu0 0.0
  %1752 = vmatpush1.msra.mxu0 0.0
  %1753 = vmatprep.subr.mxu0 0.0
  %1754 = vmatpush1.msra.mxu0 0.0
  %1755 = vmatprep.subr.mxu0 0.0
  %1756 = vmatpush1.msra.mxu0 0.0
  %1757 = vmatprep.subr.mxu0 0.0
  %1758 = vmatpush1.msra.mxu0 0.0
  %1759 = vmatprep.subr.mxu0 0.0
  %1760 = vmatpush1.msra.mxu0 0.0
  %1761 = vmatprep.subr.mxu0 0.0
  %1762 = vmatpush1.msra.mxu0 0.0
  %1763 = vmatprep.subr.mxu0 0.0
  %1764 = vmatpush1.msra.mxu0 0.0
  %1765 = vmatprep.subr.mxu0 0.0
  %1766 = vmatpush1.msra.mxu0 0.0
  %1767 = vmatprep.subr.mxu0 0.0
  %1768 = vmatpush1.msra.mxu0 0.0
  %1769 = vmatprep.subr.mxu0 0.0
  %1770 = vmatpush1.msra.mxu0 0.0
  %1771 = vmatprep.subr.mxu0 0.0
  %1772 = vmatpush1.msra.mxu0 0.0
  %1773 = vmatprep.subr.mxu0 0.0
  %1774 = vmatpush1.msra.mxu0 0.0
  %1775 = vmatprep.subr.mxu0 0.0
  %1776 = vmatpush1.msra.mxu0 0.0
  %1777 = vmatprep.subr.mxu0 0.0
  %1778 = vmatpush1.msra.mxu0 0.0
  %1779 = vmatprep.subr.mxu0 0.0
  %1780 = vmatpush1.msra.mxu0 0.0
  %1781 = vmatprep.subr.mxu0 0.0
  %1782 = vmatpush1.msra.mxu0 0.0
  %1783 = vmatprep.subr.mxu0 0.0
  %1784 = vmatpush1.msra.mxu0 0.0
  %1785 = vmatprep.subr.mxu0 0.0
  %1786 = vmatpush1.msra.mxu0 0.0
  %1787 = vmatprep.subr.mxu0 0.0
  %1788 = vmatpush1.msra.mxu0 0.0
  %1789 = vmatprep.subr.mxu0 0.0
  %1790 = vmatpush1.msra.mxu0 0.0
  %1791 = vmatprep.subr.mxu0 0.0
  %1792 = vmatpush1.msra.mxu0 0.0
  %1793 = vmatprep.mubr.f32.mxu0 0.0
  %1794 = vmatmul.mubr.f32.gmra.mrb[0].mxu0 %v1505
  %v1795 = vpop.f32.mrb[0].mxu0
  %v1796 = vadd.f32 %v1631, %v1795
  %v1797 = vpop.f32.mrb[0].mxu0
  %1798 = vmatprep.mubr.f32.mxu0 0.0
  %1799 = vmatmul.mubr.f32.gmra.mrb[0].mxu0 %v1508
  %v1800 = vpop.f32.mrb[0].mxu0
  %v1801 = vadd.f32 %v1636, %v1800
  %v1802 = vpop.f32.mrb[0].mxu0
  %1803 = vmatprep.mubr.f32.mxu0 0.0
  %1804 = vmatmul.mubr.f32.gmra.mrb[0].mxu0 %v1511
  %v1805 = vpop.f32.mrb[0].mxu0
  %v1806 = vadd.f32 %v1641, %v1805
  %v1807 = vpop.f32.mrb[0].mxu0
  %1808 = vmatprep.mubr.f32.mxu0 0.0
  %1809 = vmatmul.mubr.f32.gmra.mrb[0].mxu0 %v1514
  %v1810 = vpop.f32.mrb[0].mxu0
  %v1811 = vadd.f32 %v1646, %v1810
  %v1812 = vpop.f32.mrb[0].mxu0
  %1813 = vmatprep.mubr.f32.mxu0 0.0
  %1814 = vmatmul.mubr.f32.gmra.mrb[0].mxu0 %v1517
  %v1815 = vpop.f32.mrb[0].mxu0
  %v1816 = vadd.f32 %v1651, %v1815
  %v1817 = vpop.f32.mrb[0].mxu0
  %1818 = vmatprep.mubr.f32.mxu0 0.0
  %1819 = vmatmul.mubr.f32.gmra.mrb[0].mxu0 %v1520
  %v1820 = vpop.f32.mrb[0].mxu0
  %v1821 = vadd.f32 %v1656, %v1820
  %v1822 = vpop.f32.mrb[0].mxu0
  %1823 = vmatprep.mubr.f32.mxu0 0.0
  %1824 = vmatmul.mubr.f32.gmra.mrb[0].mxu0 %v1523
  %v1825 = vpop.f32.mrb[0].mxu0
  %v1826 = vadd.f32 %v1661, %v1825
  %v1827 = vpop.f32.mrb[0].mxu0
  %1828 = vmatprep.mubr.f32.mxu0 0.0
  %1829 = vmatmul.mubr.f32.gmra.mrb[0].mxu0 %v1526
  %v1830 = vpop.f32.mrb[0].mxu0
  %v1831 = vadd.f32 %v1666, %v1830
  %v1832 = vpop.f32.mrb[0].mxu0
  %1833 = vmatprep.mubr.f32.mxu0 0.0
  %1834 = vmatmul.mubr.f32.gmra.mrb[0].mxu0 %v1529
  %v1835 = vpop.f32.mrb[0].mxu0
  %v1836 = vadd.f32 %v1671, %v1835
  %v1837 = vpop.f32.mrb[0].mxu0
  %1838 = vmatprep.mubr.f32.mxu0 0.0
  %1839 = vmatmul.mubr.f32.gmra.mrb[0].mxu0 %v1532
  %v1840 = vpop.f32.mrb[0].mxu0
  %v1841 = vadd.f32 %v1676, %v1840
  %v1842 = vpop.f32.mrb[0].mxu0
  %1843 = vmatprep.mubr.f32.mxu0 0.0
  %1844 = vmatmul.mubr.f32.gmra.mrb[0].mxu0 %v1535
  %v1845 = vpop.f32.mrb[0].mxu0
  %v1846 = vadd.f32 %v1681, %v1845
  %v1847 = vpop.f32.mrb[0].mxu0
  %1848 = vmatprep.mubr.f32.mxu0 0.0
  %1849 = vmatmul.mubr.f32.gmra.mrb[0].mxu0 %v1538
  %v1850 = vpop.f32.mrb[0].mxu0
  %v1851 = vadd.f32 %v1686, %v1850
  %v1852 = vpop.f32.mrb[0].mxu0
  %1853 = vmatprep.mubr.f32.mxu0 0.0
  %1854 = vmatmul.mubr.f32.gmra.mrb[0].mxu0 %v1541
  %v1855 = vpop.f32.mrb[0].mxu0
  %v1856 = vadd.f32 %v1691, %v1855
  %v1857 = vpop.f32.mrb[0].mxu0
  %1858 = vmatprep.mubr.f32.mxu0 0.0
  %1859 = vmatmul.mubr.f32.gmra.mrb[0].mxu0 %v1544
  %v1860 = vpop.f32.mrb[0].mxu0
  %v1861 = vadd.f32 %v1696, %v1860
  %v1862 = vpop.f32.mrb[0].mxu0
  %1863 = vmatprep.mubr.f32.mxu0 0.0
  %1864 = vmatmul.mubr.f32.gmra.mrb[0].mxu0 %v1547
  %v1865 = vpop.f32.mrb[0].mxu0
  %v1866 = vadd.f32 %v1701, %v1865
  %v1867 = vpop.f32.mrb[0].mxu0
  %1868 = vmatprep.mubr.f32.mxu0 0.0
  %1869 = vmatmul.mubr.f32.gmra.mrb[0].mxu0 %v1550
  %v1870 = vpop.f32.mrb[0].mxu0
  %v1871 = vadd.f32 %v1706, %v1870
  %v1872 = vpop.f32.mrb[0].mxu0
  %1873 = vmatprep.mubr.f32.mxu0 0.0
  %1874 = vmatmul.mubr.f32.gmra.mrb[0].mxu0 %v1553
  %v1875 = vpop.f32.mrb[0].mxu0
  %v1876 = vadd.f32 %v1711, %v1875
  %v1877 = vpop.f32.mrb[0].mxu0
  %1878 = vmatprep.mubr.f32.mxu0 0.0
  %1879 = vmatmul.mubr.f32.gmra.mrb[0].mxu0 %v1556
  %v1880 = vpop.f32.mrb[0].mxu0
  %v1881 = vadd.f32 %v1716, %v1880
  %v1882 = vpop.f32.mrb[0].mxu0
  %1883 = vmatprep.mubr.f32.mxu0 0.0
  %1884 = vmatmul.mubr.f32.gmra.mrb[0].mxu0 %v1559
  %v1885 = vpop.f32.mrb[0].mxu0
  %v1886 = vadd.f32 %v1721, %v1885
  %v1887 = vpop.f32.mrb[0].mxu0
  %1888 = vmatprep.mubr.f32.mxu0 0.0
  %1889 = vmatmul.mubr.f32.gmra.mrb[0].mxu0 %v1562
  %v1890 = vpop.f32.mrb[0].mxu0
  %v1891 = vadd.f32 %v1726, %v1890
  %v1892 = vpop.f32.mrb[0].mxu0
  %1893 = vdwg.mxu0
  %v1894 = vmax.f32 %v1423, %v1796
  %v1895 = vmax.f32 %v1424, %v1801
  %v1896 = vmax.f32 %v1425, %v1806
  %v1897 = vmax.f32 %v1426, %v1811
  %v1898 = vmax.f32 %v1427, %v1816
  %v1899 = vmax.f32 %v1428, %v1821
  %v1900 = vmax.f32 %v1429, %v1826
  %v1901 = vmax.f32 %v1430, %v1831
  %v1902 = vmax.f32 %v1431, %v1836
  %v1903 = vmax.f32 %v1432, %v1841
  %v1904 = vmax.f32 %v1433, %v1846
  %v1905 = vmax.f32 %v1434, %v1851
  %v1906 = vmax.f32 %v1435, %v1856
  %v1907 = vmax.f32 %v1436, %v1861
  %v1908 = vmax.f32 %v1437, %v1866
  %v1909 = vmax.f32 %v1438, %v1871
  %v1910 = vmax.f32 %v1439, %v1876
  %v1911 = vmax.f32 %v1440, %v1881
  %v1912 = vmax.f32 %v1441, %v1886
  %v1913 = vmax.f32 %v1442, %v1891
  %v1914 = vld [vmem:[%s2] sm:$0x1]
  %v1916 = vlaneseq
  %v1917 = vshrl.u32 %v1916, 7
  %v1918 = vsub.s32 0, %v1917
  %v1919 = vrot.slane %v1914, %v1918
  %v1921 = vadd.f32 %v1894, %v1919
  %v1922 = vadd.f32 %v1895, %v1919
  %v1923 = vadd.f32 %v1896, %v1919
  %v1924 = vadd.f32 %v1897, %v1919
  %v1925 = vadd.f32 %v1898, %v1919
  %v1926 = vadd.f32 %v1899, %v1919
  %v1927 = vadd.f32 %v1900, %v1919
  %v1928 = vadd.f32 %v1901, %v1919
  %v1929 = vadd.f32 %v1902, %v1919
  %v1930 = vadd.f32 %v1903, %v1919
  %v1931 = vadd.f32 %v1904, %v1919
  %v1932 = vadd.f32 %v1905, %v1919
  %v1933 = vadd.f32 %v1906, %v1919
  %v1934 = vadd.f32 %v1907, %v1919
  %v1935 = vadd.f32 %v1908, %v1919
  %v1936 = vadd.f32 %v1909, %v1919
  %v1937 = vadd.f32 %v1910, %v1919
  %v1938 = vadd.f32 %v1911, %v1919
  %v1939 = vadd.f32 %v1912, %v1919
  %v1940 = vadd.f32 %v1913, %v1919
  %vm1941 = vcmask 523264
  %1942 = vst.msk [vmem:[%s3] sm:$0xff] %vm1941, %v1921
  %1943 = vst.msk [vmem:[%s3 + $0x8] sm:$0xff] %vm1941, %v1922
  %1944 = vst.msk [vmem:[%s3 + $0x10] sm:$0xff] %vm1941, %v1923
  %1945 = vst.msk [vmem:[%s3 + $0x18] sm:$0xff] %vm1941, %v1924
  %1946 = vst.msk [vmem:[%s3 + $0x20] sm:$0xff] %vm1941, %v1925
  %1947 = vst.msk [vmem:[%s3 + $0x28] sm:$0xff] %vm1941, %v1926
  %1948 = vst.msk [vmem:[%s3 + $0x30] sm:$0xff] %vm1941, %v1927
  %1949 = vst.msk [vmem:[%s3 + $0x38] sm:$0xff] %vm1941, %v1928
  %1950 = vst.msk [vmem:[%s3 + $0x40] sm:$0xff] %vm1941, %v1929
  %1951 = vst.msk [vmem:[%s3 + $0x48] sm:$0xff] %vm1941, %v1930
  %1952 = vst.msk [vmem:[%s3 + $0x50] sm:$0xff] %vm1941, %v1931
  %1953 = vst.msk [vmem:[%s3 + $0x58] sm:$0xff] %vm1941, %v1932
  %1954 = vst.msk [vmem:[%s3 + $0x60] sm:$0xff] %vm1941, %v1933
  %1955 = vst.msk [vmem:[%s3 + $0x68] sm:$0xff] %vm1941, %v1934
  %1956 = vst.msk [vmem:[%s3 + $0x70] sm:$0xff] %vm1941, %v1935
  %1957 = vst.msk [vmem:[%s3 + $0x78] sm:$0xff] %vm1941, %v1936
  %1958 = vst.msk [vmem:[%s3 + $0x80] sm:$0xff] %vm1941, %v1937
  %1959 = vst.msk [vmem:[%s3 + $0x88] sm:$0xff] %vm1941, %v1938
  %1960 = vst.msk [vmem:[%s3 + $0x90] sm:$0xff] %vm1941, %v1939
  %1961 = vst.msk [vmem:[%s3 + $0x98] sm:$0xff] %vm1941, %v1940
  // Predicated region
  $region14: #{net_forward.4} parent=0 // pred_check
    _
  $region15: #{net_forward.4} parent=0 // pred_check_branch
    %1963 = sbr.rel (0) target = $region17
  $region16: #{net_forward.4} parent=0 // pred_region
    _
  $region17: #{net_forward.4} parent=0 // pred_fallthru
    _
  // Predicated region
  $region18: #{net_forward.4} parent=0 // pred_check
    _
  $region19: #{net_forward.4} parent=0 // pred_check_branch
    %1965 = sbr.rel (0) target = $region21
  $region20: #{net_forward.4} parent=0 // pred_region
    _
  $region21: #{net_forward.4} parent=0 // pred_fallthru
    _

// kernel: net_forward.5
$region0: #{net_forward.5}
  #allocation0 [shape = 'u32[]', space=smem, size = 0x4, offset = 0x4, fixed_abs, tag = 'smem constant byte address 0x4 - core index']
  #allocation1 [shape = 'u32[144,128]{1,0:T(1,128)}', space=vmem, size = 0x12000, scoped, tag = 'internal scratch']
  #allocation2 [shape = 'f32[2,1024]{1,0:T(2,128)}', space=vmem, size = 0x2000, scoped, tag = 'scratch operand']
  %s0 = inlined_call_operand.vmem [shape: f32[2,5120], index: 0, kind: input, shape index: {}]
  %s1 = inlined_call_operand.vmem [shape: bf16[5120,1024], index: 1, kind: input, shape index: {}]
  %s2 = inlined_call_operand.vmem [shape: f32[1,1024], index: 2, kind: input, shape index: {}]
  %s3 = inlined_call_operand.vmem [shape: bf16[1024,128], index: 3, kind: input, shape index: {}]
  %s4 = inlined_call_operand.vmem [shape: f32[1,128], index: 4, kind: input, shape index: {}]
  %s5 = inlined_call_operand.hbm [shape: f32[2,128], index: 5, kind: output, shape index: {}]
  %s6 = sld [smem:[#allocation0]]
  $region61: #{net_forward.5} parent=0
    _
  %s8 = ssub.s32 1, %s6
  %s9 = scalar_select 0, %s8, %s6
  $region1: #{net_forward.5} parent=0
    #allocation3 [shape = 'u8[1024]{0}', space=vmem, size = 0x400, scoped, tag = 'output window, operand 0, single buffered']
    #allocation4 [shape = 's32[2]{0}', space=sflag, size = 0x8, scoped, tag = 'scoped memory for net_forward.5']
    %10 = vsyncpa [#allocation4], 0
    loop: start=0, step=1, limit=7
    $region2: #{net_forward.5} parent=1 // loop_pre_header
      _
    $region3: #{net_forward.5} parent=1 // loop_header
      %s12 = sphi 0, %s16
      %p13 = scmp.ge.s32.totalorder %s12, 7
      %s22 = sphi 0, %s24
      %s25 = sphi 0, %s22
      %s26 = sphi 0, %s25
      %s42 = sphi 0, %s26
      %s48 = sphi 0, %s50
      %s51 = sphi 0, %s48
      %s52 = sphi 0, %s51
      %s68 = sphi 0, %s52
      %s72 = sphi 0, %s72
      %s74 = sphi 0, %s72
      %s75 = sphi 0, %s74
      %s89 = sphi 0, %s75
      %s93 = sphi 0, %s93
      %s95 = sphi 0, %s93
      %s96 = sphi 0, %s95
      %s110 = sphi 0, %s96
      %s114 = sphi 0, %s114
      %s116 = sphi 0, %s114
      %s117 = sphi 0, %s116
      %s131 = sphi 0, %s117
      %s135 = sphi 0, %s135
      %s137 = sphi 0, %s135
      %s138 = sphi 0, %s137
      %s152 = sphi 0, %s138
    $region4: #{net_forward.5} parent=1 // loop_header_branch
      %15 = sbr.rel (%p13) target = $region8
    $region5: #{net_forward.5} parent=1 // loop_body
      %s17 = ssub.s32 %s12, 1
      %s18 = ssub.s32 %s12, 2
      %s19 = sadd.s32 %s12, 1
      %s20 = ssub.s32 %s12, %s19
      %p21 = scmp.eq.s32.totalorder %s20, 0
      %s23 = sadd.s32 %s22, 1
      %s24 = scalar_select %p21, %s22, %s23
      %p27 = pneg %p21
      %p28 = scmp.eq.s32.totalorder %s12, 4
      %p29 = por %p27, %p28
      %p30 = scmp.ne.s32.totalorder %s22, %s25
      %p31 = scmp.eq.s32.totalorder %s12, 0
      %p32 = por %p30, %p31
      %p33 = scmp.ne.s32.totalorder %s22, %s25
      %p34 = scmp.eq.s32.totalorder %s17, 4
      %p35 = por %p33, %p34
      %p36 = scmp.ne.s32.totalorder %s25, %s26
      %p37 = scmp.eq.s32.totalorder %s17, 0
      %p38 = por %p36, %p37
      %p39 = scmp.ne.s32.totalorder %s25, %s26
      %p40 = scmp.eq.s32.totalorder %s18, 4
      %p41 = por %p39, %p40
      %p43 = scmp.ne.s32.totalorder %s26, %s42
      %p44 = scmp.eq.s32.totalorder %s18, 0
      %p45 = por %p43, %p44
      %s46 = ssub.s32 %s12, %s19
      %p47 = scmp.eq.s32.totalorder %s46, 0
      %s49 = sadd.s32 %s48, 1
      %s50 = scalar_select %p47, %s48, %s49
      %p53 = pneg %p47
      %p54 = scmp.eq.s32.totalorder %s12, 4
      %p55 = por %p53, %p54
      %p56 = scmp.ne.s32.totalorder %s48, %s51
      %p57 = scmp.eq.s32.totalorder %s12, 0
      %p58 = por %p56, %p57
      %p59 = scmp.ne.s32.totalorder %s48, %s51
      %p60 = scmp.eq.s32.totalorder %s17, 4
      %p61 = por %p59, %p60
      %p62 = scmp.ne.s32.totalorder %s51, %s52
      %p63 = scmp.eq.s32.totalorder %s17, 0
      %p64 = por %p62, %p63
      %p65 = scmp.ne.s32.totalorder %s51, %s52
      %p66 = scmp.eq.s32.totalorder %s18, 4
      %p67 = por %p65, %p66
      %p69 = scmp.ne.s32.totalorder %s52, %s68
      %p70 = scmp.eq.s32.totalorder %s18, 0
      %p71 = por %p69, %p70
      %s73 = sadd.s32 %s72, 1
      %p76 = scmp.eq.s32.totalorder %s12, 4
      %p77 = scmp.ne.s32.totalorder %s72, %s74
      %p78 = scmp.eq.s32.totalorder %s12, 0
      %p79 = por %p77, %p78
      %p80 = scmp.ne.s32.totalorder %s72, %s74
      %p81 = scmp.eq.s32.totalorder %s17, 4
      %p82 = por %p80, %p81
      %p83 = scmp.ne.s32.totalorder %s74, %s75
      %p84 = scmp.eq.s32.totalorder %s17, 0
      %p85 = por %p83, %p84
      %p86 = scmp.ne.s32.totalorder %s74, %s75
      %p87 = scmp.eq.s32.totalorder %s18, 4
      %p88 = por %p86, %p87
      %p90 = scmp.ne.s32.totalorder %s75, %s89
      %p91 = scmp.eq.s32.totalorder %s18, 0
      %p92 = por %p90, %p91
      %s94 = sadd.s32 %s93, 1
      %p97 = scmp.eq.s32.totalorder %s12, 4
      %p98 = scmp.ne.s32.totalorder %s93, %s95
      %p99 = scmp.eq.s32.totalorder %s12, 0
      %p100 = por %p98, %p99
      %p101 = scmp.ne.s32.totalorder %s93, %s95
      %p102 = scmp.eq.s32.totalorder %s17, 4
      %p103 = por %p101, %p102
      %p104 = scmp.ne.s32.totalorder %s95, %s96
      %p105 = scmp.eq.s32.totalorder %s17, 0
      %p106 = por %p104, %p105
      %p107 = scmp.ne.s32.totalorder %s95, %s96
      %p108 = scmp.eq.s32.totalorder %s18, 4
      %p109 = por %p107, %p108
      %p111 = scmp.ne.s32.totalorder %s96, %s110
      %p112 = scmp.eq.s32.totalorder %s18, 0
      %p113 = por %p111, %p112
      %s115 = sadd.s32 %s114, 1
      %p118 = scmp.eq.s32.totalorder %s12, 4
      %p119 = scmp.ne.s32.totalorder %s114, %s116
      %p120 = scmp.eq.s32.totalorder %s12, 0
      %p121 = por %p119, %p120
      %p122 = scmp.ne.s32.totalorder %s114, %s116
      %p123 = scmp.eq.s32.totalorder %s17, 4
      %p124 = por %p122, %p123
      %p125 = scmp.ne.s32.totalorder %s116, %s117
      %p126 = scmp.eq.s32.totalorder %s17, 0
      %p127 = por %p125, %p126
      %p128 = scmp.ne.s32.totalorder %s116, %s117
      %p129 = scmp.eq.s32.totalorder %s18, 4
      %p130 = por %p128, %p129
      %p132 = scmp.ne.s32.totalorder %s117, %s131
      %p133 = scmp.eq.s32.totalorder %s18, 0
      %p134 = por %p132, %p133
      %s136 = sadd.s32 %s135, 1
      %p139 = scmp.eq.s32.totalorder %s12, 4
      %p140 = scmp.ne.s32.totalorder %s135, %s137
      %p141 = scmp.eq.s32.totalorder %s12, 0
      %p142 = por %p140, %p141
      %p143 = scmp.ne.s32.totalorder %s135, %s137
      %p144 = scmp.eq.s32.totalorder %s17, 4
      %p145 = por %p143, %p144
      %p146 = scmp.ne.s32.totalorder %s137, %s138
      %p147 = scmp.eq.s32.totalorder %s17, 0
      %p148 = por %p146, %p147
      %p149 = scmp.ne.s32.totalorder %s137, %s138
      %p150 = scmp.eq.s32.totalorder %s18, 4
      %p151 = por %p149, %p150
      %p153 = scmp.ne.s32.totalorder %s138, %s152
      %p154 = scmp.eq.s32.totalorder %s18, 0
      %p155 = por %p153, %p154
      %p156 = scmp.le.s32.totalorder 1, %s12
      %p157 = scmp.lt.s32.totalorder %s12, 6
      %p158 = pnand %p156, %p157
      %p159 = pneg %p158
      // Predicated region
      $region9: #{net_forward.5} parent=5 // pred_check
        _
      $region10: #{net_forward.5} parent=5 // pred_check_branch
        %161 = sbr.rel (%p158) target = $region12
      $region11: #{net_forward.5} parent=5 // pred_region
        %s162 = ssub.s32 %s12, 1
        // Predicated region
        $region13: #{net_forward.5} parent=11 // pred_check
          %p163 = pneg %p85
        $region14: #{net_forward.5} parent=11 // pred_check_branch
          %165 = sbr.rel (%p163) target = $region16
        $region15: #{net_forward.5} parent=11 // pred_region
          _
        $region16: #{net_forward.5} parent=11 // pred_fallthru
          _
        // Predicated region
        $region17: #{net_forward.5} parent=11 // pred_check
          %p166 = pneg %p106
        $region18: #{net_forward.5} parent=11 // pred_check_branch
          %168 = sbr.rel (%p166) target = $region20
        $region19: #{net_forward.5} parent=11 // pred_region
          _
        $region20: #{net_forward.5} parent=11 // pred_fallthru
          _
        // Predicated region
        $region21: #{net_forward.5} parent=11 // pred_check
          %p169 = pneg %p127
        $region22: #{net_forward.5} parent=11 // pred_check_branch
          %171 = sbr.rel (%p169) target = $region24
        $region23: #{net_forward.5} parent=11 // pred_region
          _
        $region24: #{net_forward.5} parent=11 // pred_fallthru
          _
      $region12: #{net_forward.5} parent=5 // pred_fallthru
        _
      %p172 = scmp.lt.s32.totalorder %s12, 5
      // Predicated region
      $region25: #{net_forward.5} parent=5 // pred_check
        %p173 = pneg %p172
      $region26: #{net_forward.5} parent=5 // pred_check_branch
        %175 = sbr.rel (%p173) target = $region28
      $region27: #{net_forward.5} parent=5 // pred_region
        // Predicated region
        $region29: #{net_forward.5} parent=27 // pred_check
          %p176 = pneg %p32
        $region30: #{net_forward.5} parent=27 // pred_check_branch
          %178 = sbr.rel (%p176) target = $region32
        $region31: #{net_forward.5} parent=27 // pred_region
          %s179 = smul.u32 8, %s12
          %p180 = scmp.lt.s32.totalorder %s179, 39
          %s181 = scalar_select %p180, %s179, 39
          %s182 = smul.addr %s181, 2
          %s183 = scalar_lea.vmem %s0, %s182
          %s184 = smul.u32 8, %s12
        $region32: #{net_forward.5} parent=27 // pred_fallthru
          _
        // Predicated region
        $region33: #{net_forward.5} parent=27 // pred_check
          %p185 = pneg %p58
        $region34: #{net_forward.5} parent=27 // pred_check_branch
          %187 = sbr.rel (%p185) target = $region36
        $region35: #{net_forward.5} parent=27 // pred_region
          %s188 = smul.u32 128, %s12
          %p189 = scmp.lt.s32.totalorder %s188, 639
          %s190 = scalar_select %p189, %s188, 639
          %s191 = smul.addr %s190, 8
          %s192 = smul.addr %s191, 4
          %s193 = scalar_lea.vmem %s1, %s192
          %s194 = smul.u32 128, %s12
        $region36: #{net_forward.5} parent=27 // pred_fallthru
          _
      $region28: #{net_forward.5} parent=5 // pred_fallthru
        _
      %p195 = scmp.le.s32.totalorder 1, %s12
      %p196 = scmp.lt.s32.totalorder %s12, 6
      %p197 = pnand %p195, %p196
      %p198 = pneg %p197
      // Predicated region
      $region37: #{net_forward.5} parent=5 // pred_check
        _
      $region38: #{net_forward.5} parent=5 // pred_check_branch
        %200 = sbr.rel (%p197) target = $region40
      $region39: #{net_forward.5} parent=5 // pred_region
        %s201 = ssub.s32 %s12, 1
        %s202 = smul.u32 8, %s17
        %p203 = scmp.lt.s32.totalorder %s202, 39
        %s204 = scalar_select %p203, %s202, 39
        %s205 = smul.addr %s204, 2
        %s206 = scalar_lea.vmem %s0, %s205
        %p207 = pneg %p38
        %p208 = pneg %p35
        %s209 = smul.u32 128, %s17
        %p210 = scmp.lt.s32.totalorder %s209, 639
        %s211 = scalar_select %p210, %s209, 639
        %s212 = smul.addr %s211, 8
        %s213 = smul.addr %s212, 4
        %s214 = scalar_lea.vmem %s1, %s213
        %p215 = pneg %p64
        %p216 = pneg %p61
        %p217 = pneg %p85
        %p218 = pneg %p82
        %p219 = pneg %p106
        %p220 = pneg %p103
        %p221 = pneg %p127
        %p222 = pneg %p124
        %p223 = pneg %p148
        %p224 = pneg %p145
        %s225 = smul.u32 8, %s17
        %p226 = scmp.lt.s32.totalorder %s225, 39
        %s227 = scalar_select %p226, %s225, 39
        %s228 = smul.addr %s227, 2
        %s229 = scalar_lea.vmem %s0, %s228
        %s230 = smul.u32 8, %s17
        %s231 = smul.u32 128, %s17
        %p232 = scmp.lt.s32.totalorder %s231, 639
        %s233 = scalar_select %p232, %s231, 639
        %s234 = smul.addr %s233, 8
        %s235 = smul.addr %s234, 4
        %s236 = scalar_lea.vmem %s1, %s235
        %s237 = smul.u32 128, %s17
        %p239 = scmp.eq.s32.totalorder %s17, 0
        // Predicated region
        $region41: #{net_forward.5} parent=39 // pred_check
          %p240 = pneg %p239
        $region42: #{net_forward.5} parent=39 // pred_check_branch
          %242 = sbr.rel (%p240) target = $region44
        $region43: #{net_forward.5} parent=39 // pred_region
          %243 = vst [vmem:[#allocation2] sm:$0xff] 0.0
          %244 = vst [vmem:[#allocation2 + $0x8] sm:$0xff] 0.0
        $region44: #{net_forward.5} parent=39 // pred_fallthru
          _
        %v245 = vld [vmem:[#allocation2] sm:$0xff]
        %v246 = vld [vmem:[#allocation2 + $0x8] sm:$0xff]
        %v247 = vld [vmem:[%s229] sm:$0xff]
        %v248 = vld [vmem:[%s229 + $0x8] sm:$0xff]
        %v251 = vcombine.high %v247, %v247
        %v253 = vunpack.c.l.s4 1983009808
        %v254 = vunpack.c.0.s8 %v253
        %v255 = vlaneseq
        %v256 = vshrl.u32 %v255, 7
        %v257 = vsub.s32 %v254, %v256
        %v258 = vrot.slane %v247, %v257
        %v260 = vunpack.c.l.s4 1983009808
        %v261 = vunpack.c.0.s8 %v260
        %v262 = vlaneseq
        %v263 = vshrl.u32 %v262, 7
        %v264 = vsub.s32 %v261, %v263
        %v265 = vrot.slane %v251, %v264
        %v266 = vcombine.high %v258, %v258
        %v267 = vcombine.high %v265, %v265
        %v268 = vcombine.high %v248, %v248
        %v270 = vunpack.c.l.s4 1983009808
        %v271 = vunpack.c.0.s8 %v270
        %v272 = vlaneseq
        %v273 = vshrl.u32 %v272, 7
        %v274 = vsub.s32 %v271, %v273
        %v275 = vrot.slane %v248, %v274
        %v277 = vunpack.c.l.s4 1983009808
        %v278 = vunpack.c.0.s8 %v277
        %v279 = vlaneseq
        %v280 = vshrl.u32 %v279, 7
        %v281 = vsub.s32 %v278, %v280
        %v282 = vrot.slane %v268, %v281
        %v283 = vcombine.high %v275, %v275
        %v284 = vcombine.high %v282, %v282
        %v293 = vpack.c.bf16 %v258, %v258
        %v294 = vpack.c.bf16 %v266, %v266
        %v295 = vpack.c.bf16 %v265, %v265
        %v296 = vpack.c.bf16 %v267, %v267
        %v297 = vpack.c.bf16 %v275, %v275
        %v298 = vpack.c.bf16 %v283, %v283
        %v299 = vpack.c.bf16 %v282, %v282
        %v300 = vpack.c.bf16 %v284, %v284
        %v301 = vld [vmem:[%s236] sm:$0xff]
        %v302 = vld [vmem:[%s236 + $0x8] sm:$0xff]
        %v303 = vld [vmem:[%s236 + $0x10] sm:$0xff]
        %v304 = vld [vmem:[%s236 + $0x18] sm:$0xff]
        %v305 = vld [vmem:[%s236 + $0x20] sm:$0xff]
        %v306 = vld [vmem:[%s236 + $0x28] sm:$0xff]
        %v307 = vld [vmem:[%s236 + $0x30] sm:$0xff]
        %v308 = vld [vmem:[%s236 + $0x38] sm:$0xff]
        %v309 = vld [vmem:[%s236 + $0x40] sm:$0xff]
        %v310 = vld [vmem:[%s236 + $0x48] sm:$0xff]
        %v311 = vld [vmem:[%s236 + $0x50] sm:$0xff]
        %v312 = vld [vmem:[%s236 + $0x58] sm:$0xff]
        %v313 = vld [vmem:[%s236 + $0x60] sm:$0xff]
        %v314 = vld [vmem:[%s236 + $0x68] sm:$0xff]
        %v315 = vld [vmem:[%s236 + $0x70] sm:$0xff]
        %v316 = vld [vmem:[%s236 + $0x78] sm:$0xff]
        %v317 = vld [vmem:[%s236 + $0x80] sm:$0xff]
        %v318 = vld [vmem:[%s236 + $0x88] sm:$0xff]
        %v319 = vld [vmem:[%s236 + $0x90] sm:$0xff]
        %v320 = vld [vmem:[%s236 + $0x98] sm:$0xff]
        %v321 = vld [vmem:[%s236 + $0xa0] sm:$0xff]
        %v322 = vld [vmem:[%s236 + $0xa8] sm:$0xff]
        %v323 = vld [vmem:[%s236 + $0xb0] sm:$0xff]
        %v324 = vld [vmem:[%s236 + $0xb8] sm:$0xff]
        %v325 = vld [vmem:[%s236 + $0xc0] sm:$0xff]
        %v326 = vld [vmem:[%s236 + $0xc8] sm:$0xff]
        %v327 = vld [vmem:[%s236 + $0xd0] sm:$0xff]
        %v328 = vld [vmem:[%s236 + $0xd8] sm:$0xff]
        %v329 = vld [vmem:[%s236 + $0xe0] sm:$0xff]
        %v330 = vld [vmem:[%s236 + $0xe8] sm:$0xff]
        %v331 = vld [vmem:[%s236 + $0xf0] sm:$0xff]
        %v332 = vld [vmem:[%s236 + $0xf8] sm:$0xff]
        %v333 = vld [vmem:[%s236 + $0x100] sm:$0xff]
        %v334 = vld [vmem:[%s236 + $0x108] sm:$0xff]
        %v335 = vld [vmem:[%s236 + $0x110] sm:$0xff]
        %v336 = vld [vmem:[%s236 + $0x118] sm:$0xff]
        %v337 = vld [vmem:[%s236 + $0x120] sm:$0xff]
        %v338 = vld [vmem:[%s236 + $0x128] sm:$0xff]
        %v339 = vld [vmem:[%s236 + $0x130] sm:$0xff]
        %v340 = vld [vmem:[%s236 + $0x138] sm:$0xff]
        %v341 = vld [vmem:[%s236 + $0x140] sm:$0xff]
        %v342 = vld [vmem:[%s236 + $0x148] sm:$0xff]
        %v343 = vld [vmem:[%s236 + $0x150] sm:$0xff]
        %v344 = vld [vmem:[%s236 + $0x158] sm:$0xff]
        %v345 = vld [vmem:[%s236 + $0x160] sm:$0xff]
        %v346 = vld [vmem:[%s236 + $0x168] sm:$0xff]
        %v347 = vld [vmem:[%s236 + $0x170] sm:$0xff]
        %v348 = vld [vmem:[%s236 + $0x178] sm:$0xff]
        %v349 = vld [vmem:[%s236 + $0x180] sm:$0xff]
        %v350 = vld [vmem:[%s236 + $0x188] sm:$0xff]
        %v351 = vld [vmem:[%s236 + $0x190] sm:$0xff]
        %v352 = vld [vmem:[%s236 + $0x198] sm:$0xff]
        %v353 = vld [vmem:[%s236 + $0x1a0] sm:$0xff]
        %v354 = vld [vmem:[%s236 + $0x1a8] sm:$0xff]
        %v355 = vld [vmem:[%s236 + $0x1b0] sm:$0xff]
        %v356 = vld [vmem:[%s236 + $0x1b8] sm:$0xff]
        %v357 = vld [vmem:[%s236 + $0x1c0] sm:$0xff]
        %v358 = vld [vmem:[%s236 + $0x1c8] sm:$0xff]
        %v359 = vld [vmem:[%s236 + $0x1d0] sm:$0xff]
        %v360 = vld [vmem:[%s236 + $0x1d8] sm:$0xff]
        %v361 = vld [vmem:[%s236 + $0x1e0] sm:$0xff]
        %v362 = vld [vmem:[%s236 + $0x1e8] sm:$0xff]
        %v363 = vld [vmem:[%s236 + $0x1f0] sm:$0xff]
        %v364 = vld [vmem:[%s236 + $0x1f8] sm:$0xff]
        %v365 = vld [vmem:[%s236 + $0x200] sm:$0xff]
        %v366 = vld [vmem:[%s236 + $0x208] sm:$0xff]
        %v367 = vld [vmem:[%s236 + $0x210] sm:$0xff]
        %v368 = vld [vmem:[%s236 + $0x218] sm:$0xff]
        %v369 = vld [vmem:[%s236 + $0x220] sm:$0xff]
        %v370 = vld [vmem:[%s236 + $0x228] sm:$0xff]
        %v371 = vld [vmem:[%s236 + $0x230] sm:$0xff]
        %v372 = vld [vmem:[%s236 + $0x238] sm:$0xff]
        %v373 = vld [vmem:[%s236 + $0x240] sm:$0xff]
        %v374 = vld [vmem:[%s236 + $0x248] sm:$0xff]
        %v375 = vld [vmem:[%s236 + $0x250] sm:$0xff]
        %v376 = vld [vmem:[%s236 + $0x258] sm:$0xff]
        %v377 = vld [vmem:[%s236 + $0x260] sm:$0xff]
        %v378 = vld [vmem:[%s236 + $0x268] sm:$0xff]
        %v379 = vld [vmem:[%s236 + $0x270] sm:$0xff]
        %v380 = vld [vmem:[%s236 + $0x278] sm:$0xff]
        %v381 = vld [vmem:[%s236 + $0x280] sm:$0xff]
        %v382 = vld [vmem:[%s236 + $0x288] sm:$0xff]
        %v383 = vld [vmem:[%s236 + $0x290] sm:$0xff]
        %v384 = vld [vmem:[%s236 + $0x298] sm:$0xff]
        %v385 = vld [vmem:[%s236 + $0x2a0] sm:$0xff]
        %v386 = vld [vmem:[%s236 + $0x2a8] sm:$0xff]
        %v387 = vld [vmem:[%s236 + $0x2b0] sm:$0xff]
        %v388 = vld [vmem:[%s236 + $0x2b8] sm:$0xff]
        %v389 = vld [vmem:[%s236 + $0x2c0] sm:$0xff]
        %v390 = vld [vmem:[%s236 + $0x2c8] sm:$0xff]
        %v391 = vld [vmem:[%s236 + $0x2d0] sm:$0xff]
        %v392 = vld [vmem:[%s236 + $0x2d8] sm:$0xff]
        %v393 = vld [vmem:[%s236 + $0x2e0] sm:$0xff]
        %v394 = vld [vmem:[%s236 + $0x2e8] sm:$0xff]
        %v395 = vld [vmem:[%s236 + $0x2f0] sm:$0xff]
        %v396 = vld [vmem:[%s236 + $0x2f8] sm:$0xff]
        %v397 = vld [vmem:[%s236 + $0x300] sm:$0xff]
        %v398 = vld [vmem:[%s236 + $0x308] sm:$0xff]
        %v399 = vld [vmem:[%s236 + $0x310] sm:$0xff]
        %v400 = vld [vmem:[%s236 + $0x318] sm:$0xff]
        %v401 = vld [vmem:[%s236 + $0x320] sm:$0xff]
        %v402 = vld [vmem:[%s236 + $0x328] sm:$0xff]
        %v403 = vld [vmem:[%s236 + $0x330] sm:$0xff]
        %v404 = vld [vmem:[%s236 + $0x338] sm:$0xff]
        %v405 = vld [vmem:[%s236 + $0x340] sm:$0xff]
        %v406 = vld [vmem:[%s236 + $0x348] sm:$0xff]
        %v407 = vld [vmem:[%s236 + $0x350] sm:$0xff]
        %v408 = vld [vmem:[%s236 + $0x358] sm:$0xff]
        %v409 = vld [vmem:[%s236 + $0x360] sm:$0xff]
        %v410 = vld [vmem:[%s236 + $0x368] sm:$0xff]
        %v411 = vld [vmem:[%s236 + $0x370] sm:$0xff]
        %v412 = vld [vmem:[%s236 + $0x378] sm:$0xff]
        %v413 = vld [vmem:[%s236 + $0x380] sm:$0xff]
        %v414 = vld [vmem:[%s236 + $0x388] sm:$0xff]
        %v415 = vld [vmem:[%s236 + $0x390] sm:$0xff]
        %v416 = vld [vmem:[%s236 + $0x398] sm:$0xff]
        %v417 = vld [vmem:[%s236 + $0x3a0] sm:$0xff]
        %v418 = vld [vmem:[%s236 + $0x3a8] sm:$0xff]
        %v419 = vld [vmem:[%s236 + $0x3b0] sm:$0xff]
        %v420 = vld [vmem:[%s236 + $0x3b8] sm:$0xff]
        %v421 = vld [vmem:[%s236 + $0x3c0] sm:$0xff]
        %v422 = vld [vmem:[%s236 + $0x3c8] sm:$0xff]
        %v423 = vld [vmem:[%s236 + $0x3d0] sm:$0xff]
        %v424 = vld [vmem:[%s236 + $0x3d8] sm:$0xff]
        %v425 = vld [vmem:[%s236 + $0x3e0] sm:$0xff]
        %v426 = vld [vmem:[%s236 + $0x3e8] sm:$0xff]
        %v427 = vld [vmem:[%s236 + $0x3f0] sm:$0xff]
        %v428 = vld [vmem:[%s236 + $0x3f8] sm:$0xff]
        %v429 = vld [vmem:[%s236 + $0x400] sm:$0xff]
        %v430 = vld [vmem:[%s236 + $0x408] sm:$0xff]
        %v431 = vld [vmem:[%s236 + $0x410] sm:$0xff]
        %v432 = vld [vmem:[%s236 + $0x418] sm:$0xff]
        %v433 = vld [vmem:[%s236 + $0x420] sm:$0xff]
        %v434 = vld [vmem:[%s236 + $0x428] sm:$0xff]
        %v435 = vld [vmem:[%s236 + $0x430] sm:$0xff]
        %v436 = vld [vmem:[%s236 + $0x438] sm:$0xff]
        %v437 = vld [vmem:[%s236 + $0x440] sm:$0xff]
        %v438 = vld [vmem:[%s236 + $0x448] sm:$0xff]
        %v439 = vld [vmem:[%s236 + $0x450] sm:$0xff]
        %v440 = vld [vmem:[%s236 + $0x458] sm:$0xff]
        %v441 = vld [vmem:[%s236 + $0x460] sm:$0xff]
        %v442 = vld [vmem:[%s236 + $0x468] sm:$0xff]
        %v443 = vld [vmem:[%s236 + $0x470] sm:$0xff]
        %v444 = vld [vmem:[%s236 + $0x478] sm:$0xff]
        %v445 = vld [vmem:[%s236 + $0x480] sm:$0xff]
        %v446 = vld [vmem:[%s236 + $0x488] sm:$0xff]
        %v447 = vld [vmem:[%s236 + $0x490] sm:$0xff]
        %v448 = vld [vmem:[%s236 + $0x498] sm:$0xff]
        %v449 = vld [vmem:[%s236 + $0x4a0] sm:$0xff]
        %v450 = vld [vmem:[%s236 + $0x4a8] sm:$0xff]
        %v451 = vld [vmem:[%s236 + $0x4b0] sm:$0xff]
        %v452 = vld [vmem:[%s236 + $0x4b8] sm:$0xff]
        %v453 = vld [vmem:[%s236 + $0x4c0] sm:$0xff]
        %v454 = vld [vmem:[%s236 + $0x4c8] sm:$0xff]
        %v455 = vld [vmem:[%s236 + $0x4d0] sm:$0xff]
        %v456 = vld [vmem:[%s236 + $0x4d8] sm:$0xff]
        %v457 = vld [vmem:[%s236 + $0x4e0] sm:$0xff]
        %v458 = vld [vmem:[%s236 + $0x4e8] sm:$0xff]
        %v459 = vld [vmem:[%s236 + $0x4f0] sm:$0xff]
        %v460 = vld [vmem:[%s236 + $0x4f8] sm:$0xff]
        %v461 = vld [vmem:[%s236 + $0x500] sm:$0xff]
        %v462 = vld [vmem:[%s236 + $0x508] sm:$0xff]
        %v463 = vld [vmem:[%s236 + $0x510] sm:$0xff]
        %v464 = vld [vmem:[%s236 + $0x518] sm:$0xff]
        %v465 = vld [vmem:[%s236 + $0x520] sm:$0xff]
        %v466 = vld [vmem:[%s236 + $0x528] sm:$0xff]
        %v467 = vld [vmem:[%s236 + $0x530] sm:$0xff]
        %v468 = vld [vmem:[%s236 + $0x538] sm:$0xff]
        %v469 = vld [vmem:[%s236 + $0x540] sm:$0xff]
        %v470 = vld [vmem:[%s236 + $0x548] sm:$0xff]
        %v471 = vld [vmem:[%s236 + $0x550] sm:$0xff]
        %v472 = vld [vmem:[%s236 + $0x558] sm:$0xff]
        %v473 = vld [vmem:[%s236 + $0x560] sm:$0xff]
        %v474 = vld [vmem:[%s236 + $0x568] sm:$0xff]
        %v475 = vld [vmem:[%s236 + $0x570] sm:$0xff]
        %v476 = vld [vmem:[%s236 + $0x578] sm:$0xff]
        %v477 = vld [vmem:[%s236 + $0x580] sm:$0xff]
        %v478 = vld [vmem:[%s236 + $0x588] sm:$0xff]
        %v479 = vld [vmem:[%s236 + $0x590] sm:$0xff]
        %v480 = vld [vmem:[%s236 + $0x598] sm:$0xff]
        %v481 = vld [vmem:[%s236 + $0x5a0] sm:$0xff]
        %v482 = vld [vmem:[%s236 + $0x5a8] sm:$0xff]
        %v483 = vld [vmem:[%s236 + $0x5b0] sm:$0xff]
        %v484 = vld [vmem:[%s236 + $0x5b8] sm:$0xff]
        %v485 = vld [vmem:[%s236 + $0x5c0] sm:$0xff]
        %v486 = vld [vmem:[%s236 + $0x5c8] sm:$0xff]
        %v487 = vld [vmem:[%s236 + $0x5d0] sm:$0xff]
        %v488 = vld [vmem:[%s236 + $0x5d8] sm:$0xff]
        %v489 = vld [vmem:[%s236 + $0x5e0] sm:$0xff]
        %v490 = vld [vmem:[%s236 + $0x5e8] sm:$0xff]
        %v491 = vld [vmem:[%s236 + $0x5f0] sm:$0xff]
        %v492 = vld [vmem:[%s236 + $0x5f8] sm:$0xff]
        %v493 = vld [vmem:[%s236 + $0x600] sm:$0xff]
        %v494 = vld [vmem:[%s236 + $0x608] sm:$0xff]
        %v495 = vld [vmem:[%s236 + $0x610] sm:$0xff]
        %v496 = vld [vmem:[%s236 + $0x618] sm:$0xff]
        %v497 = vld [vmem:[%s236 + $0x620] sm:$0xff]
        %v498 = vld [vmem:[%s236 + $0x628] sm:$0xff]
        %v499 = vld [vmem:[%s236 + $0x630] sm:$0xff]
        %v500 = vld [vmem:[%s236 + $0x638] sm:$0xff]
        %v501 = vld [vmem:[%s236 + $0x640] sm:$0xff]
        %v502 = vld [vmem:[%s236 + $0x648] sm:$0xff]
        %v503 = vld [vmem:[%s236 + $0x650] sm:$0xff]
        %v504 = vld [vmem:[%s236 + $0x658] sm:$0xff]
        %v505 = vld [vmem:[%s236 + $0x660] sm:$0xff]
        %v506 = vld [vmem:[%s236 + $0x668] sm:$0xff]
        %v507 = vld [vmem:[%s236 + $0x670] sm:$0xff]
        %v508 = vld [vmem:[%s236 + $0x678] sm:$0xff]
        %v509 = vld [vmem:[%s236 + $0x680] sm:$0xff]
        %v510 = vld [vmem:[%s236 + $0x688] sm:$0xff]
        %v511 = vld [vmem:[%s236 + $0x690] sm:$0xff]
        %v512 = vld [vmem:[%s236 + $0x698] sm:$0xff]
        %v513 = vld [vmem:[%s236 + $0x6a0] sm:$0xff]
        %v514 = vld [vmem:[%s236 + $0x6a8] sm:$0xff]
        %v515 = vld [vmem:[%s236 + $0x6b0] sm:$0xff]
        %v516 = vld [vmem:[%s236 + $0x6b8] sm:$0xff]
        %v517 = vld [vmem:[%s236 + $0x6c0] sm:$0xff]
        %v518 = vld [vmem:[%s236 + $0x6c8] sm:$0xff]
        %v519 = vld [vmem:[%s236 + $0x6d0] sm:$0xff]
        %v520 = vld [vmem:[%s236 + $0x6d8] sm:$0xff]
        %v521 = vld [vmem:[%s236 + $0x6e0] sm:$0xff]
        %v522 = vld [vmem:[%s236 + $0x6e8] sm:$0xff]
        %v523 = vld [vmem:[%s236 + $0x6f0] sm:$0xff]
        %v524 = vld [vmem:[%s236 + $0x6f8] sm:$0xff]
        %v525 = vld [vmem:[%s236 + $0x700] sm:$0xff]
        %v526 = vld [vmem:[%s236 + $0x708] sm:$0xff]
        %v527 = vld [vmem:[%s236 + $0x710] sm:$0xff]
        %v528 = vld [vmem:[%s236 + $0x718] sm:$0xff]
        %v529 = vld [vmem:[%s236 + $0x720] sm:$0xff]
        %v530 = vld [vmem:[%s236 + $0x728] sm:$0xff]
        %v531 = vld [vmem:[%s236 + $0x730] sm:$0xff]
        %v532 = vld [vmem:[%s236 + $0x738] sm:$0xff]
        %v533 = vld [vmem:[%s236 + $0x740] sm:$0xff]
        %v534 = vld [vmem:[%s236 + $0x748] sm:$0xff]
        %v535 = vld [vmem:[%s236 + $0x750] sm:$0xff]
        %v536 = vld [vmem:[%s236 + $0x758] sm:$0xff]
        %v537 = vld [vmem:[%s236 + $0x760] sm:$0xff]
        %v538 = vld [vmem:[%s236 + $0x768] sm:$0xff]
        %v539 = vld [vmem:[%s236 + $0x770] sm:$0xff]
        %v540 = vld [vmem:[%s236 + $0x778] sm:$0xff]
        %v541 = vld [vmem:[%s236 + $0x780] sm:$0xff]
        %v542 = vld [vmem:[%s236 + $0x788] sm:$0xff]
        %v543 = vld [vmem:[%s236 + $0x790] sm:$0xff]
        %v544 = vld [vmem:[%s236 + $0x798] sm:$0xff]
        %v545 = vld [vmem:[%s236 + $0x7a0] sm:$0xff]
        %v546 = vld [vmem:[%s236 + $0x7a8] sm:$0xff]
        %v547 = vld [vmem:[%s236 + $0x7b0] sm:$0xff]
        %v548 = vld [vmem:[%s236 + $0x7b8] sm:$0xff]
        %v549 = vld [vmem:[%s236 + $0x7c0] sm:$0xff]
        %v550 = vld [vmem:[%s236 + $0x7c8] sm:$0xff]
        %v551 = vld [vmem:[%s236 + $0x7d0] sm:$0xff]
        %v552 = vld [vmem:[%s236 + $0x7d8] sm:$0xff]
        %v553 = vld [vmem:[%s236 + $0x7e0] sm:$0xff]
        %v554 = vld [vmem:[%s236 + $0x7e8] sm:$0xff]
        %v555 = vld [vmem:[%s236 + $0x7f0] sm:$0xff]
        %v556 = vld [vmem:[%s236 + $0x7f8] sm:$0xff]
        %v557 = vld [vmem:[%s236 + $0x800] sm:$0xff]
        %v558 = vld [vmem:[%s236 + $0x808] sm:$0xff]
        %v559 = vld [vmem:[%s236 + $0x810] sm:$0xff]
        %v560 = vld [vmem:[%s236 + $0x818] sm:$0xff]
        %v561 = vld [vmem:[%s236 + $0x820] sm:$0xff]
        %v562 = vld [vmem:[%s236 + $0x828] sm:$0xff]
        %v563 = vld [vmem:[%s236 + $0x830] sm:$0xff]
        %v564 = vld [vmem:[%s236 + $0x838] sm:$0xff]
        %v565 = vld [vmem:[%s236 + $0x840] sm:$0xff]
        %v566 = vld [vmem:[%s236 + $0x848] sm:$0xff]
        %v567 = vld [vmem:[%s236 + $0x850] sm:$0xff]
        %v568 = vld [vmem:[%s236 + $0x858] sm:$0xff]
        %v569 = vld [vmem:[%s236 + $0x860] sm:$0xff]
        %v570 = vld [vmem:[%s236 + $0x868] sm:$0xff]
        %v571 = vld [vmem:[%s236 + $0x870] sm:$0xff]
        %v572 = vld [vmem:[%s236 + $0x878] sm:$0xff]
        %v573 = vld [vmem:[%s236 + $0x880] sm:$0xff]
        %v574 = vld [vmem:[%s236 + $0x888] sm:$0xff]
        %v575 = vld [vmem:[%s236 + $0x890] sm:$0xff]
        %v576 = vld [vmem:[%s236 + $0x898] sm:$0xff]
        %v577 = vld [vmem:[%s236 + $0x8a0] sm:$0xff]
        %v578 = vld [vmem:[%s236 + $0x8a8] sm:$0xff]
        %v579 = vld [vmem:[%s236 + $0x8b0] sm:$0xff]
        %v580 = vld [vmem:[%s236 + $0x8b8] sm:$0xff]
        %v581 = vld [vmem:[%s236 + $0x8c0] sm:$0xff]
        %v582 = vld [vmem:[%s236 + $0x8c8] sm:$0xff]
        %v583 = vld [vmem:[%s236 + $0x8d0] sm:$0xff]
        %v584 = vld [vmem:[%s236 + $0x8d8] sm:$0xff]
        %v585 = vld [vmem:[%s236 + $0x8e0] sm:$0xff]
        %v586 = vld [vmem:[%s236 + $0x8e8] sm:$0xff]
        %v587 = vld [vmem:[%s236 + $0x8f0] sm:$0xff]
        %v588 = vld [vmem:[%s236 + $0x8f8] sm:$0xff]
        %v589 = vld [vmem:[%s236 + $0x900] sm:$0xff]
        %v590 = vld [vmem:[%s236 + $0x908] sm:$0xff]
        %v591 = vld [vmem:[%s236 + $0x910] sm:$0xff]
        %v592 = vld [vmem:[%s236 + $0x918] sm:$0xff]
        %v593 = vld [vmem:[%s236 + $0x920] sm:$0xff]
        %v594 = vld [vmem:[%s236 + $0x928] sm:$0xff]
        %v595 = vld [vmem:[%s236 + $0x930] sm:$0xff]
        %v596 = vld [vmem:[%s236 + $0x938] sm:$0xff]
        %v597 = vld [vmem:[%s236 + $0x940] sm:$0xff]
        %v598 = vld [vmem:[%s236 + $0x948] sm:$0xff]
        %v599 = vld [vmem:[%s236 + $0x950] sm:$0xff]
        %v600 = vld [vmem:[%s236 + $0x958] sm:$0xff]
        %v601 = vld [vmem:[%s236 + $0x960] sm:$0xff]
        %v602 = vld [vmem:[%s236 + $0x968] sm:$0xff]
        %v603 = vld [vmem:[%s236 + $0x970] sm:$0xff]
        %v604 = vld [vmem:[%s236 + $0x978] sm:$0xff]
        %v605 = vld [vmem:[%s236 + $0x980] sm:$0xff]
        %v606 = vld [vmem:[%s236 + $0x988] sm:$0xff]
        %v607 = vld [vmem:[%s236 + $0x990] sm:$0xff]
        %v608 = vld [vmem:[%s236 + $0x998] sm:$0xff]
        %v609 = vld [vmem:[%s236 + $0x9a0] sm:$0xff]
        %v610 = vld [vmem:[%s236 + $0x9a8] sm:$0xff]
        %v611 = vld [vmem:[%s236 + $0x9b0] sm:$0xff]
        %v612 = vld [vmem:[%s236 + $0x9b8] sm:$0xff]
        %v613 = vld [vmem:[%s236 + $0x9c0] sm:$0xff]
        %v614 = vld [vmem:[%s236 + $0x9c8] sm:$0xff]
        %v615 = vld [vmem:[%s236 + $0x9d0] sm:$0xff]
        %v616 = vld [vmem:[%s236 + $0x9d8] sm:$0xff]
        %v617 = vld [vmem:[%s236 + $0x9e0] sm:$0xff]
        %v618 = vld [vmem:[%s236 + $0x9e8] sm:$0xff]
        %v619 = vld [vmem:[%s236 + $0x9f0] sm:$0xff]
        %v620 = vld [vmem:[%s236 + $0x9f8] sm:$0xff]
        %v621 = vld [vmem:[%s236 + $0xa00] sm:$0xff]
        %v622 = vld [vmem:[%s236 + $0xa08] sm:$0xff]
        %v623 = vld [vmem:[%s236 + $0xa10] sm:$0xff]
        %v624 = vld [vmem:[%s236 + $0xa18] sm:$0xff]
        %v625 = vld [vmem:[%s236 + $0xa20] sm:$0xff]
        %v626 = vld [vmem:[%s236 + $0xa28] sm:$0xff]
        %v627 = vld [vmem:[%s236 + $0xa30] sm:$0xff]
        %v628 = vld [vmem:[%s236 + $0xa38] sm:$0xff]
        %v629 = vld [vmem:[%s236 + $0xa40] sm:$0xff]
        %v630 = vld [vmem:[%s236 + $0xa48] sm:$0xff]
        %v631 = vld [vmem:[%s236 + $0xa50] sm:$0xff]
        %v632 = vld [vmem:[%s236 + $0xa58] sm:$0xff]
        %v633 = vld [vmem:[%s236 + $0xa60] sm:$0xff]
        %v634 = vld [vmem:[%s236 + $0xa68] sm:$0xff]
        %v635 = vld [vmem:[%s236 + $0xa70] sm:$0xff]
        %v636 = vld [vmem:[%s236 + $0xa78] sm:$0xff]
        %v637 = vld [vmem:[%s236 + $0xa80] sm:$0xff]
        %v638 = vld [vmem:[%s236 + $0xa88] sm:$0xff]
        %v639 = vld [vmem:[%s236 + $0xa90] sm:$0xff]
        %v640 = vld [vmem:[%s236 + $0xa98] sm:$0xff]
        %v641 = vld [vmem:[%s236 + $0xaa0] sm:$0xff]
        %v642 = vld [vmem:[%s236 + $0xaa8] sm:$0xff]
        %v643 = vld [vmem:[%s236 + $0xab0] sm:$0xff]
        %v644 = vld [vmem:[%s236 + $0xab8] sm:$0xff]
        %v645 = vld [vmem:[%s236 + $0xac0] sm:$0xff]
        %v646 = vld [vmem:[%s236 + $0xac8] sm:$0xff]
        %v647 = vld [vmem:[%s236 + $0xad0] sm:$0xff]
        %v648 = vld [vmem:[%s236 + $0xad8] sm:$0xff]
        %v649 = vld [vmem:[%s236 + $0xae0] sm:$0xff]
        %v650 = vld [vmem:[%s236 + $0xae8] sm:$0xff]
        %v651 = vld [vmem:[%s236 + $0xaf0] sm:$0xff]
        %v652 = vld [vmem:[%s236 + $0xaf8] sm:$0xff]
        %v653 = vld [vmem:[%s236 + $0xb00] sm:$0xff]
        %v654 = vld [vmem:[%s236 + $0xb08] sm:$0xff]
        %v655 = vld [vmem:[%s236 + $0xb10] sm:$0xff]
        %v656 = vld [vmem:[%s236 + $0xb18] sm:$0xff]
        %v657 = vld [vmem:[%s236 + $0xb20] sm:$0xff]
        %v658 = vld [vmem:[%s236 + $0xb28] sm:$0xff]
        %v659 = vld [vmem:[%s236 + $0xb30] sm:$0xff]
        %v660 = vld [vmem:[%s236 + $0xb38] sm:$0xff]
        %v661 = vld [vmem:[%s236 + $0xb40] sm:$0xff]
        %v662 = vld [vmem:[%s236 + $0xb48] sm:$0xff]
        %v663 = vld [vmem:[%s236 + $0xb50] sm:$0xff]
        %v664 = vld [vmem:[%s236 + $0xb58] sm:$0xff]
        %v665 = vld [vmem:[%s236 + $0xb60] sm:$0xff]
        %v666 = vld [vmem:[%s236 + $0xb68] sm:$0xff]
        %v667 = vld [vmem:[%s236 + $0xb70] sm:$0xff]
        %v668 = vld [vmem:[%s236 + $0xb78] sm:$0xff]
        %v669 = vld [vmem:[%s236 + $0xb80] sm:$0xff]
        %v670 = vld [vmem:[%s236 + $0xb88] sm:$0xff]
        %v671 = vld [vmem:[%s236 + $0xb90] sm:$0xff]
        %v672 = vld [vmem:[%s236 + $0xb98] sm:$0xff]
        %v673 = vld [vmem:[%s236 + $0xba0] sm:$0xff]
        %v674 = vld [vmem:[%s236 + $0xba8] sm:$0xff]
        %v675 = vld [vmem:[%s236 + $0xbb0] sm:$0xff]
        %v676 = vld [vmem:[%s236 + $0xbb8] sm:$0xff]
        %v677 = vld [vmem:[%s236 + $0xbc0] sm:$0xff]
        %v678 = vld [vmem:[%s236 + $0xbc8] sm:$0xff]
        %v679 = vld [vmem:[%s236 + $0xbd0] sm:$0xff]
        %v680 = vld [vmem:[%s236 + $0xbd8] sm:$0xff]
        %v681 = vld [vmem:[%s236 + $0xbe0] sm:$0xff]
        %v682 = vld [vmem:[%s236 + $0xbe8] sm:$0xff]
        %v683 = vld [vmem:[%s236 + $0xbf0] sm:$0xff]
        %v684 = vld [vmem:[%s236 + $0xbf8] sm:$0xff]
        %v685 = vld [vmem:[%s236 + $0xc00] sm:$0xff]
        %v686 = vld [vmem:[%s236 + $0xc08] sm:$0xff]
        %v687 = vld [vmem:[%s236 + $0xc10] sm:$0xff]
        %v688 = vld [vmem:[%s236 + $0xc18] sm:$0xff]
        %v689 = vld [vmem:[%s236 + $0xc20] sm:$0xff]
        %v690 = vld [vmem:[%s236 + $0xc28] sm:$0xff]
        %v691 = vld [vmem:[%s236 + $0xc30] sm:$0xff]
        %v692 = vld [vmem:[%s236 + $0xc38] sm:$0xff]
        %v693 = vld [vmem:[%s236 + $0xc40] sm:$0xff]
        %v694 = vld [vmem:[%s236 + $0xc48] sm:$0xff]
        %v695 = vld [vmem:[%s236 + $0xc50] sm:$0xff]
        %v696 = vld [vmem:[%s236 + $0xc58] sm:$0xff]
        %v697 = vld [vmem:[%s236 + $0xc60] sm:$0xff]
        %v698 = vld [vmem:[%s236 + $0xc68] sm:$0xff]
        %v699 = vld [vmem:[%s236 + $0xc70] sm:$0xff]
        %v700 = vld [vmem:[%s236 + $0xc78] sm:$0xff]
        %v701 = vld [vmem:[%s236 + $0xc80] sm:$0xff]
        %v702 = vld [vmem:[%s236 + $0xc88] sm:$0xff]
        %v703 = vld [vmem:[%s236 + $0xc90] sm:$0xff]
        %v704 = vld [vmem:[%s236 + $0xc98] sm:$0xff]
        %v705 = vld [vmem:[%s236 + $0xca0] sm:$0xff]
        %v706 = vld [vmem:[%s236 + $0xca8] sm:$0xff]
        %v707 = vld [vmem:[%s236 + $0xcb0] sm:$0xff]
        %v708 = vld [vmem:[%s236 + $0xcb8] sm:$0xff]
        %v709 = vld [vmem:[%s236 + $0xcc0] sm:$0xff]
        %v710 = vld [vmem:[%s236 + $0xcc8] sm:$0xff]
        %v711 = vld [vmem:[%s236 + $0xcd0] sm:$0xff]
        %v712 = vld [vmem:[%s236 + $0xcd8] sm:$0xff]
        %v713 = vld [vmem:[%s236 + $0xce0] sm:$0xff]
        %v714 = vld [vmem:[%s236 + $0xce8] sm:$0xff]
        %v715 = vld [vmem:[%s236 + $0xcf0] sm:$0xff]
        %v716 = vld [vmem:[%s236 + $0xcf8] sm:$0xff]
        %v717 = vld [vmem:[%s236 + $0xd00] sm:$0xff]
        %v718 = vld [vmem:[%s236 + $0xd08] sm:$0xff]
        %v719 = vld [vmem:[%s236 + $0xd10] sm:$0xff]
        %v720 = vld [vmem:[%s236 + $0xd18] sm:$0xff]
        %v721 = vld [vmem:[%s236 + $0xd20] sm:$0xff]
        %v722 = vld [vmem:[%s236 + $0xd28] sm:$0xff]
        %v723 = vld [vmem:[%s236 + $0xd30] sm:$0xff]
        %v724 = vld [vmem:[%s236 + $0xd38] sm:$0xff]
        %v725 = vld [vmem:[%s236 + $0xd40] sm:$0xff]
        %v726 = vld [vmem:[%s236 + $0xd48] sm:$0xff]
        %v727 = vld [vmem:[%s236 + $0xd50] sm:$0xff]
        %v728 = vld [vmem:[%s236 + $0xd58] sm:$0xff]
        %v729 = vld [vmem:[%s236 + $0xd60] sm:$0xff]
        %v730 = vld [vmem:[%s236 + $0xd68] sm:$0xff]
        %v731 = vld [vmem:[%s236 + $0xd70] sm:$0xff]
        %v732 = vld [vmem:[%s236 + $0xd78] sm:$0xff]
        %v733 = vld [vmem:[%s236 + $0xd80] sm:$0xff]
        %v734 = vld [vmem:[%s236 + $0xd88] sm:$0xff]
        %v735 = vld [vmem:[%s236 + $0xd90] sm:$0xff]
        %v736 = vld [vmem:[%s236 + $0xd98] sm:$0xff]
        %v737 = vld [vmem:[%s236 + $0xda0] sm:$0xff]
        %v738 = vld [vmem:[%s236 + $0xda8] sm:$0xff]
        %v739 = vld [vmem:[%s236 + $0xdb0] sm:$0xff]
        %v740 = vld [vmem:[%s236 + $0xdb8] sm:$0xff]
        %v741 = vld [vmem:[%s236 + $0xdc0] sm:$0xff]
        %v742 = vld [vmem:[%s236 + $0xdc8] sm:$0xff]
        %v743 = vld [vmem:[%s236 + $0xdd0] sm:$0xff]
        %v744 = vld [vmem:[%s236 + $0xdd8] sm:$0xff]
        %v745 = vld [vmem:[%s236 + $0xde0] sm:$0xff]
        %v746 = vld [vmem:[%s236 + $0xde8] sm:$0xff]
        %v747 = vld [vmem:[%s236 + $0xdf0] sm:$0xff]
        %v748 = vld [vmem:[%s236 + $0xdf8] sm:$0xff]
        %v749 = vld [vmem:[%s236 + $0xe00] sm:$0xff]
        %v750 = vld [vmem:[%s236 + $0xe08] sm:$0xff]
        %v751 = vld [vmem:[%s236 + $0xe10] sm:$0xff]
        %v752 = vld [vmem:[%s236 + $0xe18] sm:$0xff]
        %v753 = vld [vmem:[%s236 + $0xe20] sm:$0xff]
        %v754 = vld [vmem:[%s236 + $0xe28] sm:$0xff]
        %v755 = vld [vmem:[%s236 + $0xe30] sm:$0xff]
        %v756 = vld [vmem:[%s236 + $0xe38] sm:$0xff]
        %v757 = vld [vmem:[%s236 + $0xe40] sm:$0xff]
        %v758 = vld [vmem:[%s236 + $0xe48] sm:$0xff]
        %v759 = vld [vmem:[%s236 + $0xe50] sm:$0xff]
        %v760 = vld [vmem:[%s236 + $0xe58] sm:$0xff]
        %v761 = vld [vmem:[%s236 + $0xe60] sm:$0xff]
        %v762 = vld [vmem:[%s236 + $0xe68] sm:$0xff]
        %v763 = vld [vmem:[%s236 + $0xe70] sm:$0xff]
        %v764 = vld [vmem:[%s236 + $0xe78] sm:$0xff]
        %v765 = vld [vmem:[%s236 + $0xe80] sm:$0xff]
        %v766 = vld [vmem:[%s236 + $0xe88] sm:$0xff]
        %v767 = vld [vmem:[%s236 + $0xe90] sm:$0xff]
        %v768 = vld [vmem:[%s236 + $0xe98] sm:$0xff]
        %v769 = vld [vmem:[%s236 + $0xea0] sm:$0xff]
        %v770 = vld [vmem:[%s236 + $0xea8] sm:$0xff]
        %v771 = vld [vmem:[%s236 + $0xeb0] sm:$0xff]
        %v772 = vld [vmem:[%s236 + $0xeb8] sm:$0xff]
        %v773 = vld [vmem:[%s236 + $0xec0] sm:$0xff]
        %v774 = vld [vmem:[%s236 + $0xec8] sm:$0xff]
        %v775 = vld [vmem:[%s236 + $0xed0] sm:$0xff]
        %v776 = vld [vmem:[%s236 + $0xed8] sm:$0xff]
        %v777 = vld [vmem:[%s236 + $0xee0] sm:$0xff]
        %v778 = vld [vmem:[%s236 + $0xee8] sm:$0xff]
        %v779 = vld [vmem:[%s236 + $0xef0] sm:$0xff]
        %v780 = vld [vmem:[%s236 + $0xef8] sm:$0xff]
        %v781 = vld [vmem:[%s236 + $0xf00] sm:$0xff]
        %v782 = vld [vmem:[%s236 + $0xf08] sm:$0xff]
        %v783 = vld [vmem:[%s236 + $0xf10] sm:$0xff]
        %v784 = vld [vmem:[%s236 + $0xf18] sm:$0xff]
        %v785 = vld [vmem:[%s236 + $0xf20] sm:$0xff]
        %v786 = vld [vmem:[%s236 + $0xf28] sm:$0xff]
        %v787 = vld [vmem:[%s236 + $0xf30] sm:$0xff]
        %v788 = vld [vmem:[%s236 + $0xf38] sm:$0xff]
        %v789 = vld [vmem:[%s236 + $0xf40] sm:$0xff]
        %v790 = vld [vmem:[%s236 + $0xf48] sm:$0xff]
        %v791 = vld [vmem:[%s236 + $0xf50] sm:$0xff]
        %v792 = vld [vmem:[%s236 + $0xf58] sm:$0xff]
        %v793 = vld [vmem:[%s236 + $0xf60] sm:$0xff]
        %v794 = vld [vmem:[%s236 + $0xf68] sm:$0xff]
        %v795 = vld [vmem:[%s236 + $0xf70] sm:$0xff]
        %v796 = vld [vmem:[%s236 + $0xf78] sm:$0xff]
        %v797 = vld [vmem:[%s236 + $0xf80] sm:$0xff]
        %v798 = vld [vmem:[%s236 + $0xf88] sm:$0xff]
        %v799 = vld [vmem:[%s236 + $0xf90] sm:$0xff]
        %v800 = vld [vmem:[%s236 + $0xf98] sm:$0xff]
        %v801 = vld [vmem:[%s236 + $0xfa0] sm:$0xff]
        %v802 = vld [vmem:[%s236 + $0xfa8] sm:$0xff]
        %v803 = vld [vmem:[%s236 + $0xfb0] sm:$0xff]
        %v804 = vld [vmem:[%s236 + $0xfb8] sm:$0xff]
        %v805 = vld [vmem:[%s236 + $0xfc0] sm:$0xff]
        %v806 = vld [vmem:[%s236 + $0xfc8] sm:$0xff]
        %v807 = vld [vmem:[%s236 + $0xfd0] sm:$0xff]
        %v808 = vld [vmem:[%s236 + $0xfd8] sm:$0xff]
        %v809 = vld [vmem:[%s236 + $0xfe0] sm:$0xff]
        %v810 = vld [vmem:[%s236 + $0xfe8] sm:$0xff]
        %v811 = vld [vmem:[%s236 + $0xff0] sm:$0xff]
        %v812 = vld [vmem:[%s236 + $0xff8] sm:$0xff]
        %v1325 = vunpack.c.l.b16 %v301
        %v1326 = vunpack.c.h.b16 %v301
        %v1327 = vunpack.c.l.b16 %v302
        %v1328 = vunpack.c.h.b16 %v302
        %v1329 = vunpack.c.l.b16 %v303
        %v1330 = vunpack.c.h.b16 %v303
        %v1331 = vunpack.c.l.b16 %v304
        %v1332 = vunpack.c.h.b16 %v304
        %v1333 = vunpack.c.l.b16 %v305
        %v1334 = vunpack.c.h.b16 %v305
        %v1335 = vunpack.c.l.b16 %v306
        %v1336 = vunpack.c.h.b16 %v306
        %v1337 = vunpack.c.l.b16 %v307
        %v1338 = vunpack.c.h.b16 %v307
        %v1339 = vunpack.c.l.b16 %v308
        %v1340 = vunpack.c.h.b16 %v308
        %v1341 = vunpack.c.l.b16 %v309
        %v1342 = vunpack.c.h.b16 %v309
        %v1343 = vunpack.c.l.b16 %v310
        %v1344 = vunpack.c.h.b16 %v310
        %v1345 = vunpack.c.l.b16 %v311
        %v1346 = vunpack.c.h.b16 %v311
        %v1347 = vunpack.c.l.b16 %v312
        %v1348 = vunpack.c.h.b16 %v312
        %v1349 = vunpack.c.l.b16 %v313
        %v1350 = vunpack.c.h.b16 %v313
        %v1351 = vunpack.c.l.b16 %v314
        %v1352 = vunpack.c.h.b16 %v314
        %v1353 = vunpack.c.l.b16 %v315
        %v1354 = vunpack.c.h.b16 %v315
        %v1355 = vunpack.c.l.b16 %v316
        %v1356 = vunpack.c.h.b16 %v316
        %v1357 = vunpack.c.l.b16 %v317
        %v1358 = vunpack.c.h.b16 %v317
        %v1359 = vunpack.c.l.b16 %v318
        %v1360 = vunpack.c.h.b16 %v318
        %v1361 = vunpack.c.l.b16 %v319
        %v1362 = vunpack.c.h.b16 %v319
        %v1363 = vunpack.c.l.b16 %v320
        %v1364 = vunpack.c.h.b16 %v320
        %v1365 = vunpack.c.l.b16 %v321
        %v1366 = vunpack.c.h.b16 %v321
        %v1367 = vunpack.c.l.b16 %v322
        %v1368 = vunpack.c.h.b16 %v322
        %v1369 = vunpack.c.l.b16 %v323
        %v1370 = vunpack.c.h.b16 %v323
        %v1371 = vunpack.c.l.b16 %v324
        %v1372 = vunpack.c.h.b16 %v324
        %v1373 = vunpack.c.l.b16 %v325
        %v1374 = vunpack.c.h.b16 %v325
        %v1375 = vunpack.c.l.b16 %v326
        %v1376 = vunpack.c.h.b16 %v326
        %v1377 = vunpack.c.l.b16 %v327
        %v1378 = vunpack.c.h.b16 %v327
        %v1379 = vunpack.c.l.b16 %v328
        %v1380 = vunpack.c.h.b16 %v328
        %v1381 = vunpack.c.l.b16 %v329
        %v1382 = vunpack.c.h.b16 %v329
        %v1383 = vunpack.c.l.b16 %v330
        %v1384 = vunpack.c.h.b16 %v330
        %v1385 = vunpack.c.l.b16 %v331
        %v1386 = vunpack.c.h.b16 %v331
        %v1387 = vunpack.c.l.b16 %v332
        %v1388 = vunpack.c.h.b16 %v332
        %v1389 = vunpack.c.l.b16 %v333
        %v1390 = vunpack.c.h.b16 %v333
        %v1391 = vunpack.c.l.b16 %v334
        %v1392 = vunpack.c.h.b16 %v334
        %v1393 = vunpack.c.l.b16 %v335
        %v1394 = vunpack.c.h.b16 %v335
        %v1395 = vunpack.c.l.b16 %v336
        %v1396 = vunpack.c.h.b16 %v336
        %v1397 = vunpack.c.l.b16 %v337
        %v1398 = vunpack.c.h.b16 %v337
        %v1399 = vunpack.c.l.b16 %v338
        %v1400 = vunpack.c.h.b16 %v338
        %v1401 = vunpack.c.l.b16 %v339
        %v1402 = vunpack.c.h.b16 %v339
        %v1403 = vunpack.c.l.b16 %v340
        %v1404 = vunpack.c.h.b16 %v340
        %v1405 = vunpack.c.l.b16 %v341
        %v1406 = vunpack.c.h.b16 %v341
        %v1407 = vunpack.c.l.b16 %v342
        %v1408 = vunpack.c.h.b16 %v342
        %v1409 = vunpack.c.l.b16 %v343
        %v1410 = vunpack.c.h.b16 %v343
        %v1411 = vunpack.c.l.b16 %v344
        %v1412 = vunpack.c.h.b16 %v344
        %v1413 = vunpack.c.l.b16 %v345
        %v1414 = vunpack.c.h.b16 %v345
        %v1415 = vunpack.c.l.b16 %v346
        %v1416 = vunpack.c.h.b16 %v346
        %v1417 = vunpack.c.l.b16 %v347
        %v1418 = vunpack.c.h.b16 %v347
        %v1419 = vunpack.c.l.b16 %v348
        %v1420 = vunpack.c.h.b16 %v348
        %v1421 = vunpack.c.l.b16 %v349
        %v1422 = vunpack.c.h.b16 %v349
        %v1423 = vunpack.c.l.b16 %v350
        %v1424 = vunpack.c.h.b16 %v350
        %v1425 = vunpack.c.l.b16 %v351
        %v1426 = vunpack.c.h.b16 %v351
        %v1427 = vunpack.c.l.b16 %v352
        %v1428 = vunpack.c.h.b16 %v352
        %v1429 = vunpack.c.l.b16 %v353
        %v1430 = vunpack.c.h.b16 %v353
        %v1431 = vunpack.c.l.b16 %v354
        %v1432 = vunpack.c.h.b16 %v354
        %v1433 = vunpack.c.l.b16 %v355
        %v1434 = vunpack.c.h.b16 %v355
        %v1435 = vunpack.c.l.b16 %v356
        %v1436 = vunpack.c.h.b16 %v356
        %v1437 = vunpack.c.l.b16 %v357
        %v1438 = vunpack.c.h.b16 %v357
        %v1439 = vunpack.c.l.b16 %v358
        %v1440 = vunpack.c.h.b16 %v358
        %v1441 = vunpack.c.l.b16 %v359
        %v1442 = vunpack.c.h.b16 %v359
        %v1443 = vunpack.c.l.b16 %v360
        %v1444 = vunpack.c.h.b16 %v360
        %v1445 = vunpack.c.l.b16 %v361
        %v1446 = vunpack.c.h.b16 %v361
        %v1447 = vunpack.c.l.b16 %v362
        %v1448 = vunpack.c.h.b16 %v362
        %v1449 = vunpack.c.l.b16 %v363
        %v1450 = vunpack.c.h.b16 %v363
        %v1451 = vunpack.c.l.b16 %v364
        %v1452 = vunpack.c.h.b16 %v364
        %v1453 = vunpack.c.l.b16 %v365
        %v1454 = vunpack.c.h.b16 %v365
        %v1455 = vunpack.c.l.b16 %v366
        %v1456 = vunpack.c.h.b16 %v366
        %v1457 = vunpack.c.l.b16 %v367
        %v1458 = vunpack.c.h.b16 %v367
        %v1459 = vunpack.c.l.b16 %v368
        %v1460 = vunpack.c.h.b16 %v368
        %v1461 = vunpack.c.l.b16 %v369
        %v1462 = vunpack.c.h.b16 %v369
        %v1463 = vunpack.c.l.b16 %v370
        %v1464 = vunpack.c.h.b16 %v370
        %v1465 = vunpack.c.l.b16 %v371
        %v1466 = vunpack.c.h.b16 %v371
        %v1467 = vunpack.c.l.b16 %v372
        %v1468 = vunpack.c.h.b16 %v372
        %v1469 = vunpack.c.l.b16 %v373
        %v1470 = vunpack.c.h.b16 %v373
        %v1471 = vunpack.c.l.b16 %v374
        %v1472 = vunpack.c.h.b16 %v374
        %v1473 = vunpack.c.l.b16 %v375
        %v1474 = vunpack.c.h.b16 %v375
        %v1475 = vunpack.c.l.b16 %v376
        %v1476 = vunpack.c.h.b16 %v376
        %v1477 = vunpack.c.l.b16 %v377
        %v1478 = vunpack.c.h.b16 %v377
        %v1479 = vunpack.c.l.b16 %v378
        %v1480 = vunpack.c.h.b16 %v378
        %v1481 = vunpack.c.l.b16 %v379
        %v1482 = vunpack.c.h.b16 %v379
        %v1483 = vunpack.c.l.b16 %v380
        %v1484 = vunpack.c.h.b16 %v380
        %v1485 = vunpack.c.l.b16 %v381
        %v1486 = vunpack.c.h.b16 %v381
        %v1487 = vunpack.c.l.b16 %v382
        %v1488 = vunpack.c.h.b16 %v382
        %v1489 = vunpack.c.l.b16 %v383
        %v1490 = vunpack.c.h.b16 %v383
        %v1491 = vunpack.c.l.b16 %v384
        %v1492 = vunpack.c.h.b16 %v384
        %v1493 = vunpack.c.l.b16 %v385
        %v1494 = vunpack.c.h.b16 %v385
        %v1495 = vunpack.c.l.b16 %v386
        %v1496 = vunpack.c.h.b16 %v386
        %v1497 = vunpack.c.l.b16 %v387
        %v1498 = vunpack.c.h.b16 %v387
        %v1499 = vunpack.c.l.b16 %v388
        %v1500 = vunpack.c.h.b16 %v388
        %v1501 = vunpack.c.l.b16 %v389
        %v1502 = vunpack.c.h.b16 %v389
        %v1503 = vunpack.c.l.b16 %v390
        %v1504 = vunpack.c.h.b16 %v390
        %v1505 = vunpack.c.l.b16 %v391
        %v1506 = vunpack.c.h.b16 %v391
        %v1507 = vunpack.c.l.b16 %v392
        %v1508 = vunpack.c.h.b16 %v392
        %v1509 = vunpack.c.l.b16 %v393
        %v1510 = vunpack.c.h.b16 %v393
        %v1511 = vunpack.c.l.b16 %v394
        %v1512 = vunpack.c.h.b16 %v394
        %v1513 = vunpack.c.l.b16 %v395
        %v1514 = vunpack.c.h.b16 %v395
        %v1515 = vunpack.c.l.b16 %v396
        %v1516 = vunpack.c.h.b16 %v396
        %v1517 = vunpack.c.l.b16 %v397
        %v1518 = vunpack.c.h.b16 %v397
        %v1519 = vunpack.c.l.b16 %v398
        %v1520 = vunpack.c.h.b16 %v398
        %v1521 = vunpack.c.l.b16 %v399
        %v1522 = vunpack.c.h.b16 %v399
        %v1523 = vunpack.c.l.b16 %v400
        %v1524 = vunpack.c.h.b16 %v400
        %v1525 = vunpack.c.l.b16 %v401
        %v1526 = vunpack.c.h.b16 %v401
        %v1527 = vunpack.c.l.b16 %v402
        %v1528 = vunpack.c.h.b16 %v402
        %v1529 = vunpack.c.l.b16 %v403
        %v1530 = vunpack.c.h.b16 %v403
        %v1531 = vunpack.c.l.b16 %v404
        %v1532 = vunpack.c.h.b16 %v404
        %v1533 = vunpack.c.l.b16 %v405
        %v1534 = vunpack.c.h.b16 %v405
        %v1535 = vunpack.c.l.b16 %v406
        %v1536 = vunpack.c.h.b16 %v406
        %v1537 = vunpack.c.l.b16 %v407
        %v1538 = vunpack.c.h.b16 %v407
        %v1539 = vunpack.c.l.b16 %v408
        %v1540 = vunpack.c.h.b16 %v408
        %v1541 = vunpack.c.l.b16 %v409
        %v1542 = vunpack.c.h.b16 %v409
        %v1543 = vunpack.c.l.b16 %v410
        %v1544 = vunpack.c.h.b16 %v410
        %v1545 = vunpack.c.l.b16 %v411
        %v1546 = vunpack.c.h.b16 %v411
        %v1547 = vunpack.c.l.b16 %v412
        %v1548 = vunpack.c.h.b16 %v412
        %v1549 = vunpack.c.l.b16 %v413
        %v1550 = vunpack.c.h.b16 %v413
        %v1551 = vunpack.c.l.b16 %v414
        %v1552 = vunpack.c.h.b16 %v414
        %v1553 = vunpack.c.l.b16 %v415
        %v1554 = vunpack.c.h.b16 %v415
        %v1555 = vunpack.c.l.b16 %v416
        %v1556 = vunpack.c.h.b16 %v416
        %v1557 = vunpack.c.l.b16 %v417
        %v1558 = vunpack.c.h.b16 %v417
        %v1559 = vunpack.c.l.b16 %v418
        %v1560 = vunpack.c.h.b16 %v418
        %v1561 = vunpack.c.l.b16 %v419
        %v1562 = vunpack.c.h.b16 %v419
        %v1563 = vunpack.c.l.b16 %v420
        %v1564 = vunpack.c.h.b16 %v420
        %v1565 = vunpack.c.l.b16 %v421
        %v1566 = vunpack.c.h.b16 %v421
        %v1567 = vunpack.c.l.b16 %v422
        %v1568 = vunpack.c.h.b16 %v422
        %v1569 = vunpack.c.l.b16 %v423
        %v1570 = vunpack.c.h.b16 %v423
        %v1571 = vunpack.c.l.b16 %v424
        %v1572 = vunpack.c.h.b16 %v424
        %v1573 = vunpack.c.l.b16 %v425
        %v1574 = vunpack.c.h.b16 %v425
        %v1575 = vunpack.c.l.b16 %v426
        %v1576 = vunpack.c.h.b16 %v426
        %v1577 = vunpack.c.l.b16 %v427
        %v1578 = vunpack.c.h.b16 %v427
        %v1579 = vunpack.c.l.b16 %v428
        %v1580 = vunpack.c.h.b16 %v428
        %v1581 = vunpack.c.l.b16 %v429
        %v1582 = vunpack.c.h.b16 %v429
        %v1583 = vunpack.c.l.b16 %v430
        %v1584 = vunpack.c.h.b16 %v430
        %v1585 = vunpack.c.l.b16 %v431
        %v1586 = vunpack.c.h.b16 %v431
        %v1587 = vunpack.c.l.b16 %v432
        %v1588 = vunpack.c.h.b16 %v432
        %v1589 = vunpack.c.l.b16 %v433
        %v1590 = vunpack.c.h.b16 %v433
        %v1591 = vunpack.c.l.b16 %v434
        %v1592 = vunpack.c.h.b16 %v434
        %v1593 = vunpack.c.l.b16 %v435
        %v1594 = vunpack.c.h.b16 %v435
        %v1595 = vunpack.c.l.b16 %v436
        %v1596 = vunpack.c.h.b16 %v436
        %v1597 = vunpack.c.l.b16 %v437
        %v1598 = vunpack.c.h.b16 %v437
        %v1599 = vunpack.c.l.b16 %v438
        %v1600 = vunpack.c.h.b16 %v438
        %v1601 = vunpack.c.l.b16 %v439
        %v1602 = vunpack.c.h.b16 %v439
        %v1603 = vunpack.c.l.b16 %v440
        %v1604 = vunpack.c.h.b16 %v440
        %v1605 = vunpack.c.l.b16 %v441
        %v1606 = vunpack.c.h.b16 %v441
        %v1607 = vunpack.c.l.b16 %v442
        %v1608 = vunpack.c.h.b16 %v442
        %v1609 = vunpack.c.l.b16 %v443
        %v1610 = vunpack.c.h.b16 %v443
        %v1611 = vunpack.c.l.b16 %v444
        %v1612 = vunpack.c.h.b16 %v444
        %v1613 = vunpack.c.l.b16 %v445
        %v1614 = vunpack.c.h.b16 %v445
        %v1615 = vunpack.c.l.b16 %v446
        %v1616 = vunpack.c.h.b16 %v446
        %v1617 = vunpack.c.l.b16 %v447
        %v1618 = vunpack.c.h.b16 %v447
        %v1619 = vunpack.c.l.b16 %v448
        %v1620 = vunpack.c.h.b16 %v448
        %v1621 = vunpack.c.l.b16 %v449
        %v1622 = vunpack.c.h.b16 %v449
        %v1623 = vunpack.c.l.b16 %v450
        %v1624 = vunpack.c.h.b16 %v450
        %v1625 = vunpack.c.l.b16 %v451
        %v1626 = vunpack.c.h.b16 %v451
        %v1627 = vunpack.c.l.b16 %v452
        %v1628 = vunpack.c.h.b16 %v452
        %v1629 = vunpack.c.l.b16 %v453
        %v1630 = vunpack.c.h.b16 %v453
        %v1631 = vunpack.c.l.b16 %v454
        %v1632 = vunpack.c.h.b16 %v454
        %v1633 = vunpack.c.l.b16 %v455
        %v1634 = vunpack.c.h.b16 %v455
        %v1635 = vunpack.c.l.b16 %v456
        %v1636 = vunpack.c.h.b16 %v456
        %v1637 = vunpack.c.l.b16 %v457
        %v1638 = vunpack.c.h.b16 %v457
        %v1639 = vunpack.c.l.b16 %v458
        %v1640 = vunpack.c.h.b16 %v458
        %v1641 = vunpack.c.l.b16 %v459
        %v1642 = vunpack.c.h.b16 %v459
        %v1643 = vunpack.c.l.b16 %v460
        %v1644 = vunpack.c.h.b16 %v460
        %v1645 = vunpack.c.l.b16 %v461
        %v1646 = vunpack.c.h.b16 %v461
        %v1647 = vunpack.c.l.b16 %v462
        %v1648 = vunpack.c.h.b16 %v462
        %v1649 = vunpack.c.l.b16 %v463
        %v1650 = vunpack.c.h.b16 %v463
        %v1651 = vunpack.c.l.b16 %v464
        %v1652 = vunpack.c.h.b16 %v464
        %v1653 = vunpack.c.l.b16 %v465
        %v1654 = vunpack.c.h.b16 %v465
        %v1655 = vunpack.c.l.b16 %v466
        %v1656 = vunpack.c.h.b16 %v466
        %v1657 = vunpack.c.l.b16 %v467
        %v1658 = vunpack.c.h.b16 %v467
        %v1659 = vunpack.c.l.b16 %v468
        %v1660 = vunpack.c.h.b16 %v468
        %v1661 = vunpack.c.l.b16 %v469
        %v1662 = vunpack.c.h.b16 %v469
        %v1663 = vunpack.c.l.b16 %v470
        %v1664 = vunpack.c.h.b16 %v470
        %v1665 = vunpack.c.l.b16 %v471
        %v1666 = vunpack.c.h.b16 %v471
        %v1667 = vunpack.c.l.b16 %v472
        %v1668 = vunpack.c.h.b16 %v472
        %v1669 = vunpack.c.l.b16 %v473
        %v1670 = vunpack.c.h.b16 %v473
        %v1671 = vunpack.c.l.b16 %v474
        %v1672 = vunpack.c.h.b16 %v474
        %v1673 = vunpack.c.l.b16 %v475
        %v1674 = vunpack.c.h.b16 %v475
        %v1675 = vunpack.c.l.b16 %v476
        %v1676 = vunpack.c.h.b16 %v476
        %v1677 = vunpack.c.l.b16 %v477
        %v1678 = vunpack.c.h.b16 %v477
        %v1679 = vunpack.c.l.b16 %v478
        %v1680 = vunpack.c.h.b16 %v478
        %v1681 = vunpack.c.l.b16 %v479
        %v1682 = vunpack.c.h.b16 %v479
        %v1683 = vunpack.c.l.b16 %v480
        %v1684 = vunpack.c.h.b16 %v480
        %v1685 = vunpack.c.l.b16 %v481
        %v1686 = vunpack.c.h.b16 %v481
        %v1687 = vunpack.c.l.b16 %v482
        %v1688 = vunpack.c.h.b16 %v482
        %v1689 = vunpack.c.l.b16 %v483
        %v1690 = vunpack.c.h.b16 %v483
        %v1691 = vunpack.c.l.b16 %v484
        %v1692 = vunpack.c.h.b16 %v484
        %v1693 = vunpack.c.l.b16 %v485
        %v1694 = vunpack.c.h.b16 %v485
        %v1695 = vunpack.c.l.b16 %v486
        %v1696 = vunpack.c.h.b16 %v486
        %v1697 = vunpack.c.l.b16 %v487
        %v1698 = vunpack.c.h.b16 %v487
        %v1699 = vunpack.c.l.b16 %v488
        %v1700 = vunpack.c.h.b16 %v488
        %v1701 = vunpack.c.l.b16 %v489
        %v1702 = vunpack.c.h.b16 %v489
        %v1703 = vunpack.c.l.b16 %v490
        %v1704 = vunpack.c.h.b16 %v490
        %v1705 = vunpack.c.l.b16 %v491
        %v1706 = vunpack.c.h.b16 %v491
        %v1707 = vunpack.c.l.b16 %v492
        %v1708 = vunpack.c.h.b16 %v492
        %v1709 = vunpack.c.l.b16 %v493
        %v1710 = vunpack.c.h.b16 %v493
        %v1711 = vunpack.c.l.b16 %v494
        %v1712 = vunpack.c.h.b16 %v494
        %v1713 = vunpack.c.l.b16 %v495
        %v1714 = vunpack.c.h.b16 %v495
        %v1715 = vunpack.c.l.b16 %v496
        %v1716 = vunpack.c.h.b16 %v496
        %v1717 = vunpack.c.l.b16 %v497
        %v1718 = vunpack.c.h.b16 %v497
        %v1719 = vunpack.c.l.b16 %v498
        %v1720 = vunpack.c.h.b16 %v498
        %v1721 = vunpack.c.l.b16 %v499
        %v1722 = vunpack.c.h.b16 %v499
        %v1723 = vunpack.c.l.b16 %v500
        %v1724 = vunpack.c.h.b16 %v500
        %v1725 = vunpack.c.l.b16 %v501
        %v1726 = vunpack.c.h.b16 %v501
        %v1727 = vunpack.c.l.b16 %v502
        %v1728 = vunpack.c.h.b16 %v502
        %v1729 = vunpack.c.l.b16 %v503
        %v1730 = vunpack.c.h.b16 %v503
        %v1731 = vunpack.c.l.b16 %v504
        %v1732 = vunpack.c.h.b16 %v504
        %v1733 = vunpack.c.l.b16 %v505
        %v1734 = vunpack.c.h.b16 %v505
        %v1735 = vunpack.c.l.b16 %v506
        %v1736 = vunpack.c.h.b16 %v506
        %v1737 = vunpack.c.l.b16 %v507
        %v1738 = vunpack.c.h.b16 %v507
        %v1739 = vunpack.c.l.b16 %v508
        %v1740 = vunpack.c.h.b16 %v508
        %v1741 = vunpack.c.l.b16 %v509
        %v1742 = vunpack.c.h.b16 %v509
        %v1743 = vunpack.c.l.b16 %v510
        %v1744 = vunpack.c.h.b16 %v510
        %v1745 = vunpack.c.l.b16 %v511
        %v1746 = vunpack.c.h.b16 %v511
        %v1747 = vunpack.c.l.b16 %v512
        %v1748 = vunpack.c.h.b16 %v512
        %v1749 = vunpack.c.l.b16 %v513
        %v1750 = vunpack.c.h.b16 %v513
        %v1751 = vunpack.c.l.b16 %v514
        %v1752 = vunpack.c.h.b16 %v514
        %v1753 = vunpack.c.l.b16 %v515
        %v1754 = vunpack.c.h.b16 %v515
        %v1755 = vunpack.c.l.b16 %v516
        %v1756 = vunpack.c.h.b16 %v516
        %v1757 = vunpack.c.l.b16 %v517
        %v1758 = vunpack.c.h.b16 %v517
        %v1759 = vunpack.c.l.b16 %v518
        %v1760 = vunpack.c.h.b16 %v518
        %v1761 = vunpack.c.l.b16 %v519
        %v1762 = vunpack.c.h.b16 %v519
        %v1763 = vunpack.c.l.b16 %v520
        %v1764 = vunpack.c.h.b16 %v520
        %v1765 = vunpack.c.l.b16 %v521
        %v1766 = vunpack.c.h.b16 %v521
        %v1767 = vunpack.c.l.b16 %v522
        %v1768 = vunpack.c.h.b16 %v522
        %v1769 = vunpack.c.l.b16 %v523
        %v1770 = vunpack.c.h.b16 %v523
        %v1771 = vunpack.c.l.b16 %v524
        %v1772 = vunpack.c.h.b16 %v524
        %v1773 = vunpack.c.l.b16 %v525
        %v1774 = vunpack.c.h.b16 %v525
        %v1775 = vunpack.c.l.b16 %v526
        %v1776 = vunpack.c.h.b16 %v526
        %v1777 = vunpack.c.l.b16 %v527
        %v1778 = vunpack.c.h.b16 %v527
        %v1779 = vunpack.c.l.b16 %v528
        %v1780 = vunpack.c.h.b16 %v528
        %v1781 = vunpack.c.l.b16 %v529
        %v1782 = vunpack.c.h.b16 %v529
        %v1783 = vunpack.c.l.b16 %v530
        %v1784 = vunpack.c.h.b16 %v530
        %v1785 = vunpack.c.l.b16 %v531
        %v1786 = vunpack.c.h.b16 %v531
        %v1787 = vunpack.c.l.b16 %v532
        %v1788 = vunpack.c.h.b16 %v532
        %v1789 = vunpack.c.l.b16 %v533
        %v1790 = vunpack.c.h.b16 %v533
        %v1791 = vunpack.c.l.b16 %v534
        %v1792 = vunpack.c.h.b16 %v534
        %v1793 = vunpack.c.l.b16 %v535
        %v1794 = vunpack.c.h.b16 %v535
        %v1795 = vunpack.c.l.b16 %v536
        %v1796 = vunpack.c.h.b16 %v536
        %v1797 = vunpack.c.l.b16 %v537
        %v1798 = vunpack.c.h.b16 %v537
        %v1799 = vunpack.c.l.b16 %v538
        %v1800 = vunpack.c.h.b16 %v538
        %v1801 = vunpack.c.l.b16 %v539
        %v1802 = vunpack.c.h.b16 %v539
        %v1803 = vunpack.c.l.b16 %v540
        %v1804 = vunpack.c.h.b16 %v540
        %v1805 = vunpack.c.l.b16 %v541
        %v1806 = vunpack.c.h.b16 %v541
        %v1807 = vunpack.c.l.b16 %v542
        %v1808 = vunpack.c.h.b16 %v542
        %v1809 = vunpack.c.l.b16 %v543
        %v1810 = vunpack.c.h.b16 %v543
        %v1811 = vunpack.c.l.b16 %v544
        %v1812 = vunpack.c.h.b16 %v544
        %v1813 = vunpack.c.l.b16 %v545
        %v1814 = vunpack.c.h.b16 %v545
        %v1815 = vunpack.c.l.b16 %v546
        %v1816 = vunpack.c.h.b16 %v546
        %v1817 = vunpack.c.l.b16 %v547
        %v1818 = vunpack.c.h.b16 %v547
        %v1819 = vunpack.c.l.b16 %v548
        %v1820 = vunpack.c.h.b16 %v548
        %v1821 = vunpack.c.l.b16 %v549
        %v1822 = vunpack.c.h.b16 %v549
        %v1823 = vunpack.c.l.b16 %v550
        %v1824 = vunpack.c.h.b16 %v550
        %v1825 = vunpack.c.l.b16 %v551
        %v1826 = vunpack.c.h.b16 %v551
        %v1827 = vunpack.c.l.b16 %v552
        %v1828 = vunpack.c.h.b16 %v552
        %v1829 = vunpack.c.l.b16 %v553
        %v1830 = vunpack.c.h.b16 %v553
        %v1831 = vunpack.c.l.b16 %v554
        %v1832 = vunpack.c.h.b16 %v554
        %v1833 = vunpack.c.l.b16 %v555
        %v1834 = vunpack.c.h.b16 %v555
        %v1835 = vunpack.c.l.b16 %v556
        %v1836 = vunpack.c.h.b16 %v556
        %v1837 = vunpack.c.l.b16 %v557
        %v1838 = vunpack.c.h.b16 %v557
        %v1839 = vunpack.c.l.b16 %v558
        %v1840 = vunpack.c.h.b16 %v558
        %v1841 = vunpack.c.l.b16 %v559
        %v1842 = vunpack.c.h.b16 %v559
        %v1843 = vunpack.c.l.b16 %v560
        %v1844 = vunpack.c.h.b16 %v560
        %v1845 = vunpack.c.l.b16 %v561
        %v1846 = vunpack.c.h.b16 %v561
        %v1847 = vunpack.c.l.b16 %v562
        %v1848 = vunpack.c.h.b16 %v562
        %v1849 = vunpack.c.l.b16 %v563
        %v1850 = vunpack.c.h.b16 %v563
        %v1851 = vunpack.c.l.b16 %v564
        %v1852 = vunpack.c.h.b16 %v564
        %v1853 = vunpack.c.l.b16 %v565
        %v1854 = vunpack.c.h.b16 %v565
        %v1855 = vunpack.c.l.b16 %v566
        %v1856 = vunpack.c.h.b16 %v566
        %v1857 = vunpack.c.l.b16 %v567
        %v1858 = vunpack.c.h.b16 %v567
        %v1859 = vunpack.c.l.b16 %v568
        %v1860 = vunpack.c.h.b16 %v568
        %v1861 = vunpack.c.l.b16 %v569
        %v1862 = vunpack.c.h.b16 %v569
        %v1863 = vunpack.c.l.b16 %v570
        %v1864 = vunpack.c.h.b16 %v570
        %v1865 = vunpack.c.l.b16 %v571
        %v1866 = vunpack.c.h.b16 %v571
        %v1867 = vunpack.c.l.b16 %v572
        %v1868 = vunpack.c.h.b16 %v572
        %v1869 = vunpack.c.l.b16 %v573
        %v1870 = vunpack.c.h.b16 %v573
        %v1871 = vunpack.c.l.b16 %v574
        %v1872 = vunpack.c.h.b16 %v574
        %v1873 = vunpack.c.l.b16 %v575
        %v1874 = vunpack.c.h.b16 %v575
        %v1875 = vunpack.c.l.b16 %v576
        %v1876 = vunpack.c.h.b16 %v576
        %v1877 = vunpack.c.l.b16 %v577
        %v1878 = vunpack.c.h.b16 %v577
        %v1879 = vunpack.c.l.b16 %v578
        %v1880 = vunpack.c.h.b16 %v578
        %v1881 = vunpack.c.l.b16 %v579
        %v1882 = vunpack.c.h.b16 %v579
        %v1883 = vunpack.c.l.b16 %v580
        %v1884 = vunpack.c.h.b16 %v580
        %v1885 = vunpack.c.l.b16 %v581
        %v1886 = vunpack.c.h.b16 %v581
        %v1887 = vunpack.c.l.b16 %v582
        %v1888 = vunpack.c.h.b16 %v582
        %v1889 = vunpack.c.l.b16 %v583
        %v1890 = vunpack.c.h.b16 %v583
        %v1891 = vunpack.c.l.b16 %v584
        %v1892 = vunpack.c.h.b16 %v584
        %v1893 = vunpack.c.l.b16 %v585
        %v1894 = vunpack.c.h.b16 %v585
        %v1895 = vunpack.c.l.b16 %v586
        %v1896 = vunpack.c.h.b16 %v586
        %v1897 = vunpack.c.l.b16 %v587
        %v1898 = vunpack.c.h.b16 %v587
        %v1899 = vunpack.c.l.b16 %v588
        %v1900 = vunpack.c.h.b16 %v588
        %v1901 = vunpack.c.l.b16 %v589
        %v1902 = vunpack.c.h.b16 %v589
        %v1903 = vunpack.c.l.b16 %v590
        %v1904 = vunpack.c.h.b16 %v590
        %v1905 = vunpack.c.l.b16 %v591
        %v1906 = vunpack.c.h.b16 %v591
        %v1907 = vunpack.c.l.b16 %v592
        %v1908 = vunpack.c.h.b16 %v592
        %v1909 = vunpack.c.l.b16 %v593
        %v1910 = vunpack.c.h.b16 %v593
        %v1911 = vunpack.c.l.b16 %v594
        %v1912 = vunpack.c.h.b16 %v594
        %v1913 = vunpack.c.l.b16 %v595
        %v1914 = vunpack.c.h.b16 %v595
        %v1915 = vunpack.c.l.b16 %v596
        %v1916 = vunpack.c.h.b16 %v596
        %v1917 = vunpack.c.l.b16 %v597
        %v1918 = vunpack.c.h.b16 %v597
        %v1919 = vunpack.c.l.b16 %v598
        %v1920 = vunpack.c.h.b16 %v598
        %v1921 = vunpack.c.l.b16 %v599
        %v1922 = vunpack.c.h.b16 %v599
        %v1923 = vunpack.c.l.b16 %v600
        %v1924 = vunpack.c.h.b16 %v600
        %v1925 = vunpack.c.l.b16 %v601
        %v1926 = vunpack.c.h.b16 %v601
        %v1927 = vunpack.c.l.b16 %v602
        %v1928 = vunpack.c.h.b16 %v602
        %v1929 = vunpack.c.l.b16 %v603
        %v1930 = vunpack.c.h.b16 %v603
        %v1931 = vunpack.c.l.b16 %v604
        %v1932 = vunpack.c.h.b16 %v604
        %v1933 = vunpack.c.l.b16 %v605
        %v1934 = vunpack.c.h.b16 %v605
        %v1935 = vunpack.c.l.b16 %v606
        %v1936 = vunpack.c.h.b16 %v606
        %v1937 = vunpack.c.l.b16 %v607
        %v1938 = vunpack.c.h.b16 %v607
        %v1939 = vunpack.c.l.b16 %v608
        %v1940 = vunpack.c.h.b16 %v608
        %v1941 = vunpack.c.l.b16 %v609
        %v1942 = vunpack.c.h.b16 %v609
        %v1943 = vunpack.c.l.b16 %v610
        %v1944 = vunpack.c.h.b16 %v610
        %v1945 = vunpack.c.l.b16 %v611
        %v1946 = vunpack.c.h.b16 %v611
        %v1947 = vunpack.c.l.b16 %v612
        %v1948 = vunpack.c.h.b16 %v612
        %v1949 = vunpack.c.l.b16 %v613
        %v1950 = vunpack.c.h.b16 %v613
        %v1951 = vunpack.c.l.b16 %v614
        %v1952 = vunpack.c.h.b16 %v614
        %v1953 = vunpack.c.l.b16 %v615
        %v1954 = vunpack.c.h.b16 %v615
        %v1955 = vunpack.c.l.b16 %v616
        %v1956 = vunpack.c.h.b16 %v616
        %v1957 = vunpack.c.l.b16 %v617
        %v1958 = vunpack.c.h.b16 %v617
        %v1959 = vunpack.c.l.b16 %v618
        %v1960 = vunpack.c.h.b16 %v618
        %v1961 = vunpack.c.l.b16 %v619
        %v1962 = vunpack.c.h.b16 %v619
        %v1963 = vunpack.c.l.b16 %v620
        %v1964 = vunpack.c.h.b16 %v620
        %v1965 = vunpack.c.l.b16 %v621
        %v1966 = vunpack.c.h.b16 %v621
        %v1967 = vunpack.c.l.b16 %v622
        %v1968 = vunpack.c.h.b16 %v622
        %v1969 = vunpack.c.l.b16 %v623
        %v1970 = vunpack.c.h.b16 %v623
        %v1971 = vunpack.c.l.b16 %v624
        %v1972 = vunpack.c.h.b16 %v624
        %v1973 = vunpack.c.l.b16 %v625
        %v1974 = vunpack.c.h.b16 %v625
        %v1975 = vunpack.c.l.b16 %v626
        %v1976 = vunpack.c.h.b16 %v626
        %v1977 = vunpack.c.l.b16 %v627
        %v1978 = vunpack.c.h.b16 %v627
        %v1979 = vunpack.c.l.b16 %v628
        %v1980 = vunpack.c.h.b16 %v628
        %v1981 = vunpack.c.l.b16 %v629
        %v1982 = vunpack.c.h.b16 %v629
        %v1983 = vunpack.c.l.b16 %v630
        %v1984 = vunpack.c.h.b16 %v630
        %v1985 = vunpack.c.l.b16 %v631
        %v1986 = vunpack.c.h.b16 %v631
        %v1987 = vunpack.c.l.b16 %v632
        %v1988 = vunpack.c.h.b16 %v632
        %v1989 = vunpack.c.l.b16 %v633
        %v1990 = vunpack.c.h.b16 %v633
        %v1991 = vunpack.c.l.b16 %v634
        %v1992 = vunpack.c.h.b16 %v634
        %v1993 = vunpack.c.l.b16 %v635
        %v1994 = vunpack.c.h.b16 %v635
        %v1995 = vunpack.c.l.b16 %v636
        %v1996 = vunpack.c.h.b16 %v636
        %v1997 = vunpack.c.l.b16 %v637
        %v1998 = vunpack.c.h.b16 %v637
        %v1999 = vunpack.c.l.b16 %v638
        %v2000 = vunpack.c.h.b16 %v638
        %v2001 = vunpack.c.l.b16 %v639
        %v2002 = vunpack.c.h.b16 %v639
        %v2003 = vunpack.c.l.b16 %v640
        %v2004 = vunpack.c.h.b16 %v640
        %v2005 = vunpack.c.l.b16 %v641
        %v2006 = vunpack.c.h.b16 %v641
        %v2007 = vunpack.c.l.b16 %v642
        %v2008 = vunpack.c.h.b16 %v642
        %v2009 = vunpack.c.l.b16 %v643
        %v2010 = vunpack.c.h.b16 %v643
        %v2011 = vunpack.c.l.b16 %v644
        %v2012 = vunpack.c.h.b16 %v644
        %v2013 = vunpack.c.l.b16 %v645
        %v2014 = vunpack.c.h.b16 %v645
        %v2015 = vunpack.c.l.b16 %v646
        %v2016 = vunpack.c.h.b16 %v646
        %v2017 = vunpack.c.l.b16 %v647
        %v2018 = vunpack.c.h.b16 %v647
        %v2019 = vunpack.c.l.b16 %v648
        %v2020 = vunpack.c.h.b16 %v648
        %v2021 = vunpack.c.l.b16 %v649
        %v2022 = vunpack.c.h.b16 %v649
        %v2023 = vunpack.c.l.b16 %v650
        %v2024 = vunpack.c.h.b16 %v650
        %v2025 = vunpack.c.l.b16 %v651
        %v2026 = vunpack.c.h.b16 %v651
        %v2027 = vunpack.c.l.b16 %v652
        %v2028 = vunpack.c.h.b16 %v652
        %v2029 = vunpack.c.l.b16 %v653
        %v2030 = vunpack.c.h.b16 %v653
        %v2031 = vunpack.c.l.b16 %v654
        %v2032 = vunpack.c.h.b16 %v654
        %v2033 = vunpack.c.l.b16 %v655
        %v2034 = vunpack.c.h.b16 %v655
        %v2035 = vunpack.c.l.b16 %v656
        %v2036 = vunpack.c.h.b16 %v656
        %v2037 = vunpack.c.l.b16 %v657
        %v2038 = vunpack.c.h.b16 %v657
        %v2039 = vunpack.c.l.b16 %v658
        %v2040 = vunpack.c.h.b16 %v658
        %v2041 = vunpack.c.l.b16 %v659
        %v2042 = vunpack.c.h.b16 %v659
        %v2043 = vunpack.c.l.b16 %v660
        %v2044 = vunpack.c.h.b16 %v660
        %v2045 = vunpack.c.l.b16 %v661
        %v2046 = vunpack.c.h.b16 %v661
        %v2047 = vunpack.c.l.b16 %v662
        %v2048 = vunpack.c.h.b16 %v662
        %v2049 = vunpack.c.l.b16 %v663
        %v2050 = vunpack.c.h.b16 %v663
        %v2051 = vunpack.c.l.b16 %v664
        %v2052 = vunpack.c.h.b16 %v664
        %v2053 = vunpack.c.l.b16 %v665
        %v2054 = vunpack.c.h.b16 %v665
        %v2055 = vunpack.c.l.b16 %v666
        %v2056 = vunpack.c.h.b16 %v666
        %v2057 = vunpack.c.l.b16 %v667
        %v2058 = vunpack.c.h.b16 %v667
        %v2059 = vunpack.c.l.b16 %v668
        %v2060 = vunpack.c.h.b16 %v668
        %v2061 = vunpack.c.l.b16 %v669
        %v2062 = vunpack.c.h.b16 %v669
        %v2063 = vunpack.c.l.b16 %v670
        %v2064 = vunpack.c.h.b16 %v670
        %v2065 = vunpack.c.l.b16 %v671
        %v2066 = vunpack.c.h.b16 %v671
        %v2067 = vunpack.c.l.b16 %v672
        %v2068 = vunpack.c.h.b16 %v672
        %v2069 = vunpack.c.l.b16 %v673
        %v2070 = vunpack.c.h.b16 %v673
        %v2071 = vunpack.c.l.b16 %v674
        %v2072 = vunpack.c.h.b16 %v674
        %v2073 = vunpack.c.l.b16 %v675
        %v2074 = vunpack.c.h.b16 %v675
        %v2075 = vunpack.c.l.b16 %v676
        %v2076 = vunpack.c.h.b16 %v676
        %v2077 = vunpack.c.l.b16 %v677
        %v2078 = vunpack.c.h.b16 %v677
        %v2079 = vunpack.c.l.b16 %v678
        %v2080 = vunpack.c.h.b16 %v678
        %v2081 = vunpack.c.l.b16 %v679
        %v2082 = vunpack.c.h.b16 %v679
        %v2083 = vunpack.c.l.b16 %v680
        %v2084 = vunpack.c.h.b16 %v680
        %v2085 = vunpack.c.l.b16 %v681
        %v2086 = vunpack.c.h.b16 %v681
        %v2087 = vunpack.c.l.b16 %v682
        %v2088 = vunpack.c.h.b16 %v682
        %v2089 = vunpack.c.l.b16 %v683
        %v2090 = vunpack.c.h.b16 %v683
        %v2091 = vunpack.c.l.b16 %v684
        %v2092 = vunpack.c.h.b16 %v684
        %v2093 = vunpack.c.l.b16 %v685
        %v2094 = vunpack.c.h.b16 %v685
        %v2095 = vunpack.c.l.b16 %v686
        %v2096 = vunpack.c.h.b16 %v686
        %v2097 = vunpack.c.l.b16 %v687
        %v2098 = vunpack.c.h.b16 %v687
        %v2099 = vunpack.c.l.b16 %v688
        %v2100 = vunpack.c.h.b16 %v688
        %v2101 = vunpack.c.l.b16 %v689
        %v2102 = vunpack.c.h.b16 %v689
        %v2103 = vunpack.c.l.b16 %v690
        %v2104 = vunpack.c.h.b16 %v690
        %v2105 = vunpack.c.l.b16 %v691
        %v2106 = vunpack.c.h.b16 %v691
        %v2107 = vunpack.c.l.b16 %v692
        %v2108 = vunpack.c.h.b16 %v692
        %v2109 = vunpack.c.l.b16 %v693
        %v2110 = vunpack.c.h.b16 %v693
        %v2111 = vunpack.c.l.b16 %v694
        %v2112 = vunpack.c.h.b16 %v694
        %v2113 = vunpack.c.l.b16 %v695
        %v2114 = vunpack.c.h.b16 %v695
        %v2115 = vunpack.c.l.b16 %v696
        %v2116 = vunpack.c.h.b16 %v696
        %v2117 = vunpack.c.l.b16 %v697
        %v2118 = vunpack.c.h.b16 %v697
        %v2119 = vunpack.c.l.b16 %v698
        %v2120 = vunpack.c.h.b16 %v698
        %v2121 = vunpack.c.l.b16 %v699
        %v2122 = vunpack.c.h.b16 %v699
        %v2123 = vunpack.c.l.b16 %v700
        %v2124 = vunpack.c.h.b16 %v700
        %v2125 = vunpack.c.l.b16 %v701
        %v2126 = vunpack.c.h.b16 %v701
        %v2127 = vunpack.c.l.b16 %v702
        %v2128 = vunpack.c.h.b16 %v702
        %v2129 = vunpack.c.l.b16 %v703
        %v2130 = vunpack.c.h.b16 %v703
        %v2131 = vunpack.c.l.b16 %v704
        %v2132 = vunpack.c.h.b16 %v704
        %v2133 = vunpack.c.l.b16 %v705
        %v2134 = vunpack.c.h.b16 %v705
        %v2135 = vunpack.c.l.b16 %v706
        %v2136 = vunpack.c.h.b16 %v706
        %v2137 = vunpack.c.l.b16 %v707
        %v2138 = vunpack.c.h.b16 %v707
        %v2139 = vunpack.c.l.b16 %v708
        %v2140 = vunpack.c.h.b16 %v708
        %v2141 = vunpack.c.l.b16 %v709
        %v2142 = vunpack.c.h.b16 %v709
        %v2143 = vunpack.c.l.b16 %v710
        %v2144 = vunpack.c.h.b16 %v710
        %v2145 = vunpack.c.l.b16 %v711
        %v2146 = vunpack.c.h.b16 %v711
        %v2147 = vunpack.c.l.b16 %v712
        %v2148 = vunpack.c.h.b16 %v712
        %v2149 = vunpack.c.l.b16 %v713
        %v2150 = vunpack.c.h.b16 %v713
        %v2151 = vunpack.c.l.b16 %v714
        %v2152 = vunpack.c.h.b16 %v714
        %v2153 = vunpack.c.l.b16 %v715
        %v2154 = vunpack.c.h.b16 %v715
        %v2155 = vunpack.c.l.b16 %v716
        %v2156 = vunpack.c.h.b16 %v716
        %v2157 = vunpack.c.l.b16 %v717
        %v2158 = vunpack.c.h.b16 %v717
        %v2159 = vunpack.c.l.b16 %v718
        %v2160 = vunpack.c.h.b16 %v718
        %v2161 = vunpack.c.l.b16 %v719
        %v2162 = vunpack.c.h.b16 %v719
        %v2163 = vunpack.c.l.b16 %v720
        %v2164 = vunpack.c.h.b16 %v720
        %v2165 = vunpack.c.l.b16 %v721
        %v2166 = vunpack.c.h.b16 %v721
        %v2167 = vunpack.c.l.b16 %v722
        %v2168 = vunpack.c.h.b16 %v722
        %v2169 = vunpack.c.l.b16 %v723
        %v2170 = vunpack.c.h.b16 %v723
        %v2171 = vunpack.c.l.b16 %v724
        %v2172 = vunpack.c.h.b16 %v724
        %v2173 = vunpack.c.l.b16 %v725
        %v2174 = vunpack.c.h.b16 %v725
        %v2175 = vunpack.c.l.b16 %v726
        %v2176 = vunpack.c.h.b16 %v726
        %v2177 = vunpack.c.l.b16 %v727
        %v2178 = vunpack.c.h.b16 %v727
        %v2179 = vunpack.c.l.b16 %v728
        %v2180 = vunpack.c.h.b16 %v728
        %v2181 = vunpack.c.l.b16 %v729
        %v2182 = vunpack.c.h.b16 %v729
        %v2183 = vunpack.c.l.b16 %v730
        %v2184 = vunpack.c.h.b16 %v730
        %v2185 = vunpack.c.l.b16 %v731
        %v2186 = vunpack.c.h.b16 %v731
        %v2187 = vunpack.c.l.b16 %v732
        %v2188 = vunpack.c.h.b16 %v732
        %v2189 = vunpack.c.l.b16 %v733
        %v2190 = vunpack.c.h.b16 %v733
        %v2191 = vunpack.c.l.b16 %v734
        %v2192 = vunpack.c.h.b16 %v734
        %v2193 = vunpack.c.l.b16 %v735
        %v2194 = vunpack.c.h.b16 %v735
        %v2195 = vunpack.c.l.b16 %v736
        %v2196 = vunpack.c.h.b16 %v736
        %v2197 = vunpack.c.l.b16 %v737
        %v2198 = vunpack.c.h.b16 %v737
        %v2199 = vunpack.c.l.b16 %v738
        %v2200 = vunpack.c.h.b16 %v738
        %v2201 = vunpack.c.l.b16 %v739
        %v2202 = vunpack.c.h.b16 %v739
        %v2203 = vunpack.c.l.b16 %v740
        %v2204 = vunpack.c.h.b16 %v740
        %v2205 = vunpack.c.l.b16 %v741
        %v2206 = vunpack.c.h.b16 %v741
        %v2207 = vunpack.c.l.b16 %v742
        %v2208 = vunpack.c.h.b16 %v742
        %v2209 = vunpack.c.l.b16 %v743
        %v2210 = vunpack.c.h.b16 %v743
        %v2211 = vunpack.c.l.b16 %v744
        %v2212 = vunpack.c.h.b16 %v744
        %v2213 = vunpack.c.l.b16 %v745
        %v2214 = vunpack.c.h.b16 %v745
        %v2215 = vunpack.c.l.b16 %v746
        %v2216 = vunpack.c.h.b16 %v746
        %v2217 = vunpack.c.l.b16 %v747
        %v2218 = vunpack.c.h.b16 %v747
        %v2219 = vunpack.c.l.b16 %v748
        %v2220 = vunpack.c.h.b16 %v748
        %v2221 = vunpack.c.l.b16 %v749
        %v2222 = vunpack.c.h.b16 %v749
        %v2223 = vunpack.c.l.b16 %v750
        %v2224 = vunpack.c.h.b16 %v750
        %v2225 = vunpack.c.l.b16 %v751
        %v2226 = vunpack.c.h.b16 %v751
        %v2227 = vunpack.c.l.b16 %v752
        %v2228 = vunpack.c.h.b16 %v752
        %v2229 = vunpack.c.l.b16 %v753
        %v2230 = vunpack.c.h.b16 %v753
        %v2231 = vunpack.c.l.b16 %v754
        %v2232 = vunpack.c.h.b16 %v754
        %v2233 = vunpack.c.l.b16 %v755
        %v2234 = vunpack.c.h.b16 %v755
        %v2235 = vunpack.c.l.b16 %v756
        %v2236 = vunpack.c.h.b16 %v756
        %v2237 = vunpack.c.l.b16 %v757
        %v2238 = vunpack.c.h.b16 %v757
        %v2239 = vunpack.c.l.b16 %v758
        %v2240 = vunpack.c.h.b16 %v758
        %v2241 = vunpack.c.l.b16 %v759
        %v2242 = vunpack.c.h.b16 %v759
        %v2243 = vunpack.c.l.b16 %v760
        %v2244 = vunpack.c.h.b16 %v760
        %v2245 = vunpack.c.l.b16 %v761
        %v2246 = vunpack.c.h.b16 %v761
        %v2247 = vunpack.c.l.b16 %v762
        %v2248 = vunpack.c.h.b16 %v762
        %v2249 = vunpack.c.l.b16 %v763
        %v2250 = vunpack.c.h.b16 %v763
        %v2251 = vunpack.c.l.b16 %v764
        %v2252 = vunpack.c.h.b16 %v764
        %v2253 = vunpack.c.l.b16 %v765
        %v2254 = vunpack.c.h.b16 %v765
        %v2255 = vunpack.c.l.b16 %v766
        %v2256 = vunpack.c.h.b16 %v766
        %v2257 = vunpack.c.l.b16 %v767
        %v2258 = vunpack.c.h.b16 %v767
        %v2259 = vunpack.c.l.b16 %v768
        %v2260 = vunpack.c.h.b16 %v768
        %v2261 = vunpack.c.l.b16 %v769
        %v2262 = vunpack.c.h.b16 %v769
        %v2263 = vunpack.c.l.b16 %v770
        %v2264 = vunpack.c.h.b16 %v770
        %v2265 = vunpack.c.l.b16 %v771
        %v2266 = vunpack.c.h.b16 %v771
        %v2267 = vunpack.c.l.b16 %v772
        %v2268 = vunpack.c.h.b16 %v772
        %v2269 = vunpack.c.l.b16 %v773
        %v2270 = vunpack.c.h.b16 %v773
        %v2271 = vunpack.c.l.b16 %v774
        %v2272 = vunpack.c.h.b16 %v774
        %v2273 = vunpack.c.l.b16 %v775
        %v2274 = vunpack.c.h.b16 %v775
        %v2275 = vunpack.c.l.b16 %v776
        %v2276 = vunpack.c.h.b16 %v776
        %v2277 = vunpack.c.l.b16 %v777
        %v2278 = vunpack.c.h.b16 %v777
        %v2279 = vunpack.c.l.b16 %v778
        %v2280 = vunpack.c.h.b16 %v778
        %v2281 = vunpack.c.l.b16 %v779
        %v2282 = vunpack.c.h.b16 %v779
        %v2283 = vunpack.c.l.b16 %v780
        %v2284 = vunpack.c.h.b16 %v780
        %v2285 = vunpack.c.l.b16 %v781
        %v2286 = vunpack.c.h.b16 %v781
        %v2287 = vunpack.c.l.b16 %v782
        %v2288 = vunpack.c.h.b16 %v782
        %v2289 = vunpack.c.l.b16 %v783
        %v2290 = vunpack.c.h.b16 %v783
        %v2291 = vunpack.c.l.b16 %v784
        %v2292 = vunpack.c.h.b16 %v784
        %v2293 = vunpack.c.l.b16 %v785
        %v2294 = vunpack.c.h.b16 %v785
        %v2295 = vunpack.c.l.b16 %v786
        %v2296 = vunpack.c.h.b16 %v786
        %v2297 = vunpack.c.l.b16 %v787
        %v2298 = vunpack.c.h.b16 %v787
        %v2299 = vunpack.c.l.b16 %v788
        %v2300 = vunpack.c.h.b16 %v788
        %v2301 = vunpack.c.l.b16 %v789
        %v2302 = vunpack.c.h.b16 %v789
        %v2303 = vunpack.c.l.b16 %v790
        %v2304 = vunpack.c.h.b16 %v790
        %v2305 = vunpack.c.l.b16 %v791
        %v2306 = vunpack.c.h.b16 %v791
        %v2307 = vunpack.c.l.b16 %v792
        %v2308 = vunpack.c.h.b16 %v792
        %v2309 = vunpack.c.l.b16 %v793
        %v2310 = vunpack.c.h.b16 %v793
        %v2311 = vunpack.c.l.b16 %v794
        %v2312 = vunpack.c.h.b16 %v794
        %v2313 = vunpack.c.l.b16 %v795
        %v2314 = vunpack.c.h.b16 %v795
        %v2315 = vunpack.c.l.b16 %v796
        %v2316 = vunpack.c.h.b16 %v796
        %v2317 = vunpack.c.l.b16 %v797
        %v2318 = vunpack.c.h.b16 %v797
        %v2319 = vunpack.c.l.b16 %v798
        %v2320 = vunpack.c.h.b16 %v798
        %v2321 = vunpack.c.l.b16 %v799
        %v2322 = vunpack.c.h.b16 %v799
        %v2323 = vunpack.c.l.b16 %v800
        %v2324 = vunpack.c.h.b16 %v800
        %v2325 = vunpack.c.l.b16 %v801
        %v2326 = vunpack.c.h.b16 %v801
        %v2327 = vunpack.c.l.b16 %v802
        %v2328 = vunpack.c.h.b16 %v802
        %v2329 = vunpack.c.l.b16 %v803
        %v2330 = vunpack.c.h.b16 %v803
        %v2331 = vunpack.c.l.b16 %v804
        %v2332 = vunpack.c.h.b16 %v804
        %v2333 = vunpack.c.l.b16 %v805
        %v2334 = vunpack.c.h.b16 %v805
        %v2335 = vunpack.c.l.b16 %v806
        %v2336 = vunpack.c.h.b16 %v806
        %v2337 = vunpack.c.l.b16 %v807
        %v2338 = vunpack.c.h.b16 %v807
        %v2339 = vunpack.c.l.b16 %v808
        %v2340 = vunpack.c.h.b16 %v808
        %v2341 = vunpack.c.l.b16 %v809
        %v2342 = vunpack.c.h.b16 %v809
        %v2343 = vunpack.c.l.b16 %v810
        %v2344 = vunpack.c.h.b16 %v810
        %v2345 = vunpack.c.l.b16 %v811
        %v2346 = vunpack.c.h.b16 %v811
        %v2347 = vunpack.c.l.b16 %v812
        %v2348 = vunpack.c.h.b16 %v812
        %v2349 = vpack.c.b16 %v1333, %v1325
        %v2350 = vpack.c.b16 %v1334, %v1326
        %v2351 = vpack.c.b16 %v1335, %v1327
        %v2352 = vpack.c.b16 %v1336, %v1328
        %v2353 = vpack.c.b16 %v1337, %v1329
        %v2354 = vpack.c.b16 %v1338, %v1330
        %v2355 = vpack.c.b16 %v1339, %v1331
        %v2356 = vpack.c.b16 %v1340, %v1332
        %v2357 = vpack.c.b16 %v1349, %v1341
        %v2358 = vpack.c.b16 %v1350, %v1342
        %v2359 = vpack.c.b16 %v1351, %v1343
        %v2360 = vpack.c.b16 %v1352, %v1344
        %v2361 = vpack.c.b16 %v1353, %v1345
        %v2362 = vpack.c.b16 %v1354, %v1346
        %v2363 = vpack.c.b16 %v1355, %v1347
        %v2364 = vpack.c.b16 %v1356, %v1348
        %v2365 = vpack.c.b16 %v1365, %v1357
        %v2366 = vpack.c.b16 %v1366, %v1358
        %v2367 = vpack.c.b16 %v1367, %v1359
        %v2368 = vpack.c.b16 %v1368, %v1360
        %v2369 = vpack.c.b16 %v1369, %v1361
        %v2370 = vpack.c.b16 %v1370, %v1362
        %v2371 = vpack.c.b16 %v1371, %v1363
        %v2372 = vpack.c.b16 %v1372, %v1364
        %v2373 = vpack.c.b16 %v1381, %v1373
        %v2374 = vpack.c.b16 %v1382, %v1374
        %v2375 = vpack.c.b16 %v1383, %v1375
        %v2376 = vpack.c.b16 %v1384, %v1376
        %v2377 = vpack.c.b16 %v1385, %v1377
        %v2378 = vpack.c.b16 %v1386, %v1378
        %v2379 = vpack.c.b16 %v1387, %v1379
        %v2380 = vpack.c.b16 %v1388, %v1380
        %v2381 = vpack.c.b16 %v1397, %v1389
        %v2382 = vpack.c.b16 %v1398, %v1390
        %v2383 = vpack.c.b16 %v1399, %v1391
        %v2384 = vpack.c.b16 %v1400, %v1392
        %v2385 = vpack.c.b16 %v1401, %v1393
        %v2386 = vpack.c.b16 %v1402, %v1394
        %v2387 = vpack.c.b16 %v1403, %v1395
        %v2388 = vpack.c.b16 %v1404, %v1396
        %v2389 = vpack.c.b16 %v1413, %v1405
        %v2390 = vpack.c.b16 %v1414, %v1406
        %v2391 = vpack.c.b16 %v1415, %v1407
        %v2392 = vpack.c.b16 %v1416, %v1408
        %v2393 = vpack.c.b16 %v1417, %v1409
        %v2394 = vpack.c.b16 %v1418, %v1410
        %v2395 = vpack.c.b16 %v1419, %v1411
        %v2396 = vpack.c.b16 %v1420, %v1412
        %v2397 = vpack.c.b16 %v1429, %v1421
        %v2398 = vpack.c.b16 %v1430, %v1422
        %v2399 = vpack.c.b16 %v1431, %v1423
        %v2400 = vpack.c.b16 %v1432, %v1424
        %v2401 = vpack.c.b16 %v1433, %v1425
        %v2402 = vpack.c.b16 %v1434, %v1426
        %v2403 = vpack.c.b16 %v1435, %v1427
        %v2404 = vpack.c.b16 %v1436, %v1428
        %v2405 = vpack.c.b16 %v1445, %v1437
        %v2406 = vpack.c.b16 %v1446, %v1438
        %v2407 = vpack.c.b16 %v1447, %v1439
        %v2408 = vpack.c.b16 %v1448, %v1440
        %v2409 = vpack.c.b16 %v1449, %v1441
        %v2410 = vpack.c.b16 %v1450, %v1442
        %v2411 = vpack.c.b16 %v1451, %v1443
        %v2412 = vpack.c.b16 %v1452, %v1444
        %v2413 = vpack.c.b16 %v1461, %v1453
        %v2414 = vpack.c.b16 %v1462, %v1454
        %v2415 = vpack.c.b16 %v1463, %v1455
        %v2416 = vpack.c.b16 %v1464, %v1456
        %v2417 = vpack.c.b16 %v1465, %v1457
        %v2418 = vpack.c.b16 %v1466, %v1458
        %v2419 = vpack.c.b16 %v1467, %v1459
        %v2420 = vpack.c.b16 %v1468, %v1460
        %v2421 = vpack.c.b16 %v1477, %v1469
        %v2422 = vpack.c.b16 %v1478, %v1470
        %v2423 = vpack.c.b16 %v1479, %v1471
        %v2424 = vpack.c.b16 %v1480, %v1472
        %v2425 = vpack.c.b16 %v1481, %v1473
        %v2426 = vpack.c.b16 %v1482, %v1474
        %v2427 = vpack.c.b16 %v1483, %v1475
        %v2428 = vpack.c.b16 %v1484, %v1476
        %v2429 = vpack.c.b16 %v1493, %v1485
        %v2430 = vpack.c.b16 %v1494, %v1486
        %v2431 = vpack.c.b16 %v1495, %v1487
        %v2432 = vpack.c.b16 %v1496, %v1488
        %v2433 = vpack.c.b16 %v1497, %v1489
        %v2434 = vpack.c.b16 %v1498, %v1490
        %v2435 = vpack.c.b16 %v1499, %v1491
        %v2436 = vpack.c.b16 %v1500, %v1492
        %v2437 = vpack.c.b16 %v1509, %v1501
        %v2438 = vpack.c.b16 %v1510, %v1502
        %v2439 = vpack.c.b16 %v1511, %v1503
        %v2440 = vpack.c.b16 %v1512, %v1504
        %v2441 = vpack.c.b16 %v1513, %v1505
        %v2442 = vpack.c.b16 %v1514, %v1506
        %v2443 = vpack.c.b16 %v1515, %v1507
        %v2444 = vpack.c.b16 %v1516, %v1508
        %v2445 = vpack.c.b16 %v1525, %v1517
        %v2446 = vpack.c.b16 %v1526, %v1518
        %v2447 = vpack.c.b16 %v1527, %v1519
        %v2448 = vpack.c.b16 %v1528, %v1520
        %v2449 = vpack.c.b16 %v1529, %v1521
        %v2450 = vpack.c.b16 %v1530, %v1522
        %v2451 = vpack.c.b16 %v1531, %v1523
        %v2452 = vpack.c.b16 %v1532, %v1524
        %v2453 = vpack.c.b16 %v1541, %v1533
        %v2454 = vpack.c.b16 %v1542, %v1534
        %v2455 = vpack.c.b16 %v1543, %v1535
        %v2456 = vpack.c.b16 %v1544, %v1536
        %v2457 = vpack.c.b16 %v1545, %v1537
        %v2458 = vpack.c.b16 %v1546, %v1538
        %v2459 = vpack.c.b16 %v1547, %v1539
        %v2460 = vpack.c.b16 %v1548, %v1540
        %v2461 = vpack.c.b16 %v1557, %v1549
        %v2462 = vpack.c.b16 %v1558, %v1550
        %v2463 = vpack.c.b16 %v1559, %v1551
        %v2464 = vpack.c.b16 %v1560, %v1552
        %v2465 = vpack.c.b16 %v1561, %v1553
        %v2466 = vpack.c.b16 %v1562, %v1554
        %v2467 = vpack.c.b16 %v1563, %v1555
        %v2468 = vpack.c.b16 %v1564, %v1556
        %v2469 = vpack.c.b16 %v1573, %v1565
        %v2470 = vpack.c.b16 %v1574, %v1566
        %v2471 = vpack.c.b16 %v1575, %v1567
        %v2472 = vpack.c.b16 %v1576, %v1568
        %v2473 = vpack.c.b16 %v1577, %v1569
        %v2474 = vpack.c.b16 %v1578, %v1570
        %v2475 = vpack.c.b16 %v1579, %v1571
        %v2476 = vpack.c.b16 %v1580, %v1572
        %v2477 = vpack.c.b16 %v1589, %v1581
        %v2478 = vpack.c.b16 %v1590, %v1582
        %v2479 = vpack.c.b16 %v1591, %v1583
        %v2480 = vpack.c.b16 %v1592, %v1584
        %v2481 = vpack.c.b16 %v1593, %v1585
        %v2482 = vpack.c.b16 %v1594, %v1586
        %v2483 = vpack.c.b16 %v1595, %v1587
        %v2484 = vpack.c.b16 %v1596, %v1588
        %v2485 = vpack.c.b16 %v1605, %v1597
        %v2486 = vpack.c.b16 %v1606, %v1598
        %v2487 = vpack.c.b16 %v1607, %v1599
        %v2488 = vpack.c.b16 %v1608, %v1600
        %v2489 = vpack.c.b16 %v1609, %v1601
        %v2490 = vpack.c.b16 %v1610, %v1602
        %v2491 = vpack.c.b16 %v1611, %v1603
        %v2492 = vpack.c.b16 %v1612, %v1604
        %v2493 = vpack.c.b16 %v1621, %v1613
        %v2494 = vpack.c.b16 %v1622, %v1614
        %v2495 = vpack.c.b16 %v1623, %v1615
        %v2496 = vpack.c.b16 %v1624, %v1616
        %v2497 = vpack.c.b16 %v1625, %v1617
        %v2498 = vpack.c.b16 %v1626, %v1618
        %v2499 = vpack.c.b16 %v1627, %v1619
        %v2500 = vpack.c.b16 %v1628, %v1620
        %v2501 = vpack.c.b16 %v1637, %v1629
        %v2502 = vpack.c.b16 %v1638, %v1630
        %v2503 = vpack.c.b16 %v1639, %v1631
        %v2504 = vpack.c.b16 %v1640, %v1632
        %v2505 = vpack.c.b16 %v1641, %v1633
        %v2506 = vpack.c.b16 %v1642, %v1634
        %v2507 = vpack.c.b16 %v1643, %v1635
        %v2508 = vpack.c.b16 %v1644, %v1636
        %v2509 = vpack.c.b16 %v1653, %v1645
        %v2510 = vpack.c.b16 %v1654, %v1646
        %v2511 = vpack.c.b16 %v1655, %v1647
        %v2512 = vpack.c.b16 %v1656, %v1648
        %v2513 = vpack.c.b16 %v1657, %v1649
        %v2514 = vpack.c.b16 %v1658, %v1650
        %v2515 = vpack.c.b16 %v1659, %v1651
        %v2516 = vpack.c.b16 %v1660, %v1652
        %v2517 = vpack.c.b16 %v1669, %v1661
        %v2518 = vpack.c.b16 %v1670, %v1662
        %v2519 = vpack.c.b16 %v1671, %v1663
        %v2520 = vpack.c.b16 %v1672, %v1664
        %v2521 = vpack.c.b16 %v1673, %v1665
        %v2522 = vpack.c.b16 %v1674, %v1666
        %v2523 = vpack.c.b16 %v1675, %v1667
        %v2524 = vpack.c.b16 %v1676, %v1668
        %v2525 = vpack.c.b16 %v1685, %v1677
        %v2526 = vpack.c.b16 %v1686, %v1678
        %v2527 = vpack.c.b16 %v1687, %v1679
        %v2528 = vpack.c.b16 %v1688, %v1680
        %v2529 = vpack.c.b16 %v1689, %v1681
        %v2530 = vpack.c.b16 %v1690, %v1682
        %v2531 = vpack.c.b16 %v1691, %v1683
        %v2532 = vpack.c.b16 %v1692, %v1684
        %v2533 = vpack.c.b16 %v1701, %v1693
        %v2534 = vpack.c.b16 %v1702, %v1694
        %v2535 = vpack.c.b16 %v1703, %v1695
        %v2536 = vpack.c.b16 %v1704, %v1696
        %v2537 = vpack.c.b16 %v1705, %v1697
        %v2538 = vpack.c.b16 %v1706, %v1698
        %v2539 = vpack.c.b16 %v1707, %v1699
        %v2540 = vpack.c.b16 %v1708, %v1700
        %v2541 = vpack.c.b16 %v1717, %v1709
        %v2542 = vpack.c.b16 %v1718, %v1710
        %v2543 = vpack.c.b16 %v1719, %v1711
        %v2544 = vpack.c.b16 %v1720, %v1712
        %v2545 = vpack.c.b16 %v1721, %v1713
        %v2546 = vpack.c.b16 %v1722, %v1714
        %v2547 = vpack.c.b16 %v1723, %v1715
        %v2548 = vpack.c.b16 %v1724, %v1716
        %v2549 = vpack.c.b16 %v1733, %v1725
        %v2550 = vpack.c.b16 %v1734, %v1726
        %v2551 = vpack.c.b16 %v1735, %v1727
        %v2552 = vpack.c.b16 %v1736, %v1728
        %v2553 = vpack.c.b16 %v1737, %v1729
        %v2554 = vpack.c.b16 %v1738, %v1730
        %v2555 = vpack.c.b16 %v1739, %v1731
        %v2556 = vpack.c.b16 %v1740, %v1732
        %v2557 = vpack.c.b16 %v1749, %v1741
        %v2558 = vpack.c.b16 %v1750, %v1742
        %v2559 = vpack.c.b16 %v1751, %v1743
        %v2560 = vpack.c.b16 %v1752, %v1744
        %v2561 = vpack.c.b16 %v1753, %v1745
        %v2562 = vpack.c.b16 %v1754, %v1746
        %v2563 = vpack.c.b16 %v1755, %v1747
        %v2564 = vpack.c.b16 %v1756, %v1748
        %v2565 = vpack.c.b16 %v1765, %v1757
        %v2566 = vpack.c.b16 %v1766, %v1758
        %v2567 = vpack.c.b16 %v1767, %v1759
        %v2568 = vpack.c.b16 %v1768, %v1760
        %v2569 = vpack.c.b16 %v1769, %v1761
        %v2570 = vpack.c.b16 %v1770, %v1762
        %v2571 = vpack.c.b16 %v1771, %v1763
        %v2572 = vpack.c.b16 %v1772, %v1764
        %v2573 = vpack.c.b16 %v1781, %v1773
        %v2574 = vpack.c.b16 %v1782, %v1774
        %v2575 = vpack.c.b16 %v1783, %v1775
        %v2576 = vpack.c.b16 %v1784, %v1776
        %v2577 = vpack.c.b16 %v1785, %v1777
        %v2578 = vpack.c.b16 %v1786, %v1778
        %v2579 = vpack.c.b16 %v1787, %v1779
        %v2580 = vpack.c.b16 %v1788, %v1780
        %v2581 = vpack.c.b16 %v1797, %v1789
        %v2582 = vpack.c.b16 %v1798, %v1790
        %v2583 = vpack.c.b16 %v1799, %v1791
        %v2584 = vpack.c.b16 %v1800, %v1792
        %v2585 = vpack.c.b16 %v1801, %v1793
        %v2586 = vpack.c.b16 %v1802, %v1794
        %v2587 = vpack.c.b16 %v1803, %v1795
        %v2588 = vpack.c.b16 %v1804, %v1796
        %v2589 = vpack.c.b16 %v1813, %v1805
        %v2590 = vpack.c.b16 %v1814, %v1806
        %v2591 = vpack.c.b16 %v1815, %v1807
        %v2592 = vpack.c.b16 %v1816, %v1808
        %v2593 = vpack.c.b16 %v1817, %v1809
        %v2594 = vpack.c.b16 %v1818, %v1810
        %v2595 = vpack.c.b16 %v1819, %v1811
        %v2596 = vpack.c.b16 %v1820, %v1812
        %v2597 = vpack.c.b16 %v1829, %v1821
        %v2598 = vpack.c.b16 %v1830, %v1822
        %v2599 = vpack.c.b16 %v1831, %v1823
        %v2600 = vpack.c.b16 %v1832, %v1824
        %v2601 = vpack.c.b16 %v1833, %v1825
        %v2602 = vpack.c.b16 %v1834, %v1826
        %v2603 = vpack.c.b16 %v1835, %v1827
        %v2604 = vpack.c.b16 %v1836, %v1828
        %v2605 = vpack.c.b16 %v1845, %v1837
        %v2606 = vpack.c.b16 %v1846, %v1838
        %v2607 = vpack.c.b16 %v1847, %v1839
        %v2608 = vpack.c.b16 %v1848, %v1840
        %v2609 = vpack.c.b16 %v1849, %v1841
        %v2610 = vpack.c.b16 %v1850, %v1842
        %v2611 = vpack.c.b16 %v1851, %v1843
        %v2612 = vpack.c.b16 %v1852, %v1844
        %v2613 = vpack.c.b16 %v1861, %v1853
        %v2614 = vpack.c.b16 %v1862, %v1854
        %v2615 = vpack.c.b16 %v1863, %v1855
        %v2616 = vpack.c.b16 %v1864, %v1856
        %v2617 = vpack.c.b16 %v1865, %v1857
        %v2618 = vpack.c.b16 %v1866, %v1858
        %v2619 = vpack.c.b16 %v1867, %v1859
        %v2620 = vpack.c.b16 %v1868, %v1860
        %v2621 = vpack.c.b16 %v1877, %v1869
        %v2622 = vpack.c.b16 %v1878, %v1870
        %v2623 = vpack.c.b16 %v1879, %v1871
        %v2624 = vpack.c.b16 %v1880, %v1872
        %v2625 = vpack.c.b16 %v1881, %v1873
        %v2626 = vpack.c.b16 %v1882, %v1874
        %v2627 = vpack.c.b16 %v1883, %v1875
        %v2628 = vpack.c.b16 %v1884, %v1876
        %v2629 = vpack.c.b16 %v1893, %v1885
        %v2630 = vpack.c.b16 %v1894, %v1886
        %v2631 = vpack.c.b16 %v1895, %v1887
        %v2632 = vpack.c.b16 %v1896, %v1888
        %v2633 = vpack.c.b16 %v1897, %v1889
        %v2634 = vpack.c.b16 %v1898, %v1890
        %v2635 = vpack.c.b16 %v1899, %v1891
        %v2636 = vpack.c.b16 %v1900, %v1892
        %v2637 = vpack.c.b16 %v1909, %v1901
        %v2638 = vpack.c.b16 %v1910, %v1902
        %v2639 = vpack.c.b16 %v1911, %v1903
        %v2640 = vpack.c.b16 %v1912, %v1904
        %v2641 = vpack.c.b16 %v1913, %v1905
        %v2642 = vpack.c.b16 %v1914, %v1906
        %v2643 = vpack.c.b16 %v1915, %v1907
        %v2644 = vpack.c.b16 %v1916, %v1908
        %v2645 = vpack.c.b16 %v1925, %v1917
        %v2646 = vpack.c.b16 %v1926, %v1918
        %v2647 = vpack.c.b16 %v1927, %v1919
        %v2648 = vpack.c.b16 %v1928, %v1920
        %v2649 = vpack.c.b16 %v1929, %v1921
        %v2650 = vpack.c.b16 %v1930, %v1922
        %v2651 = vpack.c.b16 %v1931, %v1923
        %v2652 = vpack.c.b16 %v1932, %v1924
        %v2653 = vpack.c.b16 %v1941, %v1933
        %v2654 = vpack.c.b16 %v1942, %v1934
        %v2655 = vpack.c.b16 %v1943, %v1935
        %v2656 = vpack.c.b16 %v1944, %v1936
        %v2657 = vpack.c.b16 %v1945, %v1937
        %v2658 = vpack.c.b16 %v1946, %v1938
        %v2659 = vpack.c.b16 %v1947, %v1939
        %v2660 = vpack.c.b16 %v1948, %v1940
        %v2661 = vpack.c.b16 %v1957, %v1949
        %v2662 = vpack.c.b16 %v1958, %v1950
        %v2663 = vpack.c.b16 %v1959, %v1951
        %v2664 = vpack.c.b16 %v1960, %v1952
        %v2665 = vpack.c.b16 %v1961, %v1953
        %v2666 = vpack.c.b16 %v1962, %v1954
        %v2667 = vpack.c.b16 %v1963, %v1955
        %v2668 = vpack.c.b16 %v1964, %v1956
        %v2669 = vpack.c.b16 %v1973, %v1965
        %v2670 = vpack.c.b16 %v1974, %v1966
        %v2671 = vpack.c.b16 %v1975, %v1967
        %v2672 = vpack.c.b16 %v1976, %v1968
        %v2673 = vpack.c.b16 %v1977, %v1969
        %v2674 = vpack.c.b16 %v1978, %v1970
        %v2675 = vpack.c.b16 %v1979, %v1971
        %v2676 = vpack.c.b16 %v1980, %v1972
        %v2677 = vpack.c.b16 %v1989, %v1981
        %v2678 = vpack.c.b16 %v1990, %v1982
        %v2679 = vpack.c.b16 %v1991, %v1983
        %v2680 = vpack.c.b16 %v1992, %v1984
        %v2681 = vpack.c.b16 %v1993, %v1985
        %v2682 = vpack.c.b16 %v1994, %v1986
        %v2683 = vpack.c.b16 %v1995, %v1987
        %v2684 = vpack.c.b16 %v1996, %v1988
        %v2685 = vpack.c.b16 %v2005, %v1997
        %v2686 = vpack.c.b16 %v2006, %v1998
        %v2687 = vpack.c.b16 %v2007, %v1999
        %v2688 = vpack.c.b16 %v2008, %v2000
        %v2689 = vpack.c.b16 %v2009, %v2001
        %v2690 = vpack.c.b16 %v2010, %v2002
        %v2691 = vpack.c.b16 %v2011, %v2003
        %v2692 = vpack.c.b16 %v2012, %v2004
        %v2693 = vpack.c.b16 %v2021, %v2013
        %v2694 = vpack.c.b16 %v2022, %v2014
        %v2695 = vpack.c.b16 %v2023, %v2015
        %v2696 = vpack.c.b16 %v2024, %v2016
        %v2697 = vpack.c.b16 %v2025, %v2017
        %v2698 = vpack.c.b16 %v2026, %v2018
        %v2699 = vpack.c.b16 %v2027, %v2019
        %v2700 = vpack.c.b16 %v2028, %v2020
        %v2701 = vpack.c.b16 %v2037, %v2029
        %v2702 = vpack.c.b16 %v2038, %v2030
        %v2703 = vpack.c.b16 %v2039, %v2031
        %v2704 = vpack.c.b16 %v2040, %v2032
        %v2705 = vpack.c.b16 %v2041, %v2033
        %v2706 = vpack.c.b16 %v2042, %v2034
        %v2707 = vpack.c.b16 %v2043, %v2035
        %v2708 = vpack.c.b16 %v2044, %v2036
        %v2709 = vpack.c.b16 %v2053, %v2045
        %v2710 = vpack.c.b16 %v2054, %v2046
        %v2711 = vpack.c.b16 %v2055, %v2047
        %v2712 = vpack.c.b16 %v2056, %v2048
        %v2713 = vpack.c.b16 %v2057, %v2049
        %v2714 = vpack.c.b16 %v2058, %v2050
        %v2715 = vpack.c.b16 %v2059, %v2051
        %v2716 = vpack.c.b16 %v2060, %v2052
        %v2717 = vpack.c.b16 %v2069, %v2061
        %v2718 = vpack.c.b16 %v2070, %v2062
        %v2719 = vpack.c.b16 %v2071, %v2063
        %v2720 = vpack.c.b16 %v2072, %v2064
        %v2721 = vpack.c.b16 %v2073, %v2065
        %v2722 = vpack.c.b16 %v2074, %v2066
        %v2723 = vpack.c.b16 %v2075, %v2067
        %v2724 = vpack.c.b16 %v2076, %v2068
        %v2725 = vpack.c.b16 %v2085, %v2077
        %v2726 = vpack.c.b16 %v2086, %v2078
        %v2727 = vpack.c.b16 %v2087, %v2079
        %v2728 = vpack.c.b16 %v2088, %v2080
        %v2729 = vpack.c.b16 %v2089, %v2081
        %v2730 = vpack.c.b16 %v2090, %v2082
        %v2731 = vpack.c.b16 %v2091, %v2083
        %v2732 = vpack.c.b16 %v2092, %v2084
        %v2733 = vpack.c.b16 %v2101, %v2093
        %v2734 = vpack.c.b16 %v2102, %v2094
        %v2735 = vpack.c.b16 %v2103, %v2095
        %v2736 = vpack.c.b16 %v2104, %v2096
        %v2737 = vpack.c.b16 %v2105, %v2097
        %v2738 = vpack.c.b16 %v2106, %v2098
        %v2739 = vpack.c.b16 %v2107, %v2099
        %v2740 = vpack.c.b16 %v2108, %v2100
        %v2741 = vpack.c.b16 %v2117, %v2109
        %v2742 = vpack.c.b16 %v2118, %v2110
        %v2743 = vpack.c.b16 %v2119, %v2111
        %v2744 = vpack.c.b16 %v2120, %v2112
        %v2745 = vpack.c.b16 %v2121, %v2113
        %v2746 = vpack.c.b16 %v2122, %v2114
        %v2747 = vpack.c.b16 %v2123, %v2115
        %v2748 = vpack.c.b16 %v2124, %v2116
        %v2749 = vpack.c.b16 %v2133, %v2125
        %v2750 = vpack.c.b16 %v2134, %v2126
        %v2751 = vpack.c.b16 %v2135, %v2127
        %v2752 = vpack.c.b16 %v2136, %v2128
        %v2753 = vpack.c.b16 %v2137, %v2129
        %v2754 = vpack.c.b16 %v2138, %v2130
        %v2755 = vpack.c.b16 %v2139, %v2131
        %v2756 = vpack.c.b16 %v2140, %v2132
        %v2757 = vpack.c.b16 %v2149, %v2141
        %v2758 = vpack.c.b16 %v2150, %v2142
        %v2759 = vpack.c.b16 %v2151, %v2143
        %v2760 = vpack.c.b16 %v2152, %v2144
        %v2761 = vpack.c.b16 %v2153, %v2145
        %v2762 = vpack.c.b16 %v2154, %v2146
        %v2763 = vpack.c.b16 %v2155, %v2147
        %v2764 = vpack.c.b16 %v2156, %v2148
        %v2765 = vpack.c.b16 %v2165, %v2157
        %v2766 = vpack.c.b16 %v2166, %v2158
        %v2767 = vpack.c.b16 %v2167, %v2159
        %v2768 = vpack.c.b16 %v2168, %v2160
        %v2769 = vpack.c.b16 %v2169, %v2161
        %v2770 = vpack.c.b16 %v2170, %v2162
        %v2771 = vpack.c.b16 %v2171, %v2163
        %v2772 = vpack.c.b16 %v2172, %v2164
        %v2773 = vpack.c.b16 %v2181, %v2173
        %v2774 = vpack.c.b16 %v2182, %v2174
        %v2775 = vpack.c.b16 %v2183, %v2175
        %v2776 = vpack.c.b16 %v2184, %v2176
        %v2777 = vpack.c.b16 %v2185, %v2177
        %v2778 = vpack.c.b16 %v2186, %v2178
        %v2779 = vpack.c.b16 %v2187, %v2179
        %v2780 = vpack.c.b16 %v2188, %v2180
        %v2781 = vpack.c.b16 %v2197, %v2189
        %v2782 = vpack.c.b16 %v2198, %v2190
        %v2783 = vpack.c.b16 %v2199, %v2191
        %v2784 = vpack.c.b16 %v2200, %v2192
        %v2785 = vpack.c.b16 %v2201, %v2193
        %v2786 = vpack.c.b16 %v2202, %v2194
        %v2787 = vpack.c.b16 %v2203, %v2195
        %v2788 = vpack.c.b16 %v2204, %v2196
        %v2789 = vpack.c.b16 %v2213, %v2205
        %v2790 = vpack.c.b16 %v2214, %v2206
        %v2791 = vpack.c.b16 %v2215, %v2207
        %v2792 = vpack.c.b16 %v2216, %v2208
        %v2793 = vpack.c.b16 %v2217, %v2209
        %v2794 = vpack.c.b16 %v2218, %v2210
        %v2795 = vpack.c.b16 %v2219, %v2211
        %v2796 = vpack.c.b16 %v2220, %v2212
        %v2797 = vpack.c.b16 %v2229, %v2221
        %v2798 = vpack.c.b16 %v2230, %v2222
        %v2799 = vpack.c.b16 %v2231, %v2223
        %v2800 = vpack.c.b16 %v2232, %v2224
        %v2801 = vpack.c.b16 %v2233, %v2225
        %v2802 = vpack.c.b16 %v2234, %v2226
        %v2803 = vpack.c.b16 %v2235, %v2227
        %v2804 = vpack.c.b16 %v2236, %v2228
        %v2805 = vpack.c.b16 %v2245, %v2237
        %v2806 = vpack.c.b16 %v2246, %v2238
        %v2807 = vpack.c.b16 %v2247, %v2239
        %v2808 = vpack.c.b16 %v2248, %v2240
        %v2809 = vpack.c.b16 %v2249, %v2241
        %v2810 = vpack.c.b16 %v2250, %v2242
        %v2811 = vpack.c.b16 %v2251, %v2243
        %v2812 = vpack.c.b16 %v2252, %v2244
        %v2813 = vpack.c.b16 %v2261, %v2253
        %v2814 = vpack.c.b16 %v2262, %v2254
        %v2815 = vpack.c.b16 %v2263, %v2255
        %v2816 = vpack.c.b16 %v2264, %v2256
        %v2817 = vpack.c.b16 %v2265, %v2257
        %v2818 = vpack.c.b16 %v2266, %v2258
        %v2819 = vpack.c.b16 %v2267, %v2259
        %v2820 = vpack.c.b16 %v2268, %v2260
        %v2821 = vpack.c.b16 %v2277, %v2269
        %v2822 = vpack.c.b16 %v2278, %v2270
        %v2823 = vpack.c.b16 %v2279, %v2271
        %v2824 = vpack.c.b16 %v2280, %v2272
        %v2825 = vpack.c.b16 %v2281, %v2273
        %v2826 = vpack.c.b16 %v2282, %v2274
        %v2827 = vpack.c.b16 %v2283, %v2275
        %v2828 = vpack.c.b16 %v2284, %v2276
        %v2829 = vpack.c.b16 %v2293, %v2285
        %v2830 = vpack.c.b16 %v2294, %v2286
        %v2831 = vpack.c.b16 %v2295, %v2287
        %v2832 = vpack.c.b16 %v2296, %v2288
        %v2833 = vpack.c.b16 %v2297, %v2289
        %v2834 = vpack.c.b16 %v2298, %v2290
        %v2835 = vpack.c.b16 %v2299, %v2291
        %v2836 = vpack.c.b16 %v2300, %v2292
        %v2837 = vpack.c.b16 %v2309, %v2301
        %v2838 = vpack.c.b16 %v2310, %v2302
        %v2839 = vpack.c.b16 %v2311, %v2303
        %v2840 = vpack.c.b16 %v2312, %v2304
        %v2841 = vpack.c.b16 %v2313, %v2305
        %v2842 = vpack.c.b16 %v2314, %v2306
        %v2843 = vpack.c.b16 %v2315, %v2307
        %v2844 = vpack.c.b16 %v2316, %v2308
        %v2845 = vpack.c.b16 %v2325, %v2317
        %v2846 = vpack.c.b16 %v2326, %v2318
        %v2847 = vpack.c.b16 %v2327, %v2319
        %v2848 = vpack.c.b16 %v2328, %v2320
        %v2849 = vpack.c.b16 %v2329, %v2321
        %v2850 = vpack.c.b16 %v2330, %v2322
        %v2851 = vpack.c.b16 %v2331, %v2323
        %v2852 = vpack.c.b16 %v2332, %v2324
        %v2853 = vpack.c.b16 %v2341, %v2333
        %v2854 = vpack.c.b16 %v2342, %v2334
        %v2855 = vpack.c.b16 %v2343, %v2335
        %v2856 = vpack.c.b16 %v2344, %v2336
        %v2857 = vpack.c.b16 %v2345, %v2337
        %v2858 = vpack.c.b16 %v2346, %v2338
        %v2859 = vpack.c.b16 %v2347, %v2339
        %v2860 = vpack.c.b16 %v2348, %v2340
        %3373 = vmatprep.subr.bf16.mxu0 %v2350
        %3374 = vmatpush1.bf16.msra.mxu0 %v2349
        %3375 = vmatprep.subr.bf16.mxu0 %v2358
        %3376 = vmatpush1.bf16.msra.mxu0 %v2357
        %3377 = vmatprep.subr.bf16.mxu0 %v2366
        %3378 = vmatpush1.bf16.msra.mxu0 %v2365
        %3379 = vmatprep.subr.bf16.mxu0 %v2374
        %3380 = vmatpush1.bf16.msra.mxu0 %v2373
        %3381 = vmatprep.subr.bf16.mxu0 %v2382
        %3382 = vmatpush1.bf16.msra.mxu0 %v2381
        %3383 = vmatprep.subr.bf16.mxu0 %v2390
        %3384 = vmatpush1.bf16.msra.mxu0 %v2389
        %3385 = vmatprep.subr.bf16.mxu0 %v2398
        %3386 = vmatpush1.bf16.msra.mxu0 %v2397
        %3387 = vmatprep.subr.bf16.mxu0 %v2406
        %3388 = vmatpush1.bf16.msra.mxu0 %v2405
        %3389 = vmatprep.subr.bf16.mxu0 %v2414
        %3390 = vmatpush1.bf16.msra.mxu0 %v2413
        %3391 = vmatprep.subr.bf16.mxu0 %v2422
        %3392 = vmatpush1.bf16.msra.mxu0 %v2421
        %3393 = vmatprep.subr.bf16.mxu0 %v2430
        %3394 = vmatpush1.bf16.msra.mxu0 %v2429
        %3395 = vmatprep.subr.bf16.mxu0 %v2438
        %3396 = vmatpush1.bf16.msra.mxu0 %v2437
        %3397 = vmatprep.subr.bf16.mxu0 %v2446
        %3398 = vmatpush1.bf16.msra.mxu0 %v2445
        %3399 = vmatprep.subr.bf16.mxu0 %v2454
        %3400 = vmatpush1.bf16.msra.mxu0 %v2453
        %3401 = vmatprep.subr.bf16.mxu0 %v2462
        %3402 = vmatpush1.bf16.msra.mxu0 %v2461
        %3403 = vmatprep.subr.bf16.mxu0 %v2470
        %3404 = vmatpush1.bf16.msra.mxu0 %v2469
        %3405 = vmatprep.mubr.bf16.mxu0 %v294
        %3406 = vmatmul.mubr.bf16.gmra.mrb[0].mxu0 %v293
        %v3407 = vpop.f32.mrb[0].mxu0
        %v3408 = vadd.f32 0.0, %v3407
        %v3409 = vpop.f32.mrb[0].mxu0
        %v3410 = vadd.f32 0.0, %v3409
        %v3411 = vpop.f32.mrb[0].mxu0
        %v3412 = vpop.f32.mrb[0].mxu0
        %3413 = vdwg.mxu0
        %3414 = vmatprep.subr.bf16.mxu0 %v2478
        %3415 = vmatpush1.bf16.msra.mxu0 %v2477
        %3416 = vmatprep.subr.bf16.mxu0 %v2486
        %3417 = vmatpush1.bf16.msra.mxu0 %v2485
        %3418 = vmatprep.subr.bf16.mxu0 %v2494
        %3419 = vmatpush1.bf16.msra.mxu0 %v2493
        %3420 = vmatprep.subr.bf16.mxu0 %v2502
        %3421 = vmatpush1.bf16.msra.mxu0 %v2501
        %3422 = vmatprep.subr.bf16.mxu0 %v2510
        %3423 = vmatpush1.bf16.msra.mxu0 %v2509
        %3424 = vmatprep.subr.bf16.mxu0 %v2518
        %3425 = vmatpush1.bf16.msra.mxu0 %v2517
        %3426 = vmatprep.subr.bf16.mxu0 %v2526
        %3427 = vmatpush1.bf16.msra.mxu0 %v2525
        %3428 = vmatprep.subr.bf16.mxu0 %v2534
        %3429 = vmatpush1.bf16.msra.mxu0 %v2533
        %3430 = vmatprep.subr.bf16.mxu0 %v2542
        %3431 = vmatpush1.bf16.msra.mxu0 %v2541
        %3432 = vmatprep.subr.bf16.mxu0 %v2550
        %3433 = vmatpush1.bf16.msra.mxu0 %v2549
        %3434 = vmatprep.subr.bf16.mxu0 %v2558
        %3435 = vmatpush1.bf16.msra.mxu0 %v2557
        %3436 = vmatprep.subr.bf16.mxu0 %v2566
        %3437 = vmatpush1.bf16.msra.mxu0 %v2565
        %3438 = vmatprep.subr.bf16.mxu0 %v2574
        %3439 = vmatpush1.bf16.msra.mxu0 %v2573
        %3440 = vmatprep.subr.bf16.mxu0 %v2582
        %3441 = vmatpush1.bf16.msra.mxu0 %v2581
        %3442 = vmatprep.subr.bf16.mxu0 %v2590
        %3443 = vmatpush1.bf16.msra.mxu0 %v2589
        %3444 = vmatprep.subr.bf16.mxu0 %v2598
        %3445 = vmatpush1.bf16.msra.mxu0 %v2597
        %3446 = vmatprep.mubr.bf16.mxu0 %v296
        %3447 = vmatmul.mubr.bf16.gmra.mrb[0].mxu0 %v295
        %v3448 = vpop.f32.mrb[0].mxu0
        %v3449 = vadd.f32 %v3408, %v3448
        %v3450 = vpop.f32.mrb[0].mxu0
        %v3451 = vadd.f32 %v3410, %v3450
        %v3452 = vpop.f32.mrb[0].mxu0
        %v3453 = vpop.f32.mrb[0].mxu0
        %3454 = vdwg.mxu0
        %3455 = vmatprep.subr.bf16.mxu0 %v2606
        %3456 = vmatpush1.bf16.msra.mxu0 %v2605
        %3457 = vmatprep.subr.bf16.mxu0 %v2614
        %3458 = vmatpush1.bf16.msra.mxu0 %v2613
        %3459 = vmatprep.subr.bf16.mxu0 %v2622
        %3460 = vmatpush1.bf16.msra.mxu0 %v2621
        %3461 = vmatprep.subr.bf16.mxu0 %v2630
        %3462 = vmatpush1.bf16.msra.mxu0 %v2629
        %3463 = vmatprep.subr.bf16.mxu0 %v2638
        %3464 = vmatpush1.bf16.msra.mxu0 %v2637
        %3465 = vmatprep.subr.bf16.mxu0 %v2646
        %3466 = vmatpush1.bf16.msra.mxu0 %v2645
        %3467 = vmatprep.subr.bf16.mxu0 %v2654
        %3468 = vmatpush1.bf16.msra.mxu0 %v2653
        %3469 = vmatprep.subr.bf16.mxu0 %v2662
        %3470 = vmatpush1.bf16.msra.mxu0 %v2661
        %3471 = vmatprep.subr.bf16.mxu0 %v2670
        %3472 = vmatpush1.bf16.msra.mxu0 %v2669
        %3473 = vmatprep.subr.bf16.mxu0 %v2678
        %3474 = vmatpush1.bf16.msra.mxu0 %v2677
        %3475 = vmatprep.subr.bf16.mxu0 %v2686
        %3476 = vmatpush1.bf16.msra.mxu0 %v2685
        %3477 = vmatprep.subr.bf16.mxu0 %v2694
        %3478 = vmatpush1.bf16.msra.mxu0 %v2693
        %3479 = vmatprep.subr.bf16.mxu0 %v2702
        %3480 = vmatpush1.bf16.msra.mxu0 %v2701
        %3481 = vmatprep.subr.bf16.mxu0 %v2710
        %3482 = vmatpush1.bf16.msra.mxu0 %v2709
        %3483 = vmatprep.subr.bf16.mxu0 %v2718
        %3484 = vmatpush1.bf16.msra.mxu0 %v2717
        %3485 = vmatprep.subr.bf16.mxu0 %v2726
        %3486 = vmatpush1.bf16.msra.mxu0 %v2725
        %3487 = vmatprep.mubr.bf16.mxu0 %v298
        %3488 = vmatmul.mubr.bf16.gmra.mrb[0].mxu0 %v297
        %v3489 = vpop.f32.mrb[0].mxu0
        %v3490 = vadd.f32 %v3449, %v3489
        %v3491 = vpop.f32.mrb[0].mxu0
        %v3492 = vadd.f32 %v3451, %v3491
        %v3493 = vpop.f32.mrb[0].mxu0
        %v3494 = vpop.f32.mrb[0].mxu0
        %3495 = vdwg.mxu0
        %3496 = vmatprep.subr.bf16.mxu0 %v2734
        %3497 = vmatpush1.bf16.msra.mxu0 %v2733
        %3498 = vmatprep.subr.bf16.mxu0 %v2742
        %3499 = vmatpush1.bf16.msra.mxu0 %v2741
        %3500 = vmatprep.subr.bf16.mxu0 %v2750
        %3501 = vmatpush1.bf16.msra.mxu0 %v2749
        %3502 = vmatprep.subr.bf16.mxu0 %v2758
        %3503 = vmatpush1.bf16.msra.mxu0 %v2757
        %3504 = vmatprep.subr.bf16.mxu0 %v2766
        %3505 = vmatpush1.bf16.msra.mxu0 %v2765
        %3506 = vmatprep.subr.bf16.mxu0 %v2774
        %3507 = vmatpush1.bf16.msra.mxu0 %v2773
        %3508 = vmatprep.subr.bf16.mxu0 %v2782
        %3509 = vmatpush1.bf16.msra.mxu0 %v2781
        %3510 = vmatprep.subr.bf16.mxu0 %v2790
        %3511 = vmatpush1.bf16.msra.mxu0 %v2789
        %3512 = vmatprep.subr.bf16.mxu0 %v2798
        %3513 = vmatpush1.bf16.msra.mxu0 %v2797
        %3514 = vmatprep.subr.bf16.mxu0 %v2806
        %3515 = vmatpush1.bf16.msra.mxu0 %v2805
        %3516 = vmatprep.subr.bf16.mxu0 %v2814
        %3517 = vmatpush1.bf16.msra.mxu0 %v2813
        %3518 = vmatprep.subr.bf16.mxu0 %v2822
        %3519 = vmatpush1.bf16.msra.mxu0 %v2821
        %3520 = vmatprep.subr.bf16.mxu0 %v2830
        %3521 = vmatpush1.bf16.msra.mxu0 %v2829
        %3522 = vmatprep.subr.bf16.mxu0 %v2838
        %3523 = vmatpush1.bf16.msra.mxu0 %v2837
        %3524 = vmatprep.subr.bf16.mxu0 %v2846
        %3525 = vmatpush1.bf16.msra.mxu0 %v2845
        %3526 = vmatprep.subr.bf16.mxu0 %v2854
        %3527 = vmatpush1.bf16.msra.mxu0 %v2853
        %3528 = vmatprep.mubr.bf16.mxu0 %v300
        %3529 = vmatmul.mubr.bf16.gmra.mrb[0].mxu0 %v299
        %v3530 = vpop.f32.mrb[0].mxu0
        %v3531 = vadd.f32 %v3490, %v3530
        %v3532 = vpop.f32.mrb[0].mxu0
        %v3533 = vadd.f32 %v3492, %v3532
        %v3534 = vpop.f32.mrb[0].mxu0
        %v3535 = vpop.f32.mrb[0].mxu0
        %3536 = vdwg.mxu0
        %3537 = vmatprep.subr.bf16.mxu0 %v2352
        %3538 = vmatpush1.bf16.msra.mxu0 %v2351
        %3539 = vmatprep.subr.bf16.mxu0 %v2360
        %3540 = vmatpush1.bf16.msra.mxu0 %v2359
        %3541 = vmatprep.subr.bf16.mxu0 %v2368
        %3542 = vmatpush1.bf16.msra.mxu0 %v2367
        %3543 = vmatprep.subr.bf16.mxu0 %v2376
        %3544 = vmatpush1.bf16.msra.mxu0 %v2375
        %3545 = vmatprep.subr.bf16.mxu0 %v2384
        %3546 = vmatpush1.bf16.msra.mxu0 %v2383
        %3547 = vmatprep.subr.bf16.mxu0 %v2392
        %3548 = vmatpush1.bf16.msra.mxu0 %v2391
        %3549 = vmatprep.subr.bf16.mxu0 %v2400
        %3550 = vmatpush1.bf16.msra.mxu0 %v2399
        %3551 = vmatprep.subr.bf16.mxu0 %v2408
        %3552 = vmatpush1.bf16.msra.mxu0 %v2407
        %3553 = vmatprep.subr.bf16.mxu0 %v2416
        %3554 = vmatpush1.bf16.msra.mxu0 %v2415
        %3555 = vmatprep.subr.bf16.mxu0 %v2424
        %3556 = vmatpush1.bf16.msra.mxu0 %v2423
        %3557 = vmatprep.subr.bf16.mxu0 %v2432
        %3558 = vmatpush1.bf16.msra.mxu0 %v2431
        %3559 = vmatprep.subr.bf16.mxu0 %v2440
        %3560 = vmatpush1.bf16.msra.mxu0 %v2439
        %3561 = vmatprep.subr.bf16.mxu0 %v2448
        %3562 = vmatpush1.bf16.msra.mxu0 %v2447
        %3563 = vmatprep.subr.bf16.mxu0 %v2456
        %3564 = vmatpush1.bf16.msra.mxu0 %v2455
        %3565 = vmatprep.subr.bf16.mxu0 %v2464
        %3566 = vmatpush1.bf16.msra.mxu0 %v2463
        %3567 = vmatprep.subr.bf16.mxu0 %v2472
        %3568 = vmatpush1.bf16.msra.mxu0 %v2471
        %3569 = vmatprep.mubr.bf16.mxu0 %v294
        %3570 = vmatmul.mubr.bf16.gmra.mrb[0].mxu0 %v293
        %v3571 = vpop.f32.mrb[0].mxu0
        %v3572 = vadd.f32 0.0, %v3571
        %v3573 = vpop.f32.mrb[0].mxu0
        %v3574 = vadd.f32 0.0, %v3573
        %v3575 = vpop.f32.mrb[0].mxu0
        %v3576 = vpop.f32.mrb[0].mxu0
        %3577 = vdwg.mxu0
        %3578 = vmatprep.subr.bf16.mxu0 %v2480
        %3579 = vmatpush1.bf16.msra.mxu0 %v2479
        %3580 = vmatprep.subr.bf16.mxu0 %v2488
        %3581 = vmatpush1.bf16.msra.mxu0 %v2487
        %3582 = vmatprep.subr.bf16.mxu0 %v2496
        %3583 = vmatpush1.bf16.msra.mxu0 %v2495
        %3584 = vmatprep.subr.bf16.mxu0 %v2504
        %3585 = vmatpush1.bf16.msra.mxu0 %v2503
        %3586 = vmatprep.subr.bf16.mxu0 %v2512
        %3587 = vmatpush1.bf16.msra.mxu0 %v2511
        %3588 = vmatprep.subr.bf16.mxu0 %v2520
        %3589 = vmatpush1.bf16.msra.mxu0 %v2519
        %3590 = vmatprep.subr.bf16.mxu0 %v2528
        %3591 = vmatpush1.bf16.msra.mxu0 %v2527
        %3592 = vmatprep.subr.bf16.mxu0 %v2536
        %3593 = vmatpush1.bf16.msra.mxu0 %v2535
        %3594 = vmatprep.subr.bf16.mxu0 %v2544
        %3595 = vmatpush1.bf16.msra.mxu0 %v2543
        %3596 = vmatprep.subr.bf16.mxu0 %v2552
        %3597 = vmatpush1.bf16.msra.mxu0 %v2551
        %3598 = vmatprep.subr.bf16.mxu0 %v2560
        %3599 = vmatpush1.bf16.msra.mxu0 %v2559
        %3600 = vmatprep.subr.bf16.mxu0 %v2568
        %3601 = vmatpush1.bf16.msra.mxu0 %v2567
        %3602 = vmatprep.subr.bf16.mxu0 %v2576
        %3603 = vmatpush1.bf16.msra.mxu0 %v2575
        %3604 = vmatprep.subr.bf16.mxu0 %v2584
        %3605 = vmatpush1.bf16.msra.mxu0 %v2583
        %3606 = vmatprep.subr.bf16.mxu0 %v2592
        %3607 = vmatpush1.bf16.msra.mxu0 %v2591
        %3608 = vmatprep.subr.bf16.mxu0 %v2600
        %3609 = vmatpush1.bf16.msra.mxu0 %v2599
        %3610 = vmatprep.mubr.bf16.mxu0 %v296
        %3611 = vmatmul.mubr.bf16.gmra.mrb[0].mxu0 %v295
        %v3612 = vpop.f32.mrb[0].mxu0
        %v3613 = vadd.f32 %v3572, %v3612
        %v3614 = vpop.f32.mrb[0].mxu0
        %v3615 = vadd.f32 %v3574, %v3614
        %v3616 = vpop.f32.mrb[0].mxu0
        %v3617 = vpop.f32.mrb[0].mxu0
        %3618 = vdwg.mxu0
        %3619 = vmatprep.subr.bf16.mxu0 %v2608
        %3620 = vmatpush1.bf16.msra.mxu0 %v2607
        %3621 = vmatprep.subr.bf16.mxu0 %v2616
        %3622 = vmatpush1.bf16.msra.mxu0 %v2615
        %3623 = vmatprep.subr.bf16.mxu0 %v2624
        %3624 = vmatpush1.bf16.msra.mxu0 %v2623
        %3625 = vmatprep.subr.bf16.mxu0 %v2632
        %3626 = vmatpush1.bf16.msra.mxu0 %v2631
        %3627 = vmatprep.subr.bf16.mxu0 %v2640
        %3628 = vmatpush1.bf16.msra.mxu0 %v2639
        %3629 = vmatprep.subr.bf16.mxu0 %v2648
        %3630 = vmatpush1.bf16.msra.mxu0 %v2647
        %3631 = vmatprep.subr.bf16.mxu0 %v2656
        %3632 = vmatpush1.bf16.msra.mxu0 %v2655
        %3633 = vmatprep.subr.bf16.mxu0 %v2664
        %3634 = vmatpush1.bf16.msra.mxu0 %v2663
        %3635 = vmatprep.subr.bf16.mxu0 %v2672
        %3636 = vmatpush1.bf16.msra.mxu0 %v2671
        %3637 = vmatprep.subr.bf16.mxu0 %v2680
        %3638 = vmatpush1.bf16.msra.mxu0 %v2679
        %3639 = vmatprep.subr.bf16.mxu0 %v2688
        %3640 = vmatpush1.bf16.msra.mxu0 %v2687
        %3641 = vmatprep.subr.bf16.mxu0 %v2696
        %3642 = vmatpush1.bf16.msra.mxu0 %v2695
        %3643 = vmatprep.subr.bf16.mxu0 %v2704
        %3644 = vmatpush1.bf16.msra.mxu0 %v2703
        %3645 = vmatprep.subr.bf16.mxu0 %v2712
        %3646 = vmatpush1.bf16.msra.mxu0 %v2711
        %3647 = vmatprep.subr.bf16.mxu0 %v2720
        %3648 = vmatpush1.bf16.msra.mxu0 %v2719
        %3649 = vmatprep.subr.bf16.mxu0 %v2728
        %3650 = vmatpush1.bf16.msra.mxu0 %v2727
        %3651 = vmatprep.mubr.bf16.mxu0 %v298
        %3652 = vmatmul.mubr.bf16.gmra.mrb[0].mxu0 %v297
        %v3653 = vpop.f32.mrb[0].mxu0
        %v3654 = vadd.f32 %v3613, %v3653
        %v3655 = vpop.f32.mrb[0].mxu0
        %v3656 = vadd.f32 %v3615, %v3655
        %v3657 = vpop.f32.mrb[0].mxu0
        %v3658 = vpop.f32.mrb[0].mxu0
        %3659 = vdwg.mxu0
        %3660 = vmatprep.subr.bf16.mxu0 %v2736
        %3661 = vmatpush1.bf16.msra.mxu0 %v2735
        %3662 = vmatprep.subr.bf16.mxu0 %v2744
        %3663 = vmatpush1.bf16.msra.mxu0 %v2743
        %3664 = vmatprep.subr.bf16.mxu0 %v2752
        %3665 = vmatpush1.bf16.msra.mxu0 %v2751
        %3666 = vmatprep.subr.bf16.mxu0 %v2760
        %3667 = vmatpush1.bf16.msra.mxu0 %v2759
        %3668 = vmatprep.subr.bf16.mxu0 %v2768
        %3669 = vmatpush1.bf16.msra.mxu0 %v2767
        %3670 = vmatprep.subr.bf16.mxu0 %v2776
        %3671 = vmatpush1.bf16.msra.mxu0 %v2775
        %3672 = vmatprep.subr.bf16.mxu0 %v2784
        %3673 = vmatpush1.bf16.msra.mxu0 %v2783
        %3674 = vmatprep.subr.bf16.mxu0 %v2792
        %3675 = vmatpush1.bf16.msra.mxu0 %v2791
        %3676 = vmatprep.subr.bf16.mxu0 %v2800
        %3677 = vmatpush1.bf16.msra.mxu0 %v2799
        %3678 = vmatprep.subr.bf16.mxu0 %v2808
        %3679 = vmatpush1.bf16.msra.mxu0 %v2807
        %3680 = vmatprep.subr.bf16.mxu0 %v2816
        %3681 = vmatpush1.bf16.msra.mxu0 %v2815
        %3682 = vmatprep.subr.bf16.mxu0 %v2824
        %3683 = vmatpush1.bf16.msra.mxu0 %v2823
        %3684 = vmatprep.subr.bf16.mxu0 %v2832
        %3685 = vmatpush1.bf16.msra.mxu0 %v2831
        %3686 = vmatprep.subr.bf16.mxu0 %v2840
        %3687 = vmatpush1.bf16.msra.mxu0 %v2839
        %3688 = vmatprep.subr.bf16.mxu0 %v2848
        %3689 = vmatpush1.bf16.msra.mxu0 %v2847
        %3690 = vmatprep.subr.bf16.mxu0 %v2856
        %3691 = vmatpush1.bf16.msra.mxu0 %v2855
        %3692 = vmatprep.mubr.bf16.mxu0 %v300
        %3693 = vmatmul.mubr.bf16.gmra.mrb[0].mxu0 %v299
        %v3694 = vpop.f32.mrb[0].mxu0
        %v3695 = vadd.f32 %v3654, %v3694
        %v3696 = vpop.f32.mrb[0].mxu0
        %v3697 = vadd.f32 %v3656, %v3696
        %v3698 = vpop.f32.mrb[0].mxu0
        %v3699 = vpop.f32.mrb[0].mxu0
        %3700 = vdwg.mxu0
        %3701 = vmatprep.subr.bf16.mxu0 %v2354
        %3702 = vmatpush1.bf16.msra.mxu0 %v2353
        %3703 = vmatprep.subr.bf16.mxu0 %v2362
        %3704 = vmatpush1.bf16.msra.mxu0 %v2361
        %3705 = vmatprep.subr.bf16.mxu0 %v2370
        %3706 = vmatpush1.bf16.msra.mxu0 %v2369
        %3707 = vmatprep.subr.bf16.mxu0 %v2378
        %3708 = vmatpush1.bf16.msra.mxu0 %v2377
        %3709 = vmatprep.subr.bf16.mxu0 %v2386
        %3710 = vmatpush1.bf16.msra.mxu0 %v2385
        %3711 = vmatprep.subr.bf16.mxu0 %v2394
        %3712 = vmatpush1.bf16.msra.mxu0 %v2393
        %3713 = vmatprep.subr.bf16.mxu0 %v2402
        %3714 = vmatpush1.bf16.msra.mxu0 %v2401
        %3715 = vmatprep.subr.bf16.mxu0 %v2410
        %3716 = vmatpush1.bf16.msra.mxu0 %v2409
        %3717 = vmatprep.subr.bf16.mxu0 %v2418
        %3718 = vmatpush1.bf16.msra.mxu0 %v2417
        %3719 = vmatprep.subr.bf16.mxu0 %v2426
        %3720 = vmatpush1.bf16.msra.mxu0 %v2425
        %3721 = vmatprep.subr.bf16.mxu0 %v2434
        %3722 = vmatpush1.bf16.msra.mxu0 %v2433
        %3723 = vmatprep.subr.bf16.mxu0 %v2442
        %3724 = vmatpush1.bf16.msra.mxu0 %v2441
        %3725 = vmatprep.subr.bf16.mxu0 %v2450
        %3726 = vmatpush1.bf16.msra.mxu0 %v2449
        %3727 = vmatprep.subr.bf16.mxu0 %v2458
        %3728 = vmatpush1.bf16.msra.mxu0 %v2457
        %3729 = vmatprep.subr.bf16.mxu0 %v2466
        %3730 = vmatpush1.bf16.msra.mxu0 %v2465
        %3731 = vmatprep.subr.bf16.mxu0 %v2474
        %3732 = vmatpush1.bf16.msra.mxu0 %v2473
        %3733 = vmatprep.mubr.bf16.mxu0 %v294
        %3734 = vmatmul.mubr.bf16.gmra.mrb[0].mxu0 %v293
        %v3735 = vpop.f32.mrb[0].mxu0
        %v3736 = vadd.f32 0.0, %v3735
        %v3737 = vpop.f32.mrb[0].mxu0
        %v3738 = vadd.f32 0.0, %v3737
        %v3739 = vpop.f32.mrb[0].mxu0
        %v3740 = vpop.f32.mrb[0].mxu0
        %3741 = vdwg.mxu0
        %3742 = vmatprep.subr.bf16.mxu0 %v2482
        %3743 = vmatpush1.bf16.msra.mxu0 %v2481
        %3744 = vmatprep.subr.bf16.mxu0 %v2490
        %3745 = vmatpush1.bf16.msra.mxu0 %v2489
        %3746 = vmatprep.subr.bf16.mxu0 %v2498
        %3747 = vmatpush1.bf16.msra.mxu0 %v2497
        %3748 = vmatprep.subr.bf16.mxu0 %v2506
        %3749 = vmatpush1.bf16.msra.mxu0 %v2505
        %3750 = vmatprep.subr.bf16.mxu0 %v2514
        %3751 = vmatpush1.bf16.msra.mxu0 %v2513
        %3752 = vmatprep.subr.bf16.mxu0 %v2522
        %3753 = vmatpush1.bf16.msra.mxu0 %v2521
        %3754 = vmatprep.subr.bf16.mxu0 %v2530
        %3755 = vmatpush1.bf16.msra.mxu0 %v2529
        %3756 = vmatprep.subr.bf16.mxu0 %v2538
        %3757 = vmatpush1.bf16.msra.mxu0 %v2537
        %3758 = vmatprep.subr.bf16.mxu0 %v2546
        %3759 = vmatpush1.bf16.msra.mxu0 %v2545
        %3760 = vmatprep.subr.bf16.mxu0 %v2554
        %3761 = vmatpush1.bf16.msra.mxu0 %v2553
        %3762 = vmatprep.subr.bf16.mxu0 %v2562
        %3763 = vmatpush1.bf16.msra.mxu0 %v2561
        %3764 = vmatprep.subr.bf16.mxu0 %v2570
        %3765 = vmatpush1.bf16.msra.mxu0 %v2569
        %3766 = vmatprep.subr.bf16.mxu0 %v2578
        %3767 = vmatpush1.bf16.msra.mxu0 %v2577
        %3768 = vmatprep.subr.bf16.mxu0 %v2586
        %3769 = vmatpush1.bf16.msra.mxu0 %v2585
        %3770 = vmatprep.subr.bf16.mxu0 %v2594
        %3771 = vmatpush1.bf16.msra.mxu0 %v2593
        %3772 = vmatprep.subr.bf16.mxu0 %v2602
        %3773 = vmatpush1.bf16.msra.mxu0 %v2601
        %3774 = vmatprep.mubr.bf16.mxu0 %v296
        %3775 = vmatmul.mubr.bf16.gmra.mrb[0].mxu0 %v295
        %v3776 = vpop.f32.mrb[0].mxu0
        %v3777 = vadd.f32 %v3736, %v3776
        %v3778 = vpop.f32.mrb[0].mxu0
        %v3779 = vadd.f32 %v3738, %v3778
        %v3780 = vpop.f32.mrb[0].mxu0
        %v3781 = vpop.f32.mrb[0].mxu0
        %3782 = vdwg.mxu0
        %3783 = vmatprep.subr.bf16.mxu0 %v2610
        %3784 = vmatpush1.bf16.msra.mxu0 %v2609
        %3785 = vmatprep.subr.bf16.mxu0 %v2618
        %3786 = vmatpush1.bf16.msra.mxu0 %v2617
        %3787 = vmatprep.subr.bf16.mxu0 %v2626
        %3788 = vmatpush1.bf16.msra.mxu0 %v2625
        %3789 = vmatprep.subr.bf16.mxu0 %v2634
        %3790 = vmatpush1.bf16.msra.mxu0 %v2633
        %3791 = vmatprep.subr.bf16.mxu0 %v2642
        %3792 = vmatpush1.bf16.msra.mxu0 %v2641
        %3793 = vmatprep.subr.bf16.mxu0 %v2650
        %3794 = vmatpush1.bf16.msra.mxu0 %v2649
        %3795 = vmatprep.subr.bf16.mxu0 %v2658
        %3796 = vmatpush1.bf16.msra.mxu0 %v2657
        %3797 = vmatprep.subr.bf16.mxu0 %v2666
        %3798 = vmatpush1.bf16.msra.mxu0 %v2665
        %3799 = vmatprep.subr.bf16.mxu0 %v2674
        %3800 = vmatpush1.bf16.msra.mxu0 %v2673
        %3801 = vmatprep.subr.bf16.mxu0 %v2682
        %3802 = vmatpush1.bf16.msra.mxu0 %v2681
        %3803 = vmatprep.subr.bf16.mxu0 %v2690
        %3804 = vmatpush1.bf16.msra.mxu0 %v2689
        %3805 = vmatprep.subr.bf16.mxu0 %v2698
        %3806 = vmatpush1.bf16.msra.mxu0 %v2697
        %3807 = vmatprep.subr.bf16.mxu0 %v2706
        %3808 = vmatpush1.bf16.msra.mxu0 %v2705
        %3809 = vmatprep.subr.bf16.mxu0 %v2714
        %3810 = vmatpush1.bf16.msra.mxu0 %v2713
        %3811 = vmatprep.subr.bf16.mxu0 %v2722
        %3812 = vmatpush1.bf16.msra.mxu0 %v2721
        %3813 = vmatprep.subr.bf16.mxu0 %v2730
        %3814 = vmatpush1.bf16.msra.mxu0 %v2729
        %3815 = vmatprep.mubr.bf16.mxu0 %v298
        %3816 = vmatmul.mubr.bf16.gmra.mrb[0].mxu0 %v297
        %v3817 = vpop.f32.mrb[0].mxu0
        %v3818 = vadd.f32 %v3777, %v3817
        %v3819 = vpop.f32.mrb[0].mxu0
        %v3820 = vadd.f32 %v3779, %v3819
        %v3821 = vpop.f32.mrb[0].mxu0
        %v3822 = vpop.f32.mrb[0].mxu0
        %3823 = vdwg.mxu0
        %3824 = vmatprep.subr.bf16.mxu0 %v2738
        %3825 = vmatpush1.bf16.msra.mxu0 %v2737
        %3826 = vmatprep.subr.bf16.mxu0 %v2746
        %3827 = vmatpush1.bf16.msra.mxu0 %v2745
        %3828 = vmatprep.subr.bf16.mxu0 %v2754
        %3829 = vmatpush1.bf16.msra.mxu0 %v2753
        %3830 = vmatprep.subr.bf16.mxu0 %v2762
        %3831 = vmatpush1.bf16.msra.mxu0 %v2761
        %3832 = vmatprep.subr.bf16.mxu0 %v2770
        %3833 = vmatpush1.bf16.msra.mxu0 %v2769
        %3834 = vmatprep.subr.bf16.mxu0 %v2778
        %3835 = vmatpush1.bf16.msra.mxu0 %v2777
        %3836 = vmatprep.subr.bf16.mxu0 %v2786
        %3837 = vmatpush1.bf16.msra.mxu0 %v2785
        %3838 = vmatprep.subr.bf16.mxu0 %v2794
        %3839 = vmatpush1.bf16.msra.mxu0 %v2793
        %3840 = vmatprep.subr.bf16.mxu0 %v2802
        %3841 = vmatpush1.bf16.msra.mxu0 %v2801
        %3842 = vmatprep.subr.bf16.mxu0 %v2810
        %3843 = vmatpush1.bf16.msra.mxu0 %v2809
        %3844 = vmatprep.subr.bf16.mxu0 %v2818
        %3845 = vmatpush1.bf16.msra.mxu0 %v2817
        %3846 = vmatprep.subr.bf16.mxu0 %v2826
        %3847 = vmatpush1.bf16.msra.mxu0 %v2825
        %3848 = vmatprep.subr.bf16.mxu0 %v2834
        %3849 = vmatpush1.bf16.msra.mxu0 %v2833
        %3850 = vmatprep.subr.bf16.mxu0 %v2842
        %3851 = vmatpush1.bf16.msra.mxu0 %v2841
        %3852 = vmatprep.subr.bf16.mxu0 %v2850
        %3853 = vmatpush1.bf16.msra.mxu0 %v2849
        %3854 = vmatprep.subr.bf16.mxu0 %v2858
        %3855 = vmatpush1.bf16.msra.mxu0 %v2857
        %3856 = vmatprep.mubr.bf16.mxu0 %v300
        %3857 = vmatmul.mubr.bf16.gmra.mrb[0].mxu0 %v299
        %v3858 = vpop.f32.mrb[0].mxu0
        %v3859 = vadd.f32 %v3818, %v3858
        %v3860 = vpop.f32.mrb[0].mxu0
        %v3861 = vadd.f32 %v3820, %v3860
        %v3862 = vpop.f32.mrb[0].mxu0
        %v3863 = vpop.f32.mrb[0].mxu0
        %3864 = vdwg.mxu0
        %3865 = vmatprep.subr.bf16.mxu0 %v2356
        %3866 = vmatpush1.bf16.msra.mxu0 %v2355
        %3867 = vmatprep.subr.bf16.mxu0 %v2364
        %3868 = vmatpush1.bf16.msra.mxu0 %v2363
        %3869 = vmatprep.subr.bf16.mxu0 %v2372
        %3870 = vmatpush1.bf16.msra.mxu0 %v2371
        %3871 = vmatprep.subr.bf16.mxu0 %v2380
        %3872 = vmatpush1.bf16.msra.mxu0 %v2379
        %3873 = vmatprep.subr.bf16.mxu0 %v2388
        %3874 = vmatpush1.bf16.msra.mxu0 %v2387
        %3875 = vmatprep.subr.bf16.mxu0 %v2396
        %3876 = vmatpush1.bf16.msra.mxu0 %v2395
        %3877 = vmatprep.subr.bf16.mxu0 %v2404
        %3878 = vmatpush1.bf16.msra.mxu0 %v2403
        %3879 = vmatprep.subr.bf16.mxu0 %v2412
        %3880 = vmatpush1.bf16.msra.mxu0 %v2411
        %3881 = vmatprep.subr.bf16.mxu0 %v2420
        %3882 = vmatpush1.bf16.msra.mxu0 %v2419
        %3883 = vmatprep.subr.bf16.mxu0 %v2428
        %3884 = vmatpush1.bf16.msra.mxu0 %v2427
        %3885 = vmatprep.subr.bf16.mxu0 %v2436
        %3886 = vmatpush1.bf16.msra.mxu0 %v2435
        %3887 = vmatprep.subr.bf16.mxu0 %v2444
        %3888 = vmatpush1.bf16.msra.mxu0 %v2443
        %3889 = vmatprep.subr.bf16.mxu0 %v2452
        %3890 = vmatpush1.bf16.msra.mxu0 %v2451
        %3891 = vmatprep.subr.bf16.mxu0 %v2460
        %3892 = vmatpush1.bf16.msra.mxu0 %v2459
        %3893 = vmatprep.subr.bf16.mxu0 %v2468
        %3894 = vmatpush1.bf16.msra.mxu0 %v2467
        %3895 = vmatprep.subr.bf16.mxu0 %v2476
        %3896 = vmatpush1.bf16.msra.mxu0 %v2475
        %3897 = vmatprep.mubr.bf16.mxu0 %v294
        %3898 = vmatmul.mubr.bf16.gmra.mrb[0].mxu0 %v293
        %v3899 = vpop.f32.mrb[0].mxu0
        %v3900 = vadd.f32 0.0, %v3899
        %v3901 = vpop.f32.mrb[0].mxu0
        %v3902 = vadd.f32 0.0, %v3901
        %v3903 = vpop.f32.mrb[0].mxu0
        %v3904 = vpop.f32.mrb[0].mxu0
        %3905 = vdwg.mxu0
        %3906 = vmatprep.subr.bf16.mxu0 %v2484
        %3907 = vmatpush1.bf16.msra.mxu0 %v2483
        %3908 = vmatprep.subr.bf16.mxu0 %v2492
        %3909 = vmatpush1.bf16.msra.mxu0 %v2491
        %3910 = vmatprep.subr.bf16.mxu0 %v2500
        %3911 = vmatpush1.bf16.msra.mxu0 %v2499
        %3912 = vmatprep.subr.bf16.mxu0 %v2508
        %3913 = vmatpush1.bf16.msra.mxu0 %v2507
        %3914 = vmatprep.subr.bf16.mxu0 %v2516
        %3915 = vmatpush1.bf16.msra.mxu0 %v2515
        %3916 = vmatprep.subr.bf16.mxu0 %v2524
        %3917 = vmatpush1.bf16.msra.mxu0 %v2523
        %3918 = vmatprep.subr.bf16.mxu0 %v2532
        %3919 = vmatpush1.bf16.msra.mxu0 %v2531
        %3920 = vmatprep.subr.bf16.mxu0 %v2540
        %3921 = vmatpush1.bf16.msra.mxu0 %v2539
        %3922 = vmatprep.subr.bf16.mxu0 %v2548
        %3923 = vmatpush1.bf16.msra.mxu0 %v2547
        %3924 = vmatprep.subr.bf16.mxu0 %v2556
        %3925 = vmatpush1.bf16.msra.mxu0 %v2555
        %3926 = vmatprep.subr.bf16.mxu0 %v2564
        %3927 = vmatpush1.bf16.msra.mxu0 %v2563
        %3928 = vmatprep.subr.bf16.mxu0 %v2572
        %3929 = vmatpush1.bf16.msra.mxu0 %v2571
        %3930 = vmatprep.subr.bf16.mxu0 %v2580
        %3931 = vmatpush1.bf16.msra.mxu0 %v2579
        %3932 = vmatprep.subr.bf16.mxu0 %v2588
        %3933 = vmatpush1.bf16.msra.mxu0 %v2587
        %3934 = vmatprep.subr.bf16.mxu0 %v2596
        %3935 = vmatpush1.bf16.msra.mxu0 %v2595
        %3936 = vmatprep.subr.bf16.mxu0 %v2604
        %3937 = vmatpush1.bf16.msra.mxu0 %v2603
        %3938 = vmatprep.mubr.bf16.mxu0 %v296
        %3939 = vmatmul.mubr.bf16.gmra.mrb[0].mxu0 %v295
        %v3940 = vpop.f32.mrb[0].mxu0
        %v3941 = vadd.f32 %v3900, %v3940
        %v3942 = vpop.f32.mrb[0].mxu0
        %v3943 = vadd.f32 %v3902, %v3942
        %v3944 = vpop.f32.mrb[0].mxu0
        %v3945 = vpop.f32.mrb[0].mxu0
        %3946 = vdwg.mxu0
        %3947 = vmatprep.subr.bf16.mxu0 %v2612
        %3948 = vmatpush1.bf16.msra.mxu0 %v2611
        %3949 = vmatprep.subr.bf16.mxu0 %v2620
        %3950 = vmatpush1.bf16.msra.mxu0 %v2619
        %3951 = vmatprep.subr.bf16.mxu0 %v2628
        %3952 = vmatpush1.bf16.msra.mxu0 %v2627
        %3953 = vmatprep.subr.bf16.mxu0 %v2636
        %3954 = vmatpush1.bf16.msra.mxu0 %v2635
        %3955 = vmatprep.subr.bf16.mxu0 %v2644
        %3956 = vmatpush1.bf16.msra.mxu0 %v2643
        %3957 = vmatprep.subr.bf16.mxu0 %v2652
        %3958 = vmatpush1.bf16.msra.mxu0 %v2651
        %3959 = vmatprep.subr.bf16.mxu0 %v2660
        %3960 = vmatpush1.bf16.msra.mxu0 %v2659
        %3961 = vmatprep.subr.bf16.mxu0 %v2668
        %3962 = vmatpush1.bf16.msra.mxu0 %v2667
        %3963 = vmatprep.subr.bf16.mxu0 %v2676
        %3964 = vmatpush1.bf16.msra.mxu0 %v2675
        %3965 = vmatprep.subr.bf16.mxu0 %v2684
        %3966 = vmatpush1.bf16.msra.mxu0 %v2683
        %3967 = vmatprep.subr.bf16.mxu0 %v2692
        %3968 = vmatpush1.bf16.msra.mxu0 %v2691
        %3969 = vmatprep.subr.bf16.mxu0 %v2700
        %3970 = vmatpush1.bf16.msra.mxu0 %v2699
        %3971 = vmatprep.subr.bf16.mxu0 %v2708
        %3972 = vmatpush1.bf16.msra.mxu0 %v2707
        %3973 = vmatprep.subr.bf16.mxu0 %v2716
        %3974 = vmatpush1.bf16.msra.mxu0 %v2715
        %3975 = vmatprep.subr.bf16.mxu0 %v2724
        %3976 = vmatpush1.bf16.msra.mxu0 %v2723
        %3977 = vmatprep.subr.bf16.mxu0 %v2732
        %3978 = vmatpush1.bf16.msra.mxu0 %v2731
        %3979 = vmatprep.mubr.bf16.mxu0 %v298
        %3980 = vmatmul.mubr.bf16.gmra.mrb[0].mxu0 %v297
        %v3981 = vpop.f32.mrb[0].mxu0
        %v3982 = vadd.f32 %v3941, %v3981
        %v3983 = vpop.f32.mrb[0].mxu0
        %v3984 = vadd.f32 %v3943, %v3983
        %v3985 = vpop.f32.mrb[0].mxu0
        %v3986 = vpop.f32.mrb[0].mxu0
        %3987 = vdwg.mxu0
        %3988 = vmatprep.subr.bf16.mxu0 %v2740
        %3989 = vmatpush1.bf16.msra.mxu0 %v2739
        %3990 = vmatprep.subr.bf16.mxu0 %v2748
        %3991 = vmatpush1.bf16.msra.mxu0 %v2747
        %3992 = vmatprep.subr.bf16.mxu0 %v2756
        %3993 = vmatpush1.bf16.msra.mxu0 %v2755
        %3994 = vmatprep.subr.bf16.mxu0 %v2764
        %3995 = vmatpush1.bf16.msra.mxu0 %v2763
        %3996 = vmatprep.subr.bf16.mxu0 %v2772
        %3997 = vmatpush1.bf16.msra.mxu0 %v2771
        %3998 = vmatprep.subr.bf16.mxu0 %v2780
        %3999 = vmatpush1.bf16.msra.mxu0 %v2779
        %4000 = vmatprep.subr.bf16.mxu0 %v2788
        %4001 = vmatpush1.bf16.msra.mxu0 %v2787
        %4002 = vmatprep.subr.bf16.mxu0 %v2796
        %4003 = vmatpush1.bf16.msra.mxu0 %v2795
        %4004 = vmatprep.subr.bf16.mxu0 %v2804
        %4005 = vmatpush1.bf16.msra.mxu0 %v2803
        %4006 = vmatprep.subr.bf16.mxu0 %v2812
        %4007 = vmatpush1.bf16.msra.mxu0 %v2811
        %4008 = vmatprep.subr.bf16.mxu0 %v2820
        %4009 = vmatpush1.bf16.msra.mxu0 %v2819
        %4010 = vmatprep.subr.bf16.mxu0 %v2828
        %4011 = vmatpush1.bf16.msra.mxu0 %v2827
        %4012 = vmatprep.subr.bf16.mxu0 %v2836
        %4013 = vmatpush1.bf16.msra.mxu0 %v2835
        %4014 = vmatprep.subr.bf16.mxu0 %v2844
        %4015 = vmatpush1.bf16.msra.mxu0 %v2843
        %4016 = vmatprep.subr.bf16.mxu0 %v2852
        %4017 = vmatpush1.bf16.msra.mxu0 %v2851
        %4018 = vmatprep.subr.bf16.mxu0 %v2860
        %4019 = vmatpush1.bf16.msra.mxu0 %v2859
        %4020 = vmatprep.mubr.bf16.mxu0 %v300
        %4021 = vmatmul.mubr.bf16.gmra.mrb[0].mxu0 %v299
        %v4022 = vpop.f32.mrb[0].mxu0
        %v4023 = vadd.f32 %v3982, %v4022
        %v4024 = vpop.f32.mrb[0].mxu0
        %v4025 = vadd.f32 %v3984, %v4024
        %v4026 = vpop.f32.mrb[0].mxu0
        %v4027 = vpop.f32.mrb[0].mxu0
        %4028 = vdwg.mxu0
        %v4037 = vcombine.low %v3531, %v3533
        %v4038 = vcombine.low %v3695, %v3697
        %v4040 = vunpack.c.l.s4 1983009808
        %v4041 = vunpack.c.0.s8 %v4040
        %v4042 = vlaneseq
        %v4043 = vshrl.u32 %v4042, 7
        %v4044 = vsub.s32 %v4041, %v4043
        %v4045 = vrot.slane %v4037, %v4044
        %v4047 = vunpack.c.l.s4 1983009808
        %v4048 = vunpack.c.0.s8 %v4047
        %v4049 = vlaneseq
        %v4050 = vshrl.u32 %v4049, 7
        %v4051 = vsub.s32 %v4048, %v4050
        %v4052 = vrot.slane %v4038, %v4051
        %v4053 = vcombine.low %v4045, %v4052
        %v4054 = vcombine.low %v3859, %v3861
        %v4055 = vcombine.low %v4023, %v4025
        %v4057 = vunpack.c.l.s4 1983009808
        %v4058 = vunpack.c.0.s8 %v4057
        %v4059 = vlaneseq
        %v4060 = vshrl.u32 %v4059, 7
        %v4061 = vsub.s32 %v4058, %v4060
        %v4062 = vrot.slane %v4054, %v4061
        %v4064 = vunpack.c.l.s4 1983009808
        %v4065 = vunpack.c.0.s8 %v4064
        %v4066 = vlaneseq
        %v4067 = vshrl.u32 %v4066, 7
        %v4068 = vsub.s32 %v4065, %v4067
        %v4069 = vrot.slane %v4055, %v4068
        %v4070 = vcombine.low %v4062, %v4069
        %v4073 = vadd.f32 %v245, %v4053
        %v4074 = vadd.f32 %v246, %v4070
        %4075 = vst [vmem:[#allocation2] sm:$0xff] %v4073
        %4076 = vst [vmem:[#allocation2 + $0x8] sm:$0xff] %v4074
        %p4077 = scmp.eq.s32.totalorder %s17, 4
        // Predicated region
        $region45: #{net_forward.5} parent=39 // pred_check
          %p4078 = pneg %p4077
        $region46: #{net_forward.5} parent=39 // pred_check_branch
          %4080 = sbr.rel (%p4078) target = $region48
        $region47: #{net_forward.5} parent=39 // pred_region
          %v4081 = vld [vmem:[#allocation2] sm:$0xff]
          %v4082 = vld [vmem:[#allocation2 + $0x8] sm:$0xff]
          %v4083 = vld [vmem:[%s2] sm:$0xff]
          %v4085 = vlaneseq
          %v4086 = vshrl.u32 %v4085, 7
          %v4087 = vsub.s32 0, %v4086
          %v4088 = vrot.slane %v4083, %v4087
          %v4089 = vlaneseq
          %v4090 = vshrl.u32 %v4089, 7
          %v4091 = vsub.s32 1, %v4090
          %v4092 = vrot.slane %v4083, %v4091
          %v4093 = vlaneseq
          %v4094 = vshrl.u32 %v4093, 7
          %v4095 = vsub.s32 2, %v4094
          %v4096 = vrot.slane %v4083, %v4095
          %v4097 = vlaneseq
          %v4098 = vshrl.u32 %v4097, 7
          %v4099 = vsub.s32 3, %v4098
          %v4100 = vrot.slane %v4083, %v4099
          %v4101 = vlaneseq
          %v4102 = vshrl.u32 %v4101, 7
          %v4103 = vsub.s32 4, %v4102
          %v4104 = vrot.slane %v4083, %v4103
          %v4105 = vlaneseq
          %v4106 = vshrl.u32 %v4105, 7
          %v4107 = vsub.s32 5, %v4106
          %v4108 = vrot.slane %v4083, %v4107
          %v4109 = vlaneseq
          %v4110 = vshrl.u32 %v4109, 7
          %v4111 = vsub.s32 6, %v4110
          %v4112 = vrot.slane %v4083, %v4111
          %v4113 = vlaneseq
          %v4114 = vshrl.u32 %v4113, 7
          %v4115 = vsub.s32 7, %v4114
          %v4116 = vrot.slane %v4083, %v4115
          %v4117 = vcombine.low %v4088, %v4092
          %v4118 = vcombine.low %v4096, %v4100
          %v4120 = vunpack.c.l.s4 1983009808
          %v4121 = vunpack.c.0.s8 %v4120
          %v4122 = vlaneseq
          %v4123 = vshrl.u32 %v4122, 7
          %v4124 = vsub.s32 %v4121, %v4123
          %v4125 = vrot.slane %v4117, %v4124
          %v4127 = vunpack.c.l.s4 1983009808
          %v4128 = vunpack.c.0.s8 %v4127
          %v4129 = vlaneseq
          %v4130 = vshrl.u32 %v4129, 7
          %v4131 = vsub.s32 %v4128, %v4130
          %v4132 = vrot.slane %v4118, %v4131
          %v4133 = vcombine.low %v4125, %v4132
          %v4134 = vcombine.low %v4104, %v4108
          %v4135 = vcombine.low %v4112, %v4116
          %v4137 = vunpack.c.l.s4 1983009808
          %v4138 = vunpack.c.0.s8 %v4137
          %v4139 = vlaneseq
          %v4140 = vshrl.u32 %v4139, 7
          %v4141 = vsub.s32 %v4138, %v4140
          %v4142 = vrot.slane %v4134, %v4141
          %v4144 = vunpack.c.l.s4 1983009808
          %v4145 = vunpack.c.0.s8 %v4144
          %v4146 = vlaneseq
          %v4147 = vshrl.u32 %v4146, 7
          %v4148 = vsub.s32 %v4145, %v4147
          %v4149 = vrot.slane %v4135, %v4148
          %v4150 = vcombine.low %v4142, %v4149
          %v4153 = vadd.f32 %v4081, %v4133
          %v4154 = vadd.f32 %v4082, %v4150
          %v4155 = vmax.f32 %v4153, 0.0
          %v4156 = vmax.f32 %v4154, 0.0
          %v4159 = vcombine.high %v4155, %v4155
          %v4161 = vunpack.c.l.s4 1983009808
          %v4162 = vunpack.c.0.s8 %v4161
          %v4163 = vlaneseq
          %v4164 = vshrl.u32 %v4163, 7
          %v4165 = vsub.s32 %v4162, %v4164
          %v4166 = vrot.slane %v4155, %v4165
          %v4168 = vunpack.c.l.s4 1983009808
          %v4169 = vunpack.c.0.s8 %v4168
          %v4170 = vlaneseq
          %v4171 = vshrl.u32 %v4170, 7
          %v4172 = vsub.s32 %v4169, %v4171
          %v4173 = vrot.slane %v4159, %v4172
          %v4174 = vcombine.high %v4166, %v4166
          %v4175 = vcombine.high %v4173, %v4173
          %v4176 = vcombine.high %v4156, %v4156
          %v4178 = vunpack.c.l.s4 1983009808
          %v4179 = vunpack.c.0.s8 %v4178
          %v4180 = vlaneseq
          %v4181 = vshrl.u32 %v4180, 7
          %v4182 = vsub.s32 %v4179, %v4181
          %v4183 = vrot.slane %v4156, %v4182
          %v4185 = vunpack.c.l.s4 1983009808
          %v4186 = vunpack.c.0.s8 %v4185
          %v4187 = vlaneseq
          %v4188 = vshrl.u32 %v4187, 7
          %v4189 = vsub.s32 %v4186, %v4188
          %v4190 = vrot.slane %v4176, %v4189
          %v4191 = vcombine.high %v4183, %v4183
          %v4192 = vcombine.high %v4190, %v4190
          %v4201 = vpack.c.bf16 %v4166, %v4166
          %v4202 = vpack.c.bf16 %v4174, %v4174
          %v4203 = vpack.c.bf16 %v4173, %v4173
          %v4204 = vpack.c.bf16 %v4175, %v4175
          %v4205 = vpack.c.bf16 %v4183, %v4183
          %v4206 = vpack.c.bf16 %v4191, %v4191
          %v4207 = vpack.c.bf16 %v4190, %v4190
          %v4208 = vpack.c.bf16 %v4192, %v4192
          %v4209 = vld [vmem:[%s3] sm:$0xf]
          %v4210 = vld [vmem:[%s3 + $0x4] sm:$0xf]
          %v4211 = vld [vmem:[%s3 + $0x8] sm:$0xf]
          %v4212 = vld [vmem:[%s3 + $0xc] sm:$0xf]
          %v4213 = vld [vmem:[%s3 + $0x10] sm:$0xf]
          %v4214 = vld [vmem:[%s3 + $0x14] sm:$0xf]
          %v4215 = vld [vmem:[%s3 + $0x18] sm:$0xf]
          %v4216 = vld [vmem:[%s3 + $0x1c] sm:$0xf]
          %v4217 = vld [vmem:[%s3 + $0x20] sm:$0xf]
          %v4218 = vld [vmem:[%s3 + $0x24] sm:$0xf]
          %v4219 = vld [vmem:[%s3 + $0x28] sm:$0xf]
          %v4220 = vld [vmem:[%s3 + $0x2c] sm:$0xf]
          %v4221 = vld [vmem:[%s3 + $0x30] sm:$0xf]
          %v4222 = vld [vmem:[%s3 + $0x34] sm:$0xf]
          %v4223 = vld [vmem:[%s3 + $0x38] sm:$0xf]
          %v4224 = vld [vmem:[%s3 + $0x3c] sm:$0xf]
          %v4225 = vld [vmem:[%s3 + $0x40] sm:$0xf]
          %v4226 = vld [vmem:[%s3 + $0x44] sm:$0xf]
          %v4227 = vld [vmem:[%s3 + $0x48] sm:$0xf]
          %v4228 = vld [vmem:[%s3 + $0x4c] sm:$0xf]
          %v4229 = vld [vmem:[%s3 + $0x50] sm:$0xf]
          %v4230 = vld [vmem:[%s3 + $0x54] sm:$0xf]
          %v4231 = vld [vmem:[%s3 + $0x58] sm:$0xf]
          %v4232 = vld [vmem:[%s3 + $0x5c] sm:$0xf]
          %v4233 = vld [vmem:[%s3 + $0x60] sm:$0xf]
          %v4234 = vld [vmem:[%s3 + $0x64] sm:$0xf]
          %v4235 = vld [vmem:[%s3 + $0x68] sm:$0xf]
          %v4236 = vld [vmem:[%s3 + $0x6c] sm:$0xf]
          %v4237 = vld [vmem:[%s3 + $0x70] sm:$0xf]
          %v4238 = vld [vmem:[%s3 + $0x74] sm:$0xf]
          %v4239 = vld [vmem:[%s3 + $0x78] sm:$0xf]
          %v4240 = vld [vmem:[%s3 + $0x7c] sm:$0xf]
          %v4241 = vld [vmem:[%s3 + $0x80] sm:$0xf]
          %v4242 = vld [vmem:[%s3 + $0x84] sm:$0xf]
          %v4243 = vld [vmem:[%s3 + $0x88] sm:$0xf]
          %v4244 = vld [vmem:[%s3 + $0x8c] sm:$0xf]
          %v4245 = vld [vmem:[%s3 + $0x90] sm:$0xf]
          %v4246 = vld [vmem:[%s3 + $0x94] sm:$0xf]
          %v4247 = vld [vmem:[%s3 + $0x98] sm:$0xf]
          %v4248 = vld [vmem:[%s3 + $0x9c] sm:$0xf]
          %v4249 = vld [vmem:[%s3 + $0xa0] sm:$0xf]
          %v4250 = vld [vmem:[%s3 + $0xa4] sm:$0xf]
          %v4251 = vld [vmem:[%s3 + $0xa8] sm:$0xf]
          %v4252 = vld [vmem:[%s3 + $0xac] sm:$0xf]
          %v4253 = vld [vmem:[%s3 + $0xb0] sm:$0xf]
          %v4254 = vld [vmem:[%s3 + $0xb4] sm:$0xf]
          %v4255 = vld [vmem:[%s3 + $0xb8] sm:$0xf]
          %v4256 = vld [vmem:[%s3 + $0xbc] sm:$0xf]
          %v4257 = vld [vmem:[%s3 + $0xc0] sm:$0xf]
          %v4258 = vld [vmem:[%s3 + $0xc4] sm:$0xf]
          %v4259 = vld [vmem:[%s3 + $0xc8] sm:$0xf]
          %v4260 = vld [vmem:[%s3 + $0xcc] sm:$0xf]
          %v4261 = vld [vmem:[%s3 + $0xd0] sm:$0xf]
          %v4262 = vld [vmem:[%s3 + $0xd4] sm:$0xf]
          %v4263 = vld [vmem:[%s3 + $0xd8] sm:$0xf]
          %v4264 = vld [vmem:[%s3 + $0xdc] sm:$0xf]
          %v4265 = vld [vmem:[%s3 + $0xe0] sm:$0xf]
          %v4266 = vld [vmem:[%s3 + $0xe4] sm:$0xf]
          %v4267 = vld [vmem:[%s3 + $0xe8] sm:$0xf]
          %v4268 = vld [vmem:[%s3 + $0xec] sm:$0xf]
          %v4269 = vld [vmem:[%s3 + $0xf0] sm:$0xf]
          %v4270 = vld [vmem:[%s3 + $0xf4] sm:$0xf]
          %v4271 = vld [vmem:[%s3 + $0xf8] sm:$0xf]
          %v4272 = vld [vmem:[%s3 + $0xfc] sm:$0xf]
          %v4273 = vld [vmem:[%s3 + $0x100] sm:$0xf]
          %v4274 = vld [vmem:[%s3 + $0x104] sm:$0xf]
          %v4275 = vld [vmem:[%s3 + $0x108] sm:$0xf]
          %v4276 = vld [vmem:[%s3 + $0x10c] sm:$0xf]
          %v4277 = vld [vmem:[%s3 + $0x110] sm:$0xf]
          %v4278 = vld [vmem:[%s3 + $0x114] sm:$0xf]
          %v4279 = vld [vmem:[%s3 + $0x118] sm:$0xf]
          %v4280 = vld [vmem:[%s3 + $0x11c] sm:$0xf]
          %v4281 = vld [vmem:[%s3 + $0x120] sm:$0xf]
          %v4282 = vld [vmem:[%s3 + $0x124] sm:$0xf]
          %v4283 = vld [vmem:[%s3 + $0x128] sm:$0xf]
          %v4284 = vld [vmem:[%s3 + $0x12c] sm:$0xf]
          %v4285 = vld [vmem:[%s3 + $0x130] sm:$0xf]
          %v4286 = vld [vmem:[%s3 + $0x134] sm:$0xf]
          %v4287 = vld [vmem:[%s3 + $0x138] sm:$0xf]
          %v4288 = vld [vmem:[%s3 + $0x13c] sm:$0xf]
          %v4289 = vld [vmem:[%s3 + $0x140] sm:$0xf]
          %v4290 = vld [vmem:[%s3 + $0x144] sm:$0xf]
          %v4291 = vld [vmem:[%s3 + $0x148] sm:$0xf]
          %v4292 = vld [vmem:[%s3 + $0x14c] sm:$0xf]
          %v4293 = vld [vmem:[%s3 + $0x150] sm:$0xf]
          %v4294 = vld [vmem:[%s3 + $0x154] sm:$0xf]
          %v4295 = vld [vmem:[%s3 + $0x158] sm:$0xf]
          %v4296 = vld [vmem:[%s3 + $0x15c] sm:$0xf]
          %v4297 = vld [vmem:[%s3 + $0x160] sm:$0xf]
          %v4298 = vld [vmem:[%s3 + $0x164] sm:$0xf]
          %v4299 = vld [vmem:[%s3 + $0x168] sm:$0xf]
          %v4300 = vld [vmem:[%s3 + $0x16c] sm:$0xf]
          %v4301 = vld [vmem:[%s3 + $0x170] sm:$0xf]
          %v4302 = vld [vmem:[%s3 + $0x174] sm:$0xf]
          %v4303 = vld [vmem:[%s3 + $0x178] sm:$0xf]
          %v4304 = vld [vmem:[%s3 + $0x17c] sm:$0xf]
          %v4305 = vld [vmem:[%s3 + $0x180] sm:$0xf]
          %v4306 = vld [vmem:[%s3 + $0x184] sm:$0xf]
          %v4307 = vld [vmem:[%s3 + $0x188] sm:$0xf]
          %v4308 = vld [vmem:[%s3 + $0x18c] sm:$0xf]
          %v4309 = vld [vmem:[%s3 + $0x190] sm:$0xf]
          %v4310 = vld [vmem:[%s3 + $0x194] sm:$0xf]
          %v4311 = vld [vmem:[%s3 + $0x198] sm:$0xf]
          %v4312 = vld [vmem:[%s3 + $0x19c] sm:$0xf]
          %v4313 = vld [vmem:[%s3 + $0x1a0] sm:$0xf]
          %v4314 = vld [vmem:[%s3 + $0x1a4] sm:$0xf]
          %v4315 = vld [vmem:[%s3 + $0x1a8] sm:$0xf]
          %v4316 = vld [vmem:[%s3 + $0x1ac] sm:$0xf]
          %v4317 = vld [vmem:[%s3 + $0x1b0] sm:$0xf]
          %v4318 = vld [vmem:[%s3 + $0x1b4] sm:$0xf]
          %v4319 = vld [vmem:[%s3 + $0x1b8] sm:$0xf]
          %v4320 = vld [vmem:[%s3 + $0x1bc] sm:$0xf]
          %v4321 = vld [vmem:[%s3 + $0x1c0] sm:$0xf]
          %v4322 = vld [vmem:[%s3 + $0x1c4] sm:$0xf]
          %v4323 = vld [vmem:[%s3 + $0x1c8] sm:$0xf]
          %v4324 = vld [vmem:[%s3 + $0x1cc] sm:$0xf]
          %v4325 = vld [vmem:[%s3 + $0x1d0] sm:$0xf]
          %v4326 = vld [vmem:[%s3 + $0x1d4] sm:$0xf]
          %v4327 = vld [vmem:[%s3 + $0x1d8] sm:$0xf]
          %v4328 = vld [vmem:[%s3 + $0x1dc] sm:$0xf]
          %v4329 = vld [vmem:[%s3 + $0x1e0] sm:$0xf]
          %v4330 = vld [vmem:[%s3 + $0x1e4] sm:$0xf]
          %v4331 = vld [vmem:[%s3 + $0x1e8] sm:$0xf]
          %v4332 = vld [vmem:[%s3 + $0x1ec] sm:$0xf]
          %v4333 = vld [vmem:[%s3 + $0x1f0] sm:$0xf]
          %v4334 = vld [vmem:[%s3 + $0x1f4] sm:$0xf]
          %v4335 = vld [vmem:[%s3 + $0x1f8] sm:$0xf]
          %v4336 = vld [vmem:[%s3 + $0x1fc] sm:$0xf]
          %v4337 = vld [vmem:[%s4] sm:$0x1]
          %v4339 = vlaneseq
          %v4340 = vshrl.u32 %v4339, 7
          %v4341 = vsub.s32 0, %v4340
          %v4342 = vrot.slane %v4337, %v4341
          %v4472 = vunpack.c.l.b16 %v4209
          %v4473 = vunpack.c.l.b16 %v4210
          %v4474 = vunpack.c.l.b16 %v4211
          %v4475 = vunpack.c.l.b16 %v4212
          %v4476 = vunpack.c.l.b16 %v4213
          %v4477 = vunpack.c.l.b16 %v4214
          %v4478 = vunpack.c.l.b16 %v4215
          %v4479 = vunpack.c.l.b16 %v4216
          %v4480 = vunpack.c.l.b16 %v4217
          %v4481 = vunpack.c.l.b16 %v4218
          %v4482 = vunpack.c.l.b16 %v4219
          %v4483 = vunpack.c.l.b16 %v4220
          %v4484 = vunpack.c.l.b16 %v4221
          %v4485 = vunpack.c.l.b16 %v4222
          %v4486 = vunpack.c.l.b16 %v4223
          %v4487 = vunpack.c.l.b16 %v4224
          %v4488 = vunpack.c.l.b16 %v4225
          %v4489 = vunpack.c.l.b16 %v4226
          %v4490 = vunpack.c.l.b16 %v4227
          %v4491 = vunpack.c.l.b16 %v4228
          %v4492 = vunpack.c.l.b16 %v4229
          %v4493 = vunpack.c.l.b16 %v4230
          %v4494 = vunpack.c.l.b16 %v4231
          %v4495 = vunpack.c.l.b16 %v4232
          %v4496 = vunpack.c.l.b16 %v4233
          %v4497 = vunpack.c.l.b16 %v4234
          %v4498 = vunpack.c.l.b16 %v4235
          %v4499 = vunpack.c.l.b16 %v4236
          %v4500 = vunpack.c.l.b16 %v4237
          %v4501 = vunpack.c.l.b16 %v4238
          %v4502 = vunpack.c.l.b16 %v4239
          %v4503 = vunpack.c.l.b16 %v4240
          %v4504 = vunpack.c.l.b16 %v4241
          %v4505 = vunpack.c.l.b16 %v4242
          %v4506 = vunpack.c.l.b16 %v4243
          %v4507 = vunpack.c.l.b16 %v4244
          %v4508 = vunpack.c.l.b16 %v4245
          %v4509 = vunpack.c.l.b16 %v4246
          %v4510 = vunpack.c.l.b16 %v4247
          %v4511 = vunpack.c.l.b16 %v4248
          %v4512 = vunpack.c.l.b16 %v4249
          %v4513 = vunpack.c.l.b16 %v4250
          %v4514 = vunpack.c.l.b16 %v4251
          %v4515 = vunpack.c.l.b16 %v4252
          %v4516 = vunpack.c.l.b16 %v4253
          %v4517 = vunpack.c.l.b16 %v4254
          %v4518 = vunpack.c.l.b16 %v4255
          %v4519 = vunpack.c.l.b16 %v4256
          %v4520 = vunpack.c.l.b16 %v4257
          %v4521 = vunpack.c.l.b16 %v4258
          %v4522 = vunpack.c.l.b16 %v4259
          %v4523 = vunpack.c.l.b16 %v4260
          %v4524 = vunpack.c.l.b16 %v4261
          %v4525 = vunpack.c.l.b16 %v4262
          %v4526 = vunpack.c.l.b16 %v4263
          %v4527 = vunpack.c.l.b16 %v4264
          %v4528 = vunpack.c.l.b16 %v4265
          %v4529 = vunpack.c.l.b16 %v4266
          %v4530 = vunpack.c.l.b16 %v4267
          %v4531 = vunpack.c.l.b16 %v4268
          %v4532 = vunpack.c.l.b16 %v4269
          %v4533 = vunpack.c.l.b16 %v4270
          %v4534 = vunpack.c.l.b16 %v4271
          %v4535 = vunpack.c.l.b16 %v4272
          %v4536 = vunpack.c.l.b16 %v4273
          %v4537 = vunpack.c.l.b16 %v4274
          %v4538 = vunpack.c.l.b16 %v4275
          %v4539 = vunpack.c.l.b16 %v4276
          %v4540 = vunpack.c.l.b16 %v4277
          %v4541 = vunpack.c.l.b16 %v4278
          %v4542 = vunpack.c.l.b16 %v4279
          %v4543 = vunpack.c.l.b16 %v4280
          %v4544 = vunpack.c.l.b16 %v4281
          %v4545 = vunpack.c.l.b16 %v4282
          %v4546 = vunpack.c.l.b16 %v4283
          %v4547 = vunpack.c.l.b16 %v4284
          %v4548 = vunpack.c.l.b16 %v4285
          %v4549 = vunpack.c.l.b16 %v4286
          %v4550 = vunpack.c.l.b16 %v4287
          %v4551 = vunpack.c.l.b16 %v4288
          %v4552 = vunpack.c.l.b16 %v4289
          %v4553 = vunpack.c.l.b16 %v4290
          %v4554 = vunpack.c.l.b16 %v4291
          %v4555 = vunpack.c.l.b16 %v4292
          %v4556 = vunpack.c.l.b16 %v4293
          %v4557 = vunpack.c.l.b16 %v4294
          %v4558 = vunpack.c.l.b16 %v4295
          %v4559 = vunpack.c.l.b16 %v4296
          %v4560 = vunpack.c.l.b16 %v4297
          %v4561 = vunpack.c.l.b16 %v4298
          %v4562 = vunpack.c.l.b16 %v4299
          %v4563 = vunpack.c.l.b16 %v4300
          %v4564 = vunpack.c.l.b16 %v4301
          %v4565 = vunpack.c.l.b16 %v4302
          %v4566 = vunpack.c.l.b16 %v4303
          %v4567 = vunpack.c.l.b16 %v4304
          %v4568 = vunpack.c.l.b16 %v4305
          %v4569 = vunpack.c.l.b16 %v4306
          %v4570 = vunpack.c.l.b16 %v4307
          %v4571 = vunpack.c.l.b16 %v4308
          %v4572 = vunpack.c.l.b16 %v4309
          %v4573 = vunpack.c.l.b16 %v4310
          %v4574 = vunpack.c.l.b16 %v4311
          %v4575 = vunpack.c.l.b16 %v4312
          %v4576 = vunpack.c.l.b16 %v4313
          %v4577 = vunpack.c.l.b16 %v4314
          %v4578 = vunpack.c.l.b16 %v4315
          %v4579 = vunpack.c.l.b16 %v4316
          %v4580 = vunpack.c.l.b16 %v4317
          %v4581 = vunpack.c.l.b16 %v4318
          %v4582 = vunpack.c.l.b16 %v4319
          %v4583 = vunpack.c.l.b16 %v4320
          %v4584 = vunpack.c.l.b16 %v4321
          %v4585 = vunpack.c.l.b16 %v4322
          %v4586 = vunpack.c.l.b16 %v4323
          %v4587 = vunpack.c.l.b16 %v4324
          %v4588 = vunpack.c.l.b16 %v4325
          %v4589 = vunpack.c.l.b16 %v4326
          %v4590 = vunpack.c.l.b16 %v4327
          %v4591 = vunpack.c.l.b16 %v4328
          %v4592 = vunpack.c.l.b16 %v4329
          %v4593 = vunpack.c.l.b16 %v4330
          %v4594 = vunpack.c.l.b16 %v4331
          %v4595 = vunpack.c.l.b16 %v4332
          %v4596 = vunpack.c.l.b16 %v4333
          %v4597 = vunpack.c.l.b16 %v4334
          %v4598 = vunpack.c.l.b16 %v4335
          %v4599 = vunpack.c.l.b16 %v4336
          %v4600 = vpack.c.b16 %v4473, %v4472
          %v4601 = vpack.c.b16 %v4475, %v4474
          %v4602 = vpack.c.b16 %v4477, %v4476
          %v4603 = vpack.c.b16 %v4479, %v4478
          %v4604 = vpack.c.b16 %v4481, %v4480
          %v4605 = vpack.c.b16 %v4483, %v4482
          %v4606 = vpack.c.b16 %v4485, %v4484
          %v4607 = vpack.c.b16 %v4487, %v4486
          %v4608 = vpack.c.b16 %v4489, %v4488
          %v4609 = vpack.c.b16 %v4491, %v4490
          %v4610 = vpack.c.b16 %v4493, %v4492
          %v4611 = vpack.c.b16 %v4495, %v4494
          %v4612 = vpack.c.b16 %v4497, %v4496
          %v4613 = vpack.c.b16 %v4499, %v4498
          %v4614 = vpack.c.b16 %v4501, %v4500
          %v4615 = vpack.c.b16 %v4503, %v4502
          %v4616 = vpack.c.b16 %v4505, %v4504
          %v4617 = vpack.c.b16 %v4507, %v4506
          %v4618 = vpack.c.b16 %v4509, %v4508
          %v4619 = vpack.c.b16 %v4511, %v4510
          %v4620 = vpack.c.b16 %v4513, %v4512
          %v4621 = vpack.c.b16 %v4515, %v4514
          %v4622 = vpack.c.b16 %v4517, %v4516
          %v4623 = vpack.c.b16 %v4519, %v4518
          %v4624 = vpack.c.b16 %v4521, %v4520
          %v4625 = vpack.c.b16 %v4523, %v4522
          %v4626 = vpack.c.b16 %v4525, %v4524
          %v4627 = vpack.c.b16 %v4527, %v4526
          %v4628 = vpack.c.b16 %v4529, %v4528
          %v4629 = vpack.c.b16 %v4531, %v4530
          %v4630 = vpack.c.b16 %v4533, %v4532
          %v4631 = vpack.c.b16 %v4535, %v4534
          %v4632 = vpack.c.b16 %v4537, %v4536
          %v4633 = vpack.c.b16 %v4539, %v4538
          %v4634 = vpack.c.b16 %v4541, %v4540
          %v4635 = vpack.c.b16 %v4543, %v4542
          %v4636 = vpack.c.b16 %v4545, %v4544
          %v4637 = vpack.c.b16 %v4547, %v4546
          %v4638 = vpack.c.b16 %v4549, %v4548
          %v4639 = vpack.c.b16 %v4551, %v4550
          %v4640 = vpack.c.b16 %v4553, %v4552
          %v4641 = vpack.c.b16 %v4555, %v4554
          %v4642 = vpack.c.b16 %v4557, %v4556
          %v4643 = vpack.c.b16 %v4559, %v4558
          %v4644 = vpack.c.b16 %v4561, %v4560
          %v4645 = vpack.c.b16 %v4563, %v4562
          %v4646 = vpack.c.b16 %v4565, %v4564
          %v4647 = vpack.c.b16 %v4567, %v4566
          %v4648 = vpack.c.b16 %v4569, %v4568
          %v4649 = vpack.c.b16 %v4571, %v4570
          %v4650 = vpack.c.b16 %v4573, %v4572
          %v4651 = vpack.c.b16 %v4575, %v4574
          %v4652 = vpack.c.b16 %v4577, %v4576
          %v4653 = vpack.c.b16 %v4579, %v4578
          %v4654 = vpack.c.b16 %v4581, %v4580
          %v4655 = vpack.c.b16 %v4583, %v4582
          %v4656 = vpack.c.b16 %v4585, %v4584
          %v4657 = vpack.c.b16 %v4587, %v4586
          %v4658 = vpack.c.b16 %v4589, %v4588
          %v4659 = vpack.c.b16 %v4591, %v4590
          %v4660 = vpack.c.b16 %v4593, %v4592
          %v4661 = vpack.c.b16 %v4595, %v4594
          %v4662 = vpack.c.b16 %v4597, %v4596
          %v4663 = vpack.c.b16 %v4599, %v4598
          %4728 = vmatprep.subr.bf16.mxu0 0
          %4729 = vmatpush1.bf16.msra.mxu0 %v4600
          %4730 = vmatprep.subr.bf16.mxu0 0
          %4731 = vmatpush1.bf16.msra.mxu0 %v4601
          %4732 = vmatprep.subr.bf16.mxu0 0
          %4733 = vmatpush1.bf16.msra.mxu0 %v4602
          %4734 = vmatprep.subr.bf16.mxu0 0
          %4735 = vmatpush1.bf16.msra.mxu0 %v4603
          %4736 = vmatprep.subr.bf16.mxu0 0
          %4737 = vmatpush1.bf16.msra.mxu0 %v4604
          %4738 = vmatprep.subr.bf16.mxu0 0
          %4739 = vmatpush1.bf16.msra.mxu0 %v4605
          %4740 = vmatprep.subr.bf16.mxu0 0
          %4741 = vmatpush1.bf16.msra.mxu0 %v4606
          %4742 = vmatprep.subr.bf16.mxu0 0
          %4743 = vmatpush1.bf16.msra.mxu0 %v4607
          %4744 = vmatprep.subr.bf16.mxu0 0
          %4745 = vmatpush1.bf16.msra.mxu0 %v4608
          %4746 = vmatprep.subr.bf16.mxu0 0
          %4747 = vmatpush1.bf16.msra.mxu0 %v4609
          %4748 = vmatprep.subr.bf16.mxu0 0
          %4749 = vmatpush1.bf16.msra.mxu0 %v4610
          %4750 = vmatprep.subr.bf16.mxu0 0
          %4751 = vmatpush1.bf16.msra.mxu0 %v4611
          %4752 = vmatprep.subr.bf16.mxu0 0
          %4753 = vmatpush1.bf16.msra.mxu0 %v4612
          %4754 = vmatprep.subr.bf16.mxu0 0
          %4755 = vmatpush1.bf16.msra.mxu0 %v4613
          %4756 = vmatprep.subr.bf16.mxu0 0
          %4757 = vmatpush1.bf16.msra.mxu0 %v4614
          %4758 = vmatprep.subr.bf16.mxu0 0
          %4759 = vmatpush1.bf16.msra.mxu0 %v4615
          %4760 = vmatprep.mubr.bf16.mxu0 %v4202
          %4761 = vmatmul.mubr.bf16.gmra.mrb[0].mxu0 %v4201
          %v4762 = vpop.f32.mrb[0].mxu0
          %v4763 = vadd.f32 %v4342, %v4762
          %v4764 = vpop.f32.mrb[0].mxu0
          %v4765 = vpop.f32.mrb[0].mxu0
          %v4766 = vpop.f32.mrb[0].mxu0
          %4767 = vdwg.mxu0
          %4768 = vmatprep.subr.bf16.mxu0 0
          %4769 = vmatpush1.bf16.msra.mxu0 %v4616
          %4770 = vmatprep.subr.bf16.mxu0 0
          %4771 = vmatpush1.bf16.msra.mxu0 %v4617
          %4772 = vmatprep.subr.bf16.mxu0 0
          %4773 = vmatpush1.bf16.msra.mxu0 %v4618
          %4774 = vmatprep.subr.bf16.mxu0 0
          %4775 = vmatpush1.bf16.msra.mxu0 %v4619
          %4776 = vmatprep.subr.bf16.mxu0 0
          %4777 = vmatpush1.bf16.msra.mxu0 %v4620
          %4778 = vmatprep.subr.bf16.mxu0 0
          %4779 = vmatpush1.bf16.msra.mxu0 %v4621
          %4780 = vmatprep.subr.bf16.mxu0 0
          %4781 = vmatpush1.bf16.msra.mxu0 %v4622
          %4782 = vmatprep.subr.bf16.mxu0 0
          %4783 = vmatpush1.bf16.msra.mxu0 %v4623
          %4784 = vmatprep.subr.bf16.mxu0 0
          %4785 = vmatpush1.bf16.msra.mxu0 %v4624
          %4786 = vmatprep.subr.bf16.mxu0 0
          %4787 = vmatpush1.bf16.msra.mxu0 %v4625
          %4788 = vmatprep.subr.bf16.mxu0 0
          %4789 = vmatpush1.bf16.msra.mxu0 %v4626
          %4790 = vmatprep.subr.bf16.mxu0 0
          %4791 = vmatpush1.bf16.msra.mxu0 %v4627
          %4792 = vmatprep.subr.bf16.mxu0 0
          %4793 = vmatpush1.bf16.msra.mxu0 %v4628
          %4794 = vmatprep.subr.bf16.mxu0 0
          %4795 = vmatpush1.bf16.msra.mxu0 %v4629
          %4796 = vmatprep.subr.bf16.mxu0 0
          %4797 = vmatpush1.bf16.msra.mxu0 %v4630
          %4798 = vmatprep.subr.bf16.mxu0 0
          %4799 = vmatpush1.bf16.msra.mxu0 %v4631
          %4800 = vmatprep.mubr.bf16.mxu0 %v4204
          %4801 = vmatmul.mubr.bf16.gmra.mrb[0].mxu0 %v4203
          %v4802 = vpop.f32.mrb[0].mxu0
          %v4803 = vadd.f32 %v4763, %v4802
          %v4804 = vpop.f32.mrb[0].mxu0
          %v4805 = vpop.f32.mrb[0].mxu0
          %v4806 = vpop.f32.mrb[0].mxu0
          %4807 = vdwg.mxu0
          %4808 = vmatprep.subr.bf16.mxu0 0
          %4809 = vmatpush1.bf16.msra.mxu0 %v4632
          %4810 = vmatprep.subr.bf16.mxu0 0
          %4811 = vmatpush1.bf16.msra.mxu0 %v4633
          %4812 = vmatprep.subr.bf16.mxu0 0
          %4813 = vmatpush1.bf16.msra.mxu0 %v4634
          %4814 = vmatprep.subr.bf16.mxu0 0
          %4815 = vmatpush1.bf16.msra.mxu0 %v4635
          %4816 = vmatprep.subr.bf16.mxu0 0
          %4817 = vmatpush1.bf16.msra.mxu0 %v4636
          %4818 = vmatprep.subr.bf16.mxu0 0
          %4819 = vmatpush1.bf16.msra.mxu0 %v4637
          %4820 = vmatprep.subr.bf16.mxu0 0
          %4821 = vmatpush1.bf16.msra.mxu0 %v4638
          %4822 = vmatprep.subr.bf16.mxu0 0
          %4823 = vmatpush1.bf16.msra.mxu0 %v4639
          %4824 = vmatprep.subr.bf16.mxu0 0
          %4825 = vmatpush1.bf16.msra.mxu0 %v4640
          %4826 = vmatprep.subr.bf16.mxu0 0
          %4827 = vmatpush1.bf16.msra.mxu0 %v4641
          %4828 = vmatprep.subr.bf16.mxu0 0
          %4829 = vmatpush1.bf16.msra.mxu0 %v4642
          %4830 = vmatprep.subr.bf16.mxu0 0
          %4831 = vmatpush1.bf16.msra.mxu0 %v4643
          %4832 = vmatprep.subr.bf16.mxu0 0
          %4833 = vmatpush1.bf16.msra.mxu0 %v4644
          %4834 = vmatprep.subr.bf16.mxu0 0
          %4835 = vmatpush1.bf16.msra.mxu0 %v4645
          %4836 = vmatprep.subr.bf16.mxu0 0
          %4837 = vmatpush1.bf16.msra.mxu0 %v4646
          %4838 = vmatprep.subr.bf16.mxu0 0
          %4839 = vmatpush1.bf16.msra.mxu0 %v4647
          %4840 = vmatprep.mubr.bf16.mxu0 %v4206
          %4841 = vmatmul.mubr.bf16.gmra.mrb[0].mxu0 %v4205
          %v4842 = vpop.f32.mrb[0].mxu0
          %v4843 = vadd.f32 %v4803, %v4842
          %v4844 = vpop.f32.mrb[0].mxu0
          %v4845 = vpop.f32.mrb[0].mxu0
          %v4846 = vpop.f32.mrb[0].mxu0
          %4847 = vdwg.mxu0
          %4848 = vmatprep.subr.bf16.mxu0 0
          %4849 = vmatpush1.bf16.msra.mxu0 %v4648
          %4850 = vmatprep.subr.bf16.mxu0 0
          %4851 = vmatpush1.bf16.msra.mxu0 %v4649
          %4852 = vmatprep.subr.bf16.mxu0 0
          %4853 = vmatpush1.bf16.msra.mxu0 %v4650
          %4854 = vmatprep.subr.bf16.mxu0 0
          %4855 = vmatpush1.bf16.msra.mxu0 %v4651
          %4856 = vmatprep.subr.bf16.mxu0 0
          %4857 = vmatpush1.bf16.msra.mxu0 %v4652
          %4858 = vmatprep.subr.bf16.mxu0 0
          %4859 = vmatpush1.bf16.msra.mxu0 %v4653
          %4860 = vmatprep.subr.bf16.mxu0 0
          %4861 = vmatpush1.bf16.msra.mxu0 %v4654
          %4862 = vmatprep.subr.bf16.mxu0 0
          %4863 = vmatpush1.bf16.msra.mxu0 %v4655
          %4864 = vmatprep.subr.bf16.mxu0 0
          %4865 = vmatpush1.bf16.msra.mxu0 %v4656
          %4866 = vmatprep.subr.bf16.mxu0 0
          %4867 = vmatpush1.bf16.msra.mxu0 %v4657
          %4868 = vmatprep.subr.bf16.mxu0 0
          %4869 = vmatpush1.bf16.msra.mxu0 %v4658
          %4870 = vmatprep.subr.bf16.mxu0 0
          %4871 = vmatpush1.bf16.msra.mxu0 %v4659
          %4872 = vmatprep.subr.bf16.mxu0 0
          %4873 = vmatpush1.bf16.msra.mxu0 %v4660
          %4874 = vmatprep.subr.bf16.mxu0 0
          %4875 = vmatpush1.bf16.msra.mxu0 %v4661
          %4876 = vmatprep.subr.bf16.mxu0 0
          %4877 = vmatpush1.bf16.msra.mxu0 %v4662
          %4878 = vmatprep.subr.bf16.mxu0 0
          %4879 = vmatpush1.bf16.msra.mxu0 %v4663
          %4880 = vmatprep.mubr.bf16.mxu0 %v4208
          %4881 = vmatmul.mubr.bf16.gmra.mrb[0].mxu0 %v4207
          %v4882 = vpop.f32.mrb[0].mxu0
          %v4883 = vadd.f32 %v4843, %v4882
          %v4884 = vpop.f32.mrb[0].mxu0
          %v4885 = vpop.f32.mrb[0].mxu0
          %v4886 = vpop.f32.mrb[0].mxu0
          %4887 = vdwg.mxu0
          %4888 = vst [vmem:[#allocation3] sm:$0x3] %v4883
        $region48: #{net_forward.5} parent=39 // pred_fallthru
          _
        // Predicated region
        $region49: #{net_forward.5} parent=39 // pred_check
          %p4889 = pneg %p145
        $region50: #{net_forward.5} parent=39 // pred_check_branch
          %4891 = sbr.rel (%p4889) target = $region52
        $region51: #{net_forward.5} parent=39 // pred_region
          %s4893 = ssub.s32 32, 32
          %4894 = vsyncadd [#allocation4], %s4893
          %s4896 = sshll.u32 [#allocation3], 4
          %s4897 = int_to_ptr.vmem [resolvable:$true] %s4896
          %4899 = dma.vmem_to_hbm [thread:$0]  %s4897, 32, %s5, [#allocation4]
        $region52: #{net_forward.5} parent=39 // pred_fallthru
          _
        // Predicated region
        $region53: #{net_forward.5} parent=39 // pred_check
          %p4900 = pneg %p145
        $region54: #{net_forward.5} parent=39 // pred_check_branch
          %4902 = sbr.rel (%p4900) target = $region56
        $region55: #{net_forward.5} parent=39 // pred_region
          %4903 = dma.done [#allocation4], 32
        $region56: #{net_forward.5} parent=39 // pred_fallthru
          _
      $region40: #{net_forward.5} parent=5 // pred_fallthru
        _
      %p4904 = scmp.le.s32.totalorder 2, %s12
      // Predicated region
      $region57: #{net_forward.5} parent=5 // pred_check
        %p4905 = pneg %p4904
      $region58: #{net_forward.5} parent=5 // pred_check_branch
        %4907 = sbr.rel (%p4905) target = $region60
      $region59: #{net_forward.5} parent=5 // pred_region
        %s4908 = ssub.s32 %s12, 2
      $region60: #{net_forward.5} parent=5 // pred_fallthru
        _
    $region6: #{net_forward.5} parent=1 // loop_footer
      %s16 = sadd.s32 1, %s12
    $region7: #{net_forward.5} parent=1 // loop_footer_branch
      %11 = sbr.rel target = $region3
    $region8: #{net_forward.5} parent=1 // loop_exit
      _
    %4909 = vsyncpa [#allocation4], 1
    %s4910 = scalar_lea.sflag [#allocation4], 1
    %4911 = vsyncpa %s4910, 1

</llo_original>
